<compile_context>
chip_gen: v7x
topology: tpu7x:2x2x1
jax: 0.10.0
libtpu: 0.0.40
codegen_flags: <defaults>
</compile_context>

<pallas_src>
import math
import functools

import jax
import jax.numpy as jnp
from jax import lax
from jax.experimental import pallas as pl
from jax.experimental.pallas import tpu as pltpu

LOG_SIG_MIN, LOG_SIG_MAX = -20.0, 2.0
TANH_EPS = 1e-6                       # rlkit/torchkit TanhNormal epsilon
HALF_LOG_2PI = 0.5 * math.log(2.0 * math.pi)
OUT_LANES = 128                       # lane-dense output slab width (>= 3*A + 1)
SUBLANE = 8                           # f32 sublane tile


def _relu(x):
    return jnp.maximum(x, 0.0)


def _place_cols(x, offset, total):
    """Scatter x:(M, w) into columns [offset, offset+w) of an (M, total) slab.

    Uses an exact 0/1 selection matrix on the MXU (w > 1) or a VPU broadcast
    (w == 1) so the final output store is a single unmasked lane-dense write,
    avoiding unaligned lane concatenation / partial masked stores.
    """
    w = x.shape[-1]
    col = lax.broadcasted_iota(jnp.int32, (w, total), 1)
    row = lax.broadcasted_iota(jnp.int32, (w, total), 0)
    sel = (col == row + offset).astype(jnp.float32)
    if w == 1:
        return x * sel                          # (M,1)*(1,total) broadcast
    return jnp.dot(x, sel, preferred_element_type=jnp.float32)


def pomdp_policy_kernel(
    T, B,
    # flattened (T*B, feature) per-timestep data
    act_ref, rew_ref, obs_ref, eps_ref,
    # ObsRepMLP (both=True): shared token layer + two relu heads
    wtok_ref, btok_ref, wobs_ref, bobs_ref, wcur_ref, bcur_ref,
    # action / reward FeatureExtractors (Linear + relu)
    wact_ref, bact_ref, wrew_ref, brew_ref,
    # GRU: input-side weights per concat component, hidden-side per gate (r,z,n)
    wih_a_ref, wih_r_ref, wih_o_ref, bih_ref,
    whh_r_ref, whh_z_ref, whh_n_ref, bhh_r_ref, bhh_z_ref, bhh_n_ref,
    # TanhGaussianPolicy MLP (first layer split for concat(hidden, curr_embed))
    wp1_h_ref, wp1_c_ref, bp1_ref, wp2_ref, bp2_ref,
    wmu_ref, bmu_ref, wls_ref, bls_ref,
    # output: (T*B, OUT_LANES) slab = [action | logp | mean | log_std | zero pad]
    out_ref,
    # scratch: hidden states for all timesteps
    hid_scratch,
):
    dot = functools.partial(jnp.dot, preferred_element_type=jnp.float32)

    a = act_ref[...]        # (TB, A)
    r = rew_ref[...]        # (TB, 1)
    o = obs_ref[...]        # (TB, O)
    eps = eps_ref[...]      # (TB, A) reparameterization noise
    A = a.shape[-1]
    H = whh_r_ref.shape[0]

    # ---- Phase 1 (batched over T*B): embedders + input-side GRU projection ----
    # TODO(synk): exact ORDER ObsRepMLP tokenization/masking is approximated by a
    # shared (obs_dim -> obs_dim*token_dim) relu layer with two relu projection
    # heads; only the mask_scheme=None path is implemented.
    tok = _relu(dot(o, wtok_ref[...]) + btok_ref[...])
    obs_emb = _relu(dot(tok, wobs_ref[...]) + bobs_ref[...])
    cur_emb = _relu(dot(tok, wcur_ref[...]) + bcur_ref[...])
    a_emb = _relu(dot(a, wact_ref[...]) + bact_ref[...])
    # reward embedder has contraction dim K=1: VPU broadcast, not an MXU matmul
    r_emb = _relu(r * wrew_ref[...] + brew_ref[...])

    # PyTorch GRU gate order (r, z, n); rnn inputs = cat(a_emb, r_emb, obs_emb)
    gi = (dot(a_emb, wih_a_ref[...]) + dot(r_emb, wih_r_ref[...])
          + dot(obs_emb, wih_o_ref[...]) + bih_ref[...])           # (TB, 3H)
    # H = 128 here so these lane slices are tile-aligned (correct for any H).
    gi_r = gi[:, 0:H]
    gi_z = gi[:, H:2 * H]
    gi_n = gi[:, 2 * H:3 * H]

    # ---- Phase 2 (serial): only h @ W_hh + the gate math stays on this path ----
    h = jnp.zeros((B, H), jnp.float32)
    for t in range(T):                  # T is small & static -> fully unrolled
        lo = t * B                      # B padded to sublane multiple -> aligned
        gh_r = dot(h, whh_r_ref[...]) + bhh_r_ref[...]
        gh_z = dot(h, whh_z_ref[...]) + bhh_z_ref[...]
        gh_n = dot(h, whh_n_ref[...]) + bhh_n_ref[...]
        r_g = jax.nn.sigmoid(gi_r[lo:lo + B, :] + gh_r)
        z_g = jax.nn.sigmoid(gi_z[lo:lo + B, :] + gh_z)
        n_g = jnp.tanh(gi_n[lo:lo + B, :] + r_g * gh_n)
        h = (1.0 - z_g) * n_g + z_g * h
        hid_scratch[lo:lo + B, :] = h

    hidden = hid_scratch[...]           # (TB, H)

    # ---- Phase 3 (batched): TanhGaussianPolicy on cat(hidden, curr_embed) ----
    h1 = _relu(dot(hidden, wp1_h_ref[...]) + dot(cur_emb, wp1_c_ref[...])
               + bp1_ref[...])
    h2 = _relu(dot(h1, wp2_ref[...]) + bp2_ref[...])
    mean = dot(h2, wmu_ref[...]) + bmu_ref[...]
    log_std = jnp.clip(dot(h2, wls_ref[...]) + bls_ref[...],
                       LOG_SIG_MIN, LOG_SIG_MAX)
    std = jnp.exp(log_std)

    pre_tanh = mean + std * eps         # rsample
    action = jnp.tanh(pre_tanh)
    # rlkit/torchkit TanhNormal.log_prob (module semantics kept):
    #   Normal(mean, std).log_prob(pre_tanh) - log(1 - tanh(pre)^2 + eps)
    # (the softplus-stable form 2*(log2 - pre - softplus(-2*pre)) only differs
    #  for |pre_tanh| >> 1; kept eps-form for fidelity with the PyTorch module)
    logp_per_dim = (-0.5 * eps * eps - log_std - HALF_LOG_2PI
                    - jnp.log(1.0 - action * action + TANH_EPS))
    log_prob = jnp.sum(logp_per_dim, axis=-1, keepdims=True)       # (TB, 1)

    # ---- single lane-dense (TB, 128) output store ----
    out_ref[...] = (_place_cols(action, 0, OUT_LANES)
                    + _place_cols(log_prob, A, OUT_LANES)
                    + _place_cols(mean, A + 1, OUT_LANES)
                    + _place_cols(log_std, 2 * A + 1, OUT_LANES))


def pomdp_policy_forward(params, prev_actions, rewards, observs, noise):
    T, B, A = prev_actions.shape
    O = observs.shape[-1]
    H = params["whh"].shape[0]
    assert 3 * A + 1 <= OUT_LANES

    # Pad the batch to the f32 sublane tile so every per-timestep row block in
    # the kernel is (8,128)-aligned and the recurrent matmul uses full sublanes.
    Bp = max(SUBLANE, ((B + SUBLANE - 1) // SUBLANE) * SUBLANE)
    if Bp != B:
        padb = lambda x: jnp.pad(x, ((0, 0), (0, Bp - B), (0, 0)))
        prev_actions = padb(prev_actions)
        rewards = padb(rewards)
        observs = padb(observs)
        noise = padb(noise)
    TBp = T * Bp

    a2 = prev_actions.reshape(TBp, A)
    r2 = rewards.reshape(TBp, 1)
    o2 = observs.reshape(TBp, O)
    e2 = noise.reshape(TBp, A)

    p = params
    whh, bhh = p["whh"], p["bhh"]
    weights = [
        p["wtok"], p["btok"], p["wobs"], p["bobs"], p["wcur"], p["bcur"],
        p["wact"], p["bact"], p["wrew"], p["brew"],
        p["wih_a"], p["wih_r"], p["wih_o"], p["bih"],
        whh[:, 0:H], whh[:, H:2 * H], whh[:, 2 * H:3 * H],
        bhh[:, 0:H], bhh[:, H:2 * H], bhh[:, 2 * H:3 * H],
        p["wp1_h"], p["wp1_c"], p["bp1"], p["wp2"], p["bp2"],
        p["wmu"], p["bmu"], p["wls"], p["bls"],
    ]
    inputs = [a2, r2, o2, e2] + weights

    # advisory cost estimate for XLA scheduling
    def mm(m, k, n):
        return 2 * m * k * n
    tok_dim = p["wtok"].shape[1]
    Eo = p["wobs"].shape[1]
    Ea = p["wact"].shape[1]
    Er = p["wrew"].shape[1]
    P1, P2 = p["wp2"].shape
    flops = (mm(TBp, O, tok_dim) + 2 * mm(TBp, tok_dim, Eo) + mm(TBp, A, Ea)
             + mm(TBp, Ea, 3 * H) + mm(TBp, Er, 3 * H) + mm(TBp, Eo, 3 * H)
             + T * 3 * mm(Bp, H, H)
             + mm(TBp, H, P1) + mm(TBp, Eo, P1) + mm(TBp, P1, P2)
             + 2 * mm(TBp, P2, A) + 3 * mm(TBp, A, OUT_LANES))
    transcendentals = TBp * (3 * H + 3 * A)
    in_bytes = sum(int(x.size) * x.dtype.itemsize for x in inputs)
    out_bytes = TBp * OUT_LANES * 4
    bytes_accessed = in_bytes + out_bytes
    vmem_limit = int(max(8 * 1024 * 1024, 4 * bytes_accessed))

    kernel = functools.partial(pomdp_policy_kernel, T, Bp)
    vmem_spec = pl.BlockSpec(memory_space=pltpu.MemorySpace.VMEM)
    slab = pl.pallas_call(
        kernel,
        out_shape=jax.ShapeDtypeStruct((TBp, OUT_LANES), jnp.float32),
        in_specs=[vmem_spec] * len(inputs),
        out_specs=vmem_spec,
        scratch_shapes=[pltpu.VMEM((TBp, H), jnp.float32)],
        compiler_params=pltpu.CompilerParams(vmem_limit_bytes=vmem_limit),
        cost_estimate=pl.CostEstimate(
            flops=int(flops),
            transcendentals=int(transcendentals),
            bytes_accessed=int(bytes_accessed)),
    )(*inputs)

    def field(off, w):
        return slab[:, off:off + w].reshape(T, Bp, w)[:, :B, :]

    action = field(0, A)
    log_prob = field(A, 1)
    mean = field(A + 1, A)
    log_std = field(2 * A + 1, A)
    return action, log_prob, mean, log_std


def init_params(key, *, obs_dim, action_dim, token_dim, action_embedding_size,
                observ_embedding_size, reward_embedding_size, rnn_hidden_size,
                policy_layers):
    keys = iter(jax.random.split(key, 32))

    def lin(k, fan_in, fan_out):
        scale = 1.0 / math.sqrt(fan_in)
        return jax.random.uniform(k, (fan_in, fan_out), jnp.float32, -scale, scale)

    tok_dim = obs_dim * token_dim
    H = rnn_hidden_size
    p1, p2 = policy_layers
    z = lambda n: jnp.zeros((1, n), jnp.float32)
    params = {
        "wtok": lin(next(keys), obs_dim, tok_dim), "btok": z(tok_dim),
        "wobs": lin(next(keys), tok_dim, observ_embedding_size), "bobs": z(observ_embedding_size),
        "wcur": lin(next(keys), tok_dim, observ_embedding_size), "bcur": z(observ_embedding_size),
        "wact": lin(next(keys), action_dim, action_embedding_size), "bact": z(action_embedding_size),
        "wrew": lin(next(keys), 1, reward_embedding_size), "brew": z(reward_embedding_size),
        # GRU weights (nn.init.orthogonal_ approximated; biases = 0 as in module)
        "wih_a": 0.3 * jax.random.normal(next(keys), (action_embedding_size, 3 * H), jnp.float32),
        "wih_r": 0.3 * jax.random.normal(next(keys), (reward_embedding_size, 3 * H), jnp.float32),
        "wih_o": 0.3 * jax.random.normal(next(keys), (observ_embedding_size, 3 * H), jnp.float32),
        "whh": 0.3 * jax.random.normal(next(keys), (H, 3 * H), jnp.float32),
        "bih": z(3 * H), "bhh": z(3 * H),
        "wp1_h": lin(next(keys), H, p1), "wp1_c": lin(next(keys), observ_embedding_size, p1),
        "bp1": z(p1),
        "wp2": lin(next(keys), p1, p2), "bp2": z(p2),
        "wmu": lin(next(keys), p2, action_dim), "bmu": z(action_dim),
        "wls": lin(next(keys), p2, action_dim), "bls": z(action_dim),
    }
    return params


def reference_forward(params, prev_actions, rewards, observs, noise):
    p = params
    hp = lambda a, b: jnp.matmul(a, b, precision=lax.Precision.HIGHEST)
    relu = lambda x: jnp.maximum(x, 0.0)
    tok = relu(hp(observs, p["wtok"]) + p["btok"])
    obs_emb = relu(hp(tok, p["wobs"]) + p["bobs"])
    cur_emb = relu(hp(tok, p["wcur"]) + p["bcur"])
    a_emb = relu(hp(prev_actions, p["wact"]) + p["bact"])
    r_emb = relu(hp(rewards, p["wrew"]) + p["brew"])
    gi = (hp(a_emb, p["wih_a"]) + hp(r_emb, p["wih_r"])
          + hp(obs_emb, p["wih_o"]) + p["bih"])                    # (T, B, 3H)
    H = p["whh"].shape[0]
    B = prev_actions.shape[1]

    def gru_step(h, gi_t):
        gh = hp(h, p["whh"]) + p["bhh"]
        r_g = jax.nn.sigmoid(gi_t[:, :H] + gh[:, :H])
        z_g = jax.nn.sigmoid(gi_t[:, H:2 * H] + gh[:, H:2 * H])
        n_g = jnp.tanh(gi_t[:, 2 * H:] + r_g * gh[:, 2 * H:])
        h_new = (1.0 - z_g) * n_g + z_g * h
        return h_new, h_new

    _, hidden = lax.scan(gru_step, jnp.zeros((B, H), jnp.float32), gi)
    h1 = relu(hp(hidden, p["wp1_h"]) + hp(cur_emb, p["wp1_c"]) + p["bp1"])
    h2 = relu(hp(h1, p["wp2"]) + p["bp2"])
    mean = hp(h2, p["wmu"]) + p["bmu"]
    log_std = jnp.clip(hp(h2, p["wls"]) + p["bls"], LOG_SIG_MIN, LOG_SIG_MAX)
    std = jnp.exp(log_std)
    pre = mean + std * noise
    action = jnp.tanh(pre)
    logp = (-0.5 * noise ** 2 - log_std - HALF_LOG_2PI
            - jnp.log(1.0 - action ** 2 + TANH_EPS)).sum(-1, keepdims=True)
    return action, logp, mean, log_std


if __name__ == "__main__":
    # small shapes implied by the forward: (T, B, dim) sequences
    T, B = 8, 2
    obs_dim, action_dim, token_dim = 16, 4, 8
    action_embedding_size = 16
    observ_embedding_size = 32
    reward_embedding_size = 16
    rnn_hidden_size = 128
    policy_layers = (64, 64)

    key = jax.random.PRNGKey(0)
    k_param, k_a, k_r, k_o, k_n = jax.random.split(key, 5)
    params = init_params(
        k_param, obs_dim=obs_dim, action_dim=action_dim, token_dim=token_dim,
        action_embedding_size=action_embedding_size,
        observ_embedding_size=observ_embedding_size,
        reward_embedding_size=reward_embedding_size,
        rnn_hidden_size=rnn_hidden_size, policy_layers=policy_layers)

    prev_actions = jax.random.normal(k_a, (T, B, action_dim), jnp.float32)
    rewards = jax.random.normal(k_r, (T, B, 1), jnp.float32)
    observs = jax.random.normal(k_o, (T, B, obs_dim), jnp.float32)
    # rsample noise for TanhGaussianPolicy, generated outside for determinism
    noise = jax.random.normal(k_n, (T, B, action_dim), jnp.float32)

    outs = pomdp_policy_forward(params, prev_actions, rewards, observs, noise)
    actions, log_probs, mean, log_std = jax.block_until_ready(outs)

    ref = reference_forward(params, prev_actions, rewards, observs, noise)
    for got, want in zip((actions, log_probs, mean, log_std), ref):
        assert got.shape == want.shape, (got.shape, want.shape)
        assert bool(jnp.all(jnp.isfinite(got)))
        assert bool(jnp.allclose(got, want, atol=2e-3, rtol=2e-3)), \
            float(jnp.max(jnp.abs(got - want)))

    print("KERNEL_OK")
</pallas_src>

<mosaic_0001>
module attributes {stable_mosaic.version = 11 : i64} {
  func.func @pomdp_policy_kernel(%arg0: memref<64x4xf32, #tpu.memory_space<vmem>>, %arg1: memref<64x1xf32, #tpu.memory_space<vmem>>, %arg2: memref<64x16xf32, #tpu.memory_space<vmem>>, %arg3: memref<64x4xf32, #tpu.memory_space<vmem>>, %arg4: memref<16x128xf32, #tpu.memory_space<vmem>>, %arg5: memref<1x128xf32, #tpu.memory_space<vmem>>, %arg6: memref<128x32xf32, #tpu.memory_space<vmem>>, %arg7: memref<1x32xf32, #tpu.memory_space<vmem>>, %arg8: memref<128x32xf32, #tpu.memory_space<vmem>>, %arg9: memref<1x32xf32, #tpu.memory_space<vmem>>, %arg10: memref<4x16xf32, #tpu.memory_space<vmem>>, %arg11: memref<1x16xf32, #tpu.memory_space<vmem>>, %arg12: memref<1x16xf32, #tpu.memory_space<vmem>>, %arg13: memref<1x16xf32, #tpu.memory_space<vmem>>, %arg14: memref<16x384xf32, #tpu.memory_space<vmem>>, %arg15: memref<16x384xf32, #tpu.memory_space<vmem>>, %arg16: memref<32x384xf32, #tpu.memory_space<vmem>>, %arg17: memref<1x384xf32, #tpu.memory_space<vmem>>, %arg18: memref<128x128xf32, #tpu.memory_space<vmem>>, %arg19: memref<128x128xf32, #tpu.memory_space<vmem>>, %arg20: memref<128x128xf32, #tpu.memory_space<vmem>>, %arg21: memref<1x128xf32, #tpu.memory_space<vmem>>, %arg22: memref<1x128xf32, #tpu.memory_space<vmem>>, %arg23: memref<1x128xf32, #tpu.memory_space<vmem>>, %arg24: memref<128x64xf32, #tpu.memory_space<vmem>>, %arg25: memref<32x64xf32, #tpu.memory_space<vmem>>, %arg26: memref<1x64xf32, #tpu.memory_space<vmem>>, %arg27: memref<64x64xf32, #tpu.memory_space<vmem>>, %arg28: memref<1x64xf32, #tpu.memory_space<vmem>>, %arg29: memref<64x4xf32, #tpu.memory_space<vmem>>, %arg30: memref<1x4xf32, #tpu.memory_space<vmem>>, %arg31: memref<64x4xf32, #tpu.memory_space<vmem>>, %arg32: memref<1x4xf32, #tpu.memory_space<vmem>>, %arg33: memref<64x128xf32, #tpu.memory_space<vmem>>, %arg34: memref<64x128xf32, #tpu.memory_space<vmem>>) attributes {dimension_semantics = [], scalar_prefetch = 0 : i64, scratch_operands = 1 : i64, tpu.core_type = #tpu.core_type<tc>} {
    %c0 = arith.constant 0 : index
    %c0_0 = arith.constant 0 : index
    %0 = vector.load %arg0[%c0, %c0_0] : memref<64x4xf32, #tpu.memory_space<vmem>>, vector<64x4xf32>
    %c0_1 = arith.constant 0 : index
    %c0_2 = arith.constant 0 : index
    %1 = vector.load %arg1[%c0_1, %c0_2] : memref<64x1xf32, #tpu.memory_space<vmem>>, vector<64x1xf32>
    %c0_3 = arith.constant 0 : index
    %c0_4 = arith.constant 0 : index
    %2 = vector.load %arg2[%c0_3, %c0_4] : memref<64x16xf32, #tpu.memory_space<vmem>>, vector<64x16xf32>
    %c0_5 = arith.constant 0 : index
    %c0_6 = arith.constant 0 : index
    %3 = vector.load %arg3[%c0_5, %c0_6] : memref<64x4xf32, #tpu.memory_space<vmem>>, vector<64x4xf32>
    %c0_7 = arith.constant 0 : index
    %c0_8 = arith.constant 0 : index
    %4 = vector.load %arg4[%c0_7, %c0_8] : memref<16x128xf32, #tpu.memory_space<vmem>>, vector<16x128xf32>
    %cst = arith.constant dense<0.000000e+00> : vector<64x128xf32>
    %5 = tpu.matmul %2, %4, %cst {dimension_numbers = #tpu.dot_dimension_numbers<[1], [0], [0], [1], [0, 0, 1, 1], [], []>} : vector<64x16xf32>, vector<16x128xf32>, vector<64x128xf32> -> vector<64x128xf32>
    %c0_9 = arith.constant 0 : index
    %c0_10 = arith.constant 0 : index
    %6 = vector.load %arg5[%c0_9, %c0_10] : memref<1x128xf32, #tpu.memory_space<vmem>>, vector<1x128xf32>
    %7 = vector.broadcast %6 : vector<1x128xf32> to vector<64x128xf32>
    %8 = arith.addf %5, %7 : vector<64x128xf32>
    %cst_11 = arith.constant 0.000000e+00 : f32
    %9 = vector.broadcast %cst_11 : f32 to vector<64x128xf32>
    %10 = arith.maximumf %8, %9 : vector<64x128xf32>
    %c0_12 = arith.constant 0 : index
    %c0_13 = arith.constant 0 : index
    %11 = vector.load %arg6[%c0_12, %c0_13] : memref<128x32xf32, #tpu.memory_space<vmem>>, vector<128x32xf32>
    %cst_14 = arith.constant dense<0.000000e+00> : vector<64x32xf32>
    %12 = tpu.matmul %10, %11, %cst_14 {dimension_numbers = #tpu.dot_dimension_numbers<[1], [0], [0], [1], [0, 0, 1, 1], [], []>} : vector<64x128xf32>, vector<128x32xf32>, vector<64x32xf32> -> vector<64x32xf32>
    %c0_15 = arith.constant 0 : index
    %c0_16 = arith.constant 0 : index
    %13 = vector.load %arg7[%c0_15, %c0_16] : memref<1x32xf32, #tpu.memory_space<vmem>>, vector<1x32xf32>
    %14 = vector.broadcast %13 : vector<1x32xf32> to vector<64x32xf32>
    %15 = arith.addf %12, %14 : vector<64x32xf32>
    %cst_17 = arith.constant 0.000000e+00 : f32
    %16 = vector.broadcast %cst_17 : f32 to vector<64x32xf32>
    %17 = arith.maximumf %15, %16 : vector<64x32xf32>
    %c0_18 = arith.constant 0 : index
    %c0_19 = arith.constant 0 : index
    %18 = vector.load %arg8[%c0_18, %c0_19] : memref<128x32xf32, #tpu.memory_space<vmem>>, vector<128x32xf32>
    %cst_20 = arith.constant dense<0.000000e+00> : vector<64x32xf32>
    %19 = tpu.matmul %10, %18, %cst_20 {dimension_numbers = #tpu.dot_dimension_numbers<[1], [0], [0], [1], [0, 0, 1, 1], [], []>} : vector<64x128xf32>, vector<128x32xf32>, vector<64x32xf32> -> vector<64x32xf32>
    %c0_21 = arith.constant 0 : index
    %c0_22 = arith.constant 0 : index
    %20 = vector.load %arg9[%c0_21, %c0_22] : memref<1x32xf32, #tpu.memory_space<vmem>>, vector<1x32xf32>
    %21 = vector.broadcast %20 : vector<1x32xf32> to vector<64x32xf32>
    %22 = arith.addf %19, %21 : vector<64x32xf32>
    %cst_23 = arith.constant 0.000000e+00 : f32
    %23 = vector.broadcast %cst_23 : f32 to vector<64x32xf32>
    %24 = arith.maximumf %22, %23 : vector<64x32xf32>
    %c0_24 = arith.constant 0 : index
    %c0_25 = arith.constant 0 : index
    %25 = vector.load %arg10[%c0_24, %c0_25] : memref<4x16xf32, #tpu.memory_space<vmem>>, vector<4x16xf32>
    %cst_26 = arith.constant dense<0.000000e+00> : vector<64x16xf32>
    %26 = tpu.matmul %0, %25, %cst_26 {dimension_numbers = #tpu.dot_dimension_numbers<[1], [0], [0], [1], [0, 0, 1, 1], [], []>} : vector<64x4xf32>, vector<4x16xf32>, vector<64x16xf32> -> vector<64x16xf32>
    %c0_27 = arith.constant 0 : index
    %c0_28 = arith.constant 0 : index
    %27 = vector.load %arg11[%c0_27, %c0_28] : memref<1x16xf32, #tpu.memory_space<vmem>>, vector<1x16xf32>
    %28 = vector.broadcast %27 : vector<1x16xf32> to vector<64x16xf32>
    %29 = arith.addf %26, %28 : vector<64x16xf32>
    %cst_29 = arith.constant 0.000000e+00 : f32
    %30 = vector.broadcast %cst_29 : f32 to vector<64x16xf32>
    %31 = arith.maximumf %29, %30 : vector<64x16xf32>
    %c0_30 = arith.constant 0 : index
    %c0_31 = arith.constant 0 : index
    %32 = vector.load %arg12[%c0_30, %c0_31] : memref<1x16xf32, #tpu.memory_space<vmem>>, vector<1x16xf32>
    %33 = vector.broadcast %1 : vector<64x1xf32> to vector<64x16xf32>
    %34 = vector.broadcast %32 : vector<1x16xf32> to vector<64x16xf32>
    %35 = arith.mulf %33, %34 : vector<64x16xf32>
    %c0_32 = arith.constant 0 : index
    %c0_33 = arith.constant 0 : index
    %36 = vector.load %arg13[%c0_32, %c0_33] : memref<1x16xf32, #tpu.memory_space<vmem>>, vector<1x16xf32>
    %37 = vector.broadcast %36 : vector<1x16xf32> to vector<64x16xf32>
    %38 = arith.addf %35, %37 : vector<64x16xf32>
    %cst_34 = arith.constant 0.000000e+00 : f32
    %39 = vector.broadcast %cst_34 : f32 to vector<64x16xf32>
    %40 = arith.maximumf %38, %39 : vector<64x16xf32>
    %c0_35 = arith.constant 0 : index
    %c0_36 = arith.constant 0 : index
    %41 = vector.load %arg14[%c0_35, %c0_36] : memref<16x384xf32, #tpu.memory_space<vmem>>, vector<16x384xf32>
    %cst_37 = arith.constant dense<0.000000e+00> : vector<64x384xf32>
    %42 = tpu.matmul %31, %41, %cst_37 {dimension_numbers = #tpu.dot_dimension_numbers<[1], [0], [0], [1], [0, 0, 1, 1], [], []>} : vector<64x16xf32>, vector<16x384xf32>, vector<64x384xf32> -> vector<64x384xf32>
    %c0_38 = arith.constant 0 : index
    %c0_39 = arith.constant 0 : index
    %43 = vector.load %arg15[%c0_38, %c0_39] : memref<16x384xf32, #tpu.memory_space<vmem>>, vector<16x384xf32>
    %cst_40 = arith.constant dense<0.000000e+00> : vector<64x384xf32>
    %44 = tpu.matmul %40, %43, %cst_40 {dimension_numbers = #tpu.dot_dimension_numbers<[1], [0], [0], [1], [0, 0, 1, 1], [], []>} : vector<64x16xf32>, vector<16x384xf32>, vector<64x384xf32> -> vector<64x384xf32>
    %45 = arith.addf %42, %44 : vector<64x384xf32>
    %c0_41 = arith.constant 0 : index
    %c0_42 = arith.constant 0 : index
    %46 = vector.load %arg16[%c0_41, %c0_42] : memref<32x384xf32, #tpu.memory_space<vmem>>, vector<32x384xf32>
    %cst_43 = arith.constant dense<0.000000e+00> : vector<64x384xf32>
    %47 = tpu.matmul %17, %46, %cst_43 {dimension_numbers = #tpu.dot_dimension_numbers<[1], [0], [0], [1], [0, 0, 1, 1], [], []>} : vector<64x32xf32>, vector<32x384xf32>, vector<64x384xf32> -> vector<64x384xf32>
    %48 = arith.addf %45, %47 : vector<64x384xf32>
    %c0_44 = arith.constant 0 : index
    %c0_45 = arith.constant 0 : index
    %49 = vector.load %arg17[%c0_44, %c0_45] : memref<1x384xf32, #tpu.memory_space<vmem>>, vector<1x384xf32>
    %50 = vector.broadcast %49 : vector<1x384xf32> to vector<64x384xf32>
    %51 = arith.addf %48, %50 : vector<64x384xf32>
    %52 = vector.extract_strided_slice %51 {offsets = [0, 0], sizes = [64, 128], strides = [1, 1]} : vector<64x384xf32> to vector<64x128xf32>
    %53 = vector.extract_strided_slice %51 {offsets = [0, 128], sizes = [64, 128], strides = [1, 1]} : vector<64x384xf32> to vector<64x128xf32>
    %54 = vector.extract_strided_slice %51 {offsets = [0, 256], sizes = [64, 128], strides = [1, 1]} : vector<64x384xf32> to vector<64x128xf32>
    %cst_46 = arith.constant 0.000000e+00 : f32
    %55 = vector.broadcast %cst_46 : f32 to vector<8x128xf32>
    %c0_47 = arith.constant 0 : index
    %c0_48 = arith.constant 0 : index
    %56 = vector.load %arg18[%c0_47, %c0_48] : memref<128x128xf32, #tpu.memory_space<vmem>>, vector<128x128xf32>
    %cst_49 = arith.constant dense<0.000000e+00> : vector<8x128xf32>
    %57 = tpu.matmul %55, %56, %cst_49 {dimension_numbers = #tpu.dot_dimension_numbers<[1], [0], [0], [1], [0, 0, 1, 1], [], []>} : vector<8x128xf32>, vector<128x128xf32>, vector<8x128xf32> -> vector<8x128xf32>
    %c0_50 = arith.constant 0 : index
    %c0_51 = arith.constant 0 : index
    %58 = vector.load %arg21[%c0_50, %c0_51] : memref<1x128xf32, #tpu.memory_space<vmem>>, vector<1x128xf32>
    %59 = vector.broadcast %58 : vector<1x128xf32> to vector<8x128xf32>
    %60 = arith.addf %57, %59 : vector<8x128xf32>
    %c0_52 = arith.constant 0 : index
    %c0_53 = arith.constant 0 : index
    %61 = vector.load %arg19[%c0_52, %c0_53] : memref<128x128xf32, #tpu.memory_space<vmem>>, vector<128x128xf32>
    %cst_54 = arith.constant dense<0.000000e+00> : vector<8x128xf32>
    %62 = tpu.matmul %55, %61, %cst_54 {dimension_numbers = #tpu.dot_dimension_numbers<[1], [0], [0], [1], [0, 0, 1, 1], [], []>} : vector<8x128xf32>, vector<128x128xf32>, vector<8x128xf32> -> vector<8x128xf32>
    %c0_55 = arith.constant 0 : index
    %c0_56 = arith.constant 0 : index
    %63 = vector.load %arg22[%c0_55, %c0_56] : memref<1x128xf32, #tpu.memory_space<vmem>>, vector<1x128xf32>
    %64 = vector.broadcast %63 : vector<1x128xf32> to vector<8x128xf32>
    %65 = arith.addf %62, %64 : vector<8x128xf32>
    %c0_57 = arith.constant 0 : index
    %c0_58 = arith.constant 0 : index
    %66 = vector.load %arg20[%c0_57, %c0_58] : memref<128x128xf32, #tpu.memory_space<vmem>>, vector<128x128xf32>
    %cst_59 = arith.constant dense<0.000000e+00> : vector<8x128xf32>
    %67 = tpu.matmul %55, %66, %cst_59 {dimension_numbers = #tpu.dot_dimension_numbers<[1], [0], [0], [1], [0, 0, 1, 1], [], []>} : vector<8x128xf32>, vector<128x128xf32>, vector<8x128xf32> -> vector<8x128xf32>
    %c0_60 = arith.constant 0 : index
    %c0_61 = arith.constant 0 : index
    %68 = vector.load %arg23[%c0_60, %c0_61] : memref<1x128xf32, #tpu.memory_space<vmem>>, vector<1x128xf32>
    %69 = vector.broadcast %68 : vector<1x128xf32> to vector<8x128xf32>
    %70 = arith.addf %67, %69 : vector<8x128xf32>
    %71 = vector.extract_strided_slice %52 {offsets = [0, 0], sizes = [8, 128], strides = [1, 1]} : vector<64x128xf32> to vector<8x128xf32>
    %72 = arith.addf %71, %60 : vector<8x128xf32>
    %73 = arith.negf %72 : vector<8x128xf32>
    %74 = math.exp %73 : vector<8x128xf32>
    %cst_62 = arith.constant 1.000000e+00 : f32
    %75 = vector.broadcast %cst_62 : f32 to vector<8x128xf32>
    %76 = arith.addf %75, %74 : vector<8x128xf32>
    %77 = arith.divf %75, %76 : vector<8x128xf32>
    %78 = vector.extract_strided_slice %53 {offsets = [0, 0], sizes = [8, 128], strides = [1, 1]} : vector<64x128xf32> to vector<8x128xf32>
    %79 = arith.addf %78, %65 : vector<8x128xf32>
    %80 = arith.negf %79 : vector<8x128xf32>
    %81 = math.exp %80 : vector<8x128xf32>
    %cst_63 = arith.constant 1.000000e+00 : f32
    %82 = vector.broadcast %cst_63 : f32 to vector<8x128xf32>
    %83 = arith.addf %82, %81 : vector<8x128xf32>
    %84 = arith.divf %82, %83 : vector<8x128xf32>
    %85 = vector.extract_strided_slice %54 {offsets = [0, 0], sizes = [8, 128], strides = [1, 1]} : vector<64x128xf32> to vector<8x128xf32>
    %86 = arith.mulf %77, %70 : vector<8x128xf32>
    %87 = arith.addf %85, %86 : vector<8x128xf32>
    %88 = math.tanh %87 : vector<8x128xf32>
    %cst_64 = arith.constant 1.000000e+00 : f32
    %89 = vector.broadcast %cst_64 : f32 to vector<8x128xf32>
    %90 = arith.subf %89, %84 : vector<8x128xf32>
    %91 = arith.mulf %90, %88 : vector<8x128xf32>
    %92 = arith.mulf %84, %55 : vector<8x128xf32>
    %93 = arith.addf %91, %92 : vector<8x128xf32>
    %c0_65 = arith.constant 0 : index
    %c0_66 = arith.constant 0 : index
    %94 = vector.load %arg34[%c0_65, %c0_66] : memref<64x128xf32, #tpu.memory_space<vmem>>, vector<8x128xf32>
    tpu.vector_store %arg34[%c0_65, %c0_66], %93 {strides = array<i32>} : memref<64x128xf32, #tpu.memory_space<vmem>>, vector<8x128xf32>,
    %c0_67 = arith.constant 0 : index
    %c0_68 = arith.constant 0 : index
    %95 = vector.load %arg18[%c0_67, %c0_68] : memref<128x128xf32, #tpu.memory_space<vmem>>, vector<128x128xf32>
    %cst_69 = arith.constant dense<0.000000e+00> : vector<8x128xf32>
    %96 = tpu.matmul %93, %95, %cst_69 {dimension_numbers = #tpu.dot_dimension_numbers<[1], [0], [0], [1], [0, 0, 1, 1], [], []>} : vector<8x128xf32>, vector<128x128xf32>, vector<8x128xf32> -> vector<8x128xf32>
    %c0_70 = arith.constant 0 : index
    %c0_71 = arith.constant 0 : index
    %97 = vector.load %arg21[%c0_70, %c0_71] : memref<1x128xf32, #tpu.memory_space<vmem>>, vector<1x128xf32>
    %98 = vector.broadcast %97 : vector<1x128xf32> to vector<8x128xf32>
    %99 = arith.addf %96, %98 : vector<8x128xf32>
    %c0_72 = arith.constant 0 : index
    %c0_73 = arith.constant 0 : index
    %100 = vector.load %arg19[%c0_72, %c0_73] : memref<128x128xf32, #tpu.memory_space<vmem>>, vector<128x128xf32>
    %cst_74 = arith.constant dense<0.000000e+00> : vector<8x128xf32>
    %101 = tpu.matmul %93, %100, %cst_74 {dimension_numbers = #tpu.dot_dimension_numbers<[1], [0], [0], [1], [0, 0, 1, 1], [], []>} : vector<8x128xf32>, vector<128x128xf32>, vector<8x128xf32> -> vector<8x128xf32>
    %c0_75 = arith.constant 0 : index
    %c0_76 = arith.constant 0 : index
    %102 = vector.load %arg22[%c0_75, %c0_76] : memref<1x128xf32, #tpu.memory_space<vmem>>, vector<1x128xf32>
    %103 = vector.broadcast %102 : vector<1x128xf32> to vector<8x128xf32>
    %104 = arith.addf %101, %103 : vector<8x128xf32>
    %c0_77 = arith.constant 0 : index
    %c0_78 = arith.constant 0 : index
    %105 = vector.load %arg20[%c0_77, %c0_78] : memref<128x128xf32, #tpu.memory_space<vmem>>, vector<128x128xf32>
    %cst_79 = arith.constant dense<0.000000e+00> : vector<8x128xf32>
    %106 = tpu.matmul %93, %105, %cst_79 {dimension_numbers = #tpu.dot_dimension_numbers<[1], [0], [0], [1], [0, 0, 1, 1], [], []>} : vector<8x128xf32>, vector<128x128xf32>, vector<8x128xf32> -> vector<8x128xf32>
    %c0_80 = arith.constant 0 : index
    %c0_81 = arith.constant 0 : index
    %107 = vector.load %arg23[%c0_80, %c0_81] : memref<1x128xf32, #tpu.memory_space<vmem>>, vector<1x128xf32>
    %108 = vector.broadcast %107 : vector<1x128xf32> to vector<8x128xf32>
    %109 = arith.addf %106, %108 : vector<8x128xf32>
    %110 = vector.extract_strided_slice %52 {offsets = [8, 0], sizes = [8, 128], strides = [1, 1]} : vector<64x128xf32> to vector<8x128xf32>
    %111 = arith.addf %110, %99 : vector<8x128xf32>
    %112 = arith.negf %111 : vector<8x128xf32>
    %113 = math.exp %112 : vector<8x128xf32>
    %cst_82 = arith.constant 1.000000e+00 : f32
    %114 = vector.broadcast %cst_82 : f32 to vector<8x128xf32>
    %115 = arith.addf %114, %113 : vector<8x128xf32>
    %116 = arith.divf %114, %115 : vector<8x128xf32>
    %117 = vector.extract_strided_slice %53 {offsets = [8, 0], sizes = [8, 128], strides = [1, 1]} : vector<64x128xf32> to vector<8x128xf32>
    %118 = arith.addf %117, %104 : vector<8x128xf32>
    %119 = arith.negf %118 : vector<8x128xf32>
    %120 = math.exp %119 : vector<8x128xf32>
    %cst_83 = arith.constant 1.000000e+00 : f32
    %121 = vector.broadcast %cst_83 : f32 to vector<8x128xf32>
    %122 = arith.addf %121, %120 : vector<8x128xf32>
    %123 = arith.divf %121, %122 : vector<8x128xf32>
    %124 = vector.extract_strided_slice %54 {offsets = [8, 0], sizes = [8, 128], strides = [1, 1]} : vector<64x128xf32> to vector<8x128xf32>
    %125 = arith.mulf %116, %109 : vector<8x128xf32>
    %126 = arith.addf %124, %125 : vector<8x128xf32>
    %127 = math.tanh %126 : vector<8x128xf32>
    %cst_84 = arith.constant 1.000000e+00 : f32
    %128 = vector.broadcast %cst_84 : f32 to vector<8x128xf32>
    %129 = arith.subf %128, %123 : vector<8x128xf32>
    %130 = arith.mulf %129, %127 : vector<8x128xf32>
    %131 = arith.mulf %123, %93 : vector<8x128xf32>
    %132 = arith.addf %130, %131 : vector<8x128xf32>
    %c8 = arith.constant 8 : index
    %c0_85 = arith.constant 0 : index
    %133 = vector.load %arg34[%c8, %c0_85] : memref<64x128xf32, #tpu.memory_space<vmem>>, vector<8x128xf32>
    tpu.vector_store %arg34[%c8, %c0_85], %132 {strides = array<i32>} : memref<64x128xf32, #tpu.memory_space<vmem>>, vector<8x128xf32>,
    %c0_86 = arith.constant 0 : index
    %c0_87 = arith.constant 0 : index
    %134 = vector.load %arg18[%c0_86, %c0_87] : memref<128x128xf32, #tpu.memory_space<vmem>>, vector<128x128xf32>
    %cst_88 = arith.constant dense<0.000000e+00> : vector<8x128xf32>
    %135 = tpu.matmul %132, %134, %cst_88 {dimension_numbers = #tpu.dot_dimension_numbers<[1], [0], [0], [1], [0, 0, 1, 1], [], []>} : vector<8x128xf32>, vector<128x128xf32>, vector<8x128xf32> -> vector<8x128xf32>
    %c0_89 = arith.constant 0 : index
    %c0_90 = arith.constant 0 : index
    %136 = vector.load %arg21[%c0_89, %c0_90] : memref<1x128xf32, #tpu.memory_space<vmem>>, vector<1x128xf32>
    %137 = vector.broadcast %136 : vector<1x128xf32> to vector<8x128xf32>
    %138 = arith.addf %135, %137 : vector<8x128xf32>
    %c0_91 = arith.constant 0 : index
    %c0_92 = arith.constant 0 : index
    %139 = vector.load %arg19[%c0_91, %c0_92] : memref<128x128xf32, #tpu.memory_space<vmem>>, vector<128x128xf32>
    %cst_93 = arith.constant dense<0.000000e+00> : vector<8x128xf32>
    %140 = tpu.matmul %132, %139, %cst_93 {dimension_numbers = #tpu.dot_dimension_numbers<[1], [0], [0], [1], [0, 0, 1, 1], [], []>} : vector<8x128xf32>, vector<128x128xf32>, vector<8x128xf32> -> vector<8x128xf32>
    %c0_94 = arith.constant 0 : index
    %c0_95 = arith.constant 0 : index
    %141 = vector.load %arg22[%c0_94, %c0_95] : memref<1x128xf32, #tpu.memory_space<vmem>>, vector<1x128xf32>
    %142 = vector.broadcast %141 : vector<1x128xf32> to vector<8x128xf32>
    %143 = arith.addf %140, %142 : vector<8x128xf32>
    %c0_96 = arith.constant 0 : index
    %c0_97 = arith.constant 0 : index
    %144 = vector.load %arg20[%c0_96, %c0_97] : memref<128x128xf32, #tpu.memory_space<vmem>>, vector<128x128xf32>
    %cst_98 = arith.constant dense<0.000000e+00> : vector<8x128xf32>
    %145 = tpu.matmul %132, %144, %cst_98 {dimension_numbers = #tpu.dot_dimension_numbers<[1], [0], [0], [1], [0, 0, 1, 1], [], []>} : vector<8x128xf32>, vector<128x128xf32>, vector<8x128xf32> -> vector<8x128xf32>
    %c0_99 = arith.constant 0 : index
    %c0_100 = arith.constant 0 : index
    %146 = vector.load %arg23[%c0_99, %c0_100] : memref<1x128xf32, #tpu.memory_space<vmem>>, vector<1x128xf32>
    %147 = vector.broadcast %146 : vector<1x128xf32> to vector<8x128xf32>
    %148 = arith.addf %145, %147 : vector<8x128xf32>
    %149 = vector.extract_strided_slice %52 {offsets = [16, 0], sizes = [8, 128], strides = [1, 1]} : vector<64x128xf32> to vector<8x128xf32>
    %150 = arith.addf %149, %138 : vector<8x128xf32>
    %151 = arith.negf %150 : vector<8x128xf32>
    %152 = math.exp %151 : vector<8x128xf32>
    %cst_101 = arith.constant 1.000000e+00 : f32
    %153 = vector.broadcast %cst_101 : f32 to vector<8x128xf32>
    %154 = arith.addf %153, %152 : vector<8x128xf32>
    %155 = arith.divf %153, %154 : vector<8x128xf32>
    %156 = vector.extract_strided_slice %53 {offsets = [16, 0], sizes = [8, 128], strides = [1, 1]} : vector<64x128xf32> to vector<8x128xf32>
    %157 = arith.addf %156, %143 : vector<8x128xf32>
    %158 = arith.negf %157 : vector<8x128xf32>
    %159 = math.exp %158 : vector<8x128xf32>
    %cst_102 = arith.constant 1.000000e+00 : f32
    %160 = vector.broadcast %cst_102 : f32 to vector<8x128xf32>
    %161 = arith.addf %160, %159 : vector<8x128xf32>
    %162 = arith.divf %160, %161 : vector<8x128xf32>
    %163 = vector.extract_strided_slice %54 {offsets = [16, 0], sizes = [8, 128], strides = [1, 1]} : vector<64x128xf32> to vector<8x128xf32>
    %164 = arith.mulf %155, %148 : vector<8x128xf32>
    %165 = arith.addf %163, %164 : vector<8x128xf32>
    %166 = math.tanh %165 : vector<8x128xf32>
    %cst_103 = arith.constant 1.000000e+00 : f32
    %167 = vector.broadcast %cst_103 : f32 to vector<8x128xf32>
    %168 = arith.subf %167, %162 : vector<8x128xf32>
    %169 = arith.mulf %168, %166 : vector<8x128xf32>
    %170 = arith.mulf %162, %132 : vector<8x128xf32>
    %171 = arith.addf %169, %170 : vector<8x128xf32>
    %c16 = arith.constant 16 : index
    %c0_104 = arith.constant 0 : index
    %172 = vector.load %arg34[%c16, %c0_104] : memref<64x128xf32, #tpu.memory_space<vmem>>, vector<8x128xf32>
    tpu.vector_store %arg34[%c16, %c0_104], %171 {strides = array<i32>} : memref<64x128xf32, #tpu.memory_space<vmem>>, vector<8x128xf32>,
    %c0_105 = arith.constant 0 : index
    %c0_106 = arith.constant 0 : index
    %173 = vector.load %arg18[%c0_105, %c0_106] : memref<128x128xf32, #tpu.memory_space<vmem>>, vector<128x128xf32>
    %cst_107 = arith.constant dense<0.000000e+00> : vector<8x128xf32>
    %174 = tpu.matmul %171, %173, %cst_107 {dimension_numbers = #tpu.dot_dimension_numbers<[1], [0], [0], [1], [0, 0, 1, 1], [], []>} : vector<8x128xf32>, vector<128x128xf32>, vector<8x128xf32> -> vector<8x128xf32>
    %c0_108 = arith.constant 0 : index
    %c0_109 = arith.constant 0 : index
    %175 = vector.load %arg21[%c0_108, %c0_109] : memref<1x128xf32, #tpu.memory_space<vmem>>, vector<1x128xf32>
    %176 = vector.broadcast %175 : vector<1x128xf32> to vector<8x128xf32>
    %177 = arith.addf %174, %176 : vector<8x128xf32>
    %c0_110 = arith.constant 0 : index
    %c0_111 = arith.constant 0 : index
    %178 = vector.load %arg19[%c0_110, %c0_111] : memref<128x128xf32, #tpu.memory_space<vmem>>, vector<128x128xf32>
    %cst_112 = arith.constant dense<0.000000e+00> : vector<8x128xf32>
    %179 = tpu.matmul %171, %178, %cst_112 {dimension_numbers = #tpu.dot_dimension_numbers<[1], [0], [0], [1], [0, 0, 1, 1], [], []>} : vector<8x128xf32>, vector<128x128xf32>, vector<8x128xf32> -> vector<8x128xf32>
    %c0_113 = arith.constant 0 : index
    %c0_114 = arith.constant 0 : index
    %180 = vector.load %arg22[%c0_113, %c0_114] : memref<1x128xf32, #tpu.memory_space<vmem>>, vector<1x128xf32>
    %181 = vector.broadcast %180 : vector<1x128xf32> to vector<8x128xf32>
    %182 = arith.addf %179, %181 : vector<8x128xf32>
    %c0_115 = arith.constant 0 : index
    %c0_116 = arith.constant 0 : index
    %183 = vector.load %arg20[%c0_115, %c0_116] : memref<128x128xf32, #tpu.memory_space<vmem>>, vector<128x128xf32>
    %cst_117 = arith.constant dense<0.000000e+00> : vector<8x128xf32>
    %184 = tpu.matmul %171, %183, %cst_117 {dimension_numbers = #tpu.dot_dimension_numbers<[1], [0], [0], [1], [0, 0, 1, 1], [], []>} : vector<8x128xf32>, vector<128x128xf32>, vector<8x128xf32> -> vector<8x128xf32>
    %c0_118 = arith.constant 0 : index
    %c0_119 = arith.constant 0 : index
    %185 = vector.load %arg23[%c0_118, %c0_119] : memref<1x128xf32, #tpu.memory_space<vmem>>, vector<1x128xf32>
    %186 = vector.broadcast %185 : vector<1x128xf32> to vector<8x128xf32>
    %187 = arith.addf %184, %186 : vector<8x128xf32>
    %188 = vector.extract_strided_slice %52 {offsets = [24, 0], sizes = [8, 128], strides = [1, 1]} : vector<64x128xf32> to vector<8x128xf32>
    %189 = arith.addf %188, %177 : vector<8x128xf32>
    %190 = arith.negf %189 : vector<8x128xf32>
    %191 = math.exp %190 : vector<8x128xf32>
    %cst_120 = arith.constant 1.000000e+00 : f32
    %192 = vector.broadcast %cst_120 : f32 to vector<8x128xf32>
    %193 = arith.addf %192, %191 : vector<8x128xf32>
    %194 = arith.divf %192, %193 : vector<8x128xf32>
    %195 = vector.extract_strided_slice %53 {offsets = [24, 0], sizes = [8, 128], strides = [1, 1]} : vector<64x128xf32> to vector<8x128xf32>
    %196 = arith.addf %195, %182 : vector<8x128xf32>
    %197 = arith.negf %196 : vector<8x128xf32>
    %198 = math.exp %197 : vector<8x128xf32>
    %cst_121 = arith.constant 1.000000e+00 : f32
    %199 = vector.broadcast %cst_121 : f32 to vector<8x128xf32>
    %200 = arith.addf %199, %198 : vector<8x128xf32>
    %201 = arith.divf %199, %200 : vector<8x128xf32>
    %202 = vector.extract_strided_slice %54 {offsets = [24, 0], sizes = [8, 128], strides = [1, 1]} : vector<64x128xf32> to vector<8x128xf32>
    %203 = arith.mulf %194, %187 : vector<8x128xf32>
    %204 = arith.addf %202, %203 : vector<8x128xf32>
    %205 = math.tanh %204 : vector<8x128xf32>
    %cst_122 = arith.constant 1.000000e+00 : f32
    %206 = vector.broadcast %cst_122 : f32 to vector<8x128xf32>
    %207 = arith.subf %206, %201 : vector<8x128xf32>
    %208 = arith.mulf %207, %205 : vector<8x128xf32>
    %209 = arith.mulf %201, %171 : vector<8x128xf32>
    %210 = arith.addf %208, %209 : vector<8x128xf32>
    %c24 = arith.constant 24 : index
    %c0_123 = arith.constant 0 : index
    %211 = vector.load %arg34[%c24, %c0_123] : memref<64x128xf32, #tpu.memory_space<vmem>>, vector<8x128xf32>
    tpu.vector_store %arg34[%c24, %c0_123], %210 {strides = array<i32>} : memref<64x128xf32, #tpu.memory_space<vmem>>, vector<8x128xf32>,
    %c0_124 = arith.constant 0 : index
    %c0_125 = arith.constant 0 : index
    %212 = vector.load %arg18[%c0_124, %c0_125] : memref<128x128xf32, #tpu.memory_space<vmem>>, vector<128x128xf32>
    %cst_126 = arith.constant dense<0.000000e+00> : vector<8x128xf32>
    %213 = tpu.matmul %210, %212, %cst_126 {dimension_numbers = #tpu.dot_dimension_numbers<[1], [0], [0], [1], [0, 0, 1, 1], [], []>} : vector<8x128xf32>, vector<128x128xf32>, vector<8x128xf32> -> vector<8x128xf32>
    %c0_127 = arith.constant 0 : index
    %c0_128 = arith.constant 0 : index
    %214 = vector.load %arg21[%c0_127, %c0_128] : memref<1x128xf32, #tpu.memory_space<vmem>>, vector<1x128xf32>
    %215 = vector.broadcast %214 : vector<1x128xf32> to vector<8x128xf32>
    %216 = arith.addf %213, %215 : vector<8x128xf32>
    %c0_129 = arith.constant 0 : index
    %c0_130 = arith.constant 0 : index
    %217 = vector.load %arg19[%c0_129, %c0_130] : memref<128x128xf32, #tpu.memory_space<vmem>>, vector<128x128xf32>
    %cst_131 = arith.constant dense<0.000000e+00> : vector<8x128xf32>
    %218 = tpu.matmul %210, %217, %cst_131 {dimension_numbers = #tpu.dot_dimension_numbers<[1], [0], [0], [1], [0, 0, 1, 1], [], []>} : vector<8x128xf32>, vector<128x128xf32>, vector<8x128xf32> -> vector<8x128xf32>
    %c0_132 = arith.constant 0 : index
    %c0_133 = arith.constant 0 : index
    %219 = vector.load %arg22[%c0_132, %c0_133] : memref<1x128xf32, #tpu.memory_space<vmem>>, vector<1x128xf32>
    %220 = vector.broadcast %219 : vector<1x128xf32> to vector<8x128xf32>
    %221 = arith.addf %218, %220 : vector<8x128xf32>
    %c0_134 = arith.constant 0 : index
    %c0_135 = arith.constant 0 : index
    %222 = vector.load %arg20[%c0_134, %c0_135] : memref<128x128xf32, #tpu.memory_space<vmem>>, vector<128x128xf32>
    %cst_136 = arith.constant dense<0.000000e+00> : vector<8x128xf32>
    %223 = tpu.matmul %210, %222, %cst_136 {dimension_numbers = #tpu.dot_dimension_numbers<[1], [0], [0], [1], [0, 0, 1, 1], [], []>} : vector<8x128xf32>, vector<128x128xf32>, vector<8x128xf32> -> vector<8x128xf32>
    %c0_137 = arith.constant 0 : index
    %c0_138 = arith.constant 0 : index
    %224 = vector.load %arg23[%c0_137, %c0_138] : memref<1x128xf32, #tpu.memory_space<vmem>>, vector<1x128xf32>
    %225 = vector.broadcast %224 : vector<1x128xf32> to vector<8x128xf32>
    %226 = arith.addf %223, %225 : vector<8x128xf32>
    %227 = vector.extract_strided_slice %52 {offsets = [32, 0], sizes = [8, 128], strides = [1, 1]} : vector<64x128xf32> to vector<8x128xf32>
    %228 = arith.addf %227, %216 : vector<8x128xf32>
    %229 = arith.negf %228 : vector<8x128xf32>
    %230 = math.exp %229 : vector<8x128xf32>
    %cst_139 = arith.constant 1.000000e+00 : f32
    %231 = vector.broadcast %cst_139 : f32 to vector<8x128xf32>
    %232 = arith.addf %231, %230 : vector<8x128xf32>
    %233 = arith.divf %231, %232 : vector<8x128xf32>
    %234 = vector.extract_strided_slice %53 {offsets = [32, 0], sizes = [8, 128], strides = [1, 1]} : vector<64x128xf32> to vector<8x128xf32>
    %235 = arith.addf %234, %221 : vector<8x128xf32>
    %236 = arith.negf %235 : vector<8x128xf32>
    %237 = math.exp %236 : vector<8x128xf32>
    %cst_140 = arith.constant 1.000000e+00 : f32
    %238 = vector.broadcast %cst_140 : f32 to vector<8x128xf32>
    %239 = arith.addf %238, %237 : vector<8x128xf32>
    %240 = arith.divf %238, %239 : vector<8x128xf32>
    %241 = vector.extract_strided_slice %54 {offsets = [32, 0], sizes = [8, 128], strides = [1, 1]} : vector<64x128xf32> to vector<8x128xf32>
    %242 = arith.mulf %233, %226 : vector<8x128xf32>
    %243 = arith.addf %241, %242 : vector<8x128xf32>
    %244 = math.tanh %243 : vector<8x128xf32>
    %cst_141 = arith.constant 1.000000e+00 : f32
    %245 = vector.broadcast %cst_141 : f32 to vector<8x128xf32>
    %246 = arith.subf %245, %240 : vector<8x128xf32>
    %247 = arith.mulf %246, %244 : vector<8x128xf32>
    %248 = arith.mulf %240, %210 : vector<8x128xf32>
    %249 = arith.addf %247, %248 : vector<8x128xf32>
    %c32 = arith.constant 32 : index
    %c0_142 = arith.constant 0 : index
    %250 = vector.load %arg34[%c32, %c0_142] : memref<64x128xf32, #tpu.memory_space<vmem>>, vector<8x128xf32>
    tpu.vector_store %arg34[%c32, %c0_142], %249 {strides = array<i32>} : memref<64x128xf32, #tpu.memory_space<vmem>>, vector<8x128xf32>,
    %c0_143 = arith.constant 0 : index
    %c0_144 = arith.constant 0 : index
    %251 = vector.load %arg18[%c0_143, %c0_144] : memref<128x128xf32, #tpu.memory_space<vmem>>, vector<128x128xf32>
    %cst_145 = arith.constant dense<0.000000e+00> : vector<8x128xf32>
    %252 = tpu.matmul %249, %251, %cst_145 {dimension_numbers = #tpu.dot_dimension_numbers<[1], [0], [0], [1], [0, 0, 1, 1], [], []>} : vector<8x128xf32>, vector<128x128xf32>, vector<8x128xf32> -> vector<8x128xf32>
    %c0_146 = arith.constant 0 : index
    %c0_147 = arith.constant 0 : index
    %253 = vector.load %arg21[%c0_146, %c0_147] : memref<1x128xf32, #tpu.memory_space<vmem>>, vector<1x128xf32>
    %254 = vector.broadcast %253 : vector<1x128xf32> to vector<8x128xf32>
    %255 = arith.addf %252, %254 : vector<8x128xf32>
    %c0_148 = arith.constant 0 : index
    %c0_149 = arith.constant 0 : index
    %256 = vector.load %arg19[%c0_148, %c0_149] : memref<128x128xf32, #tpu.memory_space<vmem>>, vector<128x128xf32>
    %cst_150 = arith.constant dense<0.000000e+00> : vector<8x128xf32>
    %257 = tpu.matmul %249, %256, %cst_150 {dimension_numbers = #tpu.dot_dimension_numbers<[1], [0], [0], [1], [0, 0, 1, 1], [], []>} : vector<8x128xf32>, vector<128x128xf32>, vector<8x128xf32> -> vector<8x128xf32>
    %c0_151 = arith.constant 0 : index
    %c0_152 = arith.constant 0 : index
    %258 = vector.load %arg22[%c0_151, %c0_152] : memref<1x128xf32, #tpu.memory_space<vmem>>, vector<1x128xf32>
    %259 = vector.broadcast %258 : vector<1x128xf32> to vector<8x128xf32>
    %260 = arith.addf %257, %259 : vector<8x128xf32>
    %c0_153 = arith.constant 0 : index
    %c0_154 = arith.constant 0 : index
    %261 = vector.load %arg20[%c0_153, %c0_154] : memref<128x128xf32, #tpu.memory_space<vmem>>, vector<128x128xf32>
    %cst_155 = arith.constant dense<0.000000e+00> : vector<8x128xf32>
    %262 = tpu.matmul %249, %261, %cst_155 {dimension_numbers = #tpu.dot_dimension_numbers<[1], [0], [0], [1], [0, 0, 1, 1], [], []>} : vector<8x128xf32>, vector<128x128xf32>, vector<8x128xf32> -> vector<8x128xf32>
    %c0_156 = arith.constant 0 : index
    %c0_157 = arith.constant 0 : index
    %263 = vector.load %arg23[%c0_156, %c0_157] : memref<1x128xf32, #tpu.memory_space<vmem>>, vector<1x128xf32>
    %264 = vector.broadcast %263 : vector<1x128xf32> to vector<8x128xf32>
    %265 = arith.addf %262, %264 : vector<8x128xf32>
    %266 = vector.extract_strided_slice %52 {offsets = [40, 0], sizes = [8, 128], strides = [1, 1]} : vector<64x128xf32> to vector<8x128xf32>
    %267 = arith.addf %266, %255 : vector<8x128xf32>
    %268 = arith.negf %267 : vector<8x128xf32>
    %269 = math.exp %268 : vector<8x128xf32>
    %cst_158 = arith.constant 1.000000e+00 : f32
    %270 = vector.broadcast %cst_158 : f32 to vector<8x128xf32>
    %271 = arith.addf %270, %269 : vector<8x128xf32>
    %272 = arith.divf %270, %271 : vector<8x128xf32>
    %273 = vector.extract_strided_slice %53 {offsets = [40, 0], sizes = [8, 128], strides = [1, 1]} : vector<64x128xf32> to vector<8x128xf32>
    %274 = arith.addf %273, %260 : vector<8x128xf32>
    %275 = arith.negf %274 : vector<8x128xf32>
    %276 = math.exp %275 : vector<8x128xf32>
    %cst_159 = arith.constant 1.000000e+00 : f32
    %277 = vector.broadcast %cst_159 : f32 to vector<8x128xf32>
    %278 = arith.addf %277, %276 : vector<8x128xf32>
    %279 = arith.divf %277, %278 : vector<8x128xf32>
    %280 = vector.extract_strided_slice %54 {offsets = [40, 0], sizes = [8, 128], strides = [1, 1]} : vector<64x128xf32> to vector<8x128xf32>
    %281 = arith.mulf %272, %265 : vector<8x128xf32>
    %282 = arith.addf %280, %281 : vector<8x128xf32>
    %283 = math.tanh %282 : vector<8x128xf32>
    %cst_160 = arith.constant 1.000000e+00 : f32
    %284 = vector.broadcast %cst_160 : f32 to vector<8x128xf32>
    %285 = arith.subf %284, %279 : vector<8x128xf32>
    %286 = arith.mulf %285, %283 : vector<8x128xf32>
    %287 = arith.mulf %279, %249 : vector<8x128xf32>
    %288 = arith.addf %286, %287 : vector<8x128xf32>
    %c40 = arith.constant 40 : index
    %c0_161 = arith.constant 0 : index
    %289 = vector.load %arg34[%c40, %c0_161] : memref<64x128xf32, #tpu.memory_space<vmem>>, vector<8x128xf32>
    tpu.vector_store %arg34[%c40, %c0_161], %288 {strides = array<i32>} : memref<64x128xf32, #tpu.memory_space<vmem>>, vector<8x128xf32>,
    %c0_162 = arith.constant 0 : index
    %c0_163 = arith.constant 0 : index
    %290 = vector.load %arg18[%c0_162, %c0_163] : memref<128x128xf32, #tpu.memory_space<vmem>>, vector<128x128xf32>
    %cst_164 = arith.constant dense<0.000000e+00> : vector<8x128xf32>
    %291 = tpu.matmul %288, %290, %cst_164 {dimension_numbers = #tpu.dot_dimension_numbers<[1], [0], [0], [1], [0, 0, 1, 1], [], []>} : vector<8x128xf32>, vector<128x128xf32>, vector<8x128xf32> -> vector<8x128xf32>
    %c0_165 = arith.constant 0 : index
    %c0_166 = arith.constant 0 : index
    %292 = vector.load %arg21[%c0_165, %c0_166] : memref<1x128xf32, #tpu.memory_space<vmem>>, vector<1x128xf32>
    %293 = vector.broadcast %292 : vector<1x128xf32> to vector<8x128xf32>
    %294 = arith.addf %291, %293 : vector<8x128xf32>
    %c0_167 = arith.constant 0 : index
    %c0_168 = arith.constant 0 : index
    %295 = vector.load %arg19[%c0_167, %c0_168] : memref<128x128xf32, #tpu.memory_space<vmem>>, vector<128x128xf32>
    %cst_169 = arith.constant dense<0.000000e+00> : vector<8x128xf32>
    %296 = tpu.matmul %288, %295, %cst_169 {dimension_numbers = #tpu.dot_dimension_numbers<[1], [0], [0], [1], [0, 0, 1, 1], [], []>} : vector<8x128xf32>, vector<128x128xf32>, vector<8x128xf32> -> vector<8x128xf32>
    %c0_170 = arith.constant 0 : index
    %c0_171 = arith.constant 0 : index
    %297 = vector.load %arg22[%c0_170, %c0_171] : memref<1x128xf32, #tpu.memory_space<vmem>>, vector<1x128xf32>
    %298 = vector.broadcast %297 : vector<1x128xf32> to vector<8x128xf32>
    %299 = arith.addf %296, %298 : vector<8x128xf32>
    %c0_172 = arith.constant 0 : index
    %c0_173 = arith.constant 0 : index
    %300 = vector.load %arg20[%c0_172, %c0_173] : memref<128x128xf32, #tpu.memory_space<vmem>>, vector<128x128xf32>
    %cst_174 = arith.constant dense<0.000000e+00> : vector<8x128xf32>
    %301 = tpu.matmul %288, %300, %cst_174 {dimension_numbers = #tpu.dot_dimension_numbers<[1], [0], [0], [1], [0, 0, 1, 1], [], []>} : vector<8x128xf32>, vector<128x128xf32>, vector<8x128xf32> -> vector<8x128xf32>
    %c0_175 = arith.constant 0 : index
    %c0_176 = arith.constant 0 : index
    %302 = vector.load %arg23[%c0_175, %c0_176] : memref<1x128xf32, #tpu.memory_space<vmem>>, vector<1x128xf32>
    %303 = vector.broadcast %302 : vector<1x128xf32> to vector<8x128xf32>
    %304 = arith.addf %301, %303 : vector<8x128xf32>
    %305 = vector.extract_strided_slice %52 {offsets = [48, 0], sizes = [8, 128], strides = [1, 1]} : vector<64x128xf32> to vector<8x128xf32>
    %306 = arith.addf %305, %294 : vector<8x128xf32>
    %307 = arith.negf %306 : vector<8x128xf32>
    %308 = math.exp %307 : vector<8x128xf32>
    %cst_177 = arith.constant 1.000000e+00 : f32
    %309 = vector.broadcast %cst_177 : f32 to vector<8x128xf32>
    %310 = arith.addf %309, %308 : vector<8x128xf32>
    %311 = arith.divf %309, %310 : vector<8x128xf32>
    %312 = vector.extract_strided_slice %53 {offsets = [48, 0], sizes = [8, 128], strides = [1, 1]} : vector<64x128xf32> to vector<8x128xf32>
    %313 = arith.addf %312, %299 : vector<8x128xf32>
    %314 = arith.negf %313 : vector<8x128xf32>
    %315 = math.exp %314 : vector<8x128xf32>
    %cst_178 = arith.constant 1.000000e+00 : f32
    %316 = vector.broadcast %cst_178 : f32 to vector<8x128xf32>
    %317 = arith.addf %316, %315 : vector<8x128xf32>
    %318 = arith.divf %316, %317 : vector<8x128xf32>
    %319 = vector.extract_strided_slice %54 {offsets = [48, 0], sizes = [8, 128], strides = [1, 1]} : vector<64x128xf32> to vector<8x128xf32>
    %320 = arith.mulf %311, %304 : vector<8x128xf32>
    %321 = arith.addf %319, %320 : vector<8x128xf32>
    %322 = math.tanh %321 : vector<8x128xf32>
    %cst_179 = arith.constant 1.000000e+00 : f32
    %323 = vector.broadcast %cst_179 : f32 to vector<8x128xf32>
    %324 = arith.subf %323, %318 : vector<8x128xf32>
    %325 = arith.mulf %324, %322 : vector<8x128xf32>
    %326 = arith.mulf %318, %288 : vector<8x128xf32>
    %327 = arith.addf %325, %326 : vector<8x128xf32>
    %c48 = arith.constant 48 : index
    %c0_180 = arith.constant 0 : index
    %328 = vector.load %arg34[%c48, %c0_180] : memref<64x128xf32, #tpu.memory_space<vmem>>, vector<8x128xf32>
    tpu.vector_store %arg34[%c48, %c0_180], %327 {strides = array<i32>} : memref<64x128xf32, #tpu.memory_space<vmem>>, vector<8x128xf32>,
    %c0_181 = arith.constant 0 : index
    %c0_182 = arith.constant 0 : index
    %329 = vector.load %arg18[%c0_181, %c0_182] : memref<128x128xf32, #tpu.memory_space<vmem>>, vector<128x128xf32>
    %cst_183 = arith.constant dense<0.000000e+00> : vector<8x128xf32>
    %330 = tpu.matmul %327, %329, %cst_183 {dimension_numbers = #tpu.dot_dimension_numbers<[1], [0], [0], [1], [0, 0, 1, 1], [], []>} : vector<8x128xf32>, vector<128x128xf32>, vector<8x128xf32> -> vector<8x128xf32>
    %c0_184 = arith.constant 0 : index
    %c0_185 = arith.constant 0 : index
    %331 = vector.load %arg21[%c0_184, %c0_185] : memref<1x128xf32, #tpu.memory_space<vmem>>, vector<1x128xf32>
    %332 = vector.broadcast %331 : vector<1x128xf32> to vector<8x128xf32>
    %333 = arith.addf %330, %332 : vector<8x128xf32>
    %c0_186 = arith.constant 0 : index
    %c0_187 = arith.constant 0 : index
    %334 = vector.load %arg19[%c0_186, %c0_187] : memref<128x128xf32, #tpu.memory_space<vmem>>, vector<128x128xf32>
    %cst_188 = arith.constant dense<0.000000e+00> : vector<8x128xf32>
    %335 = tpu.matmul %327, %334, %cst_188 {dimension_numbers = #tpu.dot_dimension_numbers<[1], [0], [0], [1], [0, 0, 1, 1], [], []>} : vector<8x128xf32>, vector<128x128xf32>, vector<8x128xf32> -> vector<8x128xf32>
    %c0_189 = arith.constant 0 : index
    %c0_190 = arith.constant 0 : index
    %336 = vector.load %arg22[%c0_189, %c0_190] : memref<1x128xf32, #tpu.memory_space<vmem>>, vector<1x128xf32>
    %337 = vector.broadcast %336 : vector<1x128xf32> to vector<8x128xf32>
    %338 = arith.addf %335, %337 : vector<8x128xf32>
    %c0_191 = arith.constant 0 : index
    %c0_192 = arith.constant 0 : index
    %339 = vector.load %arg20[%c0_191, %c0_192] : memref<128x128xf32, #tpu.memory_space<vmem>>, vector<128x128xf32>
    %cst_193 = arith.constant dense<0.000000e+00> : vector<8x128xf32>
    %340 = tpu.matmul %327, %339, %cst_193 {dimension_numbers = #tpu.dot_dimension_numbers<[1], [0], [0], [1], [0, 0, 1, 1], [], []>} : vector<8x128xf32>, vector<128x128xf32>, vector<8x128xf32> -> vector<8x128xf32>
    %c0_194 = arith.constant 0 : index
    %c0_195 = arith.constant 0 : index
    %341 = vector.load %arg23[%c0_194, %c0_195] : memref<1x128xf32, #tpu.memory_space<vmem>>, vector<1x128xf32>
    %342 = vector.broadcast %341 : vector<1x128xf32> to vector<8x128xf32>
    %343 = arith.addf %340, %342 : vector<8x128xf32>
    %344 = vector.extract_strided_slice %52 {offsets = [56, 0], sizes = [8, 128], strides = [1, 1]} : vector<64x128xf32> to vector<8x128xf32>
    %345 = arith.addf %344, %333 : vector<8x128xf32>
    %346 = arith.negf %345 : vector<8x128xf32>
    %347 = math.exp %346 : vector<8x128xf32>
    %cst_196 = arith.constant 1.000000e+00 : f32
    %348 = vector.broadcast %cst_196 : f32 to vector<8x128xf32>
    %349 = arith.addf %348, %347 : vector<8x128xf32>
    %350 = arith.divf %348, %349 : vector<8x128xf32>
    %351 = vector.extract_strided_slice %53 {offsets = [56, 0], sizes = [8, 128], strides = [1, 1]} : vector<64x128xf32> to vector<8x128xf32>
    %352 = arith.addf %351, %338 : vector<8x128xf32>
    %353 = arith.negf %352 : vector<8x128xf32>
    %354 = math.exp %353 : vector<8x128xf32>
    %cst_197 = arith.constant 1.000000e+00 : f32
    %355 = vector.broadcast %cst_197 : f32 to vector<8x128xf32>
    %356 = arith.addf %355, %354 : vector<8x128xf32>
    %357 = arith.divf %355, %356 : vector<8x128xf32>
    %358 = vector.extract_strided_slice %54 {offsets = [56, 0], sizes = [8, 128], strides = [1, 1]} : vector<64x128xf32> to vector<8x128xf32>
    %359 = arith.mulf %350, %343 : vector<8x128xf32>
    %360 = arith.addf %358, %359 : vector<8x128xf32>
    %361 = math.tanh %360 : vector<8x128xf32>
    %cst_198 = arith.constant 1.000000e+00 : f32
    %362 = vector.broadcast %cst_198 : f32 to vector<8x128xf32>
    %363 = arith.subf %362, %357 : vector<8x128xf32>
    %364 = arith.mulf %363, %361 : vector<8x128xf32>
    %365 = arith.mulf %357, %327 : vector<8x128xf32>
    %366 = arith.addf %364, %365 : vector<8x128xf32>
    %c56 = arith.constant 56 : index
    %c0_199 = arith.constant 0 : index
    %367 = vector.load %arg34[%c56, %c0_199] : memref<64x128xf32, #tpu.memory_space<vmem>>, vector<8x128xf32>
    tpu.vector_store %arg34[%c56, %c0_199], %366 {strides = array<i32>} : memref<64x128xf32, #tpu.memory_space<vmem>>, vector<8x128xf32>,
    %c0_200 = arith.constant 0 : index
    %c0_201 = arith.constant 0 : index
    %368 = vector.load %arg34[%c0_200, %c0_201] : memref<64x128xf32, #tpu.memory_space<vmem>>, vector<64x128xf32>
    %c0_202 = arith.constant 0 : index
    %c0_203 = arith.constant 0 : index
    %369 = vector.load %arg24[%c0_202, %c0_203] : memref<128x64xf32, #tpu.memory_space<vmem>>, vector<128x64xf32>
    %cst_204 = arith.constant dense<0.000000e+00> : vector<64x64xf32>
    %370 = tpu.matmul %368, %369, %cst_204 {dimension_numbers = #tpu.dot_dimension_numbers<[1], [0], [0], [1], [0, 0, 1, 1], [], []>} : vector<64x128xf32>, vector<128x64xf32>, vector<64x64xf32> -> vector<64x64xf32>
    %c0_205 = arith.constant 0 : index
    %c0_206 = arith.constant 0 : index
    %371 = vector.load %arg25[%c0_205, %c0_206] : memref<32x64xf32, #tpu.memory_space<vmem>>, vector<32x64xf32>
    %cst_207 = arith.constant dense<0.000000e+00> : vector<64x64xf32>
    %372 = tpu.matmul %24, %371, %cst_207 {dimension_numbers = #tpu.dot_dimension_numbers<[1], [0], [0], [1], [0, 0, 1, 1], [], []>} : vector<64x32xf32>, vector<32x64xf32>, vector<64x64xf32> -> vector<64x64xf32>
    %373 = arith.addf %370, %372 : vector<64x64xf32>
    %c0_208 = arith.constant 0 : index
    %c0_209 = arith.constant 0 : index
    %374 = vector.load %arg26[%c0_208, %c0_209] : memref<1x64xf32, #tpu.memory_space<vmem>>, vector<1x64xf32>
    %375 = vector.broadcast %374 : vector<1x64xf32> to vector<64x64xf32>
    %376 = arith.addf %373, %375 : vector<64x64xf32>
    %cst_210 = arith.constant 0.000000e+00 : f32
    %377 = vector.broadcast %cst_210 : f32 to vector<64x64xf32>
    %378 = arith.maximumf %376, %377 : vector<64x64xf32>
    %c0_211 = arith.constant 0 : index
    %c0_212 = arith.constant 0 : index
    %379 = vector.load %arg27[%c0_211, %c0_212] : memref<64x64xf32, #tpu.memory_space<vmem>>, vector<64x64xf32>
    %cst_213 = arith.constant dense<0.000000e+00> : vector<64x64xf32>
    %380 = tpu.matmul %378, %379, %cst_213 {dimension_numbers = #tpu.dot_dimension_numbers<[1], [0], [0], [1], [0, 0, 1, 1], [], []>} : vector<64x64xf32>, vector<64x64xf32>, vector<64x64xf32> -> vector<64x64xf32>
    %c0_214 = arith.constant 0 : index
    %c0_215 = arith.constant 0 : index
    %381 = vector.load %arg28[%c0_214, %c0_215] : memref<1x64xf32, #tpu.memory_space<vmem>>, vector<1x64xf32>
    %382 = vector.broadcast %381 : vector<1x64xf32> to vector<64x64xf32>
    %383 = arith.addf %380, %382 : vector<64x64xf32>
    %cst_216 = arith.constant 0.000000e+00 : f32
    %384 = vector.broadcast %cst_216 : f32 to vector<64x64xf32>
    %385 = arith.maximumf %383, %384 : vector<64x64xf32>
    %c0_217 = arith.constant 0 : index
    %c0_218 = arith.constant 0 : index
    %386 = vector.load %arg29[%c0_217, %c0_218] : memref<64x4xf32, #tpu.memory_space<vmem>>, vector<64x4xf32>
    %cst_219 = arith.constant dense<0.000000e+00> : vector<64x4xf32>
    %387 = tpu.matmul %385, %386, %cst_219 {dimension_numbers = #tpu.dot_dimension_numbers<[1], [0], [0], [1], [0, 0, 1, 1], [], []>} : vector<64x64xf32>, vector<64x4xf32>, vector<64x4xf32> -> vector<64x4xf32>
    %c0_220 = arith.constant 0 : index
    %c0_221 = arith.constant 0 : index
    %388 = vector.load %arg30[%c0_220, %c0_221] : memref<1x4xf32, #tpu.memory_space<vmem>>, vector<1x4xf32>
    %389 = vector.broadcast %388 : vector<1x4xf32> to vector<64x4xf32>
    %390 = arith.addf %387, %389 : vector<64x4xf32>
    %c0_222 = arith.constant 0 : index
    %c0_223 = arith.constant 0 : index
    %391 = vector.load %arg31[%c0_222, %c0_223] : memref<64x4xf32, #tpu.memory_space<vmem>>, vector<64x4xf32>
    %cst_224 = arith.constant dense<0.000000e+00> : vector<64x4xf32>
    %392 = tpu.matmul %385, %391, %cst_224 {dimension_numbers = #tpu.dot_dimension_numbers<[1], [0], [0], [1], [0, 0, 1, 1], [], []>} : vector<64x64xf32>, vector<64x4xf32>, vector<64x4xf32> -> vector<64x4xf32>
    %c0_225 = arith.constant 0 : index
    %c0_226 = arith.constant 0 : index
    %393 = vector.load %arg32[%c0_225, %c0_226] : memref<1x4xf32, #tpu.memory_space<vmem>>, vector<1x4xf32>
    %394 = vector.broadcast %393 : vector<1x4xf32> to vector<64x4xf32>
    %395 = arith.addf %392, %394 : vector<64x4xf32>
    %cst_227 = arith.constant -2.000000e+01 : f32
    %cst_228 = arith.constant 2.000000e+00 : f32
    %396 = vector.broadcast %cst_227 : f32 to vector<64x4xf32>
    %397 = arith.maximumf %396, %395 : vector<64x4xf32>
    %398 = vector.broadcast %cst_228 : f32 to vector<64x4xf32>
    %399 = arith.minimumf %398, %397 : vector<64x4xf32>
    %400 = math.exp %399 : vector<64x4xf32>
    %401 = arith.mulf %400, %3 : vector<64x4xf32>
    %402 = arith.addf %390, %401 : vector<64x4xf32>
    %403 = math.tanh %402 : vector<64x4xf32>
    %cst_229 = arith.constant -5.000000e-01 : f32
    %404 = vector.broadcast %cst_229 : f32 to vector<64x4xf32>
    %405 = arith.mulf %404, %3 : vector<64x4xf32>
    %406 = arith.mulf %405, %3 : vector<64x4xf32>
    %407 = arith.subf %406, %399 : vector<64x4xf32>
    %cst_230 = arith.constant 0.918938517 : f32
    %408 = vector.broadcast %cst_230 : f32 to vector<64x4xf32>
    %409 = arith.subf %407, %408 : vector<64x4xf32>
    %410 = arith.mulf %403, %403 : vector<64x4xf32>
    %cst_231 = arith.constant 1.000000e+00 : f32
    %411 = vector.broadcast %cst_231 : f32 to vector<64x4xf32>
    %412 = arith.subf %411, %410 : vector<64x4xf32>
    %cst_232 = arith.constant 9.99999997E-7 : f32
    %413 = vector.broadcast %cst_232 : f32 to vector<64x4xf32>
    %414 = arith.addf %412, %413 : vector<64x4xf32>
    %415 = math.log %414 : vector<64x4xf32>
    %416 = arith.subf %409, %415 : vector<64x4xf32>
    %cst_233 = arith.constant dense<0.000000e+00> : vector<64xf32>
    %417 = vector.multi_reduction <add>, %416, %cst_233 [1] : vector<64x4xf32> to vector<64xf32>
    %418 = vector.shape_cast %417 : vector<64xf32> to vector<64x1xf32>
    %419 = tpu.iota {dimensions = array<i32: 1>} : vector<4x128xi32>
    %420 = tpu.iota {dimensions = array<i32: 0>} : vector<4x128xi32>
    %c0_i32 = arith.constant 0 : i32
    %421 = vector.broadcast %c0_i32 : i32 to vector<4x128xi32>
    %422 = arith.addi %420, %421 : vector<4x128xi32>
    %423 = arith.cmpi eq, %419, %422 : vector<4x128xi32>
    %424 = arith.extui %423 : vector<4x128xi1> to vector<4x128xi32>
    %425 = arith.sitofp %424 : vector<4x128xi32> to vector<4x128xf32>
    %cst_234 = arith.constant dense<0.000000e+00> : vector<64x128xf32>
    %426 = tpu.matmul %403, %425, %cst_234 {dimension_numbers = #tpu.dot_dimension_numbers<[1], [0], [0], [1], [0, 0, 1, 1], [], []>} : vector<64x4xf32>, vector<4x128xf32>, vector<64x128xf32> -> vector<64x128xf32>
    %427 = tpu.iota {dimensions = array<i32: 1>} : vector<1x128xi32>
    %428 = tpu.iota {dimensions = array<i32: 0>} : vector<1x128xi32>
    %c4_i32 = arith.constant 4 : i32
    %429 = vector.broadcast %c4_i32 : i32 to vector<1x128xi32>
    %430 = arith.addi %428, %429 : vector<1x128xi32>
    %431 = arith.cmpi eq, %427, %430 : vector<1x128xi32>
    %432 = arith.extui %431 : vector<1x128xi1> to vector<1x128xi32>
    %433 = arith.sitofp %432 : vector<1x128xi32> to vector<1x128xf32>
    %434 = vector.broadcast %418 : vector<64x1xf32> to vector<64x128xf32>
    %435 = vector.broadcast %433 : vector<1x128xf32> to vector<64x128xf32>
    %436 = arith.mulf %434, %435 : vector<64x128xf32>
    %437 = arith.addf %426, %436 : vector<64x128xf32>
    %438 = tpu.iota {dimensions = array<i32: 1>} : vector<4x128xi32>
    %439 = tpu.iota {dimensions = array<i32: 0>} : vector<4x128xi32>
    %c5_i32 = arith.constant 5 : i32
    %440 = vector.broadcast %c5_i32 : i32 to vector<4x128xi32>
    %441 = arith.addi %439, %440 : vector<4x128xi32>
    %442 = arith.cmpi eq, %438, %441 : vector<4x128xi32>
    %443 = arith.extui %442 : vector<4x128xi1> to vector<4x128xi32>
    %444 = arith.sitofp %443 : vector<4x128xi32> to vector<4x128xf32>
    %cst_235 = arith.constant dense<0.000000e+00> : vector<64x128xf32>
    %445 = tpu.matmul %390, %444, %cst_235 {dimension_numbers = #tpu.dot_dimension_numbers<[1], [0], [0], [1], [0, 0, 1, 1], [], []>} : vector<64x4xf32>, vector<4x128xf32>, vector<64x128xf32> -> vector<64x128xf32>
    %446 = arith.addf %437, %445 : vector<64x128xf32>
    %447 = tpu.iota {dimensions = array<i32: 1>} : vector<4x128xi32>
    %448 = tpu.iota {dimensions = array<i32: 0>} : vector<4x128xi32>
    %c9_i32 = arith.constant 9 : i32
    %449 = vector.broadcast %c9_i32 : i32 to vector<4x128xi32>
    %450 = arith.addi %448, %449 : vector<4x128xi32>
    %451 = arith.cmpi eq, %447, %450 : vector<4x128xi32>
    %452 = arith.extui %451 : vector<4x128xi1> to vector<4x128xi32>
    %453 = arith.sitofp %452 : vector<4x128xi32> to vector<4x128xf32>
    %cst_236 = arith.constant dense<0.000000e+00> : vector<64x128xf32>
    %454 = tpu.matmul %399, %453, %cst_236 {dimension_numbers = #tpu.dot_dimension_numbers<[1], [0], [0], [1], [0, 0, 1, 1], [], []>} : vector<64x4xf32>, vector<4x128xf32>, vector<64x128xf32> -> vector<64x128xf32>
    %455 = arith.addf %446, %454 : vector<64x128xf32>
    %c0_237 = arith.constant 0 : index
    %c0_238 = arith.constant 0 : index
    %456 = vector.load %arg33[%c0_237, %c0_238] : memref<64x128xf32, #tpu.memory_space<vmem>>, vector<64x128xf32>
    tpu.vector_store %arg33[%c0_237, %c0_238], %455 {strides = array<i32>} : memref<64x128xf32, #tpu.memory_space<vmem>>, vector<64x128xf32>,
    return
  }
}

</mosaic_0001>

<llo_original>
// kernel: tpu_custom_call.1
$region0: #{tpu_custom_call.1}
  #allocation0 [shape = 'u32[]', space=smem, size = 0x4, offset = 0x4, fixed_abs, tag = 'smem constant byte address 0x4 - core index']
  #allocation1 [shape = 'u32[144,128]{1,0:T(1,128)}', space=vmem, size = 0x12000, scoped, tag = 'internal scratch']
  #allocation2 [shape = 'f32[64,128]{1,0:T(8,128)}', space=vmem, size = 0x8000, scoped, tag = 'scratch operand']
  %s0 = inlined_call_operand.smem [shape: u32[34], index: -1, kind: input, shape index: {}]
  %s1 = sld [smem:[%s0]]
  %s2 = scalar_lea.smem %s0, 1
  %s3 = sld [smem:[%s2]]
  %s4 = scalar_lea.smem %s0, 2
  %s5 = sld [smem:[%s4]]
  %s6 = scalar_lea.smem %s0, 3
  %s7 = sld [smem:[%s6]]
  %s8 = scalar_lea.smem %s0, 4
  %s9 = sld [smem:[%s8]]
  %s10 = scalar_lea.smem %s0, 5
  %s11 = sld [smem:[%s10]]
  %s12 = scalar_lea.smem %s0, 6
  %s13 = sld [smem:[%s12]]
  %s14 = scalar_lea.smem %s0, 7
  %s15 = sld [smem:[%s14]]
  %s16 = scalar_lea.smem %s0, 8
  %s17 = sld [smem:[%s16]]
  %s18 = scalar_lea.smem %s0, 9
  %s19 = sld [smem:[%s18]]
  %s20 = scalar_lea.smem %s0, 10
  %s21 = sld [smem:[%s20]]
  %s22 = scalar_lea.smem %s0, 11
  %s23 = sld [smem:[%s22]]
  %s24 = scalar_lea.smem %s0, 12
  %s25 = sld [smem:[%s24]]
  %s26 = scalar_lea.smem %s0, 13
  %s27 = sld [smem:[%s26]]
  %s28 = scalar_lea.smem %s0, 14
  %s29 = sld [smem:[%s28]]
  %s30 = scalar_lea.smem %s0, 15
  %s31 = sld [smem:[%s30]]
  %s32 = scalar_lea.smem %s0, 16
  %s33 = sld [smem:[%s32]]
  %s34 = scalar_lea.smem %s0, 17
  %s35 = sld [smem:[%s34]]
  %s36 = scalar_lea.smem %s0, 18
  %s37 = sld [smem:[%s36]]
  %s38 = scalar_lea.smem %s0, 19
  %s39 = sld [smem:[%s38]]
  %s40 = scalar_lea.smem %s0, 20
  %s41 = sld [smem:[%s40]]
  %s42 = scalar_lea.smem %s0, 21
  %s43 = sld [smem:[%s42]]
  %s44 = scalar_lea.smem %s0, 22
  %s45 = sld [smem:[%s44]]
  %s46 = scalar_lea.smem %s0, 23
  %s47 = sld [smem:[%s46]]
  %s48 = scalar_lea.smem %s0, 24
  %s49 = sld [smem:[%s48]]
  %s50 = scalar_lea.smem %s0, 25
  %s51 = sld [smem:[%s50]]
  %s52 = scalar_lea.smem %s0, 26
  %s53 = sld [smem:[%s52]]
  %s54 = scalar_lea.smem %s0, 27
  %s55 = sld [smem:[%s54]]
  %s56 = scalar_lea.smem %s0, 28
  %s57 = sld [smem:[%s56]]
  %s58 = scalar_lea.smem %s0, 29
  %s59 = sld [smem:[%s58]]
  %s60 = scalar_lea.smem %s0, 30
  %s61 = sld [smem:[%s60]]
  %s62 = scalar_lea.smem %s0, 31
  %s63 = sld [smem:[%s62]]
  %s64 = scalar_lea.smem %s0, 32
  %s65 = sld [smem:[%s64]]
  %s66 = scalar_lea.smem %s0, 33
  %s67 = sld [smem:[%s66]]
  %s68 = sld [smem:[#allocation0]]
  $region142: #{tpu_custom_call.1} parent=0
    _
  %s70 = ssub.s32 1, %s68
  %s71 = scalar_select 0, %s70, %s68
  $region1: #{tpu_custom_call.1} parent=0
    #allocation3 [shape = 'u8[32768]{0}', space=vmem, size = 0x8000, scoped, tag = 'output window, operand 0, single buffered']
    #allocation4 [shape = 's32[1]{0}', space=sflag, size = 0x4, scoped, tag = 'scoped memory for tpu_custom_call.1']
    %72 = vsyncpa [#allocation4], 0
    // Predicated region
    $region2: #{tpu_custom_call.1} parent=1 // pred_check
      _
    $region3: #{tpu_custom_call.1} parent=1 // pred_check_branch
      %74 = sbr.rel (0) target = $region5
    $region4: #{tpu_custom_call.1} parent=1 // pred_region
      _
    $region5: #{tpu_custom_call.1} parent=1 // pred_fallthru
      _
    // Predicated region
    $region6: #{tpu_custom_call.1} parent=1 // pred_check
      _
    $region7: #{tpu_custom_call.1} parent=1 // pred_check_branch
      %76 = sbr.rel (0) target = $region9
    $region8: #{tpu_custom_call.1} parent=1 // pred_region
      _
    $region9: #{tpu_custom_call.1} parent=1 // pred_fallthru
      _
    // Predicated region
    $region10: #{tpu_custom_call.1} parent=1 // pred_check
      _
    $region11: #{tpu_custom_call.1} parent=1 // pred_check_branch
      %78 = sbr.rel (0) target = $region13
    $region12: #{tpu_custom_call.1} parent=1 // pred_region
      _
    $region13: #{tpu_custom_call.1} parent=1 // pred_fallthru
      _
    // Predicated region
    $region14: #{tpu_custom_call.1} parent=1 // pred_check
      _
    $region15: #{tpu_custom_call.1} parent=1 // pred_check_branch
      %80 = sbr.rel (0) target = $region17
    $region16: #{tpu_custom_call.1} parent=1 // pred_region
      _
    $region17: #{tpu_custom_call.1} parent=1 // pred_fallthru
      _
    // Predicated region
    $region18: #{tpu_custom_call.1} parent=1 // pred_check
      _
    $region19: #{tpu_custom_call.1} parent=1 // pred_check_branch
      %82 = sbr.rel (0) target = $region21
    $region20: #{tpu_custom_call.1} parent=1 // pred_region
      _
    $region21: #{tpu_custom_call.1} parent=1 // pred_fallthru
      _
    // Predicated region
    $region22: #{tpu_custom_call.1} parent=1 // pred_check
      _
    $region23: #{tpu_custom_call.1} parent=1 // pred_check_branch
      %84 = sbr.rel (0) target = $region25
    $region24: #{tpu_custom_call.1} parent=1 // pred_region
      _
    $region25: #{tpu_custom_call.1} parent=1 // pred_fallthru
      _
    // Predicated region
    $region26: #{tpu_custom_call.1} parent=1 // pred_check
      _
    $region27: #{tpu_custom_call.1} parent=1 // pred_check_branch
      %86 = sbr.rel (0) target = $region29
    $region28: #{tpu_custom_call.1} parent=1 // pred_region
      _
    $region29: #{tpu_custom_call.1} parent=1 // pred_fallthru
      _
    // Predicated region
    $region30: #{tpu_custom_call.1} parent=1 // pred_check
      _
    $region31: #{tpu_custom_call.1} parent=1 // pred_check_branch
      %88 = sbr.rel (0) target = $region33
    $region32: #{tpu_custom_call.1} parent=1 // pred_region
      _
    $region33: #{tpu_custom_call.1} parent=1 // pred_fallthru
      _
    // Predicated region
    $region34: #{tpu_custom_call.1} parent=1 // pred_check
      _
    $region35: #{tpu_custom_call.1} parent=1 // pred_check_branch
      %90 = sbr.rel (0) target = $region37
    $region36: #{tpu_custom_call.1} parent=1 // pred_region
      _
    $region37: #{tpu_custom_call.1} parent=1 // pred_fallthru
      _
    // Predicated region
    $region38: #{tpu_custom_call.1} parent=1 // pred_check
      _
    $region39: #{tpu_custom_call.1} parent=1 // pred_check_branch
      %92 = sbr.rel (0) target = $region41
    $region40: #{tpu_custom_call.1} parent=1 // pred_region
      _
    $region41: #{tpu_custom_call.1} parent=1 // pred_fallthru
      _
    // Predicated region
    $region42: #{tpu_custom_call.1} parent=1 // pred_check
      _
    $region43: #{tpu_custom_call.1} parent=1 // pred_check_branch
      %94 = sbr.rel (0) target = $region45
    $region44: #{tpu_custom_call.1} parent=1 // pred_region
      _
    $region45: #{tpu_custom_call.1} parent=1 // pred_fallthru
      _
    // Predicated region
    $region46: #{tpu_custom_call.1} parent=1 // pred_check
      _
    $region47: #{tpu_custom_call.1} parent=1 // pred_check_branch
      %96 = sbr.rel (0) target = $region49
    $region48: #{tpu_custom_call.1} parent=1 // pred_region
      _
    $region49: #{tpu_custom_call.1} parent=1 // pred_fallthru
      _
    // Predicated region
    $region50: #{tpu_custom_call.1} parent=1 // pred_check
      _
    $region51: #{tpu_custom_call.1} parent=1 // pred_check_branch
      %98 = sbr.rel (0) target = $region53
    $region52: #{tpu_custom_call.1} parent=1 // pred_region
      _
    $region53: #{tpu_custom_call.1} parent=1 // pred_fallthru
      _
    // Predicated region
    $region54: #{tpu_custom_call.1} parent=1 // pred_check
      _
    $region55: #{tpu_custom_call.1} parent=1 // pred_check_branch
      %100 = sbr.rel (0) target = $region57
    $region56: #{tpu_custom_call.1} parent=1 // pred_region
      _
    $region57: #{tpu_custom_call.1} parent=1 // pred_fallthru
      _
    // Predicated region
    $region58: #{tpu_custom_call.1} parent=1 // pred_check
      _
    $region59: #{tpu_custom_call.1} parent=1 // pred_check_branch
      %102 = sbr.rel (0) target = $region61
    $region60: #{tpu_custom_call.1} parent=1 // pred_region
      _
    $region61: #{tpu_custom_call.1} parent=1 // pred_fallthru
      _
    // Predicated region
    $region62: #{tpu_custom_call.1} parent=1 // pred_check
      _
    $region63: #{tpu_custom_call.1} parent=1 // pred_check_branch
      %104 = sbr.rel (0) target = $region65
    $region64: #{tpu_custom_call.1} parent=1 // pred_region
      _
    $region65: #{tpu_custom_call.1} parent=1 // pred_fallthru
      _
    // Predicated region
    $region66: #{tpu_custom_call.1} parent=1 // pred_check
      _
    $region67: #{tpu_custom_call.1} parent=1 // pred_check_branch
      %106 = sbr.rel (0) target = $region69
    $region68: #{tpu_custom_call.1} parent=1 // pred_region
      _
    $region69: #{tpu_custom_call.1} parent=1 // pred_fallthru
      _
    // Predicated region
    $region70: #{tpu_custom_call.1} parent=1 // pred_check
      _
    $region71: #{tpu_custom_call.1} parent=1 // pred_check_branch
      %108 = sbr.rel (0) target = $region73
    $region72: #{tpu_custom_call.1} parent=1 // pred_region
      _
    $region73: #{tpu_custom_call.1} parent=1 // pred_fallthru
      _
    // Predicated region
    $region74: #{tpu_custom_call.1} parent=1 // pred_check
      _
    $region75: #{tpu_custom_call.1} parent=1 // pred_check_branch
      %110 = sbr.rel (0) target = $region77
    $region76: #{tpu_custom_call.1} parent=1 // pred_region
      _
    $region77: #{tpu_custom_call.1} parent=1 // pred_fallthru
      _
    // Predicated region
    $region78: #{tpu_custom_call.1} parent=1 // pred_check
      _
    $region79: #{tpu_custom_call.1} parent=1 // pred_check_branch
      %112 = sbr.rel (0) target = $region81
    $region80: #{tpu_custom_call.1} parent=1 // pred_region
      _
    $region81: #{tpu_custom_call.1} parent=1 // pred_fallthru
      _
    // Predicated region
    $region82: #{tpu_custom_call.1} parent=1 // pred_check
      _
    $region83: #{tpu_custom_call.1} parent=1 // pred_check_branch
      %114 = sbr.rel (0) target = $region85
    $region84: #{tpu_custom_call.1} parent=1 // pred_region
      _
    $region85: #{tpu_custom_call.1} parent=1 // pred_fallthru
      _
    // Predicated region
    $region86: #{tpu_custom_call.1} parent=1 // pred_check
      _
    $region87: #{tpu_custom_call.1} parent=1 // pred_check_branch
      %116 = sbr.rel (0) target = $region89
    $region88: #{tpu_custom_call.1} parent=1 // pred_region
      _
    $region89: #{tpu_custom_call.1} parent=1 // pred_fallthru
      _
    // Predicated region
    $region90: #{tpu_custom_call.1} parent=1 // pred_check
      _
    $region91: #{tpu_custom_call.1} parent=1 // pred_check_branch
      %118 = sbr.rel (0) target = $region93
    $region92: #{tpu_custom_call.1} parent=1 // pred_region
      _
    $region93: #{tpu_custom_call.1} parent=1 // pred_fallthru
      _
    // Predicated region
    $region94: #{tpu_custom_call.1} parent=1 // pred_check
      _
    $region95: #{tpu_custom_call.1} parent=1 // pred_check_branch
      %120 = sbr.rel (0) target = $region97
    $region96: #{tpu_custom_call.1} parent=1 // pred_region
      _
    $region97: #{tpu_custom_call.1} parent=1 // pred_fallthru
      _
    // Predicated region
    $region98: #{tpu_custom_call.1} parent=1 // pred_check
      _
    $region99: #{tpu_custom_call.1} parent=1 // pred_check_branch
      %122 = sbr.rel (0) target = $region101
    $region100: #{tpu_custom_call.1} parent=1 // pred_region
      _
    $region101: #{tpu_custom_call.1} parent=1 // pred_fallthru
      _
    // Predicated region
    $region102: #{tpu_custom_call.1} parent=1 // pred_check
      _
    $region103: #{tpu_custom_call.1} parent=1 // pred_check_branch
      %124 = sbr.rel (0) target = $region105
    $region104: #{tpu_custom_call.1} parent=1 // pred_region
      _
    $region105: #{tpu_custom_call.1} parent=1 // pred_fallthru
      _
    // Predicated region
    $region106: #{tpu_custom_call.1} parent=1 // pred_check
      _
    $region107: #{tpu_custom_call.1} parent=1 // pred_check_branch
      %126 = sbr.rel (0) target = $region109
    $region108: #{tpu_custom_call.1} parent=1 // pred_region
      _
    $region109: #{tpu_custom_call.1} parent=1 // pred_fallthru
      _
    // Predicated region
    $region110: #{tpu_custom_call.1} parent=1 // pred_check
      _
    $region111: #{tpu_custom_call.1} parent=1 // pred_check_branch
      %128 = sbr.rel (0) target = $region113
    $region112: #{tpu_custom_call.1} parent=1 // pred_region
      _
    $region113: #{tpu_custom_call.1} parent=1 // pred_fallthru
      _
    // Predicated region
    $region114: #{tpu_custom_call.1} parent=1 // pred_check
      _
    $region115: #{tpu_custom_call.1} parent=1 // pred_check_branch
      %130 = sbr.rel (0) target = $region117
    $region116: #{tpu_custom_call.1} parent=1 // pred_region
      _
    $region117: #{tpu_custom_call.1} parent=1 // pred_fallthru
      _
    // Predicated region
    $region118: #{tpu_custom_call.1} parent=1 // pred_check
      _
    $region119: #{tpu_custom_call.1} parent=1 // pred_check_branch
      %132 = sbr.rel (0) target = $region121
    $region120: #{tpu_custom_call.1} parent=1 // pred_region
      _
    $region121: #{tpu_custom_call.1} parent=1 // pred_fallthru
      _
    // Predicated region
    $region122: #{tpu_custom_call.1} parent=1 // pred_check
      _
    $region123: #{tpu_custom_call.1} parent=1 // pred_check_branch
      %134 = sbr.rel (0) target = $region125
    $region124: #{tpu_custom_call.1} parent=1 // pred_region
      _
    $region125: #{tpu_custom_call.1} parent=1 // pred_fallthru
      _
    // Predicated region
    $region126: #{tpu_custom_call.1} parent=1 // pred_check
      _
    $region127: #{tpu_custom_call.1} parent=1 // pred_check_branch
      %136 = sbr.rel (0) target = $region129
    $region128: #{tpu_custom_call.1} parent=1 // pred_region
      _
    $region129: #{tpu_custom_call.1} parent=1 // pred_fallthru
      _
    // Predicated region
    $region130: #{tpu_custom_call.1} parent=1 // pred_check
      _
    $region131: #{tpu_custom_call.1} parent=1 // pred_check_branch
      %138 = sbr.rel (0) target = $region133
    $region132: #{tpu_custom_call.1} parent=1 // pred_region
      _
    $region133: #{tpu_custom_call.1} parent=1 // pred_fallthru
      _
    %v139 = vld [vmem:[%s1] sm:$0xff]
    %v140 = vld [vmem:[%s1 + $0x8] sm:$0xff]
    %v141 = vld [vmem:[%s1 + $0x10] sm:$0xff]
    %v142 = vld [vmem:[%s1 + $0x18] sm:$0xff]
    %v143 = vld [vmem:[%s1 + $0x20] sm:$0xff]
    %v144 = vld [vmem:[%s1 + $0x28] sm:$0xff]
    %v145 = vld [vmem:[%s1 + $0x30] sm:$0xff]
    %v146 = vld [vmem:[%s1 + $0x38] sm:$0xff]
    %v147 = vld [vmem:[%s3] sm:$0xff]
    %v148 = vld [vmem:[%s3 + $0x8] sm:$0xff]
    %v149 = vld [vmem:[%s3 + $0x10] sm:$0xff]
    %v150 = vld [vmem:[%s3 + $0x18] sm:$0xff]
    %v151 = vld [vmem:[%s3 + $0x20] sm:$0xff]
    %v152 = vld [vmem:[%s3 + $0x28] sm:$0xff]
    %v153 = vld [vmem:[%s3 + $0x30] sm:$0xff]
    %v154 = vld [vmem:[%s3 + $0x38] sm:$0xff]
    %v155 = vld [vmem:[%s5] sm:$0xff]
    %v156 = vld [vmem:[%s5 + $0x8] sm:$0xff]
    %v157 = vld [vmem:[%s5 + $0x10] sm:$0xff]
    %v158 = vld [vmem:[%s5 + $0x18] sm:$0xff]
    %v159 = vld [vmem:[%s5 + $0x20] sm:$0xff]
    %v160 = vld [vmem:[%s5 + $0x28] sm:$0xff]
    %v161 = vld [vmem:[%s5 + $0x30] sm:$0xff]
    %v162 = vld [vmem:[%s5 + $0x38] sm:$0xff]
    %v163 = vld [vmem:[%s7] sm:$0xff]
    %v164 = vld [vmem:[%s7 + $0x8] sm:$0xff]
    %v165 = vld [vmem:[%s7 + $0x10] sm:$0xff]
    %v166 = vld [vmem:[%s7 + $0x18] sm:$0xff]
    %v167 = vld [vmem:[%s7 + $0x20] sm:$0xff]
    %v168 = vld [vmem:[%s7 + $0x28] sm:$0xff]
    %v169 = vld [vmem:[%s7 + $0x30] sm:$0xff]
    %v170 = vld [vmem:[%s7 + $0x38] sm:$0xff]
    %v171 = vld [vmem:[%s9] sm:$0xff]
    %v172 = vld [vmem:[%s9 + $0x8] sm:$0xff]
    %v173 = vld [vmem:[%s11] sm:$0x1]
    %v175 = vlaneseq
    %v176 = vshrl.u32 %v175, 7
    %v177 = vsub.s32 0, %v176
    %v178 = vrot.slane %v173, %v177
    %vm180 = vcmask 130048
    %v182 = vsel %vm180, %v155, 0
    %v185 = vsel %vm180, %v156, 0
    %v188 = vsel %vm180, %v157, 0
    %v191 = vsel %vm180, %v158, 0
    %v194 = vsel %vm180, %v159, 0
    %v197 = vsel %vm180, %v160, 0
    %v200 = vsel %vm180, %v161, 0
    %v203 = vsel %vm180, %v162, 0
    %205 = vmatprep.subr.mxu0 0.0
    %206 = vmatpush1.msra.mxu0 %v171
    %207 = vmatprep.subr.mxu0 0.0
    %208 = vmatpush1.msra.mxu0 %v172
    %209 = vmatprep.subr.mxu0 0.0
    %210 = vmatpush1.msra.mxu0 0.0
    %211 = vmatprep.subr.mxu0 0.0
    %212 = vmatpush1.msra.mxu0 0.0
    %213 = vmatprep.subr.mxu0 0.0
    %214 = vmatpush1.msra.mxu0 0.0
    %215 = vmatprep.subr.mxu0 0.0
    %216 = vmatpush1.msra.mxu0 0.0
    %217 = vmatprep.subr.mxu0 0.0
    %218 = vmatpush1.msra.mxu0 0.0
    %219 = vmatprep.subr.mxu0 0.0
    %220 = vmatpush1.msra.mxu0 0.0
    %221 = vmatprep.subr.mxu0 0.0
    %222 = vmatpush1.msra.mxu0 0.0
    %223 = vmatprep.subr.mxu0 0.0
    %224 = vmatpush1.msra.mxu0 0.0
    %225 = vmatprep.subr.mxu0 0.0
    %226 = vmatpush1.msra.mxu0 0.0
    %227 = vmatprep.subr.mxu0 0.0
    %228 = vmatpush1.msra.mxu0 0.0
    %229 = vmatprep.subr.mxu0 0.0
    %230 = vmatpush1.msra.mxu0 0.0
    %231 = vmatprep.subr.mxu0 0.0
    %232 = vmatpush1.msra.mxu0 0.0
    %233 = vmatprep.subr.mxu0 0.0
    %234 = vmatpush1.msra.mxu0 0.0
    %235 = vmatprep.subr.mxu0 0.0
    %236 = vmatpush1.msra.mxu0 0.0
    %237 = vmatprep.subr.mxu0 0.0
    %238 = vmatpush1.msra.mxu0 0.0
    %239 = vmatprep.subr.mxu0 0.0
    %240 = vmatpush1.msra.mxu0 0.0
    %241 = vmatprep.subr.mxu0 0.0
    %242 = vmatpush1.msra.mxu0 0.0
    %243 = vmatprep.subr.mxu0 0.0
    %244 = vmatpush1.msra.mxu0 0.0
    %245 = vmatprep.subr.mxu0 0.0
    %246 = vmatpush1.msra.mxu0 0.0
    %247 = vmatprep.subr.mxu0 0.0
    %248 = vmatpush1.msra.mxu0 0.0
    %249 = vmatprep.subr.mxu0 0.0
    %250 = vmatpush1.msra.mxu0 0.0
    %251 = vmatprep.subr.mxu0 0.0
    %252 = vmatpush1.msra.mxu0 0.0
    %253 = vmatprep.subr.mxu0 0.0
    %254 = vmatpush1.msra.mxu0 0.0
    %255 = vmatprep.subr.mxu0 0.0
    %256 = vmatpush1.msra.mxu0 0.0
    %257 = vmatprep.subr.mxu0 0.0
    %258 = vmatpush1.msra.mxu0 0.0
    %259 = vmatprep.subr.mxu0 0.0
    %260 = vmatpush1.msra.mxu0 0.0
    %261 = vmatprep.subr.mxu0 0.0
    %262 = vmatpush1.msra.mxu0 0.0
    %263 = vmatprep.subr.mxu0 0.0
    %264 = vmatpush1.msra.mxu0 0.0
    %265 = vmatprep.subr.mxu0 0.0
    %266 = vmatpush1.msra.mxu0 0.0
    %267 = vmatprep.subr.mxu0 0.0
    %268 = vmatpush1.msra.mxu0 0.0
    %269 = vmatprep.mubr.f32.mxu0 0.0
    %270 = vmatmul.mubr.f32.gmra.mrb[0].mxu0 %v182
    %v271 = vpop.f32.mrb[0].mxu0
    %v272 = vadd.f32 %v178, %v271
    %v273 = vpop.f32.mrb[0].mxu0
    %274 = vmatprep.mubr.f32.mxu0 0.0
    %275 = vmatmul.mubr.f32.gmra.mrb[0].mxu0 %v185
    %v276 = vpop.f32.mrb[0].mxu0
    %v277 = vadd.f32 %v178, %v276
    %v278 = vpop.f32.mrb[0].mxu0
    %279 = vmatprep.mubr.f32.mxu0 0.0
    %280 = vmatmul.mubr.f32.gmra.mrb[0].mxu0 %v188
    %v281 = vpop.f32.mrb[0].mxu0
    %v282 = vadd.f32 %v178, %v281
    %v283 = vpop.f32.mrb[0].mxu0
    %284 = vmatprep.mubr.f32.mxu0 0.0
    %285 = vmatmul.mubr.f32.gmra.mrb[0].mxu0 %v191
    %v286 = vpop.f32.mrb[0].mxu0
    %v287 = vadd.f32 %v178, %v286
    %v288 = vpop.f32.mrb[0].mxu0
    %289 = vmatprep.mubr.f32.mxu0 0.0
    %290 = vmatmul.mubr.f32.gmra.mrb[0].mxu0 %v194
    %v291 = vpop.f32.mrb[0].mxu0
    %v292 = vadd.f32 %v178, %v291
    %v293 = vpop.f32.mrb[0].mxu0
    %294 = vmatprep.mubr.f32.mxu0 0.0
    %295 = vmatmul.mubr.f32.gmra.mrb[0].mxu0 %v197
    %v296 = vpop.f32.mrb[0].mxu0
    %v297 = vadd.f32 %v178, %v296
    %v298 = vpop.f32.mrb[0].mxu0
    %299 = vmatprep.mubr.f32.mxu0 0.0
    %300 = vmatmul.mubr.f32.gmra.mrb[0].mxu0 %v200
    %v301 = vpop.f32.mrb[0].mxu0
    %v302 = vadd.f32 %v178, %v301
    %v303 = vpop.f32.mrb[0].mxu0
    %304 = vmatprep.mubr.f32.mxu0 0.0
    %305 = vmatmul.mubr.f32.gmra.mrb[0].mxu0 %v203
    %v306 = vpop.f32.mrb[0].mxu0
    %v307 = vadd.f32 %v178, %v306
    %v308 = vpop.f32.mrb[0].mxu0
    %309 = vdwg.mxu0
    %v310 = vmax.f32 %v272, 0.0
    %v311 = vmax.f32 %v277, 0.0
    %v312 = vmax.f32 %v282, 0.0
    %v313 = vmax.f32 %v287, 0.0
    %v314 = vmax.f32 %v292, 0.0
    %v315 = vmax.f32 %v297, 0.0
    %v316 = vmax.f32 %v302, 0.0
    %v317 = vmax.f32 %v307, 0.0
    %v318 = vld [vmem:[%s13] sm:$0xff]
    %v319 = vld [vmem:[%s13 + $0x8] sm:$0xff]
    %v320 = vld [vmem:[%s13 + $0x10] sm:$0xff]
    %v321 = vld [vmem:[%s13 + $0x18] sm:$0xff]
    %v322 = vld [vmem:[%s13 + $0x20] sm:$0xff]
    %v323 = vld [vmem:[%s13 + $0x28] sm:$0xff]
    %v324 = vld [vmem:[%s13 + $0x30] sm:$0xff]
    %v325 = vld [vmem:[%s13 + $0x38] sm:$0xff]
    %v326 = vld [vmem:[%s13 + $0x40] sm:$0xff]
    %v327 = vld [vmem:[%s13 + $0x48] sm:$0xff]
    %v328 = vld [vmem:[%s13 + $0x50] sm:$0xff]
    %v329 = vld [vmem:[%s13 + $0x58] sm:$0xff]
    %v330 = vld [vmem:[%s13 + $0x60] sm:$0xff]
    %v331 = vld [vmem:[%s13 + $0x68] sm:$0xff]
    %v332 = vld [vmem:[%s13 + $0x70] sm:$0xff]
    %v333 = vld [vmem:[%s13 + $0x78] sm:$0xff]
    %v334 = vld [vmem:[%s15] sm:$0x1]
    %v336 = vlaneseq
    %v337 = vshrl.u32 %v336, 7
    %v338 = vsub.s32 0, %v337
    %v339 = vrot.slane %v334, %v338
    %341 = vmatprep.subr.mxu0 0.0
    %342 = vmatpush1.msra.mxu0 %v318
    %343 = vmatprep.subr.mxu0 0.0
    %344 = vmatpush1.msra.mxu0 %v319
    %345 = vmatprep.subr.mxu0 0.0
    %346 = vmatpush1.msra.mxu0 %v320
    %347 = vmatprep.subr.mxu0 0.0
    %348 = vmatpush1.msra.mxu0 %v321
    %349 = vmatprep.subr.mxu0 0.0
    %350 = vmatpush1.msra.mxu0 %v322
    %351 = vmatprep.subr.mxu0 0.0
    %352 = vmatpush1.msra.mxu0 %v323
    %353 = vmatprep.subr.mxu0 0.0
    %354 = vmatpush1.msra.mxu0 %v324
    %355 = vmatprep.subr.mxu0 0.0
    %356 = vmatpush1.msra.mxu0 %v325
    %357 = vmatprep.subr.mxu0 0.0
    %358 = vmatpush1.msra.mxu0 %v326
    %359 = vmatprep.subr.mxu0 0.0
    %360 = vmatpush1.msra.mxu0 %v327
    %361 = vmatprep.subr.mxu0 0.0
    %362 = vmatpush1.msra.mxu0 %v328
    %363 = vmatprep.subr.mxu0 0.0
    %364 = vmatpush1.msra.mxu0 %v329
    %365 = vmatprep.subr.mxu0 0.0
    %366 = vmatpush1.msra.mxu0 %v330
    %367 = vmatprep.subr.mxu0 0.0
    %368 = vmatpush1.msra.mxu0 %v331
    %369 = vmatprep.subr.mxu0 0.0
    %370 = vmatpush1.msra.mxu0 %v332
    %371 = vmatprep.subr.mxu0 0.0
    %372 = vmatpush1.msra.mxu0 %v333
    %373 = vmatprep.subr.mxu0 0.0
    %374 = vmatpush1.msra.mxu0 0.0
    %375 = vmatprep.subr.mxu0 0.0
    %376 = vmatpush1.msra.mxu0 0.0
    %377 = vmatprep.subr.mxu0 0.0
    %378 = vmatpush1.msra.mxu0 0.0
    %379 = vmatprep.subr.mxu0 0.0
    %380 = vmatpush1.msra.mxu0 0.0
    %381 = vmatprep.subr.mxu0 0.0
    %382 = vmatpush1.msra.mxu0 0.0
    %383 = vmatprep.subr.mxu0 0.0
    %384 = vmatpush1.msra.mxu0 0.0
    %385 = vmatprep.subr.mxu0 0.0
    %386 = vmatpush1.msra.mxu0 0.0
    %387 = vmatprep.subr.mxu0 0.0
    %388 = vmatpush1.msra.mxu0 0.0
    %389 = vmatprep.subr.mxu0 0.0
    %390 = vmatpush1.msra.mxu0 0.0
    %391 = vmatprep.subr.mxu0 0.0
    %392 = vmatpush1.msra.mxu0 0.0
    %393 = vmatprep.subr.mxu0 0.0
    %394 = vmatpush1.msra.mxu0 0.0
    %395 = vmatprep.subr.mxu0 0.0
    %396 = vmatpush1.msra.mxu0 0.0
    %397 = vmatprep.subr.mxu0 0.0
    %398 = vmatpush1.msra.mxu0 0.0
    %399 = vmatprep.subr.mxu0 0.0
    %400 = vmatpush1.msra.mxu0 0.0
    %401 = vmatprep.subr.mxu0 0.0
    %402 = vmatpush1.msra.mxu0 0.0
    %403 = vmatprep.subr.mxu0 0.0
    %404 = vmatpush1.msra.mxu0 0.0
    %405 = vmatprep.mubr.f32.mxu0 0.0
    %406 = vmatmul.mubr.f32.gmra.mrb[0].mxu0 %v310
    %v407 = vpop.f32.mrb[0].mxu0
    %v408 = vadd.f32 %v339, %v407
    %v409 = vpop.f32.mrb[0].mxu0
    %410 = vmatprep.mubr.f32.mxu0 0.0
    %411 = vmatmul.mubr.f32.gmra.mrb[0].mxu0 %v311
    %v412 = vpop.f32.mrb[0].mxu0
    %v413 = vadd.f32 %v339, %v412
    %v414 = vpop.f32.mrb[0].mxu0
    %415 = vmatprep.mubr.f32.mxu0 0.0
    %416 = vmatmul.mubr.f32.gmra.mrb[0].mxu0 %v312
    %v417 = vpop.f32.mrb[0].mxu0
    %v418 = vadd.f32 %v339, %v417
    %v419 = vpop.f32.mrb[0].mxu0
    %420 = vmatprep.mubr.f32.mxu0 0.0
    %421 = vmatmul.mubr.f32.gmra.mrb[0].mxu0 %v313
    %v422 = vpop.f32.mrb[0].mxu0
    %v423 = vadd.f32 %v339, %v422
    %v424 = vpop.f32.mrb[0].mxu0
    %425 = vmatprep.mubr.f32.mxu0 0.0
    %426 = vmatmul.mubr.f32.gmra.mrb[0].mxu0 %v314
    %v427 = vpop.f32.mrb[0].mxu0
    %v428 = vadd.f32 %v339, %v427
    %v429 = vpop.f32.mrb[0].mxu0
    %430 = vmatprep.mubr.f32.mxu0 0.0
    %431 = vmatmul.mubr.f32.gmra.mrb[0].mxu0 %v315
    %v432 = vpop.f32.mrb[0].mxu0
    %v433 = vadd.f32 %v339, %v432
    %v434 = vpop.f32.mrb[0].mxu0
    %435 = vmatprep.mubr.f32.mxu0 0.0
    %436 = vmatmul.mubr.f32.gmra.mrb[0].mxu0 %v316
    %v437 = vpop.f32.mrb[0].mxu0
    %v438 = vadd.f32 %v339, %v437
    %v439 = vpop.f32.mrb[0].mxu0
    %440 = vmatprep.mubr.f32.mxu0 0.0
    %441 = vmatmul.mubr.f32.gmra.mrb[0].mxu0 %v317
    %v442 = vpop.f32.mrb[0].mxu0
    %v443 = vadd.f32 %v339, %v442
    %v444 = vpop.f32.mrb[0].mxu0
    %445 = vdwg.mxu0
    %v446 = vmax.f32 %v408, 0.0
    %v447 = vmax.f32 %v413, 0.0
    %v448 = vmax.f32 %v418, 0.0
    %v449 = vmax.f32 %v423, 0.0
    %v450 = vmax.f32 %v428, 0.0
    %v451 = vmax.f32 %v433, 0.0
    %v452 = vmax.f32 %v438, 0.0
    %v453 = vmax.f32 %v443, 0.0
    %v454 = vld [vmem:[%s17] sm:$0xff]
    %v455 = vld [vmem:[%s17 + $0x8] sm:$0xff]
    %v456 = vld [vmem:[%s17 + $0x10] sm:$0xff]
    %v457 = vld [vmem:[%s17 + $0x18] sm:$0xff]
    %v458 = vld [vmem:[%s17 + $0x20] sm:$0xff]
    %v459 = vld [vmem:[%s17 + $0x28] sm:$0xff]
    %v460 = vld [vmem:[%s17 + $0x30] sm:$0xff]
    %v461 = vld [vmem:[%s17 + $0x38] sm:$0xff]
    %v462 = vld [vmem:[%s17 + $0x40] sm:$0xff]
    %v463 = vld [vmem:[%s17 + $0x48] sm:$0xff]
    %v464 = vld [vmem:[%s17 + $0x50] sm:$0xff]
    %v465 = vld [vmem:[%s17 + $0x58] sm:$0xff]
    %v466 = vld [vmem:[%s17 + $0x60] sm:$0xff]
    %v467 = vld [vmem:[%s17 + $0x68] sm:$0xff]
    %v468 = vld [vmem:[%s17 + $0x70] sm:$0xff]
    %v469 = vld [vmem:[%s17 + $0x78] sm:$0xff]
    %v470 = vld [vmem:[%s19] sm:$0x1]
    %v472 = vlaneseq
    %v473 = vshrl.u32 %v472, 7
    %v474 = vsub.s32 0, %v473
    %v475 = vrot.slane %v470, %v474
    %477 = vmatprep.subr.mxu0 0.0
    %478 = vmatpush1.msra.mxu0 %v454
    %479 = vmatprep.subr.mxu0 0.0
    %480 = vmatpush1.msra.mxu0 %v455
    %481 = vmatprep.subr.mxu0 0.0
    %482 = vmatpush1.msra.mxu0 %v456
    %483 = vmatprep.subr.mxu0 0.0
    %484 = vmatpush1.msra.mxu0 %v457
    %485 = vmatprep.subr.mxu0 0.0
    %486 = vmatpush1.msra.mxu0 %v458
    %487 = vmatprep.subr.mxu0 0.0
    %488 = vmatpush1.msra.mxu0 %v459
    %489 = vmatprep.subr.mxu0 0.0
    %490 = vmatpush1.msra.mxu0 %v460
    %491 = vmatprep.subr.mxu0 0.0
    %492 = vmatpush1.msra.mxu0 %v461
    %493 = vmatprep.subr.mxu0 0.0
    %494 = vmatpush1.msra.mxu0 %v462
    %495 = vmatprep.subr.mxu0 0.0
    %496 = vmatpush1.msra.mxu0 %v463
    %497 = vmatprep.subr.mxu0 0.0
    %498 = vmatpush1.msra.mxu0 %v464
    %499 = vmatprep.subr.mxu0 0.0
    %500 = vmatpush1.msra.mxu0 %v465
    %501 = vmatprep.subr.mxu0 0.0
    %502 = vmatpush1.msra.mxu0 %v466
    %503 = vmatprep.subr.mxu0 0.0
    %504 = vmatpush1.msra.mxu0 %v467
    %505 = vmatprep.subr.mxu0 0.0
    %506 = vmatpush1.msra.mxu0 %v468
    %507 = vmatprep.subr.mxu0 0.0
    %508 = vmatpush1.msra.mxu0 %v469
    %509 = vmatprep.subr.mxu0 0.0
    %510 = vmatpush1.msra.mxu0 0.0
    %511 = vmatprep.subr.mxu0 0.0
    %512 = vmatpush1.msra.mxu0 0.0
    %513 = vmatprep.subr.mxu0 0.0
    %514 = vmatpush1.msra.mxu0 0.0
    %515 = vmatprep.subr.mxu0 0.0
    %516 = vmatpush1.msra.mxu0 0.0
    %517 = vmatprep.subr.mxu0 0.0
    %518 = vmatpush1.msra.mxu0 0.0
    %519 = vmatprep.subr.mxu0 0.0
    %520 = vmatpush1.msra.mxu0 0.0
    %521 = vmatprep.subr.mxu0 0.0
    %522 = vmatpush1.msra.mxu0 0.0
    %523 = vmatprep.subr.mxu0 0.0
    %524 = vmatpush1.msra.mxu0 0.0
    %525 = vmatprep.subr.mxu0 0.0
    %526 = vmatpush1.msra.mxu0 0.0
    %527 = vmatprep.subr.mxu0 0.0
    %528 = vmatpush1.msra.mxu0 0.0
    %529 = vmatprep.subr.mxu0 0.0
    %530 = vmatpush1.msra.mxu0 0.0
    %531 = vmatprep.subr.mxu0 0.0
    %532 = vmatpush1.msra.mxu0 0.0
    %533 = vmatprep.subr.mxu0 0.0
    %534 = vmatpush1.msra.mxu0 0.0
    %535 = vmatprep.subr.mxu0 0.0
    %536 = vmatpush1.msra.mxu0 0.0
    %537 = vmatprep.subr.mxu0 0.0
    %538 = vmatpush1.msra.mxu0 0.0
    %539 = vmatprep.subr.mxu0 0.0
    %540 = vmatpush1.msra.mxu0 0.0
    %541 = vmatprep.mubr.f32.mxu0 0.0
    %542 = vmatmul.mubr.f32.gmra.mrb[0].mxu0 %v310
    %v543 = vpop.f32.mrb[0].mxu0
    %v544 = vadd.f32 %v475, %v543
    %v545 = vpop.f32.mrb[0].mxu0
    %546 = vmatprep.mubr.f32.mxu0 0.0
    %547 = vmatmul.mubr.f32.gmra.mrb[0].mxu0 %v311
    %v548 = vpop.f32.mrb[0].mxu0
    %v549 = vadd.f32 %v475, %v548
    %v550 = vpop.f32.mrb[0].mxu0
    %551 = vmatprep.mubr.f32.mxu0 0.0
    %552 = vmatmul.mubr.f32.gmra.mrb[0].mxu0 %v312
    %v553 = vpop.f32.mrb[0].mxu0
    %v554 = vadd.f32 %v475, %v553
    %v555 = vpop.f32.mrb[0].mxu0
    %556 = vmatprep.mubr.f32.mxu0 0.0
    %557 = vmatmul.mubr.f32.gmra.mrb[0].mxu0 %v313
    %v558 = vpop.f32.mrb[0].mxu0
    %v559 = vadd.f32 %v475, %v558
    %v560 = vpop.f32.mrb[0].mxu0
    %561 = vmatprep.mubr.f32.mxu0 0.0
    %562 = vmatmul.mubr.f32.gmra.mrb[0].mxu0 %v314
    %v563 = vpop.f32.mrb[0].mxu0
    %v564 = vadd.f32 %v475, %v563
    %v565 = vpop.f32.mrb[0].mxu0
    %566 = vmatprep.mubr.f32.mxu0 0.0
    %567 = vmatmul.mubr.f32.gmra.mrb[0].mxu0 %v315
    %v568 = vpop.f32.mrb[0].mxu0
    %v569 = vadd.f32 %v475, %v568
    %v570 = vpop.f32.mrb[0].mxu0
    %571 = vmatprep.mubr.f32.mxu0 0.0
    %572 = vmatmul.mubr.f32.gmra.mrb[0].mxu0 %v316
    %v573 = vpop.f32.mrb[0].mxu0
    %v574 = vadd.f32 %v475, %v573
    %v575 = vpop.f32.mrb[0].mxu0
    %576 = vmatprep.mubr.f32.mxu0 0.0
    %577 = vmatmul.mubr.f32.gmra.mrb[0].mxu0 %v317
    %v578 = vpop.f32.mrb[0].mxu0
    %v579 = vadd.f32 %v475, %v578
    %v580 = vpop.f32.mrb[0].mxu0
    %581 = vdwg.mxu0
    %v582 = vmax.f32 %v544, 0.0
    %v583 = vmax.f32 %v549, 0.0
    %v584 = vmax.f32 %v554, 0.0
    %v585 = vmax.f32 %v559, 0.0
    %v586 = vmax.f32 %v564, 0.0
    %v587 = vmax.f32 %v569, 0.0
    %v588 = vmax.f32 %v574, 0.0
    %v589 = vmax.f32 %v579, 0.0
    %v590 = vld [vmem:[%s21] sm:$0xf]
    %v591 = vld [vmem:[%s23] sm:$0x1]
    %v593 = vlaneseq
    %v594 = vshrl.u32 %v593, 7
    %v595 = vsub.s32 0, %v594
    %v596 = vrot.slane %v591, %v595
    %vm598 = vcmask 31744
    %v600 = vsel %vm598, %v139, 0
    %v603 = vsel %vm598, %v140, 0
    %v606 = vsel %vm598, %v141, 0
    %v609 = vsel %vm598, %v142, 0
    %v612 = vsel %vm598, %v143, 0
    %v615 = vsel %vm598, %v144, 0
    %v618 = vsel %vm598, %v145, 0
    %v621 = vsel %vm598, %v146, 0
    %vm623 = vcmask 1043456
    %v625 = vsel %vm623, %v590, 0
    %627 = vmatprep.subr.mxu0 0.0
    %628 = vmatpush1.msra.mxu0 %v625
    %629 = vmatprep.subr.mxu0 0.0
    %630 = vmatpush1.msra.mxu0 0.0
    %631 = vmatprep.subr.mxu0 0.0
    %632 = vmatpush1.msra.mxu0 0.0
    %633 = vmatprep.subr.mxu0 0.0
    %634 = vmatpush1.msra.mxu0 0.0
    %635 = vmatprep.subr.mxu0 0.0
    %636 = vmatpush1.msra.mxu0 0.0
    %637 = vmatprep.subr.mxu0 0.0
    %638 = vmatpush1.msra.mxu0 0.0
    %639 = vmatprep.subr.mxu0 0.0
    %640 = vmatpush1.msra.mxu0 0.0
    %641 = vmatprep.subr.mxu0 0.0
    %642 = vmatpush1.msra.mxu0 0.0
    %643 = vmatprep.subr.mxu0 0.0
    %644 = vmatpush1.msra.mxu0 0.0
    %645 = vmatprep.subr.mxu0 0.0
    %646 = vmatpush1.msra.mxu0 0.0
    %647 = vmatprep.subr.mxu0 0.0
    %648 = vmatpush1.msra.mxu0 0.0
    %649 = vmatprep.subr.mxu0 0.0
    %650 = vmatpush1.msra.mxu0 0.0
    %651 = vmatprep.subr.mxu0 0.0
    %652 = vmatpush1.msra.mxu0 0.0
    %653 = vmatprep.subr.mxu0 0.0
    %654 = vmatpush1.msra.mxu0 0.0
    %655 = vmatprep.subr.mxu0 0.0
    %656 = vmatpush1.msra.mxu0 0.0
    %657 = vmatprep.subr.mxu0 0.0
    %658 = vmatpush1.msra.mxu0 0.0
    %659 = vmatprep.subr.mxu0 0.0
    %660 = vmatpush1.msra.mxu0 0.0
    %661 = vmatprep.subr.mxu0 0.0
    %662 = vmatpush1.msra.mxu0 0.0
    %663 = vmatprep.subr.mxu0 0.0
    %664 = vmatpush1.msra.mxu0 0.0
    %665 = vmatprep.subr.mxu0 0.0
    %666 = vmatpush1.msra.mxu0 0.0
    %667 = vmatprep.subr.mxu0 0.0
    %668 = vmatpush1.msra.mxu0 0.0
    %669 = vmatprep.subr.mxu0 0.0
    %670 = vmatpush1.msra.mxu0 0.0
    %671 = vmatprep.subr.mxu0 0.0
    %672 = vmatpush1.msra.mxu0 0.0
    %673 = vmatprep.subr.mxu0 0.0
    %674 = vmatpush1.msra.mxu0 0.0
    %675 = vmatprep.subr.mxu0 0.0
    %676 = vmatpush1.msra.mxu0 0.0
    %677 = vmatprep.subr.mxu0 0.0
    %678 = vmatpush1.msra.mxu0 0.0
    %679 = vmatprep.subr.mxu0 0.0
    %680 = vmatpush1.msra.mxu0 0.0
    %681 = vmatprep.subr.mxu0 0.0
    %682 = vmatpush1.msra.mxu0 0.0
    %683 = vmatprep.subr.mxu0 0.0
    %684 = vmatpush1.msra.mxu0 0.0
    %685 = vmatprep.subr.mxu0 0.0
    %686 = vmatpush1.msra.mxu0 0.0
    %687 = vmatprep.subr.mxu0 0.0
    %688 = vmatpush1.msra.mxu0 0.0
    %689 = vmatprep.subr.mxu0 0.0
    %690 = vmatpush1.msra.mxu0 0.0
    %691 = vmatprep.mubr.f32.mxu0 0.0
    %692 = vmatmul.mubr.f32.gmra.mrb[0].mxu0 %v600
    %v693 = vpop.f32.mrb[0].mxu0
    %v694 = vadd.f32 %v596, %v693
    %v695 = vpop.f32.mrb[0].mxu0
    %696 = vmatprep.mubr.f32.mxu0 0.0
    %697 = vmatmul.mubr.f32.gmra.mrb[0].mxu0 %v603
    %v698 = vpop.f32.mrb[0].mxu0
    %v699 = vadd.f32 %v596, %v698
    %v700 = vpop.f32.mrb[0].mxu0
    %701 = vmatprep.mubr.f32.mxu0 0.0
    %702 = vmatmul.mubr.f32.gmra.mrb[0].mxu0 %v606
    %v703 = vpop.f32.mrb[0].mxu0
    %v704 = vadd.f32 %v596, %v703
    %v705 = vpop.f32.mrb[0].mxu0
    %706 = vmatprep.mubr.f32.mxu0 0.0
    %707 = vmatmul.mubr.f32.gmra.mrb[0].mxu0 %v609
    %v708 = vpop.f32.mrb[0].mxu0
    %v709 = vadd.f32 %v596, %v708
    %v710 = vpop.f32.mrb[0].mxu0
    %711 = vmatprep.mubr.f32.mxu0 0.0
    %712 = vmatmul.mubr.f32.gmra.mrb[0].mxu0 %v612
    %v713 = vpop.f32.mrb[0].mxu0
    %v714 = vadd.f32 %v596, %v713
    %v715 = vpop.f32.mrb[0].mxu0
    %716 = vmatprep.mubr.f32.mxu0 0.0
    %717 = vmatmul.mubr.f32.gmra.mrb[0].mxu0 %v615
    %v718 = vpop.f32.mrb[0].mxu0
    %v719 = vadd.f32 %v596, %v718
    %v720 = vpop.f32.mrb[0].mxu0
    %721 = vmatprep.mubr.f32.mxu0 0.0
    %722 = vmatmul.mubr.f32.gmra.mrb[0].mxu0 %v618
    %v723 = vpop.f32.mrb[0].mxu0
    %v724 = vadd.f32 %v596, %v723
    %v725 = vpop.f32.mrb[0].mxu0
    %726 = vmatprep.mubr.f32.mxu0 0.0
    %727 = vmatmul.mubr.f32.gmra.mrb[0].mxu0 %v621
    %v728 = vpop.f32.mrb[0].mxu0
    %v729 = vadd.f32 %v596, %v728
    %v730 = vpop.f32.mrb[0].mxu0
    %731 = vdwg.mxu0
    %v732 = vmax.f32 %v694, 0.0
    %v733 = vmax.f32 %v699, 0.0
    %v734 = vmax.f32 %v704, 0.0
    %v735 = vmax.f32 %v709, 0.0
    %v736 = vmax.f32 %v714, 0.0
    %v737 = vmax.f32 %v719, 0.0
    %v738 = vmax.f32 %v724, 0.0
    %v739 = vmax.f32 %v729, 0.0
    %v740 = vld [vmem:[%s25] sm:$0x1]
    %742 = vset.pattern.permute.xlu0 0
    %743 = vperm.xlu0 %742, %v147
    %v744 = vpop.permute.xlu0 %743
    %747 = vset.pattern.permute.xlu0 0
    %748 = vperm.xlu0 %747, %v148
    %v749 = vpop.permute.xlu0 %748
    %752 = vset.pattern.permute.xlu0 0
    %753 = vperm.xlu0 %752, %v149
    %v754 = vpop.permute.xlu0 %753
    %757 = vset.pattern.permute.xlu0 0
    %758 = vperm.xlu0 %757, %v150
    %v759 = vpop.permute.xlu0 %758
    %762 = vset.pattern.permute.xlu0 0
    %763 = vperm.xlu0 %762, %v151
    %v764 = vpop.permute.xlu0 %763
    %767 = vset.pattern.permute.xlu0 0
    %768 = vperm.xlu0 %767, %v152
    %v769 = vpop.permute.xlu0 %768
    %772 = vset.pattern.permute.xlu0 0
    %773 = vperm.xlu0 %772, %v153
    %v774 = vpop.permute.xlu0 %773
    %777 = vset.pattern.permute.xlu0 0
    %778 = vperm.xlu0 %777, %v154
    %v779 = vpop.permute.xlu0 %778
    %v782 = vlaneseq
    %v783 = vshrl.u32 %v782, 7
    %v784 = vsub.s32 0, %v783
    %v785 = vrot.slane %v740, %v784
    %v787 = vmul.f32 %v744, %v785
    %v788 = vmul.f32 %v749, %v785
    %v789 = vmul.f32 %v754, %v785
    %v790 = vmul.f32 %v759, %v785
    %v791 = vmul.f32 %v764, %v785
    %v792 = vmul.f32 %v769, %v785
    %v793 = vmul.f32 %v774, %v785
    %v794 = vmul.f32 %v779, %v785
    %v795 = vld [vmem:[%s27] sm:$0x1]
    %v797 = vlaneseq
    %v798 = vshrl.u32 %v797, 7
    %v799 = vsub.s32 0, %v798
    %v800 = vrot.slane %v795, %v799
    %v802 = vadd.f32 %v787, %v800
    %v803 = vadd.f32 %v788, %v800
    %v804 = vadd.f32 %v789, %v800
    %v805 = vadd.f32 %v790, %v800
    %v806 = vadd.f32 %v791, %v800
    %v807 = vadd.f32 %v792, %v800
    %v808 = vadd.f32 %v793, %v800
    %v809 = vadd.f32 %v794, %v800
    %v810 = vmax.f32 %v802, 0.0
    %v811 = vmax.f32 %v803, 0.0
    %v812 = vmax.f32 %v804, 0.0
    %v813 = vmax.f32 %v805, 0.0
    %v814 = vmax.f32 %v806, 0.0
    %v815 = vmax.f32 %v807, 0.0
    %v816 = vmax.f32 %v808, 0.0
    %v817 = vmax.f32 %v809, 0.0
    %v818 = vld [vmem:[%s29] sm:$0xff]
    %v819 = vld [vmem:[%s29 + $0x8] sm:$0xff]
    %v820 = vld [vmem:[%s29 + $0x10] sm:$0xff]
    %v821 = vld [vmem:[%s29 + $0x18] sm:$0xff]
    %v822 = vld [vmem:[%s29 + $0x20] sm:$0xff]
    %v823 = vld [vmem:[%s29 + $0x28] sm:$0xff]
    %v824 = vld [vmem:[%s31] sm:$0xff]
    %v825 = vld [vmem:[%s31 + $0x8] sm:$0xff]
    %v826 = vld [vmem:[%s31 + $0x10] sm:$0xff]
    %v827 = vld [vmem:[%s31 + $0x18] sm:$0xff]
    %v828 = vld [vmem:[%s31 + $0x20] sm:$0xff]
    %v829 = vld [vmem:[%s31 + $0x28] sm:$0xff]
    %v831 = vsel %vm180, %v810, 0
    %v834 = vsel %vm180, %v811, 0
    %v837 = vsel %vm180, %v812, 0
    %v840 = vsel %vm180, %v813, 0
    %v843 = vsel %vm180, %v814, 0
    %v846 = vsel %vm180, %v815, 0
    %v849 = vsel %vm180, %v816, 0
    %v852 = vsel %vm180, %v817, 0
    %854 = vmatprep.subr.mxu0 %v825
    %855 = vmatpush1.msra.mxu0 %v824
    %856 = vmatprep.subr.mxu0 %v828
    %857 = vmatpush1.msra.mxu0 %v827
    %858 = vmatprep.subr.mxu0 0.0
    %859 = vmatpush1.msra.mxu0 0.0
    %860 = vmatprep.subr.mxu0 0.0
    %861 = vmatpush1.msra.mxu0 0.0
    %862 = vmatprep.subr.mxu0 0.0
    %863 = vmatpush1.msra.mxu0 0.0
    %864 = vmatprep.subr.mxu0 0.0
    %865 = vmatpush1.msra.mxu0 0.0
    %866 = vmatprep.subr.mxu0 0.0
    %867 = vmatpush1.msra.mxu0 0.0
    %868 = vmatprep.subr.mxu0 0.0
    %869 = vmatpush1.msra.mxu0 0.0
    %870 = vmatprep.subr.mxu0 0.0
    %871 = vmatpush1.msra.mxu0 0.0
    %872 = vmatprep.subr.mxu0 0.0
    %873 = vmatpush1.msra.mxu0 0.0
    %874 = vmatprep.subr.mxu0 0.0
    %875 = vmatpush1.msra.mxu0 0.0
    %876 = vmatprep.subr.mxu0 0.0
    %877 = vmatpush1.msra.mxu0 0.0
    %878 = vmatprep.subr.mxu0 0.0
    %879 = vmatpush1.msra.mxu0 0.0
    %880 = vmatprep.subr.mxu0 0.0
    %881 = vmatpush1.msra.mxu0 0.0
    %882 = vmatprep.subr.mxu0 0.0
    %883 = vmatpush1.msra.mxu0 0.0
    %884 = vmatprep.subr.mxu0 0.0
    %885 = vmatpush1.msra.mxu0 0.0
    %886 = vmatprep.subr.mxu0 0.0
    %887 = vmatpush1.msra.mxu0 0.0
    %888 = vmatprep.subr.mxu0 0.0
    %889 = vmatpush1.msra.mxu0 0.0
    %890 = vmatprep.subr.mxu0 0.0
    %891 = vmatpush1.msra.mxu0 0.0
    %892 = vmatprep.subr.mxu0 0.0
    %893 = vmatpush1.msra.mxu0 0.0
    %894 = vmatprep.subr.mxu0 0.0
    %895 = vmatpush1.msra.mxu0 0.0
    %896 = vmatprep.subr.mxu0 0.0
    %897 = vmatpush1.msra.mxu0 0.0
    %898 = vmatprep.subr.mxu0 0.0
    %899 = vmatpush1.msra.mxu0 0.0
    %900 = vmatprep.subr.mxu0 0.0
    %901 = vmatpush1.msra.mxu0 0.0
    %902 = vmatprep.subr.mxu0 0.0
    %903 = vmatpush1.msra.mxu0 0.0
    %904 = vmatprep.subr.mxu0 0.0
    %905 = vmatpush1.msra.mxu0 0.0
    %906 = vmatprep.subr.mxu0 0.0
    %907 = vmatpush1.msra.mxu0 0.0
    %908 = vmatprep.subr.mxu0 0.0
    %909 = vmatpush1.msra.mxu0 0.0
    %910 = vmatprep.subr.mxu0 0.0
    %911 = vmatpush1.msra.mxu0 0.0
    %912 = vmatprep.subr.mxu0 0.0
    %913 = vmatpush1.msra.mxu0 0.0
    %914 = vmatprep.subr.mxu0 0.0
    %915 = vmatpush1.msra.mxu0 0.0
    %916 = vmatprep.subr.mxu0 0.0
    %917 = vmatpush1.msra.mxu0 0.0
    %918 = vmatprep.mubr.f32.mxu0 0.0
    %919 = vmatmul.mubr.f32.gmra.mrb[0].mxu0 %v831
    %v920 = vpop.f32.mrb[0].mxu0
    %v921 = vadd.f32 0.0, %v920
    %v922 = vpop.f32.mrb[0].mxu0
    %v923 = vadd.f32 0.0, %v922
    %924 = vmatprep.mubr.f32.mxu0 0.0
    %925 = vmatmul.mubr.f32.gmra.mrb[0].mxu0 %v834
    %v926 = vpop.f32.mrb[0].mxu0
    %v927 = vadd.f32 0.0, %v926
    %v928 = vpop.f32.mrb[0].mxu0
    %v929 = vadd.f32 0.0, %v928
    %930 = vmatprep.mubr.f32.mxu0 0.0
    %931 = vmatmul.mubr.f32.gmra.mrb[0].mxu0 %v837
    %v932 = vpop.f32.mrb[0].mxu0
    %v933 = vadd.f32 0.0, %v932
    %v934 = vpop.f32.mrb[0].mxu0
    %v935 = vadd.f32 0.0, %v934
    %936 = vmatprep.mubr.f32.mxu0 0.0
    %937 = vmatmul.mubr.f32.gmra.mrb[0].mxu0 %v840
    %v938 = vpop.f32.mrb[0].mxu0
    %v939 = vadd.f32 0.0, %v938
    %v940 = vpop.f32.mrb[0].mxu0
    %v941 = vadd.f32 0.0, %v940
    %942 = vmatprep.mubr.f32.mxu0 0.0
    %943 = vmatmul.mubr.f32.gmra.mrb[0].mxu0 %v843
    %v944 = vpop.f32.mrb[0].mxu0
    %v945 = vadd.f32 0.0, %v944
    %v946 = vpop.f32.mrb[0].mxu0
    %v947 = vadd.f32 0.0, %v946
    %948 = vmatprep.mubr.f32.mxu0 0.0
    %949 = vmatmul.mubr.f32.gmra.mrb[0].mxu0 %v846
    %v950 = vpop.f32.mrb[0].mxu0
    %v951 = vadd.f32 0.0, %v950
    %v952 = vpop.f32.mrb[0].mxu0
    %v953 = vadd.f32 0.0, %v952
    %954 = vmatprep.mubr.f32.mxu0 0.0
    %955 = vmatmul.mubr.f32.gmra.mrb[0].mxu0 %v849
    %v956 = vpop.f32.mrb[0].mxu0
    %v957 = vadd.f32 0.0, %v956
    %v958 = vpop.f32.mrb[0].mxu0
    %v959 = vadd.f32 0.0, %v958
    %960 = vmatprep.mubr.f32.mxu0 0.0
    %961 = vmatmul.mubr.f32.gmra.mrb[0].mxu0 %v852
    %v962 = vpop.f32.mrb[0].mxu0
    %v963 = vadd.f32 0.0, %v962
    %v964 = vpop.f32.mrb[0].mxu0
    %v965 = vadd.f32 0.0, %v964
    %966 = vdwg.mxu0
    %967 = vmatprep.subr.mxu0 0.0
    %968 = vmatpush1.msra.mxu0 %v826
    %969 = vmatprep.subr.mxu0 0.0
    %970 = vmatpush1.msra.mxu0 %v829
    %971 = vmatprep.subr.mxu0 0.0
    %972 = vmatpush1.msra.mxu0 0.0
    %973 = vmatprep.subr.mxu0 0.0
    %974 = vmatpush1.msra.mxu0 0.0
    %975 = vmatprep.subr.mxu0 0.0
    %976 = vmatpush1.msra.mxu0 0.0
    %977 = vmatprep.subr.mxu0 0.0
    %978 = vmatpush1.msra.mxu0 0.0
    %979 = vmatprep.subr.mxu0 0.0
    %980 = vmatpush1.msra.mxu0 0.0
    %981 = vmatprep.subr.mxu0 0.0
    %982 = vmatpush1.msra.mxu0 0.0
    %983 = vmatprep.subr.mxu0 0.0
    %984 = vmatpush1.msra.mxu0 0.0
    %985 = vmatprep.subr.mxu0 0.0
    %986 = vmatpush1.msra.mxu0 0.0
    %987 = vmatprep.subr.mxu0 0.0
    %988 = vmatpush1.msra.mxu0 0.0
    %989 = vmatprep.subr.mxu0 0.0
    %990 = vmatpush1.msra.mxu0 0.0
    %991 = vmatprep.subr.mxu0 0.0
    %992 = vmatpush1.msra.mxu0 0.0
    %993 = vmatprep.subr.mxu0 0.0
    %994 = vmatpush1.msra.mxu0 0.0
    %995 = vmatprep.subr.mxu0 0.0
    %996 = vmatpush1.msra.mxu0 0.0
    %997 = vmatprep.subr.mxu0 0.0
    %998 = vmatpush1.msra.mxu0 0.0
    %999 = vmatprep.subr.mxu0 0.0
    %1000 = vmatpush1.msra.mxu0 0.0
    %1001 = vmatprep.subr.mxu0 0.0
    %1002 = vmatpush1.msra.mxu0 0.0
    %1003 = vmatprep.subr.mxu0 0.0
    %1004 = vmatpush1.msra.mxu0 0.0
    %1005 = vmatprep.subr.mxu0 0.0
    %1006 = vmatpush1.msra.mxu0 0.0
    %1007 = vmatprep.subr.mxu0 0.0
    %1008 = vmatpush1.msra.mxu0 0.0
    %1009 = vmatprep.subr.mxu0 0.0
    %1010 = vmatpush1.msra.mxu0 0.0
    %1011 = vmatprep.subr.mxu0 0.0
    %1012 = vmatpush1.msra.mxu0 0.0
    %1013 = vmatprep.subr.mxu0 0.0
    %1014 = vmatpush1.msra.mxu0 0.0
    %1015 = vmatprep.subr.mxu0 0.0
    %1016 = vmatpush1.msra.mxu0 0.0
    %1017 = vmatprep.subr.mxu0 0.0
    %1018 = vmatpush1.msra.mxu0 0.0
    %1019 = vmatprep.subr.mxu0 0.0
    %1020 = vmatpush1.msra.mxu0 0.0
    %1021 = vmatprep.subr.mxu0 0.0
    %1022 = vmatpush1.msra.mxu0 0.0
    %1023 = vmatprep.subr.mxu0 0.0
    %1024 = vmatpush1.msra.mxu0 0.0
    %1025 = vmatprep.subr.mxu0 0.0
    %1026 = vmatpush1.msra.mxu0 0.0
    %1027 = vmatprep.subr.mxu0 0.0
    %1028 = vmatpush1.msra.mxu0 0.0
    %1029 = vmatprep.subr.mxu0 0.0
    %1030 = vmatpush1.msra.mxu0 0.0
    %1031 = vmatprep.mubr.f32.mxu0 0.0
    %1032 = vmatmul.mubr.f32.gmra.mrb[0].mxu0 %v831
    %v1033 = vpop.f32.mrb[0].mxu0
    %v1034 = vadd.f32 0.0, %v1033
    %v1035 = vpop.f32.mrb[0].mxu0
    %1036 = vmatprep.mubr.f32.mxu0 0.0
    %1037 = vmatmul.mubr.f32.gmra.mrb[0].mxu0 %v834
    %v1038 = vpop.f32.mrb[0].mxu0
    %v1039 = vadd.f32 0.0, %v1038
    %v1040 = vpop.f32.mrb[0].mxu0
    %1041 = vmatprep.mubr.f32.mxu0 0.0
    %1042 = vmatmul.mubr.f32.gmra.mrb[0].mxu0 %v837
    %v1043 = vpop.f32.mrb[0].mxu0
    %v1044 = vadd.f32 0.0, %v1043
    %v1045 = vpop.f32.mrb[0].mxu0
    %1046 = vmatprep.mubr.f32.mxu0 0.0
    %1047 = vmatmul.mubr.f32.gmra.mrb[0].mxu0 %v840
    %v1048 = vpop.f32.mrb[0].mxu0
    %v1049 = vadd.f32 0.0, %v1048
    %v1050 = vpop.f32.mrb[0].mxu0
    %1051 = vmatprep.mubr.f32.mxu0 0.0
    %1052 = vmatmul.mubr.f32.gmra.mrb[0].mxu0 %v843
    %v1053 = vpop.f32.mrb[0].mxu0
    %v1054 = vadd.f32 0.0, %v1053
    %v1055 = vpop.f32.mrb[0].mxu0
    %1056 = vmatprep.mubr.f32.mxu0 0.0
    %1057 = vmatmul.mubr.f32.gmra.mrb[0].mxu0 %v846
    %v1058 = vpop.f32.mrb[0].mxu0
    %v1059 = vadd.f32 0.0, %v1058
    %v1060 = vpop.f32.mrb[0].mxu0
    %1061 = vmatprep.mubr.f32.mxu0 0.0
    %1062 = vmatmul.mubr.f32.gmra.mrb[0].mxu0 %v849
    %v1063 = vpop.f32.mrb[0].mxu0
    %v1064 = vadd.f32 0.0, %v1063
    %v1065 = vpop.f32.mrb[0].mxu0
    %1066 = vmatprep.mubr.f32.mxu0 0.0
    %1067 = vmatmul.mubr.f32.gmra.mrb[0].mxu0 %v852
    %v1068 = vpop.f32.mrb[0].mxu0
    %v1069 = vadd.f32 0.0, %v1068
    %v1070 = vpop.f32.mrb[0].mxu0
    %1071 = vdwg.mxu0
    %v1073 = vsel %vm180, %v732, 0
    %v1076 = vsel %vm180, %v733, 0
    %v1079 = vsel %vm180, %v734, 0
    %v1082 = vsel %vm180, %v735, 0
    %v1085 = vsel %vm180, %v736, 0
    %v1088 = vsel %vm180, %v737, 0
    %v1091 = vsel %vm180, %v738, 0
    %v1094 = vsel %vm180, %v739, 0
    %1096 = vmatprep.subr.mxu0 %v819
    %1097 = vmatpush1.msra.mxu0 %v818
    %1098 = vmatprep.subr.mxu0 %v822
    %1099 = vmatpush1.msra.mxu0 %v821
    %1100 = vmatprep.subr.mxu0 0.0
    %1101 = vmatpush1.msra.mxu0 0.0
    %1102 = vmatprep.subr.mxu0 0.0
    %1103 = vmatpush1.msra.mxu0 0.0
    %1104 = vmatprep.subr.mxu0 0.0
    %1105 = vmatpush1.msra.mxu0 0.0
    %1106 = vmatprep.subr.mxu0 0.0
    %1107 = vmatpush1.msra.mxu0 0.0
    %1108 = vmatprep.subr.mxu0 0.0
    %1109 = vmatpush1.msra.mxu0 0.0
    %1110 = vmatprep.subr.mxu0 0.0
    %1111 = vmatpush1.msra.mxu0 0.0
    %1112 = vmatprep.subr.mxu0 0.0
    %1113 = vmatpush1.msra.mxu0 0.0
    %1114 = vmatprep.subr.mxu0 0.0
    %1115 = vmatpush1.msra.mxu0 0.0
    %1116 = vmatprep.subr.mxu0 0.0
    %1117 = vmatpush1.msra.mxu0 0.0
    %1118 = vmatprep.subr.mxu0 0.0
    %1119 = vmatpush1.msra.mxu0 0.0
    %1120 = vmatprep.subr.mxu0 0.0
    %1121 = vmatpush1.msra.mxu0 0.0
    %1122 = vmatprep.subr.mxu0 0.0
    %1123 = vmatpush1.msra.mxu0 0.0
    %1124 = vmatprep.subr.mxu0 0.0
    %1125 = vmatpush1.msra.mxu0 0.0
    %1126 = vmatprep.subr.mxu0 0.0
    %1127 = vmatpush1.msra.mxu0 0.0
    %1128 = vmatprep.subr.mxu0 0.0
    %1129 = vmatpush1.msra.mxu0 0.0
    %1130 = vmatprep.subr.mxu0 0.0
    %1131 = vmatpush1.msra.mxu0 0.0
    %1132 = vmatprep.subr.mxu0 0.0
    %1133 = vmatpush1.msra.mxu0 0.0
    %1134 = vmatprep.subr.mxu0 0.0
    %1135 = vmatpush1.msra.mxu0 0.0
    %1136 = vmatprep.subr.mxu0 0.0
    %1137 = vmatpush1.msra.mxu0 0.0
    %1138 = vmatprep.subr.mxu0 0.0
    %1139 = vmatpush1.msra.mxu0 0.0
    %1140 = vmatprep.subr.mxu0 0.0
    %1141 = vmatpush1.msra.mxu0 0.0
    %1142 = vmatprep.subr.mxu0 0.0
    %1143 = vmatpush1.msra.mxu0 0.0
    %1144 = vmatprep.subr.mxu0 0.0
    %1145 = vmatpush1.msra.mxu0 0.0
    %1146 = vmatprep.subr.mxu0 0.0
    %1147 = vmatpush1.msra.mxu0 0.0
    %1148 = vmatprep.subr.mxu0 0.0
    %1149 = vmatpush1.msra.mxu0 0.0
    %1150 = vmatprep.subr.mxu0 0.0
    %1151 = vmatpush1.msra.mxu0 0.0
    %1152 = vmatprep.subr.mxu0 0.0
    %1153 = vmatpush1.msra.mxu0 0.0
    %1154 = vmatprep.subr.mxu0 0.0
    %1155 = vmatpush1.msra.mxu0 0.0
    %1156 = vmatprep.subr.mxu0 0.0
    %1157 = vmatpush1.msra.mxu0 0.0
    %1158 = vmatprep.subr.mxu0 0.0
    %1159 = vmatpush1.msra.mxu0 0.0
    %1160 = vmatprep.mubr.f32.mxu0 0.0
    %1161 = vmatmul.mubr.f32.gmra.mrb[0].mxu0 %v1073
    %v1162 = vpop.f32.mrb[0].mxu0
    %v1163 = vadd.f32 %v921, %v1162
    %v1164 = vpop.f32.mrb[0].mxu0
    %v1165 = vadd.f32 %v923, %v1164
    %1166 = vmatprep.mubr.f32.mxu0 0.0
    %1167 = vmatmul.mubr.f32.gmra.mrb[0].mxu0 %v1076
    %v1168 = vpop.f32.mrb[0].mxu0
    %v1169 = vadd.f32 %v927, %v1168
    %v1170 = vpop.f32.mrb[0].mxu0
    %v1171 = vadd.f32 %v929, %v1170
    %1172 = vmatprep.mubr.f32.mxu0 0.0
    %1173 = vmatmul.mubr.f32.gmra.mrb[0].mxu0 %v1079
    %v1174 = vpop.f32.mrb[0].mxu0
    %v1175 = vadd.f32 %v933, %v1174
    %v1176 = vpop.f32.mrb[0].mxu0
    %v1177 = vadd.f32 %v935, %v1176
    %1178 = vmatprep.mubr.f32.mxu0 0.0
    %1179 = vmatmul.mubr.f32.gmra.mrb[0].mxu0 %v1082
    %v1180 = vpop.f32.mrb[0].mxu0
    %v1181 = vadd.f32 %v939, %v1180
    %v1182 = vpop.f32.mrb[0].mxu0
    %v1183 = vadd.f32 %v941, %v1182
    %1184 = vmatprep.mubr.f32.mxu0 0.0
    %1185 = vmatmul.mubr.f32.gmra.mrb[0].mxu0 %v1085
    %v1186 = vpop.f32.mrb[0].mxu0
    %v1187 = vadd.f32 %v945, %v1186
    %v1188 = vpop.f32.mrb[0].mxu0
    %v1189 = vadd.f32 %v947, %v1188
    %1190 = vmatprep.mubr.f32.mxu0 0.0
    %1191 = vmatmul.mubr.f32.gmra.mrb[0].mxu0 %v1088
    %v1192 = vpop.f32.mrb[0].mxu0
    %v1193 = vadd.f32 %v951, %v1192
    %v1194 = vpop.f32.mrb[0].mxu0
    %v1195 = vadd.f32 %v953, %v1194
    %1196 = vmatprep.mubr.f32.mxu0 0.0
    %1197 = vmatmul.mubr.f32.gmra.mrb[0].mxu0 %v1091
    %v1198 = vpop.f32.mrb[0].mxu0
    %v1199 = vadd.f32 %v957, %v1198
    %v1200 = vpop.f32.mrb[0].mxu0
    %v1201 = vadd.f32 %v959, %v1200
    %1202 = vmatprep.mubr.f32.mxu0 0.0
    %1203 = vmatmul.mubr.f32.gmra.mrb[0].mxu0 %v1094
    %v1204 = vpop.f32.mrb[0].mxu0
    %v1205 = vadd.f32 %v963, %v1204
    %v1206 = vpop.f32.mrb[0].mxu0
    %v1207 = vadd.f32 %v965, %v1206
    %1208 = vdwg.mxu0
    %1209 = vmatprep.subr.mxu0 0.0
    %1210 = vmatpush1.msra.mxu0 %v820
    %1211 = vmatprep.subr.mxu0 0.0
    %1212 = vmatpush1.msra.mxu0 %v823
    %1213 = vmatprep.subr.mxu0 0.0
    %1214 = vmatpush1.msra.mxu0 0.0
    %1215 = vmatprep.subr.mxu0 0.0
    %1216 = vmatpush1.msra.mxu0 0.0
    %1217 = vmatprep.subr.mxu0 0.0
    %1218 = vmatpush1.msra.mxu0 0.0
    %1219 = vmatprep.subr.mxu0 0.0
    %1220 = vmatpush1.msra.mxu0 0.0
    %1221 = vmatprep.subr.mxu0 0.0
    %1222 = vmatpush1.msra.mxu0 0.0
    %1223 = vmatprep.subr.mxu0 0.0
    %1224 = vmatpush1.msra.mxu0 0.0
    %1225 = vmatprep.subr.mxu0 0.0
    %1226 = vmatpush1.msra.mxu0 0.0
    %1227 = vmatprep.subr.mxu0 0.0
    %1228 = vmatpush1.msra.mxu0 0.0
    %1229 = vmatprep.subr.mxu0 0.0
    %1230 = vmatpush1.msra.mxu0 0.0
    %1231 = vmatprep.subr.mxu0 0.0
    %1232 = vmatpush1.msra.mxu0 0.0
    %1233 = vmatprep.subr.mxu0 0.0
    %1234 = vmatpush1.msra.mxu0 0.0
    %1235 = vmatprep.subr.mxu0 0.0
    %1236 = vmatpush1.msra.mxu0 0.0
    %1237 = vmatprep.subr.mxu0 0.0
    %1238 = vmatpush1.msra.mxu0 0.0
    %1239 = vmatprep.subr.mxu0 0.0
    %1240 = vmatpush1.msra.mxu0 0.0
    %1241 = vmatprep.subr.mxu0 0.0
    %1242 = vmatpush1.msra.mxu0 0.0
    %1243 = vmatprep.subr.mxu0 0.0
    %1244 = vmatpush1.msra.mxu0 0.0
    %1245 = vmatprep.subr.mxu0 0.0
    %1246 = vmatpush1.msra.mxu0 0.0
    %1247 = vmatprep.subr.mxu0 0.0
    %1248 = vmatpush1.msra.mxu0 0.0
    %1249 = vmatprep.subr.mxu0 0.0
    %1250 = vmatpush1.msra.mxu0 0.0
    %1251 = vmatprep.subr.mxu0 0.0
    %1252 = vmatpush1.msra.mxu0 0.0
    %1253 = vmatprep.subr.mxu0 0.0
    %1254 = vmatpush1.msra.mxu0 0.0
    %1255 = vmatprep.subr.mxu0 0.0
    %1256 = vmatpush1.msra.mxu0 0.0
    %1257 = vmatprep.subr.mxu0 0.0
    %1258 = vmatpush1.msra.mxu0 0.0
    %1259 = vmatprep.subr.mxu0 0.0
    %1260 = vmatpush1.msra.mxu0 0.0
    %1261 = vmatprep.subr.mxu0 0.0
    %1262 = vmatpush1.msra.mxu0 0.0
    %1263 = vmatprep.subr.mxu0 0.0
    %1264 = vmatpush1.msra.mxu0 0.0
    %1265 = vmatprep.subr.mxu0 0.0
    %1266 = vmatpush1.msra.mxu0 0.0
    %1267 = vmatprep.subr.mxu0 0.0
    %1268 = vmatpush1.msra.mxu0 0.0
    %1269 = vmatprep.subr.mxu0 0.0
    %1270 = vmatpush1.msra.mxu0 0.0
    %1271 = vmatprep.subr.mxu0 0.0
    %1272 = vmatpush1.msra.mxu0 0.0
    %1273 = vmatprep.mubr.f32.mxu0 0.0
    %1274 = vmatmul.mubr.f32.gmra.mrb[0].mxu0 %v1073
    %v1275 = vpop.f32.mrb[0].mxu0
    %v1276 = vadd.f32 %v1034, %v1275
    %v1277 = vpop.f32.mrb[0].mxu0
    %1278 = vmatprep.mubr.f32.mxu0 0.0
    %1279 = vmatmul.mubr.f32.gmra.mrb[0].mxu0 %v1076
    %v1280 = vpop.f32.mrb[0].mxu0
    %v1281 = vadd.f32 %v1039, %v1280
    %v1282 = vpop.f32.mrb[0].mxu0
    %1283 = vmatprep.mubr.f32.mxu0 0.0
    %1284 = vmatmul.mubr.f32.gmra.mrb[0].mxu0 %v1079
    %v1285 = vpop.f32.mrb[0].mxu0
    %v1286 = vadd.f32 %v1044, %v1285
    %v1287 = vpop.f32.mrb[0].mxu0
    %1288 = vmatprep.mubr.f32.mxu0 0.0
    %1289 = vmatmul.mubr.f32.gmra.mrb[0].mxu0 %v1082
    %v1290 = vpop.f32.mrb[0].mxu0
    %v1291 = vadd.f32 %v1049, %v1290
    %v1292 = vpop.f32.mrb[0].mxu0
    %1293 = vmatprep.mubr.f32.mxu0 0.0
    %1294 = vmatmul.mubr.f32.gmra.mrb[0].mxu0 %v1085
    %v1295 = vpop.f32.mrb[0].mxu0
    %v1296 = vadd.f32 %v1054, %v1295
    %v1297 = vpop.f32.mrb[0].mxu0
    %1298 = vmatprep.mubr.f32.mxu0 0.0
    %1299 = vmatmul.mubr.f32.gmra.mrb[0].mxu0 %v1088
    %v1300 = vpop.f32.mrb[0].mxu0
    %v1301 = vadd.f32 %v1059, %v1300
    %v1302 = vpop.f32.mrb[0].mxu0
    %1303 = vmatprep.mubr.f32.mxu0 0.0
    %1304 = vmatmul.mubr.f32.gmra.mrb[0].mxu0 %v1091
    %v1305 = vpop.f32.mrb[0].mxu0
    %v1306 = vadd.f32 %v1064, %v1305
    %v1307 = vpop.f32.mrb[0].mxu0
    %1308 = vmatprep.mubr.f32.mxu0 0.0
    %1309 = vmatmul.mubr.f32.gmra.mrb[0].mxu0 %v1094
    %v1310 = vpop.f32.mrb[0].mxu0
    %v1311 = vadd.f32 %v1069, %v1310
    %v1312 = vpop.f32.mrb[0].mxu0
    %1313 = vdwg.mxu0
    %v1314 = vld [vmem:[%s33] sm:$0xff]
    %v1315 = vld [vmem:[%s33 + $0x8] sm:$0xff]
    %v1316 = vld [vmem:[%s33 + $0x10] sm:$0xff]
    %v1317 = vld [vmem:[%s33 + $0x18] sm:$0xff]
    %v1318 = vld [vmem:[%s33 + $0x20] sm:$0xff]
    %v1319 = vld [vmem:[%s33 + $0x28] sm:$0xff]
    %v1320 = vld [vmem:[%s33 + $0x30] sm:$0xff]
    %v1321 = vld [vmem:[%s33 + $0x38] sm:$0xff]
    %v1322 = vld [vmem:[%s33 + $0x40] sm:$0xff]
    %v1323 = vld [vmem:[%s33 + $0x48] sm:$0xff]
    %v1324 = vld [vmem:[%s33 + $0x50] sm:$0xff]
    %v1325 = vld [vmem:[%s33 + $0x58] sm:$0xff]
    %vm1326 = vcmask 261120
    %v1328 = vsel %vm1326, %v446, 0
    %v1331 = vsel %vm1326, %v447, 0
    %v1334 = vsel %vm1326, %v448, 0
    %v1337 = vsel %vm1326, %v449, 0
    %v1340 = vsel %vm1326, %v450, 0
    %v1343 = vsel %vm1326, %v451, 0
    %v1346 = vsel %vm1326, %v452, 0
    %v1349 = vsel %vm1326, %v453, 0
    %1351 = vmatprep.subr.mxu0 %v1315
    %1352 = vmatpush1.msra.mxu0 %v1314
    %1353 = vmatprep.subr.mxu0 %v1318
    %1354 = vmatpush1.msra.mxu0 %v1317
    %1355 = vmatprep.subr.mxu0 %v1321
    %1356 = vmatpush1.msra.mxu0 %v1320
    %1357 = vmatprep.subr.mxu0 %v1324
    %1358 = vmatpush1.msra.mxu0 %v1323
    %1359 = vmatprep.subr.mxu0 0.0
    %1360 = vmatpush1.msra.mxu0 0.0
    %1361 = vmatprep.subr.mxu0 0.0
    %1362 = vmatpush1.msra.mxu0 0.0
    %1363 = vmatprep.subr.mxu0 0.0
    %1364 = vmatpush1.msra.mxu0 0.0
    %1365 = vmatprep.subr.mxu0 0.0
    %1366 = vmatpush1.msra.mxu0 0.0
    %1367 = vmatprep.subr.mxu0 0.0
    %1368 = vmatpush1.msra.mxu0 0.0
    %1369 = vmatprep.subr.mxu0 0.0
    %1370 = vmatpush1.msra.mxu0 0.0
    %1371 = vmatprep.subr.mxu0 0.0
    %1372 = vmatpush1.msra.mxu0 0.0
    %1373 = vmatprep.subr.mxu0 0.0
    %1374 = vmatpush1.msra.mxu0 0.0
    %1375 = vmatprep.subr.mxu0 0.0
    %1376 = vmatpush1.msra.mxu0 0.0
    %1377 = vmatprep.subr.mxu0 0.0
    %1378 = vmatpush1.msra.mxu0 0.0
    %1379 = vmatprep.subr.mxu0 0.0
    %1380 = vmatpush1.msra.mxu0 0.0
    %1381 = vmatprep.subr.mxu0 0.0
    %1382 = vmatpush1.msra.mxu0 0.0
    %1383 = vmatprep.subr.mxu0 0.0
    %1384 = vmatpush1.msra.mxu0 0.0
    %1385 = vmatprep.subr.mxu0 0.0
    %1386 = vmatpush1.msra.mxu0 0.0
    %1387 = vmatprep.subr.mxu0 0.0
    %1388 = vmatpush1.msra.mxu0 0.0
    %1389 = vmatprep.subr.mxu0 0.0
    %1390 = vmatpush1.msra.mxu0 0.0
    %1391 = vmatprep.subr.mxu0 0.0
    %1392 = vmatpush1.msra.mxu0 0.0
    %1393 = vmatprep.subr.mxu0 0.0
    %1394 = vmatpush1.msra.mxu0 0.0
    %1395 = vmatprep.subr.mxu0 0.0
    %1396 = vmatpush1.msra.mxu0 0.0
    %1397 = vmatprep.subr.mxu0 0.0
    %1398 = vmatpush1.msra.mxu0 0.0
    %1399 = vmatprep.subr.mxu0 0.0
    %1400 = vmatpush1.msra.mxu0 0.0
    %1401 = vmatprep.subr.mxu0 0.0
    %1402 = vmatpush1.msra.mxu0 0.0
    %1403 = vmatprep.subr.mxu0 0.0
    %1404 = vmatpush1.msra.mxu0 0.0
    %1405 = vmatprep.subr.mxu0 0.0
    %1406 = vmatpush1.msra.mxu0 0.0
    %1407 = vmatprep.subr.mxu0 0.0
    %1408 = vmatpush1.msra.mxu0 0.0
    %1409 = vmatprep.subr.mxu0 0.0
    %1410 = vmatpush1.msra.mxu0 0.0
    %1411 = vmatprep.subr.mxu0 0.0
    %1412 = vmatpush1.msra.mxu0 0.0
    %1413 = vmatprep.subr.mxu0 0.0
    %1414 = vmatpush1.msra.mxu0 0.0
    %1415 = vmatprep.mubr.f32.mxu0 0.0
    %1416 = vmatmul.mubr.f32.gmra.mrb[0].mxu0 %v1328
    %v1417 = vpop.f32.mrb[0].mxu0
    %v1418 = vadd.f32 0.0, %v1417
    %v1419 = vpop.f32.mrb[0].mxu0
    %v1420 = vadd.f32 0.0, %v1419
    %1421 = vmatprep.mubr.f32.mxu0 0.0
    %1422 = vmatmul.mubr.f32.gmra.mrb[0].mxu0 %v1331
    %v1423 = vpop.f32.mrb[0].mxu0
    %v1424 = vadd.f32 0.0, %v1423
    %v1425 = vpop.f32.mrb[0].mxu0
    %v1426 = vadd.f32 0.0, %v1425
    %1427 = vmatprep.mubr.f32.mxu0 0.0
    %1428 = vmatmul.mubr.f32.gmra.mrb[0].mxu0 %v1334
    %v1429 = vpop.f32.mrb[0].mxu0
    %v1430 = vadd.f32 0.0, %v1429
    %v1431 = vpop.f32.mrb[0].mxu0
    %v1432 = vadd.f32 0.0, %v1431
    %1433 = vmatprep.mubr.f32.mxu0 0.0
    %1434 = vmatmul.mubr.f32.gmra.mrb[0].mxu0 %v1337
    %v1435 = vpop.f32.mrb[0].mxu0
    %v1436 = vadd.f32 0.0, %v1435
    %v1437 = vpop.f32.mrb[0].mxu0
    %v1438 = vadd.f32 0.0, %v1437
    %1439 = vmatprep.mubr.f32.mxu0 0.0
    %1440 = vmatmul.mubr.f32.gmra.mrb[0].mxu0 %v1340
    %v1441 = vpop.f32.mrb[0].mxu0
    %v1442 = vadd.f32 0.0, %v1441
    %v1443 = vpop.f32.mrb[0].mxu0
    %v1444 = vadd.f32 0.0, %v1443
    %1445 = vmatprep.mubr.f32.mxu0 0.0
    %1446 = vmatmul.mubr.f32.gmra.mrb[0].mxu0 %v1343
    %v1447 = vpop.f32.mrb[0].mxu0
    %v1448 = vadd.f32 0.0, %v1447
    %v1449 = vpop.f32.mrb[0].mxu0
    %v1450 = vadd.f32 0.0, %v1449
    %1451 = vmatprep.mubr.f32.mxu0 0.0
    %1452 = vmatmul.mubr.f32.gmra.mrb[0].mxu0 %v1346
    %v1453 = vpop.f32.mrb[0].mxu0
    %v1454 = vadd.f32 0.0, %v1453
    %v1455 = vpop.f32.mrb[0].mxu0
    %v1456 = vadd.f32 0.0, %v1455
    %1457 = vmatprep.mubr.f32.mxu0 0.0
    %1458 = vmatmul.mubr.f32.gmra.mrb[0].mxu0 %v1349
    %v1459 = vpop.f32.mrb[0].mxu0
    %v1460 = vadd.f32 0.0, %v1459
    %v1461 = vpop.f32.mrb[0].mxu0
    %v1462 = vadd.f32 0.0, %v1461
    %1463 = vdwg.mxu0
    %1464 = vmatprep.subr.mxu0 0.0
    %1465 = vmatpush1.msra.mxu0 %v1316
    %1466 = vmatprep.subr.mxu0 0.0
    %1467 = vmatpush1.msra.mxu0 %v1319
    %1468 = vmatprep.subr.mxu0 0.0
    %1469 = vmatpush1.msra.mxu0 %v1322
    %1470 = vmatprep.subr.mxu0 0.0
    %1471 = vmatpush1.msra.mxu0 %v1325
    %1472 = vmatprep.subr.mxu0 0.0
    %1473 = vmatpush1.msra.mxu0 0.0
    %1474 = vmatprep.subr.mxu0 0.0
    %1475 = vmatpush1.msra.mxu0 0.0
    %1476 = vmatprep.subr.mxu0 0.0
    %1477 = vmatpush1.msra.mxu0 0.0
    %1478 = vmatprep.subr.mxu0 0.0
    %1479 = vmatpush1.msra.mxu0 0.0
    %1480 = vmatprep.subr.mxu0 0.0
    %1481 = vmatpush1.msra.mxu0 0.0
    %1482 = vmatprep.subr.mxu0 0.0
    %1483 = vmatpush1.msra.mxu0 0.0
    %1484 = vmatprep.subr.mxu0 0.0
    %1485 = vmatpush1.msra.mxu0 0.0
    %1486 = vmatprep.subr.mxu0 0.0
    %1487 = vmatpush1.msra.mxu0 0.0
    %1488 = vmatprep.subr.mxu0 0.0
    %1489 = vmatpush1.msra.mxu0 0.0
    %1490 = vmatprep.subr.mxu0 0.0
    %1491 = vmatpush1.msra.mxu0 0.0
    %1492 = vmatprep.subr.mxu0 0.0
    %1493 = vmatpush1.msra.mxu0 0.0
    %1494 = vmatprep.subr.mxu0 0.0
    %1495 = vmatpush1.msra.mxu0 0.0
    %1496 = vmatprep.subr.mxu0 0.0
    %1497 = vmatpush1.msra.mxu0 0.0
    %1498 = vmatprep.subr.mxu0 0.0
    %1499 = vmatpush1.msra.mxu0 0.0
    %1500 = vmatprep.subr.mxu0 0.0
    %1501 = vmatpush1.msra.mxu0 0.0
    %1502 = vmatprep.subr.mxu0 0.0
    %1503 = vmatpush1.msra.mxu0 0.0
    %1504 = vmatprep.subr.mxu0 0.0
    %1505 = vmatpush1.msra.mxu0 0.0
    %1506 = vmatprep.subr.mxu0 0.0
    %1507 = vmatpush1.msra.mxu0 0.0
    %1508 = vmatprep.subr.mxu0 0.0
    %1509 = vmatpush1.msra.mxu0 0.0
    %1510 = vmatprep.subr.mxu0 0.0
    %1511 = vmatpush1.msra.mxu0 0.0
    %1512 = vmatprep.subr.mxu0 0.0
    %1513 = vmatpush1.msra.mxu0 0.0
    %1514 = vmatprep.subr.mxu0 0.0
    %1515 = vmatpush1.msra.mxu0 0.0
    %1516 = vmatprep.subr.mxu0 0.0
    %1517 = vmatpush1.msra.mxu0 0.0
    %1518 = vmatprep.subr.mxu0 0.0
    %1519 = vmatpush1.msra.mxu0 0.0
    %1520 = vmatprep.subr.mxu0 0.0
    %1521 = vmatpush1.msra.mxu0 0.0
    %1522 = vmatprep.subr.mxu0 0.0
    %1523 = vmatpush1.msra.mxu0 0.0
    %1524 = vmatprep.subr.mxu0 0.0
    %1525 = vmatpush1.msra.mxu0 0.0
    %1526 = vmatprep.subr.mxu0 0.0
    %1527 = vmatpush1.msra.mxu0 0.0
    %1528 = vmatprep.mubr.f32.mxu0 0.0
    %1529 = vmatmul.mubr.f32.gmra.mrb[0].mxu0 %v1328
    %v1530 = vpop.f32.mrb[0].mxu0
    %v1531 = vadd.f32 0.0, %v1530
    %v1532 = vpop.f32.mrb[0].mxu0
    %1533 = vmatprep.mubr.f32.mxu0 0.0
    %1534 = vmatmul.mubr.f32.gmra.mrb[0].mxu0 %v1331
    %v1535 = vpop.f32.mrb[0].mxu0
    %v1536 = vadd.f32 0.0, %v1535
    %v1537 = vpop.f32.mrb[0].mxu0
    %1538 = vmatprep.mubr.f32.mxu0 0.0
    %1539 = vmatmul.mubr.f32.gmra.mrb[0].mxu0 %v1334
    %v1540 = vpop.f32.mrb[0].mxu0
    %v1541 = vadd.f32 0.0, %v1540
    %v1542 = vpop.f32.mrb[0].mxu0
    %1543 = vmatprep.mubr.f32.mxu0 0.0
    %1544 = vmatmul.mubr.f32.gmra.mrb[0].mxu0 %v1337
    %v1545 = vpop.f32.mrb[0].mxu0
    %v1546 = vadd.f32 0.0, %v1545
    %v1547 = vpop.f32.mrb[0].mxu0
    %1548 = vmatprep.mubr.f32.mxu0 0.0
    %1549 = vmatmul.mubr.f32.gmra.mrb[0].mxu0 %v1340
    %v1550 = vpop.f32.mrb[0].mxu0
    %v1551 = vadd.f32 0.0, %v1550
    %v1552 = vpop.f32.mrb[0].mxu0
    %1553 = vmatprep.mubr.f32.mxu0 0.0
    %1554 = vmatmul.mubr.f32.gmra.mrb[0].mxu0 %v1343
    %v1555 = vpop.f32.mrb[0].mxu0
    %v1556 = vadd.f32 0.0, %v1555
    %v1557 = vpop.f32.mrb[0].mxu0
    %1558 = vmatprep.mubr.f32.mxu0 0.0
    %1559 = vmatmul.mubr.f32.gmra.mrb[0].mxu0 %v1346
    %v1560 = vpop.f32.mrb[0].mxu0
    %v1561 = vadd.f32 0.0, %v1560
    %v1562 = vpop.f32.mrb[0].mxu0
    %1563 = vmatprep.mubr.f32.mxu0 0.0
    %1564 = vmatmul.mubr.f32.gmra.mrb[0].mxu0 %v1349
    %v1565 = vpop.f32.mrb[0].mxu0
    %v1566 = vadd.f32 0.0, %v1565
    %v1567 = vpop.f32.mrb[0].mxu0
    %1568 = vdwg.mxu0
    %v1569 = vadd.f32 %v1163, %v1418
    %v1570 = vadd.f32 %v1165, %v1420
    %v1571 = vadd.f32 %v1276, %v1531
    %v1572 = vadd.f32 %v1169, %v1424
    %v1573 = vadd.f32 %v1171, %v1426
    %v1574 = vadd.f32 %v1281, %v1536
    %v1575 = vadd.f32 %v1175, %v1430
    %v1576 = vadd.f32 %v1177, %v1432
    %v1577 = vadd.f32 %v1286, %v1541
    %v1578 = vadd.f32 %v1181, %v1436
    %v1579 = vadd.f32 %v1183, %v1438
    %v1580 = vadd.f32 %v1291, %v1546
    %v1581 = vadd.f32 %v1187, %v1442
    %v1582 = vadd.f32 %v1189, %v1444
    %v1583 = vadd.f32 %v1296, %v1551
    %v1584 = vadd.f32 %v1193, %v1448
    %v1585 = vadd.f32 %v1195, %v1450
    %v1586 = vadd.f32 %v1301, %v1556
    %v1587 = vadd.f32 %v1199, %v1454
    %v1588 = vadd.f32 %v1201, %v1456
    %v1589 = vadd.f32 %v1306, %v1561
    %v1590 = vadd.f32 %v1205, %v1460
    %v1591 = vadd.f32 %v1207, %v1462
    %v1592 = vadd.f32 %v1311, %v1566
    %v1593 = vld [vmem:[%s35] sm:$0x7]
    %v1595 = vlaneseq
    %v1596 = vshrl.u32 %v1595, 7
    %v1597 = vsub.s32 0, %v1596
    %v1598 = vrot.slane %v1593, %v1597
    %v1599 = vlaneseq
    %v1600 = vshrl.u32 %v1599, 7
    %v1601 = vsub.s32 1, %v1600
    %v1602 = vrot.slane %v1593, %v1601
    %v1603 = vlaneseq
    %v1604 = vshrl.u32 %v1603, 7
    %v1605 = vsub.s32 2, %v1604
    %v1606 = vrot.slane %v1593, %v1605
    %v1610 = vadd.f32 %v1569, %v1598
    %v1611 = vadd.f32 %v1570, %v1602
    %v1612 = vadd.f32 %v1571, %v1606
    %v1613 = vadd.f32 %v1572, %v1598
    %v1614 = vadd.f32 %v1573, %v1602
    %v1615 = vadd.f32 %v1574, %v1606
    %v1616 = vadd.f32 %v1575, %v1598
    %v1617 = vadd.f32 %v1576, %v1602
    %v1618 = vadd.f32 %v1577, %v1606
    %v1619 = vadd.f32 %v1578, %v1598
    %v1620 = vadd.f32 %v1579, %v1602
    %v1621 = vadd.f32 %v1580, %v1606
    %v1622 = vadd.f32 %v1581, %v1598
    %v1623 = vadd.f32 %v1582, %v1602
    %v1624 = vadd.f32 %v1583, %v1606
    %v1625 = vadd.f32 %v1584, %v1598
    %v1626 = vadd.f32 %v1585, %v1602
    %v1627 = vadd.f32 %v1586, %v1606
    %v1628 = vadd.f32 %v1587, %v1598
    %v1629 = vadd.f32 %v1588, %v1602
    %v1630 = vadd.f32 %v1589, %v1606
    %v1631 = vadd.f32 %v1590, %v1598
    %v1632 = vadd.f32 %v1591, %v1602
    %v1633 = vadd.f32 %v1592, %v1606
    %v1634 = vld [vmem:[%s37] sm:$0xff]
    %v1635 = vld [vmem:[%s37 + $0x8] sm:$0xff]
    %v1636 = vld [vmem:[%s37 + $0x10] sm:$0xff]
    %v1637 = vld [vmem:[%s37 + $0x18] sm:$0xff]
    %v1638 = vld [vmem:[%s37 + $0x20] sm:$0xff]
    %v1639 = vld [vmem:[%s37 + $0x28] sm:$0xff]
    %v1640 = vld [vmem:[%s37 + $0x30] sm:$0xff]
    %v1641 = vld [vmem:[%s37 + $0x38] sm:$0xff]
    %v1642 = vld [vmem:[%s37 + $0x40] sm:$0xff]
    %v1643 = vld [vmem:[%s37 + $0x48] sm:$0xff]
    %v1644 = vld [vmem:[%s37 + $0x50] sm:$0xff]
    %v1645 = vld [vmem:[%s37 + $0x58] sm:$0xff]
    %v1646 = vld [vmem:[%s37 + $0x60] sm:$0xff]
    %v1647 = vld [vmem:[%s37 + $0x68] sm:$0xff]
    %v1648 = vld [vmem:[%s37 + $0x70] sm:$0xff]
    %v1649 = vld [vmem:[%s37 + $0x78] sm:$0xff]
    %v1650 = vld [vmem:[%s43] sm:$0x1]
    %v1652 = vlaneseq
    %v1653 = vshrl.u32 %v1652, 7
    %v1654 = vsub.s32 0, %v1653
    %v1655 = vrot.slane %v1650, %v1654
    %1657 = vmatprep.subr.mxu0 0.0
    %1658 = vmatpush1.msra.mxu0 %v1634
    %1659 = vmatprep.subr.mxu0 0.0
    %1660 = vmatpush1.msra.mxu0 %v1635
    %1661 = vmatprep.subr.mxu0 0.0
    %1662 = vmatpush1.msra.mxu0 %v1636
    %1663 = vmatprep.subr.mxu0 0.0
    %1664 = vmatpush1.msra.mxu0 %v1637
    %1665 = vmatprep.subr.mxu0 0.0
    %1666 = vmatpush1.msra.mxu0 %v1638
    %1667 = vmatprep.subr.mxu0 0.0
    %1668 = vmatpush1.msra.mxu0 %v1639
    %1669 = vmatprep.subr.mxu0 0.0
    %1670 = vmatpush1.msra.mxu0 %v1640
    %1671 = vmatprep.subr.mxu0 0.0
    %1672 = vmatpush1.msra.mxu0 %v1641
    %1673 = vmatprep.subr.mxu0 0.0
    %1674 = vmatpush1.msra.mxu0 %v1642
    %1675 = vmatprep.subr.mxu0 0.0
    %1676 = vmatpush1.msra.mxu0 %v1643
    %1677 = vmatprep.subr.mxu0 0.0
    %1678 = vmatpush1.msra.mxu0 %v1644
    %1679 = vmatprep.subr.mxu0 0.0
    %1680 = vmatpush1.msra.mxu0 %v1645
    %1681 = vmatprep.subr.mxu0 0.0
    %1682 = vmatpush1.msra.mxu0 %v1646
    %1683 = vmatprep.subr.mxu0 0.0
    %1684 = vmatpush1.msra.mxu0 %v1647
    %1685 = vmatprep.subr.mxu0 0.0
    %1686 = vmatpush1.msra.mxu0 %v1648
    %1687 = vmatprep.subr.mxu0 0.0
    %1688 = vmatpush1.msra.mxu0 %v1649
    %1689 = vmatprep.subr.mxu0 0.0
    %1690 = vmatpush1.msra.mxu0 0.0
    %1691 = vmatprep.subr.mxu0 0.0
    %1692 = vmatpush1.msra.mxu0 0.0
    %1693 = vmatprep.subr.mxu0 0.0
    %1694 = vmatpush1.msra.mxu0 0.0
    %1695 = vmatprep.subr.mxu0 0.0
    %1696 = vmatpush1.msra.mxu0 0.0
    %1697 = vmatprep.subr.mxu0 0.0
    %1698 = vmatpush1.msra.mxu0 0.0
    %1699 = vmatprep.subr.mxu0 0.0
    %1700 = vmatpush1.msra.mxu0 0.0
    %1701 = vmatprep.subr.mxu0 0.0
    %1702 = vmatpush1.msra.mxu0 0.0
    %1703 = vmatprep.subr.mxu0 0.0
    %1704 = vmatpush1.msra.mxu0 0.0
    %1705 = vmatprep.subr.mxu0 0.0
    %1706 = vmatpush1.msra.mxu0 0.0
    %1707 = vmatprep.subr.mxu0 0.0
    %1708 = vmatpush1.msra.mxu0 0.0
    %1709 = vmatprep.subr.mxu0 0.0
    %1710 = vmatpush1.msra.mxu0 0.0
    %1711 = vmatprep.subr.mxu0 0.0
    %1712 = vmatpush1.msra.mxu0 0.0
    %1713 = vmatprep.subr.mxu0 0.0
    %1714 = vmatpush1.msra.mxu0 0.0
    %1715 = vmatprep.subr.mxu0 0.0
    %1716 = vmatpush1.msra.mxu0 0.0
    %1717 = vmatprep.subr.mxu0 0.0
    %1718 = vmatpush1.msra.mxu0 0.0
    %1719 = vmatprep.subr.mxu0 0.0
    %1720 = vmatpush1.msra.mxu0 0.0
    %1721 = vmatprep.mubr.f32.mxu0 0.0
    %1722 = vmatmul.mubr.f32.gmra.mrb[0].mxu0 0.0
    %v1723 = vpop.f32.mrb[0].mxu0
    %v1724 = vadd.f32 %v1655, %v1723
    %v1725 = vpop.f32.mrb[0].mxu0
    %1726 = vdwg.mxu0
    %v1727 = vld [vmem:[%s39] sm:$0xff]
    %v1728 = vld [vmem:[%s39 + $0x8] sm:$0xff]
    %v1729 = vld [vmem:[%s39 + $0x10] sm:$0xff]
    %v1730 = vld [vmem:[%s39 + $0x18] sm:$0xff]
    %v1731 = vld [vmem:[%s39 + $0x20] sm:$0xff]
    %v1732 = vld [vmem:[%s39 + $0x28] sm:$0xff]
    %v1733 = vld [vmem:[%s39 + $0x30] sm:$0xff]
    %v1734 = vld [vmem:[%s39 + $0x38] sm:$0xff]
    %v1735 = vld [vmem:[%s39 + $0x40] sm:$0xff]
    %v1736 = vld [vmem:[%s39 + $0x48] sm:$0xff]
    %v1737 = vld [vmem:[%s39 + $0x50] sm:$0xff]
    %v1738 = vld [vmem:[%s39 + $0x58] sm:$0xff]
    %v1739 = vld [vmem:[%s39 + $0x60] sm:$0xff]
    %v1740 = vld [vmem:[%s39 + $0x68] sm:$0xff]
    %v1741 = vld [vmem:[%s39 + $0x70] sm:$0xff]
    %v1742 = vld [vmem:[%s39 + $0x78] sm:$0xff]
    %v1743 = vld [vmem:[%s45] sm:$0x1]
    %v1745 = vlaneseq
    %v1746 = vshrl.u32 %v1745, 7
    %v1747 = vsub.s32 0, %v1746
    %v1748 = vrot.slane %v1743, %v1747
    %1750 = vmatprep.subr.mxu0 0.0
    %1751 = vmatpush1.msra.mxu0 %v1727
    %1752 = vmatprep.subr.mxu0 0.0
    %1753 = vmatpush1.msra.mxu0 %v1728
    %1754 = vmatprep.subr.mxu0 0.0
    %1755 = vmatpush1.msra.mxu0 %v1729
    %1756 = vmatprep.subr.mxu0 0.0
    %1757 = vmatpush1.msra.mxu0 %v1730
    %1758 = vmatprep.subr.mxu0 0.0
    %1759 = vmatpush1.msra.mxu0 %v1731
    %1760 = vmatprep.subr.mxu0 0.0
    %1761 = vmatpush1.msra.mxu0 %v1732
    %1762 = vmatprep.subr.mxu0 0.0
    %1763 = vmatpush1.msra.mxu0 %v1733
    %1764 = vmatprep.subr.mxu0 0.0
    %1765 = vmatpush1.msra.mxu0 %v1734
    %1766 = vmatprep.subr.mxu0 0.0
    %1767 = vmatpush1.msra.mxu0 %v1735
    %1768 = vmatprep.subr.mxu0 0.0
    %1769 = vmatpush1.msra.mxu0 %v1736
    %1770 = vmatprep.subr.mxu0 0.0
    %1771 = vmatpush1.msra.mxu0 %v1737
    %1772 = vmatprep.subr.mxu0 0.0
    %1773 = vmatpush1.msra.mxu0 %v1738
    %1774 = vmatprep.subr.mxu0 0.0
    %1775 = vmatpush1.msra.mxu0 %v1739
    %1776 = vmatprep.subr.mxu0 0.0
    %1777 = vmatpush1.msra.mxu0 %v1740
    %1778 = vmatprep.subr.mxu0 0.0
    %1779 = vmatpush1.msra.mxu0 %v1741
    %1780 = vmatprep.subr.mxu0 0.0
    %1781 = vmatpush1.msra.mxu0 %v1742
    %1782 = vmatprep.subr.mxu0 0.0
    %1783 = vmatpush1.msra.mxu0 0.0
    %1784 = vmatprep.subr.mxu0 0.0
    %1785 = vmatpush1.msra.mxu0 0.0
    %1786 = vmatprep.subr.mxu0 0.0
    %1787 = vmatpush1.msra.mxu0 0.0
    %1788 = vmatprep.subr.mxu0 0.0
    %1789 = vmatpush1.msra.mxu0 0.0
    %1790 = vmatprep.subr.mxu0 0.0
    %1791 = vmatpush1.msra.mxu0 0.0
    %1792 = vmatprep.subr.mxu0 0.0
    %1793 = vmatpush1.msra.mxu0 0.0
    %1794 = vmatprep.subr.mxu0 0.0
    %1795 = vmatpush1.msra.mxu0 0.0
    %1796 = vmatprep.subr.mxu0 0.0
    %1797 = vmatpush1.msra.mxu0 0.0
    %1798 = vmatprep.subr.mxu0 0.0
    %1799 = vmatpush1.msra.mxu0 0.0
    %1800 = vmatprep.subr.mxu0 0.0
    %1801 = vmatpush1.msra.mxu0 0.0
    %1802 = vmatprep.subr.mxu0 0.0
    %1803 = vmatpush1.msra.mxu0 0.0
    %1804 = vmatprep.subr.mxu0 0.0
    %1805 = vmatpush1.msra.mxu0 0.0
    %1806 = vmatprep.subr.mxu0 0.0
    %1807 = vmatpush1.msra.mxu0 0.0
    %1808 = vmatprep.subr.mxu0 0.0
    %1809 = vmatpush1.msra.mxu0 0.0
    %1810 = vmatprep.subr.mxu0 0.0
    %1811 = vmatpush1.msra.mxu0 0.0
    %1812 = vmatprep.subr.mxu0 0.0
    %1813 = vmatpush1.msra.mxu0 0.0
    %1814 = vmatprep.mubr.f32.mxu0 0.0
    %1815 = vmatmul.mubr.f32.gmra.mrb[0].mxu0 0.0
    %v1816 = vpop.f32.mrb[0].mxu0
    %v1817 = vadd.f32 %v1748, %v1816
    %v1818 = vpop.f32.mrb[0].mxu0
    %1819 = vdwg.mxu0
    %v1820 = vld [vmem:[%s41] sm:$0xff]
    %v1821 = vld [vmem:[%s41 + $0x8] sm:$0xff]
    %v1822 = vld [vmem:[%s41 + $0x10] sm:$0xff]
    %v1823 = vld [vmem:[%s41 + $0x18] sm:$0xff]
    %v1824 = vld [vmem:[%s41 + $0x20] sm:$0xff]
    %v1825 = vld [vmem:[%s41 + $0x28] sm:$0xff]
    %v1826 = vld [vmem:[%s41 + $0x30] sm:$0xff]
    %v1827 = vld [vmem:[%s41 + $0x38] sm:$0xff]
    %v1828 = vld [vmem:[%s41 + $0x40] sm:$0xff]
    %v1829 = vld [vmem:[%s41 + $0x48] sm:$0xff]
    %v1830 = vld [vmem:[%s41 + $0x50] sm:$0xff]
    %v1831 = vld [vmem:[%s41 + $0x58] sm:$0xff]
    %v1832 = vld [vmem:[%s41 + $0x60] sm:$0xff]
    %v1833 = vld [vmem:[%s41 + $0x68] sm:$0xff]
    %v1834 = vld [vmem:[%s41 + $0x70] sm:$0xff]
    %v1835 = vld [vmem:[%s41 + $0x78] sm:$0xff]
    %v1836 = vld [vmem:[%s47] sm:$0x1]
    %v1838 = vlaneseq
    %v1839 = vshrl.u32 %v1838, 7
    %v1840 = vsub.s32 0, %v1839
    %v1841 = vrot.slane %v1836, %v1840
    %1843 = vmatprep.subr.mxu0 0.0
    %1844 = vmatpush1.msra.mxu0 %v1820
    %1845 = vmatprep.subr.mxu0 0.0
    %1846 = vmatpush1.msra.mxu0 %v1821
    %1847 = vmatprep.subr.mxu0 0.0
    %1848 = vmatpush1.msra.mxu0 %v1822
    %1849 = vmatprep.subr.mxu0 0.0
    %1850 = vmatpush1.msra.mxu0 %v1823
    %1851 = vmatprep.subr.mxu0 0.0
    %1852 = vmatpush1.msra.mxu0 %v1824
    %1853 = vmatprep.subr.mxu0 0.0
    %1854 = vmatpush1.msra.mxu0 %v1825
    %1855 = vmatprep.subr.mxu0 0.0
    %1856 = vmatpush1.msra.mxu0 %v1826
    %1857 = vmatprep.subr.mxu0 0.0
    %1858 = vmatpush1.msra.mxu0 %v1827
    %1859 = vmatprep.subr.mxu0 0.0
    %1860 = vmatpush1.msra.mxu0 %v1828
    %1861 = vmatprep.subr.mxu0 0.0
    %1862 = vmatpush1.msra.mxu0 %v1829
    %1863 = vmatprep.subr.mxu0 0.0
    %1864 = vmatpush1.msra.mxu0 %v1830
    %1865 = vmatprep.subr.mxu0 0.0
    %1866 = vmatpush1.msra.mxu0 %v1831
    %1867 = vmatprep.subr.mxu0 0.0
    %1868 = vmatpush1.msra.mxu0 %v1832
    %1869 = vmatprep.subr.mxu0 0.0
    %1870 = vmatpush1.msra.mxu0 %v1833
    %1871 = vmatprep.subr.mxu0 0.0
    %1872 = vmatpush1.msra.mxu0 %v1834
    %1873 = vmatprep.subr.mxu0 0.0
    %1874 = vmatpush1.msra.mxu0 %v1835
    %1875 = vmatprep.subr.mxu0 0.0
    %1876 = vmatpush1.msra.mxu0 0.0
    %1877 = vmatprep.subr.mxu0 0.0
    %1878 = vmatpush1.msra.mxu0 0.0
    %1879 = vmatprep.subr.mxu0 0.0
    %1880 = vmatpush1.msra.mxu0 0.0
    %1881 = vmatprep.subr.mxu0 0.0
    %1882 = vmatpush1.msra.mxu0 0.0
    %1883 = vmatprep.subr.mxu0 0.0
    %1884 = vmatpush1.msra.mxu0 0.0
    %1885 = vmatprep.subr.mxu0 0.0
    %1886 = vmatpush1.msra.mxu0 0.0
    %1887 = vmatprep.subr.mxu0 0.0
    %1888 = vmatpush1.msra.mxu0 0.0
    %1889 = vmatprep.subr.mxu0 0.0
    %1890 = vmatpush1.msra.mxu0 0.0
    %1891 = vmatprep.subr.mxu0 0.0
    %1892 = vmatpush1.msra.mxu0 0.0
    %1893 = vmatprep.subr.mxu0 0.0
    %1894 = vmatpush1.msra.mxu0 0.0
    %1895 = vmatprep.subr.mxu0 0.0
    %1896 = vmatpush1.msra.mxu0 0.0
    %1897 = vmatprep.subr.mxu0 0.0
    %1898 = vmatpush1.msra.mxu0 0.0
    %1899 = vmatprep.subr.mxu0 0.0
    %1900 = vmatpush1.msra.mxu0 0.0
    %1901 = vmatprep.subr.mxu0 0.0
    %1902 = vmatpush1.msra.mxu0 0.0
    %1903 = vmatprep.subr.mxu0 0.0
    %1904 = vmatpush1.msra.mxu0 0.0
    %1905 = vmatprep.subr.mxu0 0.0
    %1906 = vmatpush1.msra.mxu0 0.0
    %1907 = vmatprep.mubr.f32.mxu0 0.0
    %1908 = vmatmul.mubr.f32.gmra.mrb[0].mxu0 0.0
    %v1909 = vpop.f32.mrb[0].mxu0
    %v1910 = vadd.f32 %v1841, %v1909
    %v1911 = vpop.f32.mrb[0].mxu0
    %1912 = vdwg.mxu0
    %v1913 = vadd.f32 %v1610, %v1724
    %v1914 = vxor.u32 %v1913, 2147483648
    %v1915 = vmul.f32 %v1914, 1.442695
    %v1916 = vpow.pop %v1915
    %v1917 = vadd.f32 %v1916, 1.0
    %v1918 = vrcp.pop %v1917
    %v1919 = vmul.f32 1.0, %v1918
    %v1920 = vadd.f32 %v1611, %v1817
    %v1921 = vxor.u32 %v1920, 2147483648
    %v1922 = vmul.f32 %v1921, 1.442695
    %v1923 = vpow.pop %v1922
    %v1924 = vadd.f32 %v1923, 1.0
    %v1925 = vrcp.pop %v1924
    %v1926 = vmul.f32 1.0, %v1925
    %v1927 = vmul.f32 %v1919, %v1910
    %v1928 = vadd.f32 %v1612, %v1927
    %v1929 = vtanh.pop %v1928
    %v1930 = vsub.f32 1.0, %v1926
    %v1931 = vmul.f32 %v1930, %v1929
    %v1932 = vmul.f32 %v1926, 0.0
    %v1933 = vadd.f32 %v1931, %v1932
    %1934 = vst [vmem:[#allocation2] sm:$0xff] %v1933
    %v1935 = vld [vmem:[%s37] sm:$0xff]
    %v1936 = vld [vmem:[%s37 + $0x8] sm:$0xff]
    %v1937 = vld [vmem:[%s37 + $0x10] sm:$0xff]
    %v1938 = vld [vmem:[%s37 + $0x18] sm:$0xff]
    %v1939 = vld [vmem:[%s37 + $0x20] sm:$0xff]
    %v1940 = vld [vmem:[%s37 + $0x28] sm:$0xff]
    %v1941 = vld [vmem:[%s37 + $0x30] sm:$0xff]
    %v1942 = vld [vmem:[%s37 + $0x38] sm:$0xff]
    %v1943 = vld [vmem:[%s37 + $0x40] sm:$0xff]
    %v1944 = vld [vmem:[%s37 + $0x48] sm:$0xff]
    %v1945 = vld [vmem:[%s37 + $0x50] sm:$0xff]
    %v1946 = vld [vmem:[%s37 + $0x58] sm:$0xff]
    %v1947 = vld [vmem:[%s37 + $0x60] sm:$0xff]
    %v1948 = vld [vmem:[%s37 + $0x68] sm:$0xff]
    %v1949 = vld [vmem:[%s37 + $0x70] sm:$0xff]
    %v1950 = vld [vmem:[%s37 + $0x78] sm:$0xff]
    %v1951 = vld [vmem:[%s43] sm:$0x1]
    %v1953 = vlaneseq
    %v1954 = vshrl.u32 %v1953, 7
    %v1955 = vsub.s32 0, %v1954
    %v1956 = vrot.slane %v1951, %v1955
    %1958 = vmatprep.subr.mxu0 0.0
    %1959 = vmatpush1.msra.mxu0 %v1935
    %1960 = vmatprep.subr.mxu0 0.0
    %1961 = vmatpush1.msra.mxu0 %v1936
    %1962 = vmatprep.subr.mxu0 0.0
    %1963 = vmatpush1.msra.mxu0 %v1937
    %1964 = vmatprep.subr.mxu0 0.0
    %1965 = vmatpush1.msra.mxu0 %v1938
    %1966 = vmatprep.subr.mxu0 0.0
    %1967 = vmatpush1.msra.mxu0 %v1939
    %1968 = vmatprep.subr.mxu0 0.0
    %1969 = vmatpush1.msra.mxu0 %v1940
    %1970 = vmatprep.subr.mxu0 0.0
    %1971 = vmatpush1.msra.mxu0 %v1941
    %1972 = vmatprep.subr.mxu0 0.0
    %1973 = vmatpush1.msra.mxu0 %v1942
    %1974 = vmatprep.subr.mxu0 0.0
    %1975 = vmatpush1.msra.mxu0 %v1943
    %1976 = vmatprep.subr.mxu0 0.0
    %1977 = vmatpush1.msra.mxu0 %v1944
    %1978 = vmatprep.subr.mxu0 0.0
    %1979 = vmatpush1.msra.mxu0 %v1945
    %1980 = vmatprep.subr.mxu0 0.0
    %1981 = vmatpush1.msra.mxu0 %v1946
    %1982 = vmatprep.subr.mxu0 0.0
    %1983 = vmatpush1.msra.mxu0 %v1947
    %1984 = vmatprep.subr.mxu0 0.0
    %1985 = vmatpush1.msra.mxu0 %v1948
    %1986 = vmatprep.subr.mxu0 0.0
    %1987 = vmatpush1.msra.mxu0 %v1949
    %1988 = vmatprep.subr.mxu0 0.0
    %1989 = vmatpush1.msra.mxu0 %v1950
    %1990 = vmatprep.subr.mxu0 0.0
    %1991 = vmatpush1.msra.mxu0 0.0
    %1992 = vmatprep.subr.mxu0 0.0
    %1993 = vmatpush1.msra.mxu0 0.0
    %1994 = vmatprep.subr.mxu0 0.0
    %1995 = vmatpush1.msra.mxu0 0.0
    %1996 = vmatprep.subr.mxu0 0.0
    %1997 = vmatpush1.msra.mxu0 0.0
    %1998 = vmatprep.subr.mxu0 0.0
    %1999 = vmatpush1.msra.mxu0 0.0
    %2000 = vmatprep.subr.mxu0 0.0
    %2001 = vmatpush1.msra.mxu0 0.0
    %2002 = vmatprep.subr.mxu0 0.0
    %2003 = vmatpush1.msra.mxu0 0.0
    %2004 = vmatprep.subr.mxu0 0.0
    %2005 = vmatpush1.msra.mxu0 0.0
    %2006 = vmatprep.subr.mxu0 0.0
    %2007 = vmatpush1.msra.mxu0 0.0
    %2008 = vmatprep.subr.mxu0 0.0
    %2009 = vmatpush1.msra.mxu0 0.0
    %2010 = vmatprep.subr.mxu0 0.0
    %2011 = vmatpush1.msra.mxu0 0.0
    %2012 = vmatprep.subr.mxu0 0.0
    %2013 = vmatpush1.msra.mxu0 0.0
    %2014 = vmatprep.subr.mxu0 0.0
    %2015 = vmatpush1.msra.mxu0 0.0
    %2016 = vmatprep.subr.mxu0 0.0
    %2017 = vmatpush1.msra.mxu0 0.0
    %2018 = vmatprep.subr.mxu0 0.0
    %2019 = vmatpush1.msra.mxu0 0.0
    %2020 = vmatprep.subr.mxu0 0.0
    %2021 = vmatpush1.msra.mxu0 0.0
    %2022 = vmatprep.mubr.f32.mxu0 0.0
    %2023 = vmatmul.mubr.f32.gmra.mrb[0].mxu0 %v1933
    %v2024 = vpop.f32.mrb[0].mxu0
    %v2025 = vadd.f32 %v1956, %v2024
    %v2026 = vpop.f32.mrb[0].mxu0
    %2027 = vdwg.mxu0
    %v2028 = vld [vmem:[%s39] sm:$0xff]
    %v2029 = vld [vmem:[%s39 + $0x8] sm:$0xff]
    %v2030 = vld [vmem:[%s39 + $0x10] sm:$0xff]
    %v2031 = vld [vmem:[%s39 + $0x18] sm:$0xff]
    %v2032 = vld [vmem:[%s39 + $0x20] sm:$0xff]
    %v2033 = vld [vmem:[%s39 + $0x28] sm:$0xff]
    %v2034 = vld [vmem:[%s39 + $0x30] sm:$0xff]
    %v2035 = vld [vmem:[%s39 + $0x38] sm:$0xff]
    %v2036 = vld [vmem:[%s39 + $0x40] sm:$0xff]
    %v2037 = vld [vmem:[%s39 + $0x48] sm:$0xff]
    %v2038 = vld [vmem:[%s39 + $0x50] sm:$0xff]
    %v2039 = vld [vmem:[%s39 + $0x58] sm:$0xff]
    %v2040 = vld [vmem:[%s39 + $0x60] sm:$0xff]
    %v2041 = vld [vmem:[%s39 + $0x68] sm:$0xff]
    %v2042 = vld [vmem:[%s39 + $0x70] sm:$0xff]
    %v2043 = vld [vmem:[%s39 + $0x78] sm:$0xff]
    %v2044 = vld [vmem:[%s45] sm:$0x1]
    %v2046 = vlaneseq
    %v2047 = vshrl.u32 %v2046, 7
    %v2048 = vsub.s32 0, %v2047
    %v2049 = vrot.slane %v2044, %v2048
    %2051 = vmatprep.subr.mxu0 0.0
    %2052 = vmatpush1.msra.mxu0 %v2028
    %2053 = vmatprep.subr.mxu0 0.0
    %2054 = vmatpush1.msra.mxu0 %v2029
    %2055 = vmatprep.subr.mxu0 0.0
    %2056 = vmatpush1.msra.mxu0 %v2030
    %2057 = vmatprep.subr.mxu0 0.0
    %2058 = vmatpush1.msra.mxu0 %v2031
    %2059 = vmatprep.subr.mxu0 0.0
    %2060 = vmatpush1.msra.mxu0 %v2032
    %2061 = vmatprep.subr.mxu0 0.0
    %2062 = vmatpush1.msra.mxu0 %v2033
    %2063 = vmatprep.subr.mxu0 0.0
    %2064 = vmatpush1.msra.mxu0 %v2034
    %2065 = vmatprep.subr.mxu0 0.0
    %2066 = vmatpush1.msra.mxu0 %v2035
    %2067 = vmatprep.subr.mxu0 0.0
    %2068 = vmatpush1.msra.mxu0 %v2036
    %2069 = vmatprep.subr.mxu0 0.0
    %2070 = vmatpush1.msra.mxu0 %v2037
    %2071 = vmatprep.subr.mxu0 0.0
    %2072 = vmatpush1.msra.mxu0 %v2038
    %2073 = vmatprep.subr.mxu0 0.0
    %2074 = vmatpush1.msra.mxu0 %v2039
    %2075 = vmatprep.subr.mxu0 0.0
    %2076 = vmatpush1.msra.mxu0 %v2040
    %2077 = vmatprep.subr.mxu0 0.0
    %2078 = vmatpush1.msra.mxu0 %v2041
    %2079 = vmatprep.subr.mxu0 0.0
    %2080 = vmatpush1.msra.mxu0 %v2042
    %2081 = vmatprep.subr.mxu0 0.0
    %2082 = vmatpush1.msra.mxu0 %v2043
    %2083 = vmatprep.subr.mxu0 0.0
    %2084 = vmatpush1.msra.mxu0 0.0
    %2085 = vmatprep.subr.mxu0 0.0
    %2086 = vmatpush1.msra.mxu0 0.0
    %2087 = vmatprep.subr.mxu0 0.0
    %2088 = vmatpush1.msra.mxu0 0.0
    %2089 = vmatprep.subr.mxu0 0.0
    %2090 = vmatpush1.msra.mxu0 0.0
    %2091 = vmatprep.subr.mxu0 0.0
    %2092 = vmatpush1.msra.mxu0 0.0
    %2093 = vmatprep.subr.mxu0 0.0
    %2094 = vmatpush1.msra.mxu0 0.0
    %2095 = vmatprep.subr.mxu0 0.0
    %2096 = vmatpush1.msra.mxu0 0.0
    %2097 = vmatprep.subr.mxu0 0.0
    %2098 = vmatpush1.msra.mxu0 0.0
    %2099 = vmatprep.subr.mxu0 0.0
    %2100 = vmatpush1.msra.mxu0 0.0
    %2101 = vmatprep.subr.mxu0 0.0
    %2102 = vmatpush1.msra.mxu0 0.0
    %2103 = vmatprep.subr.mxu0 0.0
    %2104 = vmatpush1.msra.mxu0 0.0
    %2105 = vmatprep.subr.mxu0 0.0
    %2106 = vmatpush1.msra.mxu0 0.0
    %2107 = vmatprep.subr.mxu0 0.0
    %2108 = vmatpush1.msra.mxu0 0.0
    %2109 = vmatprep.subr.mxu0 0.0
    %2110 = vmatpush1.msra.mxu0 0.0
    %2111 = vmatprep.subr.mxu0 0.0
    %2112 = vmatpush1.msra.mxu0 0.0
    %2113 = vmatprep.subr.mxu0 0.0
    %2114 = vmatpush1.msra.mxu0 0.0
    %2115 = vmatprep.mubr.f32.mxu0 0.0
    %2116 = vmatmul.mubr.f32.gmra.mrb[0].mxu0 %v1933
    %v2117 = vpop.f32.mrb[0].mxu0
    %v2118 = vadd.f32 %v2049, %v2117
    %v2119 = vpop.f32.mrb[0].mxu0
    %2120 = vdwg.mxu0
    %v2121 = vld [vmem:[%s41] sm:$0xff]
    %v2122 = vld [vmem:[%s41 + $0x8] sm:$0xff]
    %v2123 = vld [vmem:[%s41 + $0x10] sm:$0xff]
    %v2124 = vld [vmem:[%s41 + $0x18] sm:$0xff]
    %v2125 = vld [vmem:[%s41 + $0x20] sm:$0xff]
    %v2126 = vld [vmem:[%s41 + $0x28] sm:$0xff]
    %v2127 = vld [vmem:[%s41 + $0x30] sm:$0xff]
    %v2128 = vld [vmem:[%s41 + $0x38] sm:$0xff]
    %v2129 = vld [vmem:[%s41 + $0x40] sm:$0xff]
    %v2130 = vld [vmem:[%s41 + $0x48] sm:$0xff]
    %v2131 = vld [vmem:[%s41 + $0x50] sm:$0xff]
    %v2132 = vld [vmem:[%s41 + $0x58] sm:$0xff]
    %v2133 = vld [vmem:[%s41 + $0x60] sm:$0xff]
    %v2134 = vld [vmem:[%s41 + $0x68] sm:$0xff]
    %v2135 = vld [vmem:[%s41 + $0x70] sm:$0xff]
    %v2136 = vld [vmem:[%s41 + $0x78] sm:$0xff]
    %v2137 = vld [vmem:[%s47] sm:$0x1]
    %v2139 = vlaneseq
    %v2140 = vshrl.u32 %v2139, 7
    %v2141 = vsub.s32 0, %v2140
    %v2142 = vrot.slane %v2137, %v2141
    %2144 = vmatprep.subr.mxu0 0.0
    %2145 = vmatpush1.msra.mxu0 %v2121
    %2146 = vmatprep.subr.mxu0 0.0
    %2147 = vmatpush1.msra.mxu0 %v2122
    %2148 = vmatprep.subr.mxu0 0.0
    %2149 = vmatpush1.msra.mxu0 %v2123
    %2150 = vmatprep.subr.mxu0 0.0
    %2151 = vmatpush1.msra.mxu0 %v2124
    %2152 = vmatprep.subr.mxu0 0.0
    %2153 = vmatpush1.msra.mxu0 %v2125
    %2154 = vmatprep.subr.mxu0 0.0
    %2155 = vmatpush1.msra.mxu0 %v2126
    %2156 = vmatprep.subr.mxu0 0.0
    %2157 = vmatpush1.msra.mxu0 %v2127
    %2158 = vmatprep.subr.mxu0 0.0
    %2159 = vmatpush1.msra.mxu0 %v2128
    %2160 = vmatprep.subr.mxu0 0.0
    %2161 = vmatpush1.msra.mxu0 %v2129
    %2162 = vmatprep.subr.mxu0 0.0
    %2163 = vmatpush1.msra.mxu0 %v2130
    %2164 = vmatprep.subr.mxu0 0.0
    %2165 = vmatpush1.msra.mxu0 %v2131
    %2166 = vmatprep.subr.mxu0 0.0
    %2167 = vmatpush1.msra.mxu0 %v2132
    %2168 = vmatprep.subr.mxu0 0.0
    %2169 = vmatpush1.msra.mxu0 %v2133
    %2170 = vmatprep.subr.mxu0 0.0
    %2171 = vmatpush1.msra.mxu0 %v2134
    %2172 = vmatprep.subr.mxu0 0.0
    %2173 = vmatpush1.msra.mxu0 %v2135
    %2174 = vmatprep.subr.mxu0 0.0
    %2175 = vmatpush1.msra.mxu0 %v2136
    %2176 = vmatprep.subr.mxu0 0.0
    %2177 = vmatpush1.msra.mxu0 0.0
    %2178 = vmatprep.subr.mxu0 0.0
    %2179 = vmatpush1.msra.mxu0 0.0
    %2180 = vmatprep.subr.mxu0 0.0
    %2181 = vmatpush1.msra.mxu0 0.0
    %2182 = vmatprep.subr.mxu0 0.0
    %2183 = vmatpush1.msra.mxu0 0.0
    %2184 = vmatprep.subr.mxu0 0.0
    %2185 = vmatpush1.msra.mxu0 0.0
    %2186 = vmatprep.subr.mxu0 0.0
    %2187 = vmatpush1.msra.mxu0 0.0
    %2188 = vmatprep.subr.mxu0 0.0
    %2189 = vmatpush1.msra.mxu0 0.0
    %2190 = vmatprep.subr.mxu0 0.0
    %2191 = vmatpush1.msra.mxu0 0.0
    %2192 = vmatprep.subr.mxu0 0.0
    %2193 = vmatpush1.msra.mxu0 0.0
    %2194 = vmatprep.subr.mxu0 0.0
    %2195 = vmatpush1.msra.mxu0 0.0
    %2196 = vmatprep.subr.mxu0 0.0
    %2197 = vmatpush1.msra.mxu0 0.0
    %2198 = vmatprep.subr.mxu0 0.0
    %2199 = vmatpush1.msra.mxu0 0.0
    %2200 = vmatprep.subr.mxu0 0.0
    %2201 = vmatpush1.msra.mxu0 0.0
    %2202 = vmatprep.subr.mxu0 0.0
    %2203 = vmatpush1.msra.mxu0 0.0
    %2204 = vmatprep.subr.mxu0 0.0
    %2205 = vmatpush1.msra.mxu0 0.0
    %2206 = vmatprep.subr.mxu0 0.0
    %2207 = vmatpush1.msra.mxu0 0.0
    %2208 = vmatprep.mubr.f32.mxu0 0.0
    %2209 = vmatmul.mubr.f32.gmra.mrb[0].mxu0 %v1933
    %v2210 = vpop.f32.mrb[0].mxu0
    %v2211 = vadd.f32 %v2142, %v2210
    %v2212 = vpop.f32.mrb[0].mxu0
    %2213 = vdwg.mxu0
    %v2214 = vadd.f32 %v1613, %v2025
    %v2215 = vxor.u32 %v2214, 2147483648
    %v2216 = vmul.f32 %v2215, 1.442695
    %v2217 = vpow.pop %v2216
    %v2218 = vadd.f32 %v2217, 1.0
    %v2219 = vrcp.pop %v2218
    %v2220 = vmul.f32 1.0, %v2219
    %v2221 = vadd.f32 %v1614, %v2118
    %v2222 = vxor.u32 %v2221, 2147483648
    %v2223 = vmul.f32 %v2222, 1.442695
    %v2224 = vpow.pop %v2223
    %v2225 = vadd.f32 %v2224, 1.0
    %v2226 = vrcp.pop %v2225
    %v2227 = vmul.f32 1.0, %v2226
    %v2228 = vmul.f32 %v2220, %v2211
    %v2229 = vadd.f32 %v1615, %v2228
    %v2230 = vtanh.pop %v2229
    %v2231 = vsub.f32 1.0, %v2227
    %v2232 = vmul.f32 %v2231, %v2230
    %v2233 = vmul.f32 %v2227, %v1933
    %v2234 = vadd.f32 %v2232, %v2233
    %2235 = vst [vmem:[#allocation2 + $0x8] sm:$0xff] %v2234
    %v2236 = vld [vmem:[%s37] sm:$0xff]
    %v2237 = vld [vmem:[%s37 + $0x8] sm:$0xff]
    %v2238 = vld [vmem:[%s37 + $0x10] sm:$0xff]
    %v2239 = vld [vmem:[%s37 + $0x18] sm:$0xff]
    %v2240 = vld [vmem:[%s37 + $0x20] sm:$0xff]
    %v2241 = vld [vmem:[%s37 + $0x28] sm:$0xff]
    %v2242 = vld [vmem:[%s37 + $0x30] sm:$0xff]
    %v2243 = vld [vmem:[%s37 + $0x38] sm:$0xff]
    %v2244 = vld [vmem:[%s37 + $0x40] sm:$0xff]
    %v2245 = vld [vmem:[%s37 + $0x48] sm:$0xff]
    %v2246 = vld [vmem:[%s37 + $0x50] sm:$0xff]
    %v2247 = vld [vmem:[%s37 + $0x58] sm:$0xff]
    %v2248 = vld [vmem:[%s37 + $0x60] sm:$0xff]
    %v2249 = vld [vmem:[%s37 + $0x68] sm:$0xff]
    %v2250 = vld [vmem:[%s37 + $0x70] sm:$0xff]
    %v2251 = vld [vmem:[%s37 + $0x78] sm:$0xff]
    %v2252 = vld [vmem:[%s43] sm:$0x1]
    %v2254 = vlaneseq
    %v2255 = vshrl.u32 %v2254, 7
    %v2256 = vsub.s32 0, %v2255
    %v2257 = vrot.slane %v2252, %v2256
    %2259 = vmatprep.subr.mxu0 0.0
    %2260 = vmatpush1.msra.mxu0 %v2236
    %2261 = vmatprep.subr.mxu0 0.0
    %2262 = vmatpush1.msra.mxu0 %v2237
    %2263 = vmatprep.subr.mxu0 0.0
    %2264 = vmatpush1.msra.mxu0 %v2238
    %2265 = vmatprep.subr.mxu0 0.0
    %2266 = vmatpush1.msra.mxu0 %v2239
    %2267 = vmatprep.subr.mxu0 0.0
    %2268 = vmatpush1.msra.mxu0 %v2240
    %2269 = vmatprep.subr.mxu0 0.0
    %2270 = vmatpush1.msra.mxu0 %v2241
    %2271 = vmatprep.subr.mxu0 0.0
    %2272 = vmatpush1.msra.mxu0 %v2242
    %2273 = vmatprep.subr.mxu0 0.0
    %2274 = vmatpush1.msra.mxu0 %v2243
    %2275 = vmatprep.subr.mxu0 0.0
    %2276 = vmatpush1.msra.mxu0 %v2244
    %2277 = vmatprep.subr.mxu0 0.0
    %2278 = vmatpush1.msra.mxu0 %v2245
    %2279 = vmatprep.subr.mxu0 0.0
    %2280 = vmatpush1.msra.mxu0 %v2246
    %2281 = vmatprep.subr.mxu0 0.0
    %2282 = vmatpush1.msra.mxu0 %v2247
    %2283 = vmatprep.subr.mxu0 0.0
    %2284 = vmatpush1.msra.mxu0 %v2248
    %2285 = vmatprep.subr.mxu0 0.0
    %2286 = vmatpush1.msra.mxu0 %v2249
    %2287 = vmatprep.subr.mxu0 0.0
    %2288 = vmatpush1.msra.mxu0 %v2250
    %2289 = vmatprep.subr.mxu0 0.0
    %2290 = vmatpush1.msra.mxu0 %v2251
    %2291 = vmatprep.subr.mxu0 0.0
    %2292 = vmatpush1.msra.mxu0 0.0
    %2293 = vmatprep.subr.mxu0 0.0
    %2294 = vmatpush1.msra.mxu0 0.0
    %2295 = vmatprep.subr.mxu0 0.0
    %2296 = vmatpush1.msra.mxu0 0.0
    %2297 = vmatprep.subr.mxu0 0.0
    %2298 = vmatpush1.msra.mxu0 0.0
    %2299 = vmatprep.subr.mxu0 0.0
    %2300 = vmatpush1.msra.mxu0 0.0
    %2301 = vmatprep.subr.mxu0 0.0
    %2302 = vmatpush1.msra.mxu0 0.0
    %2303 = vmatprep.subr.mxu0 0.0
    %2304 = vmatpush1.msra.mxu0 0.0
    %2305 = vmatprep.subr.mxu0 0.0
    %2306 = vmatpush1.msra.mxu0 0.0
    %2307 = vmatprep.subr.mxu0 0.0
    %2308 = vmatpush1.msra.mxu0 0.0
    %2309 = vmatprep.subr.mxu0 0.0
    %2310 = vmatpush1.msra.mxu0 0.0
    %2311 = vmatprep.subr.mxu0 0.0
    %2312 = vmatpush1.msra.mxu0 0.0
    %2313 = vmatprep.subr.mxu0 0.0
    %2314 = vmatpush1.msra.mxu0 0.0
    %2315 = vmatprep.subr.mxu0 0.0
    %2316 = vmatpush1.msra.mxu0 0.0
    %2317 = vmatprep.subr.mxu0 0.0
    %2318 = vmatpush1.msra.mxu0 0.0
    %2319 = vmatprep.subr.mxu0 0.0
    %2320 = vmatpush1.msra.mxu0 0.0
    %2321 = vmatprep.subr.mxu0 0.0
    %2322 = vmatpush1.msra.mxu0 0.0
    %2323 = vmatprep.mubr.f32.mxu0 0.0
    %2324 = vmatmul.mubr.f32.gmra.mrb[0].mxu0 %v2234
    %v2325 = vpop.f32.mrb[0].mxu0
    %v2326 = vadd.f32 %v2257, %v2325
    %v2327 = vpop.f32.mrb[0].mxu0
    %2328 = vdwg.mxu0
    %v2329 = vld [vmem:[%s39] sm:$0xff]
    %v2330 = vld [vmem:[%s39 + $0x8] sm:$0xff]
    %v2331 = vld [vmem:[%s39 + $0x10] sm:$0xff]
    %v2332 = vld [vmem:[%s39 + $0x18] sm:$0xff]
    %v2333 = vld [vmem:[%s39 + $0x20] sm:$0xff]
    %v2334 = vld [vmem:[%s39 + $0x28] sm:$0xff]
    %v2335 = vld [vmem:[%s39 + $0x30] sm:$0xff]
    %v2336 = vld [vmem:[%s39 + $0x38] sm:$0xff]
    %v2337 = vld [vmem:[%s39 + $0x40] sm:$0xff]
    %v2338 = vld [vmem:[%s39 + $0x48] sm:$0xff]
    %v2339 = vld [vmem:[%s39 + $0x50] sm:$0xff]
    %v2340 = vld [vmem:[%s39 + $0x58] sm:$0xff]
    %v2341 = vld [vmem:[%s39 + $0x60] sm:$0xff]
    %v2342 = vld [vmem:[%s39 + $0x68] sm:$0xff]
    %v2343 = vld [vmem:[%s39 + $0x70] sm:$0xff]
    %v2344 = vld [vmem:[%s39 + $0x78] sm:$0xff]
    %v2345 = vld [vmem:[%s45] sm:$0x1]
    %v2347 = vlaneseq
    %v2348 = vshrl.u32 %v2347, 7
    %v2349 = vsub.s32 0, %v2348
    %v2350 = vrot.slane %v2345, %v2349
    %2352 = vmatprep.subr.mxu0 0.0
    %2353 = vmatpush1.msra.mxu0 %v2329
    %2354 = vmatprep.subr.mxu0 0.0
    %2355 = vmatpush1.msra.mxu0 %v2330
    %2356 = vmatprep.subr.mxu0 0.0
    %2357 = vmatpush1.msra.mxu0 %v2331
    %2358 = vmatprep.subr.mxu0 0.0
    %2359 = vmatpush1.msra.mxu0 %v2332
    %2360 = vmatprep.subr.mxu0 0.0
    %2361 = vmatpush1.msra.mxu0 %v2333
    %2362 = vmatprep.subr.mxu0 0.0
    %2363 = vmatpush1.msra.mxu0 %v2334
    %2364 = vmatprep.subr.mxu0 0.0
    %2365 = vmatpush1.msra.mxu0 %v2335
    %2366 = vmatprep.subr.mxu0 0.0
    %2367 = vmatpush1.msra.mxu0 %v2336
    %2368 = vmatprep.subr.mxu0 0.0
    %2369 = vmatpush1.msra.mxu0 %v2337
    %2370 = vmatprep.subr.mxu0 0.0
    %2371 = vmatpush1.msra.mxu0 %v2338
    %2372 = vmatprep.subr.mxu0 0.0
    %2373 = vmatpush1.msra.mxu0 %v2339
    %2374 = vmatprep.subr.mxu0 0.0
    %2375 = vmatpush1.msra.mxu0 %v2340
    %2376 = vmatprep.subr.mxu0 0.0
    %2377 = vmatpush1.msra.mxu0 %v2341
    %2378 = vmatprep.subr.mxu0 0.0
    %2379 = vmatpush1.msra.mxu0 %v2342
    %2380 = vmatprep.subr.mxu0 0.0
    %2381 = vmatpush1.msra.mxu0 %v2343
    %2382 = vmatprep.subr.mxu0 0.0
    %2383 = vmatpush1.msra.mxu0 %v2344
    %2384 = vmatprep.subr.mxu0 0.0
    %2385 = vmatpush1.msra.mxu0 0.0
    %2386 = vmatprep.subr.mxu0 0.0
    %2387 = vmatpush1.msra.mxu0 0.0
    %2388 = vmatprep.subr.mxu0 0.0
    %2389 = vmatpush1.msra.mxu0 0.0
    %2390 = vmatprep.subr.mxu0 0.0
    %2391 = vmatpush1.msra.mxu0 0.0
    %2392 = vmatprep.subr.mxu0 0.0
    %2393 = vmatpush1.msra.mxu0 0.0
    %2394 = vmatprep.subr.mxu0 0.0
    %2395 = vmatpush1.msra.mxu0 0.0
    %2396 = vmatprep.subr.mxu0 0.0
    %2397 = vmatpush1.msra.mxu0 0.0
    %2398 = vmatprep.subr.mxu0 0.0
    %2399 = vmatpush1.msra.mxu0 0.0
    %2400 = vmatprep.subr.mxu0 0.0
    %2401 = vmatpush1.msra.mxu0 0.0
    %2402 = vmatprep.subr.mxu0 0.0
    %2403 = vmatpush1.msra.mxu0 0.0
    %2404 = vmatprep.subr.mxu0 0.0
    %2405 = vmatpush1.msra.mxu0 0.0
    %2406 = vmatprep.subr.mxu0 0.0
    %2407 = vmatpush1.msra.mxu0 0.0
    %2408 = vmatprep.subr.mxu0 0.0
    %2409 = vmatpush1.msra.mxu0 0.0
    %2410 = vmatprep.subr.mxu0 0.0
    %2411 = vmatpush1.msra.mxu0 0.0
    %2412 = vmatprep.subr.mxu0 0.0
    %2413 = vmatpush1.msra.mxu0 0.0
    %2414 = vmatprep.subr.mxu0 0.0
    %2415 = vmatpush1.msra.mxu0 0.0
    %2416 = vmatprep.mubr.f32.mxu0 0.0
    %2417 = vmatmul.mubr.f32.gmra.mrb[0].mxu0 %v2234
    %v2418 = vpop.f32.mrb[0].mxu0
    %v2419 = vadd.f32 %v2350, %v2418
    %v2420 = vpop.f32.mrb[0].mxu0
    %2421 = vdwg.mxu0
    %v2422 = vld [vmem:[%s41] sm:$0xff]
    %v2423 = vld [vmem:[%s41 + $0x8] sm:$0xff]
    %v2424 = vld [vmem:[%s41 + $0x10] sm:$0xff]
    %v2425 = vld [vmem:[%s41 + $0x18] sm:$0xff]
    %v2426 = vld [vmem:[%s41 + $0x20] sm:$0xff]
    %v2427 = vld [vmem:[%s41 + $0x28] sm:$0xff]
    %v2428 = vld [vmem:[%s41 + $0x30] sm:$0xff]
    %v2429 = vld [vmem:[%s41 + $0x38] sm:$0xff]
    %v2430 = vld [vmem:[%s41 + $0x40] sm:$0xff]
    %v2431 = vld [vmem:[%s41 + $0x48] sm:$0xff]
    %v2432 = vld [vmem:[%s41 + $0x50] sm:$0xff]
    %v2433 = vld [vmem:[%s41 + $0x58] sm:$0xff]
    %v2434 = vld [vmem:[%s41 + $0x60] sm:$0xff]
    %v2435 = vld [vmem:[%s41 + $0x68] sm:$0xff]
    %v2436 = vld [vmem:[%s41 + $0x70] sm:$0xff]
    %v2437 = vld [vmem:[%s41 + $0x78] sm:$0xff]
    %v2438 = vld [vmem:[%s47] sm:$0x1]
    %v2440 = vlaneseq
    %v2441 = vshrl.u32 %v2440, 7
    %v2442 = vsub.s32 0, %v2441
    %v2443 = vrot.slane %v2438, %v2442
    %2445 = vmatprep.subr.mxu0 0.0
    %2446 = vmatpush1.msra.mxu0 %v2422
    %2447 = vmatprep.subr.mxu0 0.0
    %2448 = vmatpush1.msra.mxu0 %v2423
    %2449 = vmatprep.subr.mxu0 0.0
    %2450 = vmatpush1.msra.mxu0 %v2424
    %2451 = vmatprep.subr.mxu0 0.0
    %2452 = vmatpush1.msra.mxu0 %v2425
    %2453 = vmatprep.subr.mxu0 0.0
    %2454 = vmatpush1.msra.mxu0 %v2426
    %2455 = vmatprep.subr.mxu0 0.0
    %2456 = vmatpush1.msra.mxu0 %v2427
    %2457 = vmatprep.subr.mxu0 0.0
    %2458 = vmatpush1.msra.mxu0 %v2428
    %2459 = vmatprep.subr.mxu0 0.0
    %2460 = vmatpush1.msra.mxu0 %v2429
    %2461 = vmatprep.subr.mxu0 0.0
    %2462 = vmatpush1.msra.mxu0 %v2430
    %2463 = vmatprep.subr.mxu0 0.0
    %2464 = vmatpush1.msra.mxu0 %v2431
    %2465 = vmatprep.subr.mxu0 0.0
    %2466 = vmatpush1.msra.mxu0 %v2432
    %2467 = vmatprep.subr.mxu0 0.0
    %2468 = vmatpush1.msra.mxu0 %v2433
    %2469 = vmatprep.subr.mxu0 0.0
    %2470 = vmatpush1.msra.mxu0 %v2434
    %2471 = vmatprep.subr.mxu0 0.0
    %2472 = vmatpush1.msra.mxu0 %v2435
    %2473 = vmatprep.subr.mxu0 0.0
    %2474 = vmatpush1.msra.mxu0 %v2436
    %2475 = vmatprep.subr.mxu0 0.0
    %2476 = vmatpush1.msra.mxu0 %v2437
    %2477 = vmatprep.subr.mxu0 0.0
    %2478 = vmatpush1.msra.mxu0 0.0
    %2479 = vmatprep.subr.mxu0 0.0
    %2480 = vmatpush1.msra.mxu0 0.0
    %2481 = vmatprep.subr.mxu0 0.0
    %2482 = vmatpush1.msra.mxu0 0.0
    %2483 = vmatprep.subr.mxu0 0.0
    %2484 = vmatpush1.msra.mxu0 0.0
    %2485 = vmatprep.subr.mxu0 0.0
    %2486 = vmatpush1.msra.mxu0 0.0
    %2487 = vmatprep.subr.mxu0 0.0
    %2488 = vmatpush1.msra.mxu0 0.0
    %2489 = vmatprep.subr.mxu0 0.0
    %2490 = vmatpush1.msra.mxu0 0.0
    %2491 = vmatprep.subr.mxu0 0.0
    %2492 = vmatpush1.msra.mxu0 0.0
    %2493 = vmatprep.subr.mxu0 0.0
    %2494 = vmatpush1.msra.mxu0 0.0
    %2495 = vmatprep.subr.mxu0 0.0
    %2496 = vmatpush1.msra.mxu0 0.0
    %2497 = vmatprep.subr.mxu0 0.0
    %2498 = vmatpush1.msra.mxu0 0.0
    %2499 = vmatprep.subr.mxu0 0.0
    %2500 = vmatpush1.msra.mxu0 0.0
    %2501 = vmatprep.subr.mxu0 0.0
    %2502 = vmatpush1.msra.mxu0 0.0
    %2503 = vmatprep.subr.mxu0 0.0
    %2504 = vmatpush1.msra.mxu0 0.0
    %2505 = vmatprep.subr.mxu0 0.0
    %2506 = vmatpush1.msra.mxu0 0.0
    %2507 = vmatprep.subr.mxu0 0.0
    %2508 = vmatpush1.msra.mxu0 0.0
    %2509 = vmatprep.mubr.f32.mxu0 0.0
    %2510 = vmatmul.mubr.f32.gmra.mrb[0].mxu0 %v2234
    %v2511 = vpop.f32.mrb[0].mxu0
    %v2512 = vadd.f32 %v2443, %v2511
    %v2513 = vpop.f32.mrb[0].mxu0
    %2514 = vdwg.mxu0
    %v2515 = vadd.f32 %v1616, %v2326
    %v2516 = vxor.u32 %v2515, 2147483648
    %v2517 = vmul.f32 %v2516, 1.442695
    %v2518 = vpow.pop %v2517
    %v2519 = vadd.f32 %v2518, 1.0
    %v2520 = vrcp.pop %v2519
    %v2521 = vmul.f32 1.0, %v2520
    %v2522 = vadd.f32 %v1617, %v2419
    %v2523 = vxor.u32 %v2522, 2147483648
    %v2524 = vmul.f32 %v2523, 1.442695
    %v2525 = vpow.pop %v2524
    %v2526 = vadd.f32 %v2525, 1.0
    %v2527 = vrcp.pop %v2526
    %v2528 = vmul.f32 1.0, %v2527
    %v2529 = vmul.f32 %v2521, %v2512
    %v2530 = vadd.f32 %v1618, %v2529
    %v2531 = vtanh.pop %v2530
    %v2532 = vsub.f32 1.0, %v2528
    %v2533 = vmul.f32 %v2532, %v2531
    %v2534 = vmul.f32 %v2528, %v2234
    %v2535 = vadd.f32 %v2533, %v2534
    %2536 = vst [vmem:[#allocation2 + $0x10] sm:$0xff] %v2535
    %v2537 = vld [vmem:[%s37] sm:$0xff]
    %v2538 = vld [vmem:[%s37 + $0x8] sm:$0xff]
    %v2539 = vld [vmem:[%s37 + $0x10] sm:$0xff]
    %v2540 = vld [vmem:[%s37 + $0x18] sm:$0xff]
    %v2541 = vld [vmem:[%s37 + $0x20] sm:$0xff]
    %v2542 = vld [vmem:[%s37 + $0x28] sm:$0xff]
    %v2543 = vld [vmem:[%s37 + $0x30] sm:$0xff]
    %v2544 = vld [vmem:[%s37 + $0x38] sm:$0xff]
    %v2545 = vld [vmem:[%s37 + $0x40] sm:$0xff]
    %v2546 = vld [vmem:[%s37 + $0x48] sm:$0xff]
    %v2547 = vld [vmem:[%s37 + $0x50] sm:$0xff]
    %v2548 = vld [vmem:[%s37 + $0x58] sm:$0xff]
    %v2549 = vld [vmem:[%s37 + $0x60] sm:$0xff]
    %v2550 = vld [vmem:[%s37 + $0x68] sm:$0xff]
    %v2551 = vld [vmem:[%s37 + $0x70] sm:$0xff]
    %v2552 = vld [vmem:[%s37 + $0x78] sm:$0xff]
    %v2553 = vld [vmem:[%s43] sm:$0x1]
    %v2555 = vlaneseq
    %v2556 = vshrl.u32 %v2555, 7
    %v2557 = vsub.s32 0, %v2556
    %v2558 = vrot.slane %v2553, %v2557
    %2560 = vmatprep.subr.mxu0 0.0
    %2561 = vmatpush1.msra.mxu0 %v2537
    %2562 = vmatprep.subr.mxu0 0.0
    %2563 = vmatpush1.msra.mxu0 %v2538
    %2564 = vmatprep.subr.mxu0 0.0
    %2565 = vmatpush1.msra.mxu0 %v2539
    %2566 = vmatprep.subr.mxu0 0.0
    %2567 = vmatpush1.msra.mxu0 %v2540
    %2568 = vmatprep.subr.mxu0 0.0
    %2569 = vmatpush1.msra.mxu0 %v2541
    %2570 = vmatprep.subr.mxu0 0.0
    %2571 = vmatpush1.msra.mxu0 %v2542
    %2572 = vmatprep.subr.mxu0 0.0
    %2573 = vmatpush1.msra.mxu0 %v2543
    %2574 = vmatprep.subr.mxu0 0.0
    %2575 = vmatpush1.msra.mxu0 %v2544
    %2576 = vmatprep.subr.mxu0 0.0
    %2577 = vmatpush1.msra.mxu0 %v2545
    %2578 = vmatprep.subr.mxu0 0.0
    %2579 = vmatpush1.msra.mxu0 %v2546
    %2580 = vmatprep.subr.mxu0 0.0
    %2581 = vmatpush1.msra.mxu0 %v2547
    %2582 = vmatprep.subr.mxu0 0.0
    %2583 = vmatpush1.msra.mxu0 %v2548
    %2584 = vmatprep.subr.mxu0 0.0
    %2585 = vmatpush1.msra.mxu0 %v2549
    %2586 = vmatprep.subr.mxu0 0.0
    %2587 = vmatpush1.msra.mxu0 %v2550
    %2588 = vmatprep.subr.mxu0 0.0
    %2589 = vmatpush1.msra.mxu0 %v2551
    %2590 = vmatprep.subr.mxu0 0.0
    %2591 = vmatpush1.msra.mxu0 %v2552
    %2592 = vmatprep.subr.mxu0 0.0
    %2593 = vmatpush1.msra.mxu0 0.0
    %2594 = vmatprep.subr.mxu0 0.0
    %2595 = vmatpush1.msra.mxu0 0.0
    %2596 = vmatprep.subr.mxu0 0.0
    %2597 = vmatpush1.msra.mxu0 0.0
    %2598 = vmatprep.subr.mxu0 0.0
    %2599 = vmatpush1.msra.mxu0 0.0
    %2600 = vmatprep.subr.mxu0 0.0
    %2601 = vmatpush1.msra.mxu0 0.0
    %2602 = vmatprep.subr.mxu0 0.0
    %2603 = vmatpush1.msra.mxu0 0.0
    %2604 = vmatprep.subr.mxu0 0.0
    %2605 = vmatpush1.msra.mxu0 0.0
    %2606 = vmatprep.subr.mxu0 0.0
    %2607 = vmatpush1.msra.mxu0 0.0
    %2608 = vmatprep.subr.mxu0 0.0
    %2609 = vmatpush1.msra.mxu0 0.0
    %2610 = vmatprep.subr.mxu0 0.0
    %2611 = vmatpush1.msra.mxu0 0.0
    %2612 = vmatprep.subr.mxu0 0.0
    %2613 = vmatpush1.msra.mxu0 0.0
    %2614 = vmatprep.subr.mxu0 0.0
    %2615 = vmatpush1.msra.mxu0 0.0
    %2616 = vmatprep.subr.mxu0 0.0
    %2617 = vmatpush1.msra.mxu0 0.0
    %2618 = vmatprep.subr.mxu0 0.0
    %2619 = vmatpush1.msra.mxu0 0.0
    %2620 = vmatprep.subr.mxu0 0.0
    %2621 = vmatpush1.msra.mxu0 0.0
    %2622 = vmatprep.subr.mxu0 0.0
    %2623 = vmatpush1.msra.mxu0 0.0
    %2624 = vmatprep.mubr.f32.mxu0 0.0
    %2625 = vmatmul.mubr.f32.gmra.mrb[0].mxu0 %v2535
    %v2626 = vpop.f32.mrb[0].mxu0
    %v2627 = vadd.f32 %v2558, %v2626
    %v2628 = vpop.f32.mrb[0].mxu0
    %2629 = vdwg.mxu0
    %v2630 = vld [vmem:[%s39] sm:$0xff]
    %v2631 = vld [vmem:[%s39 + $0x8] sm:$0xff]
    %v2632 = vld [vmem:[%s39 + $0x10] sm:$0xff]
    %v2633 = vld [vmem:[%s39 + $0x18] sm:$0xff]
    %v2634 = vld [vmem:[%s39 + $0x20] sm:$0xff]
    %v2635 = vld [vmem:[%s39 + $0x28] sm:$0xff]
    %v2636 = vld [vmem:[%s39 + $0x30] sm:$0xff]
    %v2637 = vld [vmem:[%s39 + $0x38] sm:$0xff]
    %v2638 = vld [vmem:[%s39 + $0x40] sm:$0xff]
    %v2639 = vld [vmem:[%s39 + $0x48] sm:$0xff]
    %v2640 = vld [vmem:[%s39 + $0x50] sm:$0xff]
    %v2641 = vld [vmem:[%s39 + $0x58] sm:$0xff]
    %v2642 = vld [vmem:[%s39 + $0x60] sm:$0xff]
    %v2643 = vld [vmem:[%s39 + $0x68] sm:$0xff]
    %v2644 = vld [vmem:[%s39 + $0x70] sm:$0xff]
    %v2645 = vld [vmem:[%s39 + $0x78] sm:$0xff]
    %v2646 = vld [vmem:[%s45] sm:$0x1]
    %v2648 = vlaneseq
    %v2649 = vshrl.u32 %v2648, 7
    %v2650 = vsub.s32 0, %v2649
    %v2651 = vrot.slane %v2646, %v2650
    %2653 = vmatprep.subr.mxu0 0.0
    %2654 = vmatpush1.msra.mxu0 %v2630
    %2655 = vmatprep.subr.mxu0 0.0
    %2656 = vmatpush1.msra.mxu0 %v2631
    %2657 = vmatprep.subr.mxu0 0.0
    %2658 = vmatpush1.msra.mxu0 %v2632
    %2659 = vmatprep.subr.mxu0 0.0
    %2660 = vmatpush1.msra.mxu0 %v2633
    %2661 = vmatprep.subr.mxu0 0.0
    %2662 = vmatpush1.msra.mxu0 %v2634
    %2663 = vmatprep.subr.mxu0 0.0
    %2664 = vmatpush1.msra.mxu0 %v2635
    %2665 = vmatprep.subr.mxu0 0.0
    %2666 = vmatpush1.msra.mxu0 %v2636
    %2667 = vmatprep.subr.mxu0 0.0
    %2668 = vmatpush1.msra.mxu0 %v2637
    %2669 = vmatprep.subr.mxu0 0.0
    %2670 = vmatpush1.msra.mxu0 %v2638
    %2671 = vmatprep.subr.mxu0 0.0
    %2672 = vmatpush1.msra.mxu0 %v2639
    %2673 = vmatprep.subr.mxu0 0.0
    %2674 = vmatpush1.msra.mxu0 %v2640
    %2675 = vmatprep.subr.mxu0 0.0
    %2676 = vmatpush1.msra.mxu0 %v2641
    %2677 = vmatprep.subr.mxu0 0.0
    %2678 = vmatpush1.msra.mxu0 %v2642
    %2679 = vmatprep.subr.mxu0 0.0
    %2680 = vmatpush1.msra.mxu0 %v2643
    %2681 = vmatprep.subr.mxu0 0.0
    %2682 = vmatpush1.msra.mxu0 %v2644
    %2683 = vmatprep.subr.mxu0 0.0
    %2684 = vmatpush1.msra.mxu0 %v2645
    %2685 = vmatprep.subr.mxu0 0.0
    %2686 = vmatpush1.msra.mxu0 0.0
    %2687 = vmatprep.subr.mxu0 0.0
    %2688 = vmatpush1.msra.mxu0 0.0
    %2689 = vmatprep.subr.mxu0 0.0
    %2690 = vmatpush1.msra.mxu0 0.0
    %2691 = vmatprep.subr.mxu0 0.0
    %2692 = vmatpush1.msra.mxu0 0.0
    %2693 = vmatprep.subr.mxu0 0.0
    %2694 = vmatpush1.msra.mxu0 0.0
    %2695 = vmatprep.subr.mxu0 0.0
    %2696 = vmatpush1.msra.mxu0 0.0
    %2697 = vmatprep.subr.mxu0 0.0
    %2698 = vmatpush1.msra.mxu0 0.0
    %2699 = vmatprep.subr.mxu0 0.0
    %2700 = vmatpush1.msra.mxu0 0.0
    %2701 = vmatprep.subr.mxu0 0.0
    %2702 = vmatpush1.msra.mxu0 0.0
    %2703 = vmatprep.subr.mxu0 0.0
    %2704 = vmatpush1.msra.mxu0 0.0
    %2705 = vmatprep.subr.mxu0 0.0
    %2706 = vmatpush1.msra.mxu0 0.0
    %2707 = vmatprep.subr.mxu0 0.0
    %2708 = vmatpush1.msra.mxu0 0.0
    %2709 = vmatprep.subr.mxu0 0.0
    %2710 = vmatpush1.msra.mxu0 0.0
    %2711 = vmatprep.subr.mxu0 0.0
    %2712 = vmatpush1.msra.mxu0 0.0
    %2713 = vmatprep.subr.mxu0 0.0
    %2714 = vmatpush1.msra.mxu0 0.0
    %2715 = vmatprep.subr.mxu0 0.0
    %2716 = vmatpush1.msra.mxu0 0.0
    %2717 = vmatprep.mubr.f32.mxu0 0.0
    %2718 = vmatmul.mubr.f32.gmra.mrb[0].mxu0 %v2535
    %v2719 = vpop.f32.mrb[0].mxu0
    %v2720 = vadd.f32 %v2651, %v2719
    %v2721 = vpop.f32.mrb[0].mxu0
    %2722 = vdwg.mxu0
    %v2723 = vld [vmem:[%s41] sm:$0xff]
    %v2724 = vld [vmem:[%s41 + $0x8] sm:$0xff]
    %v2725 = vld [vmem:[%s41 + $0x10] sm:$0xff]
    %v2726 = vld [vmem:[%s41 + $0x18] sm:$0xff]
    %v2727 = vld [vmem:[%s41 + $0x20] sm:$0xff]
    %v2728 = vld [vmem:[%s41 + $0x28] sm:$0xff]
    %v2729 = vld [vmem:[%s41 + $0x30] sm:$0xff]
    %v2730 = vld [vmem:[%s41 + $0x38] sm:$0xff]
    %v2731 = vld [vmem:[%s41 + $0x40] sm:$0xff]
    %v2732 = vld [vmem:[%s41 + $0x48] sm:$0xff]
    %v2733 = vld [vmem:[%s41 + $0x50] sm:$0xff]
    %v2734 = vld [vmem:[%s41 + $0x58] sm:$0xff]
    %v2735 = vld [vmem:[%s41 + $0x60] sm:$0xff]
    %v2736 = vld [vmem:[%s41 + $0x68] sm:$0xff]
    %v2737 = vld [vmem:[%s41 + $0x70] sm:$0xff]
    %v2738 = vld [vmem:[%s41 + $0x78] sm:$0xff]
    %v2739 = vld [vmem:[%s47] sm:$0x1]
    %v2741 = vlaneseq
    %v2742 = vshrl.u32 %v2741, 7
    %v2743 = vsub.s32 0, %v2742
    %v2744 = vrot.slane %v2739, %v2743
    %2746 = vmatprep.subr.mxu0 0.0
    %2747 = vmatpush1.msra.mxu0 %v2723
    %2748 = vmatprep.subr.mxu0 0.0
    %2749 = vmatpush1.msra.mxu0 %v2724
    %2750 = vmatprep.subr.mxu0 0.0
    %2751 = vmatpush1.msra.mxu0 %v2725
    %2752 = vmatprep.subr.mxu0 0.0
    %2753 = vmatpush1.msra.mxu0 %v2726
    %2754 = vmatprep.subr.mxu0 0.0
    %2755 = vmatpush1.msra.mxu0 %v2727
    %2756 = vmatprep.subr.mxu0 0.0
    %2757 = vmatpush1.msra.mxu0 %v2728
    %2758 = vmatprep.subr.mxu0 0.0
    %2759 = vmatpush1.msra.mxu0 %v2729
    %2760 = vmatprep.subr.mxu0 0.0
    %2761 = vmatpush1.msra.mxu0 %v2730
    %2762 = vmatprep.subr.mxu0 0.0
    %2763 = vmatpush1.msra.mxu0 %v2731
    %2764 = vmatprep.subr.mxu0 0.0
    %2765 = vmatpush1.msra.mxu0 %v2732
    %2766 = vmatprep.subr.mxu0 0.0
    %2767 = vmatpush1.msra.mxu0 %v2733
    %2768 = vmatprep.subr.mxu0 0.0
    %2769 = vmatpush1.msra.mxu0 %v2734
    %2770 = vmatprep.subr.mxu0 0.0
    %2771 = vmatpush1.msra.mxu0 %v2735
    %2772 = vmatprep.subr.mxu0 0.0
    %2773 = vmatpush1.msra.mxu0 %v2736
    %2774 = vmatprep.subr.mxu0 0.0
    %2775 = vmatpush1.msra.mxu0 %v2737
    %2776 = vmatprep.subr.mxu0 0.0
    %2777 = vmatpush1.msra.mxu0 %v2738
    %2778 = vmatprep.subr.mxu0 0.0
    %2779 = vmatpush1.msra.mxu0 0.0
    %2780 = vmatprep.subr.mxu0 0.0
    %2781 = vmatpush1.msra.mxu0 0.0
    %2782 = vmatprep.subr.mxu0 0.0
    %2783 = vmatpush1.msra.mxu0 0.0
    %2784 = vmatprep.subr.mxu0 0.0
    %2785 = vmatpush1.msra.mxu0 0.0
    %2786 = vmatprep.subr.mxu0 0.0
    %2787 = vmatpush1.msra.mxu0 0.0
    %2788 = vmatprep.subr.mxu0 0.0
    %2789 = vmatpush1.msra.mxu0 0.0
    %2790 = vmatprep.subr.mxu0 0.0
    %2791 = vmatpush1.msra.mxu0 0.0
    %2792 = vmatprep.subr.mxu0 0.0
    %2793 = vmatpush1.msra.mxu0 0.0
    %2794 = vmatprep.subr.mxu0 0.0
    %2795 = vmatpush1.msra.mxu0 0.0
    %2796 = vmatprep.subr.mxu0 0.0
    %2797 = vmatpush1.msra.mxu0 0.0
    %2798 = vmatprep.subr.mxu0 0.0
    %2799 = vmatpush1.msra.mxu0 0.0
    %2800 = vmatprep.subr.mxu0 0.0
    %2801 = vmatpush1.msra.mxu0 0.0
    %2802 = vmatprep.subr.mxu0 0.0
    %2803 = vmatpush1.msra.mxu0 0.0
    %2804 = vmatprep.subr.mxu0 0.0
    %2805 = vmatpush1.msra.mxu0 0.0
    %2806 = vmatprep.subr.mxu0 0.0
    %2807 = vmatpush1.msra.mxu0 0.0
    %2808 = vmatprep.subr.mxu0 0.0
    %2809 = vmatpush1.msra.mxu0 0.0
    %2810 = vmatprep.mubr.f32.mxu0 0.0
    %2811 = vmatmul.mubr.f32.gmra.mrb[0].mxu0 %v2535
    %v2812 = vpop.f32.mrb[0].mxu0
    %v2813 = vadd.f32 %v2744, %v2812
    %v2814 = vpop.f32.mrb[0].mxu0
    %2815 = vdwg.mxu0
    %v2816 = vadd.f32 %v1619, %v2627
    %v2817 = vxor.u32 %v2816, 2147483648
    %v2818 = vmul.f32 %v2817, 1.442695
    %v2819 = vpow.pop %v2818
    %v2820 = vadd.f32 %v2819, 1.0
    %v2821 = vrcp.pop %v2820
    %v2822 = vmul.f32 1.0, %v2821
    %v2823 = vadd.f32 %v1620, %v2720
    %v2824 = vxor.u32 %v2823, 2147483648
    %v2825 = vmul.f32 %v2824, 1.442695
    %v2826 = vpow.pop %v2825
    %v2827 = vadd.f32 %v2826, 1.0
    %v2828 = vrcp.pop %v2827
    %v2829 = vmul.f32 1.0, %v2828
    %v2830 = vmul.f32 %v2822, %v2813
    %v2831 = vadd.f32 %v1621, %v2830
    %v2832 = vtanh.pop %v2831
    %v2833 = vsub.f32 1.0, %v2829
    %v2834 = vmul.f32 %v2833, %v2832
    %v2835 = vmul.f32 %v2829, %v2535
    %v2836 = vadd.f32 %v2834, %v2835
    %2837 = vst [vmem:[#allocation2 + $0x18] sm:$0xff] %v2836
    %v2838 = vld [vmem:[%s37] sm:$0xff]
    %v2839 = vld [vmem:[%s37 + $0x8] sm:$0xff]
    %v2840 = vld [vmem:[%s37 + $0x10] sm:$0xff]
    %v2841 = vld [vmem:[%s37 + $0x18] sm:$0xff]
    %v2842 = vld [vmem:[%s37 + $0x20] sm:$0xff]
    %v2843 = vld [vmem:[%s37 + $0x28] sm:$0xff]
    %v2844 = vld [vmem:[%s37 + $0x30] sm:$0xff]
    %v2845 = vld [vmem:[%s37 + $0x38] sm:$0xff]
    %v2846 = vld [vmem:[%s37 + $0x40] sm:$0xff]
    %v2847 = vld [vmem:[%s37 + $0x48] sm:$0xff]
    %v2848 = vld [vmem:[%s37 + $0x50] sm:$0xff]
    %v2849 = vld [vmem:[%s37 + $0x58] sm:$0xff]
    %v2850 = vld [vmem:[%s37 + $0x60] sm:$0xff]
    %v2851 = vld [vmem:[%s37 + $0x68] sm:$0xff]
    %v2852 = vld [vmem:[%s37 + $0x70] sm:$0xff]
    %v2853 = vld [vmem:[%s37 + $0x78] sm:$0xff]
    %v2854 = vld [vmem:[%s43] sm:$0x1]
    %v2856 = vlaneseq
    %v2857 = vshrl.u32 %v2856, 7
    %v2858 = vsub.s32 0, %v2857
    %v2859 = vrot.slane %v2854, %v2858
    %2861 = vmatprep.subr.mxu0 0.0
    %2862 = vmatpush1.msra.mxu0 %v2838
    %2863 = vmatprep.subr.mxu0 0.0
    %2864 = vmatpush1.msra.mxu0 %v2839
    %2865 = vmatprep.subr.mxu0 0.0
    %2866 = vmatpush1.msra.mxu0 %v2840
    %2867 = vmatprep.subr.mxu0 0.0
    %2868 = vmatpush1.msra.mxu0 %v2841
    %2869 = vmatprep.subr.mxu0 0.0
    %2870 = vmatpush1.msra.mxu0 %v2842
    %2871 = vmatprep.subr.mxu0 0.0
    %2872 = vmatpush1.msra.mxu0 %v2843
    %2873 = vmatprep.subr.mxu0 0.0
    %2874 = vmatpush1.msra.mxu0 %v2844
    %2875 = vmatprep.subr.mxu0 0.0
    %2876 = vmatpush1.msra.mxu0 %v2845
    %2877 = vmatprep.subr.mxu0 0.0
    %2878 = vmatpush1.msra.mxu0 %v2846
    %2879 = vmatprep.subr.mxu0 0.0
    %2880 = vmatpush1.msra.mxu0 %v2847
    %2881 = vmatprep.subr.mxu0 0.0
    %2882 = vmatpush1.msra.mxu0 %v2848
    %2883 = vmatprep.subr.mxu0 0.0
    %2884 = vmatpush1.msra.mxu0 %v2849
    %2885 = vmatprep.subr.mxu0 0.0
    %2886 = vmatpush1.msra.mxu0 %v2850
    %2887 = vmatprep.subr.mxu0 0.0
    %2888 = vmatpush1.msra.mxu0 %v2851
    %2889 = vmatprep.subr.mxu0 0.0
    %2890 = vmatpush1.msra.mxu0 %v2852
    %2891 = vmatprep.subr.mxu0 0.0
    %2892 = vmatpush1.msra.mxu0 %v2853
    %2893 = vmatprep.subr.mxu0 0.0
    %2894 = vmatpush1.msra.mxu0 0.0
    %2895 = vmatprep.subr.mxu0 0.0
    %2896 = vmatpush1.msra.mxu0 0.0
    %2897 = vmatprep.subr.mxu0 0.0
    %2898 = vmatpush1.msra.mxu0 0.0
    %2899 = vmatprep.subr.mxu0 0.0
    %2900 = vmatpush1.msra.mxu0 0.0
    %2901 = vmatprep.subr.mxu0 0.0
    %2902 = vmatpush1.msra.mxu0 0.0
    %2903 = vmatprep.subr.mxu0 0.0
    %2904 = vmatpush1.msra.mxu0 0.0
    %2905 = vmatprep.subr.mxu0 0.0
    %2906 = vmatpush1.msra.mxu0 0.0
    %2907 = vmatprep.subr.mxu0 0.0
    %2908 = vmatpush1.msra.mxu0 0.0
    %2909 = vmatprep.subr.mxu0 0.0
    %2910 = vmatpush1.msra.mxu0 0.0
    %2911 = vmatprep.subr.mxu0 0.0
    %2912 = vmatpush1.msra.mxu0 0.0
    %2913 = vmatprep.subr.mxu0 0.0
    %2914 = vmatpush1.msra.mxu0 0.0
    %2915 = vmatprep.subr.mxu0 0.0
    %2916 = vmatpush1.msra.mxu0 0.0
    %2917 = vmatprep.subr.mxu0 0.0
    %2918 = vmatpush1.msra.mxu0 0.0
    %2919 = vmatprep.subr.mxu0 0.0
    %2920 = vmatpush1.msra.mxu0 0.0
    %2921 = vmatprep.subr.mxu0 0.0
    %2922 = vmatpush1.msra.mxu0 0.0
    %2923 = vmatprep.subr.mxu0 0.0
    %2924 = vmatpush1.msra.mxu0 0.0
    %2925 = vmatprep.mubr.f32.mxu0 0.0
    %2926 = vmatmul.mubr.f32.gmra.mrb[0].mxu0 %v2836
    %v2927 = vpop.f32.mrb[0].mxu0
    %v2928 = vadd.f32 %v2859, %v2927
    %v2929 = vpop.f32.mrb[0].mxu0
    %2930 = vdwg.mxu0
    %v2931 = vld [vmem:[%s39] sm:$0xff]
    %v2932 = vld [vmem:[%s39 + $0x8] sm:$0xff]
    %v2933 = vld [vmem:[%s39 + $0x10] sm:$0xff]
    %v2934 = vld [vmem:[%s39 + $0x18] sm:$0xff]
    %v2935 = vld [vmem:[%s39 + $0x20] sm:$0xff]
    %v2936 = vld [vmem:[%s39 + $0x28] sm:$0xff]
    %v2937 = vld [vmem:[%s39 + $0x30] sm:$0xff]
    %v2938 = vld [vmem:[%s39 + $0x38] sm:$0xff]
    %v2939 = vld [vmem:[%s39 + $0x40] sm:$0xff]
    %v2940 = vld [vmem:[%s39 + $0x48] sm:$0xff]
    %v2941 = vld [vmem:[%s39 + $0x50] sm:$0xff]
    %v2942 = vld [vmem:[%s39 + $0x58] sm:$0xff]
    %v2943 = vld [vmem:[%s39 + $0x60] sm:$0xff]
    %v2944 = vld [vmem:[%s39 + $0x68] sm:$0xff]
    %v2945 = vld [vmem:[%s39 + $0x70] sm:$0xff]
    %v2946 = vld [vmem:[%s39 + $0x78] sm:$0xff]
    %v2947 = vld [vmem:[%s45] sm:$0x1]
    %v2949 = vlaneseq
    %v2950 = vshrl.u32 %v2949, 7
    %v2951 = vsub.s32 0, %v2950
    %v2952 = vrot.slane %v2947, %v2951
    %2954 = vmatprep.subr.mxu0 0.0
    %2955 = vmatpush1.msra.mxu0 %v2931
    %2956 = vmatprep.subr.mxu0 0.0
    %2957 = vmatpush1.msra.mxu0 %v2932
    %2958 = vmatprep.subr.mxu0 0.0
    %2959 = vmatpush1.msra.mxu0 %v2933
    %2960 = vmatprep.subr.mxu0 0.0
    %2961 = vmatpush1.msra.mxu0 %v2934
    %2962 = vmatprep.subr.mxu0 0.0
    %2963 = vmatpush1.msra.mxu0 %v2935
    %2964 = vmatprep.subr.mxu0 0.0
    %2965 = vmatpush1.msra.mxu0 %v2936
    %2966 = vmatprep.subr.mxu0 0.0
    %2967 = vmatpush1.msra.mxu0 %v2937
    %2968 = vmatprep.subr.mxu0 0.0
    %2969 = vmatpush1.msra.mxu0 %v2938
    %2970 = vmatprep.subr.mxu0 0.0
    %2971 = vmatpush1.msra.mxu0 %v2939
    %2972 = vmatprep.subr.mxu0 0.0
    %2973 = vmatpush1.msra.mxu0 %v2940
    %2974 = vmatprep.subr.mxu0 0.0
    %2975 = vmatpush1.msra.mxu0 %v2941
    %2976 = vmatprep.subr.mxu0 0.0
    %2977 = vmatpush1.msra.mxu0 %v2942
    %2978 = vmatprep.subr.mxu0 0.0
    %2979 = vmatpush1.msra.mxu0 %v2943
    %2980 = vmatprep.subr.mxu0 0.0
    %2981 = vmatpush1.msra.mxu0 %v2944
    %2982 = vmatprep.subr.mxu0 0.0
    %2983 = vmatpush1.msra.mxu0 %v2945
    %2984 = vmatprep.subr.mxu0 0.0
    %2985 = vmatpush1.msra.mxu0 %v2946
    %2986 = vmatprep.subr.mxu0 0.0
    %2987 = vmatpush1.msra.mxu0 0.0
    %2988 = vmatprep.subr.mxu0 0.0
    %2989 = vmatpush1.msra.mxu0 0.0
    %2990 = vmatprep.subr.mxu0 0.0
    %2991 = vmatpush1.msra.mxu0 0.0
    %2992 = vmatprep.subr.mxu0 0.0
    %2993 = vmatpush1.msra.mxu0 0.0
    %2994 = vmatprep.subr.mxu0 0.0
    %2995 = vmatpush1.msra.mxu0 0.0
    %2996 = vmatprep.subr.mxu0 0.0
    %2997 = vmatpush1.msra.mxu0 0.0
    %2998 = vmatprep.subr.mxu0 0.0
    %2999 = vmatpush1.msra.mxu0 0.0
    %3000 = vmatprep.subr.mxu0 0.0
    %3001 = vmatpush1.msra.mxu0 0.0
    %3002 = vmatprep.subr.mxu0 0.0
    %3003 = vmatpush1.msra.mxu0 0.0
    %3004 = vmatprep.subr.mxu0 0.0
    %3005 = vmatpush1.msra.mxu0 0.0
    %3006 = vmatprep.subr.mxu0 0.0
    %3007 = vmatpush1.msra.mxu0 0.0
    %3008 = vmatprep.subr.mxu0 0.0
    %3009 = vmatpush1.msra.mxu0 0.0
    %3010 = vmatprep.subr.mxu0 0.0
    %3011 = vmatpush1.msra.mxu0 0.0
    %3012 = vmatprep.subr.mxu0 0.0
    %3013 = vmatpush1.msra.mxu0 0.0
    %3014 = vmatprep.subr.mxu0 0.0
    %3015 = vmatpush1.msra.mxu0 0.0
    %3016 = vmatprep.subr.mxu0 0.0
    %3017 = vmatpush1.msra.mxu0 0.0
    %3018 = vmatprep.mubr.f32.mxu0 0.0
    %3019 = vmatmul.mubr.f32.gmra.mrb[0].mxu0 %v2836
    %v3020 = vpop.f32.mrb[0].mxu0
    %v3021 = vadd.f32 %v2952, %v3020
    %v3022 = vpop.f32.mrb[0].mxu0
    %3023 = vdwg.mxu0
    %v3024 = vld [vmem:[%s41] sm:$0xff]
    %v3025 = vld [vmem:[%s41 + $0x8] sm:$0xff]
    %v3026 = vld [vmem:[%s41 + $0x10] sm:$0xff]
    %v3027 = vld [vmem:[%s41 + $0x18] sm:$0xff]
    %v3028 = vld [vmem:[%s41 + $0x20] sm:$0xff]
    %v3029 = vld [vmem:[%s41 + $0x28] sm:$0xff]
    %v3030 = vld [vmem:[%s41 + $0x30] sm:$0xff]
    %v3031 = vld [vmem:[%s41 + $0x38] sm:$0xff]
    %v3032 = vld [vmem:[%s41 + $0x40] sm:$0xff]
    %v3033 = vld [vmem:[%s41 + $0x48] sm:$0xff]
    %v3034 = vld [vmem:[%s41 + $0x50] sm:$0xff]
    %v3035 = vld [vmem:[%s41 + $0x58] sm:$0xff]
    %v3036 = vld [vmem:[%s41 + $0x60] sm:$0xff]
    %v3037 = vld [vmem:[%s41 + $0x68] sm:$0xff]
    %v3038 = vld [vmem:[%s41 + $0x70] sm:$0xff]
    %v3039 = vld [vmem:[%s41 + $0x78] sm:$0xff]
    %v3040 = vld [vmem:[%s47] sm:$0x1]
    %v3042 = vlaneseq
    %v3043 = vshrl.u32 %v3042, 7
    %v3044 = vsub.s32 0, %v3043
    %v3045 = vrot.slane %v3040, %v3044
    %3047 = vmatprep.subr.mxu0 0.0
    %3048 = vmatpush1.msra.mxu0 %v3024
    %3049 = vmatprep.subr.mxu0 0.0
    %3050 = vmatpush1.msra.mxu0 %v3025
    %3051 = vmatprep.subr.mxu0 0.0
    %3052 = vmatpush1.msra.mxu0 %v3026
    %3053 = vmatprep.subr.mxu0 0.0
    %3054 = vmatpush1.msra.mxu0 %v3027
    %3055 = vmatprep.subr.mxu0 0.0
    %3056 = vmatpush1.msra.mxu0 %v3028
    %3057 = vmatprep.subr.mxu0 0.0
    %3058 = vmatpush1.msra.mxu0 %v3029
    %3059 = vmatprep.subr.mxu0 0.0
    %3060 = vmatpush1.msra.mxu0 %v3030
    %3061 = vmatprep.subr.mxu0 0.0
    %3062 = vmatpush1.msra.mxu0 %v3031
    %3063 = vmatprep.subr.mxu0 0.0
    %3064 = vmatpush1.msra.mxu0 %v3032
    %3065 = vmatprep.subr.mxu0 0.0
    %3066 = vmatpush1.msra.mxu0 %v3033
    %3067 = vmatprep.subr.mxu0 0.0
    %3068 = vmatpush1.msra.mxu0 %v3034
    %3069 = vmatprep.subr.mxu0 0.0
    %3070 = vmatpush1.msra.mxu0 %v3035
    %3071 = vmatprep.subr.mxu0 0.0
    %3072 = vmatpush1.msra.mxu0 %v3036
    %3073 = vmatprep.subr.mxu0 0.0
    %3074 = vmatpush1.msra.mxu0 %v3037
    %3075 = vmatprep.subr.mxu0 0.0
    %3076 = vmatpush1.msra.mxu0 %v3038
    %3077 = vmatprep.subr.mxu0 0.0
    %3078 = vmatpush1.msra.mxu0 %v3039
    %3079 = vmatprep.subr.mxu0 0.0
    %3080 = vmatpush1.msra.mxu0 0.0
    %3081 = vmatprep.subr.mxu0 0.0
    %3082 = vmatpush1.msra.mxu0 0.0
    %3083 = vmatprep.subr.mxu0 0.0
    %3084 = vmatpush1.msra.mxu0 0.0
    %3085 = vmatprep.subr.mxu0 0.0
    %3086 = vmatpush1.msra.mxu0 0.0
    %3087 = vmatprep.subr.mxu0 0.0
    %3088 = vmatpush1.msra.mxu0 0.0
    %3089 = vmatprep.subr.mxu0 0.0
    %3090 = vmatpush1.msra.mxu0 0.0
    %3091 = vmatprep.subr.mxu0 0.0
    %3092 = vmatpush1.msra.mxu0 0.0
    %3093 = vmatprep.subr.mxu0 0.0
    %3094 = vmatpush1.msra.mxu0 0.0
    %3095 = vmatprep.subr.mxu0 0.0
    %3096 = vmatpush1.msra.mxu0 0.0
    %3097 = vmatprep.subr.mxu0 0.0
    %3098 = vmatpush1.msra.mxu0 0.0
    %3099 = vmatprep.subr.mxu0 0.0
    %3100 = vmatpush1.msra.mxu0 0.0
    %3101 = vmatprep.subr.mxu0 0.0
    %3102 = vmatpush1.msra.mxu0 0.0
    %3103 = vmatprep.subr.mxu0 0.0
    %3104 = vmatpush1.msra.mxu0 0.0
    %3105 = vmatprep.subr.mxu0 0.0
    %3106 = vmatpush1.msra.mxu0 0.0
    %3107 = vmatprep.subr.mxu0 0.0
    %3108 = vmatpush1.msra.mxu0 0.0
    %3109 = vmatprep.subr.mxu0 0.0
    %3110 = vmatpush1.msra.mxu0 0.0
    %3111 = vmatprep.mubr.f32.mxu0 0.0
    %3112 = vmatmul.mubr.f32.gmra.mrb[0].mxu0 %v2836
    %v3113 = vpop.f32.mrb[0].mxu0
    %v3114 = vadd.f32 %v3045, %v3113
    %v3115 = vpop.f32.mrb[0].mxu0
    %3116 = vdwg.mxu0
    %v3117 = vadd.f32 %v1622, %v2928
    %v3118 = vxor.u32 %v3117, 2147483648
    %v3119 = vmul.f32 %v3118, 1.442695
    %v3120 = vpow.pop %v3119
    %v3121 = vadd.f32 %v3120, 1.0
    %v3122 = vrcp.pop %v3121
    %v3123 = vmul.f32 1.0, %v3122
    %v3124 = vadd.f32 %v1623, %v3021
    %v3125 = vxor.u32 %v3124, 2147483648
    %v3126 = vmul.f32 %v3125, 1.442695
    %v3127 = vpow.pop %v3126
    %v3128 = vadd.f32 %v3127, 1.0
    %v3129 = vrcp.pop %v3128
    %v3130 = vmul.f32 1.0, %v3129
    %v3131 = vmul.f32 %v3123, %v3114
    %v3132 = vadd.f32 %v1624, %v3131
    %v3133 = vtanh.pop %v3132
    %v3134 = vsub.f32 1.0, %v3130
    %v3135 = vmul.f32 %v3134, %v3133
    %v3136 = vmul.f32 %v3130, %v2836
    %v3137 = vadd.f32 %v3135, %v3136
    %3138 = vst [vmem:[#allocation2 + $0x20] sm:$0xff] %v3137
    %v3139 = vld [vmem:[%s37] sm:$0xff]
    %v3140 = vld [vmem:[%s37 + $0x8] sm:$0xff]
    %v3141 = vld [vmem:[%s37 + $0x10] sm:$0xff]
    %v3142 = vld [vmem:[%s37 + $0x18] sm:$0xff]
    %v3143 = vld [vmem:[%s37 + $0x20] sm:$0xff]
    %v3144 = vld [vmem:[%s37 + $0x28] sm:$0xff]
    %v3145 = vld [vmem:[%s37 + $0x30] sm:$0xff]
    %v3146 = vld [vmem:[%s37 + $0x38] sm:$0xff]
    %v3147 = vld [vmem:[%s37 + $0x40] sm:$0xff]
    %v3148 = vld [vmem:[%s37 + $0x48] sm:$0xff]
    %v3149 = vld [vmem:[%s37 + $0x50] sm:$0xff]
    %v3150 = vld [vmem:[%s37 + $0x58] sm:$0xff]
    %v3151 = vld [vmem:[%s37 + $0x60] sm:$0xff]
    %v3152 = vld [vmem:[%s37 + $0x68] sm:$0xff]
    %v3153 = vld [vmem:[%s37 + $0x70] sm:$0xff]
    %v3154 = vld [vmem:[%s37 + $0x78] sm:$0xff]
    %v3155 = vld [vmem:[%s43] sm:$0x1]
    %v3157 = vlaneseq
    %v3158 = vshrl.u32 %v3157, 7
    %v3159 = vsub.s32 0, %v3158
    %v3160 = vrot.slane %v3155, %v3159
    %3162 = vmatprep.subr.mxu0 0.0
    %3163 = vmatpush1.msra.mxu0 %v3139
    %3164 = vmatprep.subr.mxu0 0.0
    %3165 = vmatpush1.msra.mxu0 %v3140
    %3166 = vmatprep.subr.mxu0 0.0
    %3167 = vmatpush1.msra.mxu0 %v3141
    %3168 = vmatprep.subr.mxu0 0.0
    %3169 = vmatpush1.msra.mxu0 %v3142
    %3170 = vmatprep.subr.mxu0 0.0
    %3171 = vmatpush1.msra.mxu0 %v3143
    %3172 = vmatprep.subr.mxu0 0.0
    %3173 = vmatpush1.msra.mxu0 %v3144
    %3174 = vmatprep.subr.mxu0 0.0
    %3175 = vmatpush1.msra.mxu0 %v3145
    %3176 = vmatprep.subr.mxu0 0.0
    %3177 = vmatpush1.msra.mxu0 %v3146
    %3178 = vmatprep.subr.mxu0 0.0
    %3179 = vmatpush1.msra.mxu0 %v3147
    %3180 = vmatprep.subr.mxu0 0.0
    %3181 = vmatpush1.msra.mxu0 %v3148
    %3182 = vmatprep.subr.mxu0 0.0
    %3183 = vmatpush1.msra.mxu0 %v3149
    %3184 = vmatprep.subr.mxu0 0.0
    %3185 = vmatpush1.msra.mxu0 %v3150
    %3186 = vmatprep.subr.mxu0 0.0
    %3187 = vmatpush1.msra.mxu0 %v3151
    %3188 = vmatprep.subr.mxu0 0.0
    %3189 = vmatpush1.msra.mxu0 %v3152
    %3190 = vmatprep.subr.mxu0 0.0
    %3191 = vmatpush1.msra.mxu0 %v3153
    %3192 = vmatprep.subr.mxu0 0.0
    %3193 = vmatpush1.msra.mxu0 %v3154
    %3194 = vmatprep.subr.mxu0 0.0
    %3195 = vmatpush1.msra.mxu0 0.0
    %3196 = vmatprep.subr.mxu0 0.0
    %3197 = vmatpush1.msra.mxu0 0.0
    %3198 = vmatprep.subr.mxu0 0.0
    %3199 = vmatpush1.msra.mxu0 0.0
    %3200 = vmatprep.subr.mxu0 0.0
    %3201 = vmatpush1.msra.mxu0 0.0
    %3202 = vmatprep.subr.mxu0 0.0
    %3203 = vmatpush1.msra.mxu0 0.0
    %3204 = vmatprep.subr.mxu0 0.0
    %3205 = vmatpush1.msra.mxu0 0.0
    %3206 = vmatprep.subr.mxu0 0.0
    %3207 = vmatpush1.msra.mxu0 0.0
    %3208 = vmatprep.subr.mxu0 0.0
    %3209 = vmatpush1.msra.mxu0 0.0
    %3210 = vmatprep.subr.mxu0 0.0
    %3211 = vmatpush1.msra.mxu0 0.0
    %3212 = vmatprep.subr.mxu0 0.0
    %3213 = vmatpush1.msra.mxu0 0.0
    %3214 = vmatprep.subr.mxu0 0.0
    %3215 = vmatpush1.msra.mxu0 0.0
    %3216 = vmatprep.subr.mxu0 0.0
    %3217 = vmatpush1.msra.mxu0 0.0
    %3218 = vmatprep.subr.mxu0 0.0
    %3219 = vmatpush1.msra.mxu0 0.0
    %3220 = vmatprep.subr.mxu0 0.0
    %3221 = vmatpush1.msra.mxu0 0.0
    %3222 = vmatprep.subr.mxu0 0.0
    %3223 = vmatpush1.msra.mxu0 0.0
    %3224 = vmatprep.subr.mxu0 0.0
    %3225 = vmatpush1.msra.mxu0 0.0
    %3226 = vmatprep.mubr.f32.mxu0 0.0
    %3227 = vmatmul.mubr.f32.gmra.mrb[0].mxu0 %v3137
    %v3228 = vpop.f32.mrb[0].mxu0
    %v3229 = vadd.f32 %v3160, %v3228
    %v3230 = vpop.f32.mrb[0].mxu0
    %3231 = vdwg.mxu0
    %v3232 = vld [vmem:[%s39] sm:$0xff]
    %v3233 = vld [vmem:[%s39 + $0x8] sm:$0xff]
    %v3234 = vld [vmem:[%s39 + $0x10] sm:$0xff]
    %v3235 = vld [vmem:[%s39 + $0x18] sm:$0xff]
    %v3236 = vld [vmem:[%s39 + $0x20] sm:$0xff]
    %v3237 = vld [vmem:[%s39 + $0x28] sm:$0xff]
    %v3238 = vld [vmem:[%s39 + $0x30] sm:$0xff]
    %v3239 = vld [vmem:[%s39 + $0x38] sm:$0xff]
    %v3240 = vld [vmem:[%s39 + $0x40] sm:$0xff]
    %v3241 = vld [vmem:[%s39 + $0x48] sm:$0xff]
    %v3242 = vld [vmem:[%s39 + $0x50] sm:$0xff]
    %v3243 = vld [vmem:[%s39 + $0x58] sm:$0xff]
    %v3244 = vld [vmem:[%s39 + $0x60] sm:$0xff]
    %v3245 = vld [vmem:[%s39 + $0x68] sm:$0xff]
    %v3246 = vld [vmem:[%s39 + $0x70] sm:$0xff]
    %v3247 = vld [vmem:[%s39 + $0x78] sm:$0xff]
    %v3248 = vld [vmem:[%s45] sm:$0x1]
    %v3250 = vlaneseq
    %v3251 = vshrl.u32 %v3250, 7
    %v3252 = vsub.s32 0, %v3251
    %v3253 = vrot.slane %v3248, %v3252
    %3255 = vmatprep.subr.mxu0 0.0
    %3256 = vmatpush1.msra.mxu0 %v3232
    %3257 = vmatprep.subr.mxu0 0.0
    %3258 = vmatpush1.msra.mxu0 %v3233
    %3259 = vmatprep.subr.mxu0 0.0
    %3260 = vmatpush1.msra.mxu0 %v3234
    %3261 = vmatprep.subr.mxu0 0.0
    %3262 = vmatpush1.msra.mxu0 %v3235
    %3263 = vmatprep.subr.mxu0 0.0
    %3264 = vmatpush1.msra.mxu0 %v3236
    %3265 = vmatprep.subr.mxu0 0.0
    %3266 = vmatpush1.msra.mxu0 %v3237
    %3267 = vmatprep.subr.mxu0 0.0
    %3268 = vmatpush1.msra.mxu0 %v3238
    %3269 = vmatprep.subr.mxu0 0.0
    %3270 = vmatpush1.msra.mxu0 %v3239
    %3271 = vmatprep.subr.mxu0 0.0
    %3272 = vmatpush1.msra.mxu0 %v3240
    %3273 = vmatprep.subr.mxu0 0.0
    %3274 = vmatpush1.msra.mxu0 %v3241
    %3275 = vmatprep.subr.mxu0 0.0
    %3276 = vmatpush1.msra.mxu0 %v3242
    %3277 = vmatprep.subr.mxu0 0.0
    %3278 = vmatpush1.msra.mxu0 %v3243
    %3279 = vmatprep.subr.mxu0 0.0
    %3280 = vmatpush1.msra.mxu0 %v3244
    %3281 = vmatprep.subr.mxu0 0.0
    %3282 = vmatpush1.msra.mxu0 %v3245
    %3283 = vmatprep.subr.mxu0 0.0
    %3284 = vmatpush1.msra.mxu0 %v3246
    %3285 = vmatprep.subr.mxu0 0.0
    %3286 = vmatpush1.msra.mxu0 %v3247
    %3287 = vmatprep.subr.mxu0 0.0
    %3288 = vmatpush1.msra.mxu0 0.0
    %3289 = vmatprep.subr.mxu0 0.0
    %3290 = vmatpush1.msra.mxu0 0.0
    %3291 = vmatprep.subr.mxu0 0.0
    %3292 = vmatpush1.msra.mxu0 0.0
    %3293 = vmatprep.subr.mxu0 0.0
    %3294 = vmatpush1.msra.mxu0 0.0
    %3295 = vmatprep.subr.mxu0 0.0
    %3296 = vmatpush1.msra.mxu0 0.0
    %3297 = vmatprep.subr.mxu0 0.0
    %3298 = vmatpush1.msra.mxu0 0.0
    %3299 = vmatprep.subr.mxu0 0.0
    %3300 = vmatpush1.msra.mxu0 0.0
    %3301 = vmatprep.subr.mxu0 0.0
    %3302 = vmatpush1.msra.mxu0 0.0
    %3303 = vmatprep.subr.mxu0 0.0
    %3304 = vmatpush1.msra.mxu0 0.0
    %3305 = vmatprep.subr.mxu0 0.0
    %3306 = vmatpush1.msra.mxu0 0.0
    %3307 = vmatprep.subr.mxu0 0.0
    %3308 = vmatpush1.msra.mxu0 0.0
    %3309 = vmatprep.subr.mxu0 0.0
    %3310 = vmatpush1.msra.mxu0 0.0
    %3311 = vmatprep.subr.mxu0 0.0
    %3312 = vmatpush1.msra.mxu0 0.0
    %3313 = vmatprep.subr.mxu0 0.0
    %3314 = vmatpush1.msra.mxu0 0.0
    %3315 = vmatprep.subr.mxu0 0.0
    %3316 = vmatpush1.msra.mxu0 0.0
    %3317 = vmatprep.subr.mxu0 0.0
    %3318 = vmatpush1.msra.mxu0 0.0
    %3319 = vmatprep.mubr.f32.mxu0 0.0
    %3320 = vmatmul.mubr.f32.gmra.mrb[0].mxu0 %v3137
    %v3321 = vpop.f32.mrb[0].mxu0
    %v3322 = vadd.f32 %v3253, %v3321
    %v3323 = vpop.f32.mrb[0].mxu0
    %3324 = vdwg.mxu0
    %v3325 = vld [vmem:[%s41] sm:$0xff]
    %v3326 = vld [vmem:[%s41 + $0x8] sm:$0xff]
    %v3327 = vld [vmem:[%s41 + $0x10] sm:$0xff]
    %v3328 = vld [vmem:[%s41 + $0x18] sm:$0xff]
    %v3329 = vld [vmem:[%s41 + $0x20] sm:$0xff]
    %v3330 = vld [vmem:[%s41 + $0x28] sm:$0xff]
    %v3331 = vld [vmem:[%s41 + $0x30] sm:$0xff]
    %v3332 = vld [vmem:[%s41 + $0x38] sm:$0xff]
    %v3333 = vld [vmem:[%s41 + $0x40] sm:$0xff]
    %v3334 = vld [vmem:[%s41 + $0x48] sm:$0xff]
    %v3335 = vld [vmem:[%s41 + $0x50] sm:$0xff]
    %v3336 = vld [vmem:[%s41 + $0x58] sm:$0xff]
    %v3337 = vld [vmem:[%s41 + $0x60] sm:$0xff]
    %v3338 = vld [vmem:[%s41 + $0x68] sm:$0xff]
    %v3339 = vld [vmem:[%s41 + $0x70] sm:$0xff]
    %v3340 = vld [vmem:[%s41 + $0x78] sm:$0xff]
    %v3341 = vld [vmem:[%s47] sm:$0x1]
    %v3343 = vlaneseq
    %v3344 = vshrl.u32 %v3343, 7
    %v3345 = vsub.s32 0, %v3344
    %v3346 = vrot.slane %v3341, %v3345
    %3348 = vmatprep.subr.mxu0 0.0
    %3349 = vmatpush1.msra.mxu0 %v3325
    %3350 = vmatprep.subr.mxu0 0.0
    %3351 = vmatpush1.msra.mxu0 %v3326
    %3352 = vmatprep.subr.mxu0 0.0
    %3353 = vmatpush1.msra.mxu0 %v3327
    %3354 = vmatprep.subr.mxu0 0.0
    %3355 = vmatpush1.msra.mxu0 %v3328
    %3356 = vmatprep.subr.mxu0 0.0
    %3357 = vmatpush1.msra.mxu0 %v3329
    %3358 = vmatprep.subr.mxu0 0.0
    %3359 = vmatpush1.msra.mxu0 %v3330
    %3360 = vmatprep.subr.mxu0 0.0
    %3361 = vmatpush1.msra.mxu0 %v3331
    %3362 = vmatprep.subr.mxu0 0.0
    %3363 = vmatpush1.msra.mxu0 %v3332
    %3364 = vmatprep.subr.mxu0 0.0
    %3365 = vmatpush1.msra.mxu0 %v3333
    %3366 = vmatprep.subr.mxu0 0.0
    %3367 = vmatpush1.msra.mxu0 %v3334
    %3368 = vmatprep.subr.mxu0 0.0
    %3369 = vmatpush1.msra.mxu0 %v3335
    %3370 = vmatprep.subr.mxu0 0.0
    %3371 = vmatpush1.msra.mxu0 %v3336
    %3372 = vmatprep.subr.mxu0 0.0
    %3373 = vmatpush1.msra.mxu0 %v3337
    %3374 = vmatprep.subr.mxu0 0.0
    %3375 = vmatpush1.msra.mxu0 %v3338
    %3376 = vmatprep.subr.mxu0 0.0
    %3377 = vmatpush1.msra.mxu0 %v3339
    %3378 = vmatprep.subr.mxu0 0.0
    %3379 = vmatpush1.msra.mxu0 %v3340
    %3380 = vmatprep.subr.mxu0 0.0
    %3381 = vmatpush1.msra.mxu0 0.0
    %3382 = vmatprep.subr.mxu0 0.0
    %3383 = vmatpush1.msra.mxu0 0.0
    %3384 = vmatprep.subr.mxu0 0.0
    %3385 = vmatpush1.msra.mxu0 0.0
    %3386 = vmatprep.subr.mxu0 0.0
    %3387 = vmatpush1.msra.mxu0 0.0
    %3388 = vmatprep.subr.mxu0 0.0
    %3389 = vmatpush1.msra.mxu0 0.0
    %3390 = vmatprep.subr.mxu0 0.0
    %3391 = vmatpush1.msra.mxu0 0.0
    %3392 = vmatprep.subr.mxu0 0.0
    %3393 = vmatpush1.msra.mxu0 0.0
    %3394 = vmatprep.subr.mxu0 0.0
    %3395 = vmatpush1.msra.mxu0 0.0
    %3396 = vmatprep.subr.mxu0 0.0
    %3397 = vmatpush1.msra.mxu0 0.0
    %3398 = vmatprep.subr.mxu0 0.0
    %3399 = vmatpush1.msra.mxu0 0.0
    %3400 = vmatprep.subr.mxu0 0.0
    %3401 = vmatpush1.msra.mxu0 0.0
    %3402 = vmatprep.subr.mxu0 0.0
    %3403 = vmatpush1.msra.mxu0 0.0
    %3404 = vmatprep.subr.mxu0 0.0
    %3405 = vmatpush1.msra.mxu0 0.0
    %3406 = vmatprep.subr.mxu0 0.0
    %3407 = vmatpush1.msra.mxu0 0.0
    %3408 = vmatprep.subr.mxu0 0.0
    %3409 = vmatpush1.msra.mxu0 0.0
    %3410 = vmatprep.subr.mxu0 0.0
    %3411 = vmatpush1.msra.mxu0 0.0
    %3412 = vmatprep.mubr.f32.mxu0 0.0
    %3413 = vmatmul.mubr.f32.gmra.mrb[0].mxu0 %v3137
    %v3414 = vpop.f32.mrb[0].mxu0
    %v3415 = vadd.f32 %v3346, %v3414
    %v3416 = vpop.f32.mrb[0].mxu0
    %3417 = vdwg.mxu0
    %v3418 = vadd.f32 %v1625, %v3229
    %v3419 = vxor.u32 %v3418, 2147483648
    %v3420 = vmul.f32 %v3419, 1.442695
    %v3421 = vpow.pop %v3420
    %v3422 = vadd.f32 %v3421, 1.0
    %v3423 = vrcp.pop %v3422
    %v3424 = vmul.f32 1.0, %v3423
    %v3425 = vadd.f32 %v1626, %v3322
    %v3426 = vxor.u32 %v3425, 2147483648
    %v3427 = vmul.f32 %v3426, 1.442695
    %v3428 = vpow.pop %v3427
    %v3429 = vadd.f32 %v3428, 1.0
    %v3430 = vrcp.pop %v3429
    %v3431 = vmul.f32 1.0, %v3430
    %v3432 = vmul.f32 %v3424, %v3415
    %v3433 = vadd.f32 %v1627, %v3432
    %v3434 = vtanh.pop %v3433
    %v3435 = vsub.f32 1.0, %v3431
    %v3436 = vmul.f32 %v3435, %v3434
    %v3437 = vmul.f32 %v3431, %v3137
    %v3438 = vadd.f32 %v3436, %v3437
    %3439 = vst [vmem:[#allocation2 + $0x28] sm:$0xff] %v3438
    %v3440 = vld [vmem:[%s37] sm:$0xff]
    %v3441 = vld [vmem:[%s37 + $0x8] sm:$0xff]
    %v3442 = vld [vmem:[%s37 + $0x10] sm:$0xff]
    %v3443 = vld [vmem:[%s37 + $0x18] sm:$0xff]
    %v3444 = vld [vmem:[%s37 + $0x20] sm:$0xff]
    %v3445 = vld [vmem:[%s37 + $0x28] sm:$0xff]
    %v3446 = vld [vmem:[%s37 + $0x30] sm:$0xff]
    %v3447 = vld [vmem:[%s37 + $0x38] sm:$0xff]
    %v3448 = vld [vmem:[%s37 + $0x40] sm:$0xff]
    %v3449 = vld [vmem:[%s37 + $0x48] sm:$0xff]
    %v3450 = vld [vmem:[%s37 + $0x50] sm:$0xff]
    %v3451 = vld [vmem:[%s37 + $0x58] sm:$0xff]
    %v3452 = vld [vmem:[%s37 + $0x60] sm:$0xff]
    %v3453 = vld [vmem:[%s37 + $0x68] sm:$0xff]
    %v3454 = vld [vmem:[%s37 + $0x70] sm:$0xff]
    %v3455 = vld [vmem:[%s37 + $0x78] sm:$0xff]
    %v3456 = vld [vmem:[%s43] sm:$0x1]
    %v3458 = vlaneseq
    %v3459 = vshrl.u32 %v3458, 7
    %v3460 = vsub.s32 0, %v3459
    %v3461 = vrot.slane %v3456, %v3460
    %3463 = vmatprep.subr.mxu0 0.0
    %3464 = vmatpush1.msra.mxu0 %v3440
    %3465 = vmatprep.subr.mxu0 0.0
    %3466 = vmatpush1.msra.mxu0 %v3441
    %3467 = vmatprep.subr.mxu0 0.0
    %3468 = vmatpush1.msra.mxu0 %v3442
    %3469 = vmatprep.subr.mxu0 0.0
    %3470 = vmatpush1.msra.mxu0 %v3443
    %3471 = vmatprep.subr.mxu0 0.0
    %3472 = vmatpush1.msra.mxu0 %v3444
    %3473 = vmatprep.subr.mxu0 0.0
    %3474 = vmatpush1.msra.mxu0 %v3445
    %3475 = vmatprep.subr.mxu0 0.0
    %3476 = vmatpush1.msra.mxu0 %v3446
    %3477 = vmatprep.subr.mxu0 0.0
    %3478 = vmatpush1.msra.mxu0 %v3447
    %3479 = vmatprep.subr.mxu0 0.0
    %3480 = vmatpush1.msra.mxu0 %v3448
    %3481 = vmatprep.subr.mxu0 0.0
    %3482 = vmatpush1.msra.mxu0 %v3449
    %3483 = vmatprep.subr.mxu0 0.0
    %3484 = vmatpush1.msra.mxu0 %v3450
    %3485 = vmatprep.subr.mxu0 0.0
    %3486 = vmatpush1.msra.mxu0 %v3451
    %3487 = vmatprep.subr.mxu0 0.0
    %3488 = vmatpush1.msra.mxu0 %v3452
    %3489 = vmatprep.subr.mxu0 0.0
    %3490 = vmatpush1.msra.mxu0 %v3453
    %3491 = vmatprep.subr.mxu0 0.0
    %3492 = vmatpush1.msra.mxu0 %v3454
    %3493 = vmatprep.subr.mxu0 0.0
    %3494 = vmatpush1.msra.mxu0 %v3455
    %3495 = vmatprep.subr.mxu0 0.0
    %3496 = vmatpush1.msra.mxu0 0.0
    %3497 = vmatprep.subr.mxu0 0.0
    %3498 = vmatpush1.msra.mxu0 0.0
    %3499 = vmatprep.subr.mxu0 0.0
    %3500 = vmatpush1.msra.mxu0 0.0
    %3501 = vmatprep.subr.mxu0 0.0
    %3502 = vmatpush1.msra.mxu0 0.0
    %3503 = vmatprep.subr.mxu0 0.0
    %3504 = vmatpush1.msra.mxu0 0.0
    %3505 = vmatprep.subr.mxu0 0.0
    %3506 = vmatpush1.msra.mxu0 0.0
    %3507 = vmatprep.subr.mxu0 0.0
    %3508 = vmatpush1.msra.mxu0 0.0
    %3509 = vmatprep.subr.mxu0 0.0
    %3510 = vmatpush1.msra.mxu0 0.0
    %3511 = vmatprep.subr.mxu0 0.0
    %3512 = vmatpush1.msra.mxu0 0.0
    %3513 = vmatprep.subr.mxu0 0.0
    %3514 = vmatpush1.msra.mxu0 0.0
    %3515 = vmatprep.subr.mxu0 0.0
    %3516 = vmatpush1.msra.mxu0 0.0
    %3517 = vmatprep.subr.mxu0 0.0
    %3518 = vmatpush1.msra.mxu0 0.0
    %3519 = vmatprep.subr.mxu0 0.0
    %3520 = vmatpush1.msra.mxu0 0.0
    %3521 = vmatprep.subr.mxu0 0.0
    %3522 = vmatpush1.msra.mxu0 0.0
    %3523 = vmatprep.subr.mxu0 0.0
    %3524 = vmatpush1.msra.mxu0 0.0
    %3525 = vmatprep.subr.mxu0 0.0
    %3526 = vmatpush1.msra.mxu0 0.0
    %3527 = vmatprep.mubr.f32.mxu0 0.0
    %3528 = vmatmul.mubr.f32.gmra.mrb[0].mxu0 %v3438
    %v3529 = vpop.f32.mrb[0].mxu0
    %v3530 = vadd.f32 %v3461, %v3529
    %v3531 = vpop.f32.mrb[0].mxu0
    %3532 = vdwg.mxu0
    %v3533 = vld [vmem:[%s39] sm:$0xff]
    %v3534 = vld [vmem:[%s39 + $0x8] sm:$0xff]
    %v3535 = vld [vmem:[%s39 + $0x10] sm:$0xff]
    %v3536 = vld [vmem:[%s39 + $0x18] sm:$0xff]
    %v3537 = vld [vmem:[%s39 + $0x20] sm:$0xff]
    %v3538 = vld [vmem:[%s39 + $0x28] sm:$0xff]
    %v3539 = vld [vmem:[%s39 + $0x30] sm:$0xff]
    %v3540 = vld [vmem:[%s39 + $0x38] sm:$0xff]
    %v3541 = vld [vmem:[%s39 + $0x40] sm:$0xff]
    %v3542 = vld [vmem:[%s39 + $0x48] sm:$0xff]
    %v3543 = vld [vmem:[%s39 + $0x50] sm:$0xff]
    %v3544 = vld [vmem:[%s39 + $0x58] sm:$0xff]
    %v3545 = vld [vmem:[%s39 + $0x60] sm:$0xff]
    %v3546 = vld [vmem:[%s39 + $0x68] sm:$0xff]
    %v3547 = vld [vmem:[%s39 + $0x70] sm:$0xff]
    %v3548 = vld [vmem:[%s39 + $0x78] sm:$0xff]
    %v3549 = vld [vmem:[%s45] sm:$0x1]
    %v3551 = vlaneseq
    %v3552 = vshrl.u32 %v3551, 7
    %v3553 = vsub.s32 0, %v3552
    %v3554 = vrot.slane %v3549, %v3553
    %3556 = vmatprep.subr.mxu0 0.0
    %3557 = vmatpush1.msra.mxu0 %v3533
    %3558 = vmatprep.subr.mxu0 0.0
    %3559 = vmatpush1.msra.mxu0 %v3534
    %3560 = vmatprep.subr.mxu0 0.0
    %3561 = vmatpush1.msra.mxu0 %v3535
    %3562 = vmatprep.subr.mxu0 0.0
    %3563 = vmatpush1.msra.mxu0 %v3536
    %3564 = vmatprep.subr.mxu0 0.0
    %3565 = vmatpush1.msra.mxu0 %v3537
    %3566 = vmatprep.subr.mxu0 0.0
    %3567 = vmatpush1.msra.mxu0 %v3538
    %3568 = vmatprep.subr.mxu0 0.0
    %3569 = vmatpush1.msra.mxu0 %v3539
    %3570 = vmatprep.subr.mxu0 0.0
    %3571 = vmatpush1.msra.mxu0 %v3540
    %3572 = vmatprep.subr.mxu0 0.0
    %3573 = vmatpush1.msra.mxu0 %v3541
    %3574 = vmatprep.subr.mxu0 0.0
    %3575 = vmatpush1.msra.mxu0 %v3542
    %3576 = vmatprep.subr.mxu0 0.0
    %3577 = vmatpush1.msra.mxu0 %v3543
    %3578 = vmatprep.subr.mxu0 0.0
    %3579 = vmatpush1.msra.mxu0 %v3544
    %3580 = vmatprep.subr.mxu0 0.0
    %3581 = vmatpush1.msra.mxu0 %v3545
    %3582 = vmatprep.subr.mxu0 0.0
    %3583 = vmatpush1.msra.mxu0 %v3546
    %3584 = vmatprep.subr.mxu0 0.0
    %3585 = vmatpush1.msra.mxu0 %v3547
    %3586 = vmatprep.subr.mxu0 0.0
    %3587 = vmatpush1.msra.mxu0 %v3548
    %3588 = vmatprep.subr.mxu0 0.0
    %3589 = vmatpush1.msra.mxu0 0.0
    %3590 = vmatprep.subr.mxu0 0.0
    %3591 = vmatpush1.msra.mxu0 0.0
    %3592 = vmatprep.subr.mxu0 0.0
    %3593 = vmatpush1.msra.mxu0 0.0
    %3594 = vmatprep.subr.mxu0 0.0
    %3595 = vmatpush1.msra.mxu0 0.0
    %3596 = vmatprep.subr.mxu0 0.0
    %3597 = vmatpush1.msra.mxu0 0.0
    %3598 = vmatprep.subr.mxu0 0.0
    %3599 = vmatpush1.msra.mxu0 0.0
    %3600 = vmatprep.subr.mxu0 0.0
    %3601 = vmatpush1.msra.mxu0 0.0
    %3602 = vmatprep.subr.mxu0 0.0
    %3603 = vmatpush1.msra.mxu0 0.0
    %3604 = vmatprep.subr.mxu0 0.0
    %3605 = vmatpush1.msra.mxu0 0.0
    %3606 = vmatprep.subr.mxu0 0.0
    %3607 = vmatpush1.msra.mxu0 0.0
    %3608 = vmatprep.subr.mxu0 0.0
    %3609 = vmatpush1.msra.mxu0 0.0
    %3610 = vmatprep.subr.mxu0 0.0
    %3611 = vmatpush1.msra.mxu0 0.0
    %3612 = vmatprep.subr.mxu0 0.0
    %3613 = vmatpush1.msra.mxu0 0.0
    %3614 = vmatprep.subr.mxu0 0.0
    %3615 = vmatpush1.msra.mxu0 0.0
    %3616 = vmatprep.subr.mxu0 0.0
    %3617 = vmatpush1.msra.mxu0 0.0
    %3618 = vmatprep.subr.mxu0 0.0
    %3619 = vmatpush1.msra.mxu0 0.0
    %3620 = vmatprep.mubr.f32.mxu0 0.0
    %3621 = vmatmul.mubr.f32.gmra.mrb[0].mxu0 %v3438
    %v3622 = vpop.f32.mrb[0].mxu0
    %v3623 = vadd.f32 %v3554, %v3622
    %v3624 = vpop.f32.mrb[0].mxu0
    %3625 = vdwg.mxu0
    %v3626 = vld [vmem:[%s41] sm:$0xff]
    %v3627 = vld [vmem:[%s41 + $0x8] sm:$0xff]
    %v3628 = vld [vmem:[%s41 + $0x10] sm:$0xff]
    %v3629 = vld [vmem:[%s41 + $0x18] sm:$0xff]
    %v3630 = vld [vmem:[%s41 + $0x20] sm:$0xff]
    %v3631 = vld [vmem:[%s41 + $0x28] sm:$0xff]
    %v3632 = vld [vmem:[%s41 + $0x30] sm:$0xff]
    %v3633 = vld [vmem:[%s41 + $0x38] sm:$0xff]
    %v3634 = vld [vmem:[%s41 + $0x40] sm:$0xff]
    %v3635 = vld [vmem:[%s41 + $0x48] sm:$0xff]
    %v3636 = vld [vmem:[%s41 + $0x50] sm:$0xff]
    %v3637 = vld [vmem:[%s41 + $0x58] sm:$0xff]
    %v3638 = vld [vmem:[%s41 + $0x60] sm:$0xff]
    %v3639 = vld [vmem:[%s41 + $0x68] sm:$0xff]
    %v3640 = vld [vmem:[%s41 + $0x70] sm:$0xff]
    %v3641 = vld [vmem:[%s41 + $0x78] sm:$0xff]
    %v3642 = vld [vmem:[%s47] sm:$0x1]
    %v3644 = vlaneseq
    %v3645 = vshrl.u32 %v3644, 7
    %v3646 = vsub.s32 0, %v3645
    %v3647 = vrot.slane %v3642, %v3646
    %3649 = vmatprep.subr.mxu0 0.0
    %3650 = vmatpush1.msra.mxu0 %v3626
    %3651 = vmatprep.subr.mxu0 0.0
    %3652 = vmatpush1.msra.mxu0 %v3627
    %3653 = vmatprep.subr.mxu0 0.0
    %3654 = vmatpush1.msra.mxu0 %v3628
    %3655 = vmatprep.subr.mxu0 0.0
    %3656 = vmatpush1.msra.mxu0 %v3629
    %3657 = vmatprep.subr.mxu0 0.0
    %3658 = vmatpush1.msra.mxu0 %v3630
    %3659 = vmatprep.subr.mxu0 0.0
    %3660 = vmatpush1.msra.mxu0 %v3631
    %3661 = vmatprep.subr.mxu0 0.0
    %3662 = vmatpush1.msra.mxu0 %v3632
    %3663 = vmatprep.subr.mxu0 0.0
    %3664 = vmatpush1.msra.mxu0 %v3633
    %3665 = vmatprep.subr.mxu0 0.0
    %3666 = vmatpush1.msra.mxu0 %v3634
    %3667 = vmatprep.subr.mxu0 0.0
    %3668 = vmatpush1.msra.mxu0 %v3635
    %3669 = vmatprep.subr.mxu0 0.0
    %3670 = vmatpush1.msra.mxu0 %v3636
    %3671 = vmatprep.subr.mxu0 0.0
    %3672 = vmatpush1.msra.mxu0 %v3637
    %3673 = vmatprep.subr.mxu0 0.0
    %3674 = vmatpush1.msra.mxu0 %v3638
    %3675 = vmatprep.subr.mxu0 0.0
    %3676 = vmatpush1.msra.mxu0 %v3639
    %3677 = vmatprep.subr.mxu0 0.0
    %3678 = vmatpush1.msra.mxu0 %v3640
    %3679 = vmatprep.subr.mxu0 0.0
    %3680 = vmatpush1.msra.mxu0 %v3641
    %3681 = vmatprep.subr.mxu0 0.0
    %3682 = vmatpush1.msra.mxu0 0.0
    %3683 = vmatprep.subr.mxu0 0.0
    %3684 = vmatpush1.msra.mxu0 0.0
    %3685 = vmatprep.subr.mxu0 0.0
    %3686 = vmatpush1.msra.mxu0 0.0
    %3687 = vmatprep.subr.mxu0 0.0
    %3688 = vmatpush1.msra.mxu0 0.0
    %3689 = vmatprep.subr.mxu0 0.0
    %3690 = vmatpush1.msra.mxu0 0.0
    %3691 = vmatprep.subr.mxu0 0.0
    %3692 = vmatpush1.msra.mxu0 0.0
    %3693 = vmatprep.subr.mxu0 0.0
    %3694 = vmatpush1.msra.mxu0 0.0
    %3695 = vmatprep.subr.mxu0 0.0
    %3696 = vmatpush1.msra.mxu0 0.0
    %3697 = vmatprep.subr.mxu0 0.0
    %3698 = vmatpush1.msra.mxu0 0.0
    %3699 = vmatprep.subr.mxu0 0.0
    %3700 = vmatpush1.msra.mxu0 0.0
    %3701 = vmatprep.subr.mxu0 0.0
    %3702 = vmatpush1.msra.mxu0 0.0
    %3703 = vmatprep.subr.mxu0 0.0
    %3704 = vmatpush1.msra.mxu0 0.0
    %3705 = vmatprep.subr.mxu0 0.0
    %3706 = vmatpush1.msra.mxu0 0.0
    %3707 = vmatprep.subr.mxu0 0.0
    %3708 = vmatpush1.msra.mxu0 0.0
    %3709 = vmatprep.subr.mxu0 0.0
    %3710 = vmatpush1.msra.mxu0 0.0
    %3711 = vmatprep.subr.mxu0 0.0
    %3712 = vmatpush1.msra.mxu0 0.0
    %3713 = vmatprep.mubr.f32.mxu0 0.0
    %3714 = vmatmul.mubr.f32.gmra.mrb[0].mxu0 %v3438
    %v3715 = vpop.f32.mrb[0].mxu0
    %v3716 = vadd.f32 %v3647, %v3715
    %v3717 = vpop.f32.mrb[0].mxu0
    %3718 = vdwg.mxu0
    %v3719 = vadd.f32 %v1628, %v3530
    %v3720 = vxor.u32 %v3719, 2147483648
    %v3721 = vmul.f32 %v3720, 1.442695
    %v3722 = vpow.pop %v3721
    %v3723 = vadd.f32 %v3722, 1.0
    %v3724 = vrcp.pop %v3723
    %v3725 = vmul.f32 1.0, %v3724
    %v3726 = vadd.f32 %v1629, %v3623
    %v3727 = vxor.u32 %v3726, 2147483648
    %v3728 = vmul.f32 %v3727, 1.442695
    %v3729 = vpow.pop %v3728
    %v3730 = vadd.f32 %v3729, 1.0
    %v3731 = vrcp.pop %v3730
    %v3732 = vmul.f32 1.0, %v3731
    %v3733 = vmul.f32 %v3725, %v3716
    %v3734 = vadd.f32 %v1630, %v3733
    %v3735 = vtanh.pop %v3734
    %v3736 = vsub.f32 1.0, %v3732
    %v3737 = vmul.f32 %v3736, %v3735
    %v3738 = vmul.f32 %v3732, %v3438
    %v3739 = vadd.f32 %v3737, %v3738
    %3740 = vst [vmem:[#allocation2 + $0x30] sm:$0xff] %v3739
    %v3741 = vld [vmem:[%s37] sm:$0xff]
    %v3742 = vld [vmem:[%s37 + $0x8] sm:$0xff]
    %v3743 = vld [vmem:[%s37 + $0x10] sm:$0xff]
    %v3744 = vld [vmem:[%s37 + $0x18] sm:$0xff]
    %v3745 = vld [vmem:[%s37 + $0x20] sm:$0xff]
    %v3746 = vld [vmem:[%s37 + $0x28] sm:$0xff]
    %v3747 = vld [vmem:[%s37 + $0x30] sm:$0xff]
    %v3748 = vld [vmem:[%s37 + $0x38] sm:$0xff]
    %v3749 = vld [vmem:[%s37 + $0x40] sm:$0xff]
    %v3750 = vld [vmem:[%s37 + $0x48] sm:$0xff]
    %v3751 = vld [vmem:[%s37 + $0x50] sm:$0xff]
    %v3752 = vld [vmem:[%s37 + $0x58] sm:$0xff]
    %v3753 = vld [vmem:[%s37 + $0x60] sm:$0xff]
    %v3754 = vld [vmem:[%s37 + $0x68] sm:$0xff]
    %v3755 = vld [vmem:[%s37 + $0x70] sm:$0xff]
    %v3756 = vld [vmem:[%s37 + $0x78] sm:$0xff]
    %v3757 = vld [vmem:[%s43] sm:$0x1]
    %v3759 = vlaneseq
    %v3760 = vshrl.u32 %v3759, 7
    %v3761 = vsub.s32 0, %v3760
    %v3762 = vrot.slane %v3757, %v3761
    %3764 = vmatprep.subr.mxu0 0.0
    %3765 = vmatpush1.msra.mxu0 %v3741
    %3766 = vmatprep.subr.mxu0 0.0
    %3767 = vmatpush1.msra.mxu0 %v3742
    %3768 = vmatprep.subr.mxu0 0.0
    %3769 = vmatpush1.msra.mxu0 %v3743
    %3770 = vmatprep.subr.mxu0 0.0
    %3771 = vmatpush1.msra.mxu0 %v3744
    %3772 = vmatprep.subr.mxu0 0.0
    %3773 = vmatpush1.msra.mxu0 %v3745
    %3774 = vmatprep.subr.mxu0 0.0
    %3775 = vmatpush1.msra.mxu0 %v3746
    %3776 = vmatprep.subr.mxu0 0.0
    %3777 = vmatpush1.msra.mxu0 %v3747
    %3778 = vmatprep.subr.mxu0 0.0
    %3779 = vmatpush1.msra.mxu0 %v3748
    %3780 = vmatprep.subr.mxu0 0.0
    %3781 = vmatpush1.msra.mxu0 %v3749
    %3782 = vmatprep.subr.mxu0 0.0
    %3783 = vmatpush1.msra.mxu0 %v3750
    %3784 = vmatprep.subr.mxu0 0.0
    %3785 = vmatpush1.msra.mxu0 %v3751
    %3786 = vmatprep.subr.mxu0 0.0
    %3787 = vmatpush1.msra.mxu0 %v3752
    %3788 = vmatprep.subr.mxu0 0.0
    %3789 = vmatpush1.msra.mxu0 %v3753
    %3790 = vmatprep.subr.mxu0 0.0
    %3791 = vmatpush1.msra.mxu0 %v3754
    %3792 = vmatprep.subr.mxu0 0.0
    %3793 = vmatpush1.msra.mxu0 %v3755
    %3794 = vmatprep.subr.mxu0 0.0
    %3795 = vmatpush1.msra.mxu0 %v3756
    %3796 = vmatprep.subr.mxu0 0.0
    %3797 = vmatpush1.msra.mxu0 0.0
    %3798 = vmatprep.subr.mxu0 0.0
    %3799 = vmatpush1.msra.mxu0 0.0
    %3800 = vmatprep.subr.mxu0 0.0
    %3801 = vmatpush1.msra.mxu0 0.0
    %3802 = vmatprep.subr.mxu0 0.0
    %3803 = vmatpush1.msra.mxu0 0.0
    %3804 = vmatprep.subr.mxu0 0.0
    %3805 = vmatpush1.msra.mxu0 0.0
    %3806 = vmatprep.subr.mxu0 0.0
    %3807 = vmatpush1.msra.mxu0 0.0
    %3808 = vmatprep.subr.mxu0 0.0
    %3809 = vmatpush1.msra.mxu0 0.0
    %3810 = vmatprep.subr.mxu0 0.0
    %3811 = vmatpush1.msra.mxu0 0.0
    %3812 = vmatprep.subr.mxu0 0.0
    %3813 = vmatpush1.msra.mxu0 0.0
    %3814 = vmatprep.subr.mxu0 0.0
    %3815 = vmatpush1.msra.mxu0 0.0
    %3816 = vmatprep.subr.mxu0 0.0
    %3817 = vmatpush1.msra.mxu0 0.0
    %3818 = vmatprep.subr.mxu0 0.0
    %3819 = vmatpush1.msra.mxu0 0.0
    %3820 = vmatprep.subr.mxu0 0.0
    %3821 = vmatpush1.msra.mxu0 0.0
    %3822 = vmatprep.subr.mxu0 0.0
    %3823 = vmatpush1.msra.mxu0 0.0
    %3824 = vmatprep.subr.mxu0 0.0
    %3825 = vmatpush1.msra.mxu0 0.0
    %3826 = vmatprep.subr.mxu0 0.0
    %3827 = vmatpush1.msra.mxu0 0.0
    %3828 = vmatprep.mubr.f32.mxu0 0.0
    %3829 = vmatmul.mubr.f32.gmra.mrb[0].mxu0 %v3739
    %v3830 = vpop.f32.mrb[0].mxu0
    %v3831 = vadd.f32 %v3762, %v3830
    %v3832 = vpop.f32.mrb[0].mxu0
    %3833 = vdwg.mxu0
    %v3834 = vld [vmem:[%s39] sm:$0xff]
    %v3835 = vld [vmem:[%s39 + $0x8] sm:$0xff]
    %v3836 = vld [vmem:[%s39 + $0x10] sm:$0xff]
    %v3837 = vld [vmem:[%s39 + $0x18] sm:$0xff]
    %v3838 = vld [vmem:[%s39 + $0x20] sm:$0xff]
    %v3839 = vld [vmem:[%s39 + $0x28] sm:$0xff]
    %v3840 = vld [vmem:[%s39 + $0x30] sm:$0xff]
    %v3841 = vld [vmem:[%s39 + $0x38] sm:$0xff]
    %v3842 = vld [vmem:[%s39 + $0x40] sm:$0xff]
    %v3843 = vld [vmem:[%s39 + $0x48] sm:$0xff]
    %v3844 = vld [vmem:[%s39 + $0x50] sm:$0xff]
    %v3845 = vld [vmem:[%s39 + $0x58] sm:$0xff]
    %v3846 = vld [vmem:[%s39 + $0x60] sm:$0xff]
    %v3847 = vld [vmem:[%s39 + $0x68] sm:$0xff]
    %v3848 = vld [vmem:[%s39 + $0x70] sm:$0xff]
    %v3849 = vld [vmem:[%s39 + $0x78] sm:$0xff]
    %v3850 = vld [vmem:[%s45] sm:$0x1]
    %v3852 = vlaneseq
    %v3853 = vshrl.u32 %v3852, 7
    %v3854 = vsub.s32 0, %v3853
    %v3855 = vrot.slane %v3850, %v3854
    %3857 = vmatprep.subr.mxu0 0.0
    %3858 = vmatpush1.msra.mxu0 %v3834
    %3859 = vmatprep.subr.mxu0 0.0
    %3860 = vmatpush1.msra.mxu0 %v3835
    %3861 = vmatprep.subr.mxu0 0.0
    %3862 = vmatpush1.msra.mxu0 %v3836
    %3863 = vmatprep.subr.mxu0 0.0
    %3864 = vmatpush1.msra.mxu0 %v3837
    %3865 = vmatprep.subr.mxu0 0.0
    %3866 = vmatpush1.msra.mxu0 %v3838
    %3867 = vmatprep.subr.mxu0 0.0
    %3868 = vmatpush1.msra.mxu0 %v3839
    %3869 = vmatprep.subr.mxu0 0.0
    %3870 = vmatpush1.msra.mxu0 %v3840
    %3871 = vmatprep.subr.mxu0 0.0
    %3872 = vmatpush1.msra.mxu0 %v3841
    %3873 = vmatprep.subr.mxu0 0.0
    %3874 = vmatpush1.msra.mxu0 %v3842
    %3875 = vmatprep.subr.mxu0 0.0
    %3876 = vmatpush1.msra.mxu0 %v3843
    %3877 = vmatprep.subr.mxu0 0.0
    %3878 = vmatpush1.msra.mxu0 %v3844
    %3879 = vmatprep.subr.mxu0 0.0
    %3880 = vmatpush1.msra.mxu0 %v3845
    %3881 = vmatprep.subr.mxu0 0.0
    %3882 = vmatpush1.msra.mxu0 %v3846
    %3883 = vmatprep.subr.mxu0 0.0
    %3884 = vmatpush1.msra.mxu0 %v3847
    %3885 = vmatprep.subr.mxu0 0.0
    %3886 = vmatpush1.msra.mxu0 %v3848
    %3887 = vmatprep.subr.mxu0 0.0
    %3888 = vmatpush1.msra.mxu0 %v3849
    %3889 = vmatprep.subr.mxu0 0.0
    %3890 = vmatpush1.msra.mxu0 0.0
    %3891 = vmatprep.subr.mxu0 0.0
    %3892 = vmatpush1.msra.mxu0 0.0
    %3893 = vmatprep.subr.mxu0 0.0
    %3894 = vmatpush1.msra.mxu0 0.0
    %3895 = vmatprep.subr.mxu0 0.0
    %3896 = vmatpush1.msra.mxu0 0.0
    %3897 = vmatprep.subr.mxu0 0.0
    %3898 = vmatpush1.msra.mxu0 0.0
    %3899 = vmatprep.subr.mxu0 0.0
    %3900 = vmatpush1.msra.mxu0 0.0
    %3901 = vmatprep.subr.mxu0 0.0
    %3902 = vmatpush1.msra.mxu0 0.0
    %3903 = vmatprep.subr.mxu0 0.0
    %3904 = vmatpush1.msra.mxu0 0.0
    %3905 = vmatprep.subr.mxu0 0.0
    %3906 = vmatpush1.msra.mxu0 0.0
    %3907 = vmatprep.subr.mxu0 0.0
    %3908 = vmatpush1.msra.mxu0 0.0
    %3909 = vmatprep.subr.mxu0 0.0
    %3910 = vmatpush1.msra.mxu0 0.0
    %3911 = vmatprep.subr.mxu0 0.0
    %3912 = vmatpush1.msra.mxu0 0.0
    %3913 = vmatprep.subr.mxu0 0.0
    %3914 = vmatpush1.msra.mxu0 0.0
    %3915 = vmatprep.subr.mxu0 0.0
    %3916 = vmatpush1.msra.mxu0 0.0
    %3917 = vmatprep.subr.mxu0 0.0
    %3918 = vmatpush1.msra.mxu0 0.0
    %3919 = vmatprep.subr.mxu0 0.0
    %3920 = vmatpush1.msra.mxu0 0.0
    %3921 = vmatprep.mubr.f32.mxu0 0.0
    %3922 = vmatmul.mubr.f32.gmra.mrb[0].mxu0 %v3739
    %v3923 = vpop.f32.mrb[0].mxu0
    %v3924 = vadd.f32 %v3855, %v3923
    %v3925 = vpop.f32.mrb[0].mxu0
    %3926 = vdwg.mxu0
    %v3927 = vld [vmem:[%s41] sm:$0xff]
    %v3928 = vld [vmem:[%s41 + $0x8] sm:$0xff]
    %v3929 = vld [vmem:[%s41 + $0x10] sm:$0xff]
    %v3930 = vld [vmem:[%s41 + $0x18] sm:$0xff]
    %v3931 = vld [vmem:[%s41 + $0x20] sm:$0xff]
    %v3932 = vld [vmem:[%s41 + $0x28] sm:$0xff]
    %v3933 = vld [vmem:[%s41 + $0x30] sm:$0xff]
    %v3934 = vld [vmem:[%s41 + $0x38] sm:$0xff]
    %v3935 = vld [vmem:[%s41 + $0x40] sm:$0xff]
    %v3936 = vld [vmem:[%s41 + $0x48] sm:$0xff]
    %v3937 = vld [vmem:[%s41 + $0x50] sm:$0xff]
    %v3938 = vld [vmem:[%s41 + $0x58] sm:$0xff]
    %v3939 = vld [vmem:[%s41 + $0x60] sm:$0xff]
    %v3940 = vld [vmem:[%s41 + $0x68] sm:$0xff]
    %v3941 = vld [vmem:[%s41 + $0x70] sm:$0xff]
    %v3942 = vld [vmem:[%s41 + $0x78] sm:$0xff]
    %v3943 = vld [vmem:[%s47] sm:$0x1]
    %v3945 = vlaneseq
    %v3946 = vshrl.u32 %v3945, 7
    %v3947 = vsub.s32 0, %v3946
    %v3948 = vrot.slane %v3943, %v3947
    %3950 = vmatprep.subr.mxu0 0.0
    %3951 = vmatpush1.msra.mxu0 %v3927
    %3952 = vmatprep.subr.mxu0 0.0
    %3953 = vmatpush1.msra.mxu0 %v3928
    %3954 = vmatprep.subr.mxu0 0.0
    %3955 = vmatpush1.msra.mxu0 %v3929
    %3956 = vmatprep.subr.mxu0 0.0
    %3957 = vmatpush1.msra.mxu0 %v3930
    %3958 = vmatprep.subr.mxu0 0.0
    %3959 = vmatpush1.msra.mxu0 %v3931
    %3960 = vmatprep.subr.mxu0 0.0
    %3961 = vmatpush1.msra.mxu0 %v3932
    %3962 = vmatprep.subr.mxu0 0.0
    %3963 = vmatpush1.msra.mxu0 %v3933
    %3964 = vmatprep.subr.mxu0 0.0
    %3965 = vmatpush1.msra.mxu0 %v3934
    %3966 = vmatprep.subr.mxu0 0.0
    %3967 = vmatpush1.msra.mxu0 %v3935
    %3968 = vmatprep.subr.mxu0 0.0
    %3969 = vmatpush1.msra.mxu0 %v3936
    %3970 = vmatprep.subr.mxu0 0.0
    %3971 = vmatpush1.msra.mxu0 %v3937
    %3972 = vmatprep.subr.mxu0 0.0
    %3973 = vmatpush1.msra.mxu0 %v3938
    %3974 = vmatprep.subr.mxu0 0.0
    %3975 = vmatpush1.msra.mxu0 %v3939
    %3976 = vmatprep.subr.mxu0 0.0
    %3977 = vmatpush1.msra.mxu0 %v3940
    %3978 = vmatprep.subr.mxu0 0.0
    %3979 = vmatpush1.msra.mxu0 %v3941
    %3980 = vmatprep.subr.mxu0 0.0
    %3981 = vmatpush1.msra.mxu0 %v3942
    %3982 = vmatprep.subr.mxu0 0.0
    %3983 = vmatpush1.msra.mxu0 0.0
    %3984 = vmatprep.subr.mxu0 0.0
    %3985 = vmatpush1.msra.mxu0 0.0
    %3986 = vmatprep.subr.mxu0 0.0
    %3987 = vmatpush1.msra.mxu0 0.0
    %3988 = vmatprep.subr.mxu0 0.0
    %3989 = vmatpush1.msra.mxu0 0.0
    %3990 = vmatprep.subr.mxu0 0.0
    %3991 = vmatpush1.msra.mxu0 0.0
    %3992 = vmatprep.subr.mxu0 0.0
    %3993 = vmatpush1.msra.mxu0 0.0
    %3994 = vmatprep.subr.mxu0 0.0
    %3995 = vmatpush1.msra.mxu0 0.0
    %3996 = vmatprep.subr.mxu0 0.0
    %3997 = vmatpush1.msra.mxu0 0.0
    %3998 = vmatprep.subr.mxu0 0.0
    %3999 = vmatpush1.msra.mxu0 0.0
    %4000 = vmatprep.subr.mxu0 0.0
    %4001 = vmatpush1.msra.mxu0 0.0
    %4002 = vmatprep.subr.mxu0 0.0
    %4003 = vmatpush1.msra.mxu0 0.0
    %4004 = vmatprep.subr.mxu0 0.0
    %4005 = vmatpush1.msra.mxu0 0.0
    %4006 = vmatprep.subr.mxu0 0.0
    %4007 = vmatpush1.msra.mxu0 0.0
    %4008 = vmatprep.subr.mxu0 0.0
    %4009 = vmatpush1.msra.mxu0 0.0
    %4010 = vmatprep.subr.mxu0 0.0
    %4011 = vmatpush1.msra.mxu0 0.0
    %4012 = vmatprep.subr.mxu0 0.0
    %4013 = vmatpush1.msra.mxu0 0.0
    %4014 = vmatprep.mubr.f32.mxu0 0.0
    %4015 = vmatmul.mubr.f32.gmra.mrb[0].mxu0 %v3739
    %v4016 = vpop.f32.mrb[0].mxu0
    %v4017 = vadd.f32 %v3948, %v4016
    %v4018 = vpop.f32.mrb[0].mxu0
    %4019 = vdwg.mxu0
    %v4020 = vadd.f32 %v1631, %v3831
    %v4021 = vxor.u32 %v4020, 2147483648
    %v4022 = vmul.f32 %v4021, 1.442695
    %v4023 = vpow.pop %v4022
    %v4024 = vadd.f32 %v4023, 1.0
    %v4025 = vrcp.pop %v4024
    %v4026 = vmul.f32 1.0, %v4025
    %v4027 = vadd.f32 %v1632, %v3924
    %v4028 = vxor.u32 %v4027, 2147483648
    %v4029 = vmul.f32 %v4028, 1.442695
    %v4030 = vpow.pop %v4029
    %v4031 = vadd.f32 %v4030, 1.0
    %v4032 = vrcp.pop %v4031
    %v4033 = vmul.f32 1.0, %v4032
    %v4034 = vmul.f32 %v4026, %v4017
    %v4035 = vadd.f32 %v1633, %v4034
    %v4036 = vtanh.pop %v4035
    %v4037 = vsub.f32 1.0, %v4033
    %v4038 = vmul.f32 %v4037, %v4036
    %v4039 = vmul.f32 %v4033, %v3739
    %v4040 = vadd.f32 %v4038, %v4039
    %4041 = vst [vmem:[#allocation2 + $0x38] sm:$0xff] %v4040
    %v4042 = vld [vmem:[#allocation2] sm:$0xff]
    %v4043 = vld [vmem:[#allocation2 + $0x8] sm:$0xff]
    %v4044 = vld [vmem:[#allocation2 + $0x10] sm:$0xff]
    %v4045 = vld [vmem:[#allocation2 + $0x18] sm:$0xff]
    %v4046 = vld [vmem:[#allocation2 + $0x20] sm:$0xff]
    %v4047 = vld [vmem:[#allocation2 + $0x28] sm:$0xff]
    %v4048 = vld [vmem:[#allocation2 + $0x30] sm:$0xff]
    %v4049 = vld [vmem:[#allocation2 + $0x38] sm:$0xff]
    %v4050 = vld [vmem:[%s49] sm:$0xff]
    %v4051 = vld [vmem:[%s49 + $0x8] sm:$0xff]
    %v4052 = vld [vmem:[%s49 + $0x10] sm:$0xff]
    %v4053 = vld [vmem:[%s49 + $0x18] sm:$0xff]
    %v4054 = vld [vmem:[%s49 + $0x20] sm:$0xff]
    %v4055 = vld [vmem:[%s49 + $0x28] sm:$0xff]
    %v4056 = vld [vmem:[%s49 + $0x30] sm:$0xff]
    %v4057 = vld [vmem:[%s49 + $0x38] sm:$0xff]
    %v4058 = vld [vmem:[%s49 + $0x40] sm:$0xff]
    %v4059 = vld [vmem:[%s49 + $0x48] sm:$0xff]
    %v4060 = vld [vmem:[%s49 + $0x50] sm:$0xff]
    %v4061 = vld [vmem:[%s49 + $0x58] sm:$0xff]
    %v4062 = vld [vmem:[%s49 + $0x60] sm:$0xff]
    %v4063 = vld [vmem:[%s49 + $0x68] sm:$0xff]
    %v4064 = vld [vmem:[%s49 + $0x70] sm:$0xff]
    %v4065 = vld [vmem:[%s49 + $0x78] sm:$0xff]
    %v4066 = vld [vmem:[%s51] sm:$0xff]
    %v4067 = vld [vmem:[%s51 + $0x8] sm:$0xff]
    %v4068 = vld [vmem:[%s51 + $0x10] sm:$0xff]
    %v4069 = vld [vmem:[%s51 + $0x18] sm:$0xff]
    %v4071 = vsel %vm1326, %v582, 0
    %v4074 = vsel %vm1326, %v583, 0
    %v4077 = vsel %vm1326, %v584, 0
    %v4080 = vsel %vm1326, %v585, 0
    %v4083 = vsel %vm1326, %v586, 0
    %v4086 = vsel %vm1326, %v587, 0
    %v4089 = vsel %vm1326, %v588, 0
    %v4092 = vsel %vm1326, %v589, 0
    %4094 = vmatprep.subr.mxu0 0.0
    %4095 = vmatpush1.msra.mxu0 %v4066
    %4096 = vmatprep.subr.mxu0 0.0
    %4097 = vmatpush1.msra.mxu0 %v4067
    %4098 = vmatprep.subr.mxu0 0.0
    %4099 = vmatpush1.msra.mxu0 %v4068
    %4100 = vmatprep.subr.mxu0 0.0
    %4101 = vmatpush1.msra.mxu0 %v4069
    %4102 = vmatprep.subr.mxu0 0.0
    %4103 = vmatpush1.msra.mxu0 0.0
    %4104 = vmatprep.subr.mxu0 0.0
    %4105 = vmatpush1.msra.mxu0 0.0
    %4106 = vmatprep.subr.mxu0 0.0
    %4107 = vmatpush1.msra.mxu0 0.0
    %4108 = vmatprep.subr.mxu0 0.0
    %4109 = vmatpush1.msra.mxu0 0.0
    %4110 = vmatprep.subr.mxu0 0.0
    %4111 = vmatpush1.msra.mxu0 0.0
    %4112 = vmatprep.subr.mxu0 0.0
    %4113 = vmatpush1.msra.mxu0 0.0
    %4114 = vmatprep.subr.mxu0 0.0
    %4115 = vmatpush1.msra.mxu0 0.0
    %4116 = vmatprep.subr.mxu0 0.0
    %4117 = vmatpush1.msra.mxu0 0.0
    %4118 = vmatprep.subr.mxu0 0.0
    %4119 = vmatpush1.msra.mxu0 0.0
    %4120 = vmatprep.subr.mxu0 0.0
    %4121 = vmatpush1.msra.mxu0 0.0
    %4122 = vmatprep.subr.mxu0 0.0
    %4123 = vmatpush1.msra.mxu0 0.0
    %4124 = vmatprep.subr.mxu0 0.0
    %4125 = vmatpush1.msra.mxu0 0.0
    %4126 = vmatprep.subr.mxu0 0.0
    %4127 = vmatpush1.msra.mxu0 0.0
    %4128 = vmatprep.subr.mxu0 0.0
    %4129 = vmatpush1.msra.mxu0 0.0
    %4130 = vmatprep.subr.mxu0 0.0
    %4131 = vmatpush1.msra.mxu0 0.0
    %4132 = vmatprep.subr.mxu0 0.0
    %4133 = vmatpush1.msra.mxu0 0.0
    %4134 = vmatprep.subr.mxu0 0.0
    %4135 = vmatpush1.msra.mxu0 0.0
    %4136 = vmatprep.subr.mxu0 0.0
    %4137 = vmatpush1.msra.mxu0 0.0
    %4138 = vmatprep.subr.mxu0 0.0
    %4139 = vmatpush1.msra.mxu0 0.0
    %4140 = vmatprep.subr.mxu0 0.0
    %4141 = vmatpush1.msra.mxu0 0.0
    %4142 = vmatprep.subr.mxu0 0.0
    %4143 = vmatpush1.msra.mxu0 0.0
    %4144 = vmatprep.subr.mxu0 0.0
    %4145 = vmatpush1.msra.mxu0 0.0
    %4146 = vmatprep.subr.mxu0 0.0
    %4147 = vmatpush1.msra.mxu0 0.0
    %4148 = vmatprep.subr.mxu0 0.0
    %4149 = vmatpush1.msra.mxu0 0.0
    %4150 = vmatprep.subr.mxu0 0.0
    %4151 = vmatpush1.msra.mxu0 0.0
    %4152 = vmatprep.subr.mxu0 0.0
    %4153 = vmatpush1.msra.mxu0 0.0
    %4154 = vmatprep.subr.mxu0 0.0
    %4155 = vmatpush1.msra.mxu0 0.0
    %4156 = vmatprep.subr.mxu0 0.0
    %4157 = vmatpush1.msra.mxu0 0.0
    %4158 = vmatprep.mubr.f32.mxu0 0.0
    %4159 = vmatmul.mubr.f32.gmra.mrb[0].mxu0 %v4071
    %v4160 = vpop.f32.mrb[0].mxu0
    %v4161 = vadd.f32 0.0, %v4160
    %v4162 = vpop.f32.mrb[0].mxu0
    %4163 = vmatprep.mubr.f32.mxu0 0.0
    %4164 = vmatmul.mubr.f32.gmra.mrb[0].mxu0 %v4074
    %v4165 = vpop.f32.mrb[0].mxu0
    %v4166 = vadd.f32 0.0, %v4165
    %v4167 = vpop.f32.mrb[0].mxu0
    %4168 = vmatprep.mubr.f32.mxu0 0.0
    %4169 = vmatmul.mubr.f32.gmra.mrb[0].mxu0 %v4077
    %v4170 = vpop.f32.mrb[0].mxu0
    %v4171 = vadd.f32 0.0, %v4170
    %v4172 = vpop.f32.mrb[0].mxu0
    %4173 = vmatprep.mubr.f32.mxu0 0.0
    %4174 = vmatmul.mubr.f32.gmra.mrb[0].mxu0 %v4080
    %v4175 = vpop.f32.mrb[0].mxu0
    %v4176 = vadd.f32 0.0, %v4175
    %v4177 = vpop.f32.mrb[0].mxu0
    %4178 = vmatprep.mubr.f32.mxu0 0.0
    %4179 = vmatmul.mubr.f32.gmra.mrb[0].mxu0 %v4083
    %v4180 = vpop.f32.mrb[0].mxu0
    %v4181 = vadd.f32 0.0, %v4180
    %v4182 = vpop.f32.mrb[0].mxu0
    %4183 = vmatprep.mubr.f32.mxu0 0.0
    %4184 = vmatmul.mubr.f32.gmra.mrb[0].mxu0 %v4086
    %v4185 = vpop.f32.mrb[0].mxu0
    %v4186 = vadd.f32 0.0, %v4185
    %v4187 = vpop.f32.mrb[0].mxu0
    %4188 = vmatprep.mubr.f32.mxu0 0.0
    %4189 = vmatmul.mubr.f32.gmra.mrb[0].mxu0 %v4089
    %v4190 = vpop.f32.mrb[0].mxu0
    %v4191 = vadd.f32 0.0, %v4190
    %v4192 = vpop.f32.mrb[0].mxu0
    %4193 = vmatprep.mubr.f32.mxu0 0.0
    %4194 = vmatmul.mubr.f32.gmra.mrb[0].mxu0 %v4092
    %v4195 = vpop.f32.mrb[0].mxu0
    %v4196 = vadd.f32 0.0, %v4195
    %v4197 = vpop.f32.mrb[0].mxu0
    %4198 = vdwg.mxu0
    %4199 = vmatprep.subr.mxu0 0.0
    %4200 = vmatpush1.msra.mxu0 %v4050
    %4201 = vmatprep.subr.mxu0 0.0
    %4202 = vmatpush1.msra.mxu0 %v4051
    %4203 = vmatprep.subr.mxu0 0.0
    %4204 = vmatpush1.msra.mxu0 %v4052
    %4205 = vmatprep.subr.mxu0 0.0
    %4206 = vmatpush1.msra.mxu0 %v4053
    %4207 = vmatprep.subr.mxu0 0.0
    %4208 = vmatpush1.msra.mxu0 %v4054
    %4209 = vmatprep.subr.mxu0 0.0
    %4210 = vmatpush1.msra.mxu0 %v4055
    %4211 = vmatprep.subr.mxu0 0.0
    %4212 = vmatpush1.msra.mxu0 %v4056
    %4213 = vmatprep.subr.mxu0 0.0
    %4214 = vmatpush1.msra.mxu0 %v4057
    %4215 = vmatprep.subr.mxu0 0.0
    %4216 = vmatpush1.msra.mxu0 %v4058
    %4217 = vmatprep.subr.mxu0 0.0
    %4218 = vmatpush1.msra.mxu0 %v4059
    %4219 = vmatprep.subr.mxu0 0.0
    %4220 = vmatpush1.msra.mxu0 %v4060
    %4221 = vmatprep.subr.mxu0 0.0
    %4222 = vmatpush1.msra.mxu0 %v4061
    %4223 = vmatprep.subr.mxu0 0.0
    %4224 = vmatpush1.msra.mxu0 %v4062
    %4225 = vmatprep.subr.mxu0 0.0
    %4226 = vmatpush1.msra.mxu0 %v4063
    %4227 = vmatprep.subr.mxu0 0.0
    %4228 = vmatpush1.msra.mxu0 %v4064
    %4229 = vmatprep.subr.mxu0 0.0
    %4230 = vmatpush1.msra.mxu0 %v4065
    %4231 = vmatprep.subr.mxu0 0.0
    %4232 = vmatpush1.msra.mxu0 0.0
    %4233 = vmatprep.subr.mxu0 0.0
    %4234 = vmatpush1.msra.mxu0 0.0
    %4235 = vmatprep.subr.mxu0 0.0
    %4236 = vmatpush1.msra.mxu0 0.0
    %4237 = vmatprep.subr.mxu0 0.0
    %4238 = vmatpush1.msra.mxu0 0.0
    %4239 = vmatprep.subr.mxu0 0.0
    %4240 = vmatpush1.msra.mxu0 0.0
    %4241 = vmatprep.subr.mxu0 0.0
    %4242 = vmatpush1.msra.mxu0 0.0
    %4243 = vmatprep.subr.mxu0 0.0
    %4244 = vmatpush1.msra.mxu0 0.0
    %4245 = vmatprep.subr.mxu0 0.0
    %4246 = vmatpush1.msra.mxu0 0.0
    %4247 = vmatprep.subr.mxu0 0.0
    %4248 = vmatpush1.msra.mxu0 0.0
    %4249 = vmatprep.subr.mxu0 0.0
    %4250 = vmatpush1.msra.mxu0 0.0
    %4251 = vmatprep.subr.mxu0 0.0
    %4252 = vmatpush1.msra.mxu0 0.0
    %4253 = vmatprep.subr.mxu0 0.0
    %4254 = vmatpush1.msra.mxu0 0.0
    %4255 = vmatprep.subr.mxu0 0.0
    %4256 = vmatpush1.msra.mxu0 0.0
    %4257 = vmatprep.subr.mxu0 0.0
    %4258 = vmatpush1.msra.mxu0 0.0
    %4259 = vmatprep.subr.mxu0 0.0
    %4260 = vmatpush1.msra.mxu0 0.0
    %4261 = vmatprep.subr.mxu0 0.0
    %4262 = vmatpush1.msra.mxu0 0.0
    %4263 = vmatprep.mubr.f32.mxu0 0.0
    %4264 = vmatmul.mubr.f32.gmra.mrb[0].mxu0 %v4042
    %v4265 = vpop.f32.mrb[0].mxu0
    %v4266 = vadd.f32 %v4161, %v4265
    %v4267 = vpop.f32.mrb[0].mxu0
    %4268 = vmatprep.mubr.f32.mxu0 0.0
    %4269 = vmatmul.mubr.f32.gmra.mrb[0].mxu0 %v4043
    %v4270 = vpop.f32.mrb[0].mxu0
    %v4271 = vadd.f32 %v4166, %v4270
    %v4272 = vpop.f32.mrb[0].mxu0
    %4273 = vmatprep.mubr.f32.mxu0 0.0
    %4274 = vmatmul.mubr.f32.gmra.mrb[0].mxu0 %v4044
    %v4275 = vpop.f32.mrb[0].mxu0
    %v4276 = vadd.f32 %v4171, %v4275
    %v4277 = vpop.f32.mrb[0].mxu0
    %4278 = vmatprep.mubr.f32.mxu0 0.0
    %4279 = vmatmul.mubr.f32.gmra.mrb[0].mxu0 %v4045
    %v4280 = vpop.f32.mrb[0].mxu0
    %v4281 = vadd.f32 %v4176, %v4280
    %v4282 = vpop.f32.mrb[0].mxu0
    %4283 = vmatprep.mubr.f32.mxu0 0.0
    %4284 = vmatmul.mubr.f32.gmra.mrb[0].mxu0 %v4046
    %v4285 = vpop.f32.mrb[0].mxu0
    %v4286 = vadd.f32 %v4181, %v4285
    %v4287 = vpop.f32.mrb[0].mxu0
    %4288 = vmatprep.mubr.f32.mxu0 0.0
    %4289 = vmatmul.mubr.f32.gmra.mrb[0].mxu0 %v4047
    %v4290 = vpop.f32.mrb[0].mxu0
    %v4291 = vadd.f32 %v4186, %v4290
    %v4292 = vpop.f32.mrb[0].mxu0
    %4293 = vmatprep.mubr.f32.mxu0 0.0
    %4294 = vmatmul.mubr.f32.gmra.mrb[0].mxu0 %v4048
    %v4295 = vpop.f32.mrb[0].mxu0
    %v4296 = vadd.f32 %v4191, %v4295
    %v4297 = vpop.f32.mrb[0].mxu0
    %4298 = vmatprep.mubr.f32.mxu0 0.0
    %4299 = vmatmul.mubr.f32.gmra.mrb[0].mxu0 %v4049
    %v4300 = vpop.f32.mrb[0].mxu0
    %v4301 = vadd.f32 %v4196, %v4300
    %v4302 = vpop.f32.mrb[0].mxu0
    %4303 = vdwg.mxu0
    %v4304 = vld [vmem:[%s53] sm:$0x1]
    %v4306 = vlaneseq
    %v4307 = vshrl.u32 %v4306, 7
    %v4308 = vsub.s32 0, %v4307
    %v4309 = vrot.slane %v4304, %v4308
    %v4311 = vadd.f32 %v4266, %v4309
    %v4312 = vadd.f32 %v4271, %v4309
    %v4313 = vadd.f32 %v4276, %v4309
    %v4314 = vadd.f32 %v4281, %v4309
    %v4315 = vadd.f32 %v4286, %v4309
    %v4316 = vadd.f32 %v4291, %v4309
    %v4317 = vadd.f32 %v4296, %v4309
    %v4318 = vadd.f32 %v4301, %v4309
    %v4319 = vmax.f32 %v4311, 0.0
    %v4320 = vmax.f32 %v4312, 0.0
    %v4321 = vmax.f32 %v4313, 0.0
    %v4322 = vmax.f32 %v4314, 0.0
    %v4323 = vmax.f32 %v4315, 0.0
    %v4324 = vmax.f32 %v4316, 0.0
    %v4325 = vmax.f32 %v4317, 0.0
    %v4326 = vmax.f32 %v4318, 0.0
    %v4327 = vld [vmem:[%s55] sm:$0xff]
    %v4328 = vld [vmem:[%s55 + $0x8] sm:$0xff]
    %v4329 = vld [vmem:[%s55 + $0x10] sm:$0xff]
    %v4330 = vld [vmem:[%s55 + $0x18] sm:$0xff]
    %v4331 = vld [vmem:[%s55 + $0x20] sm:$0xff]
    %v4332 = vld [vmem:[%s55 + $0x28] sm:$0xff]
    %v4333 = vld [vmem:[%s55 + $0x30] sm:$0xff]
    %v4334 = vld [vmem:[%s55 + $0x38] sm:$0xff]
    %v4335 = vld [vmem:[%s57] sm:$0x1]
    %v4337 = vlaneseq
    %v4338 = vshrl.u32 %v4337, 7
    %v4339 = vsub.s32 0, %v4338
    %v4340 = vrot.slane %v4335, %v4339
    %vm4342 = vcmask 523264
    %v4344 = vsel %vm4342, %v4319, 0
    %v4347 = vsel %vm4342, %v4320, 0
    %v4350 = vsel %vm4342, %v4321, 0
    %v4353 = vsel %vm4342, %v4322, 0
    %v4356 = vsel %vm4342, %v4323, 0
    %v4359 = vsel %vm4342, %v4324, 0
    %v4362 = vsel %vm4342, %v4325, 0
    %v4365 = vsel %vm4342, %v4326, 0
    %4367 = vmatprep.subr.mxu0 0.0
    %4368 = vmatpush1.msra.mxu0 %v4327
    %4369 = vmatprep.subr.mxu0 0.0
    %4370 = vmatpush1.msra.mxu0 %v4328
    %4371 = vmatprep.subr.mxu0 0.0
    %4372 = vmatpush1.msra.mxu0 %v4329
    %4373 = vmatprep.subr.mxu0 0.0
    %4374 = vmatpush1.msra.mxu0 %v4330
    %4375 = vmatprep.subr.mxu0 0.0
    %4376 = vmatpush1.msra.mxu0 %v4331
    %4377 = vmatprep.subr.mxu0 0.0
    %4378 = vmatpush1.msra.mxu0 %v4332
    %4379 = vmatprep.subr.mxu0 0.0
    %4380 = vmatpush1.msra.mxu0 %v4333
    %4381 = vmatprep.subr.mxu0 0.0
    %4382 = vmatpush1.msra.mxu0 %v4334
    %4383 = vmatprep.subr.mxu0 0.0
    %4384 = vmatpush1.msra.mxu0 0.0
    %4385 = vmatprep.subr.mxu0 0.0
    %4386 = vmatpush1.msra.mxu0 0.0
    %4387 = vmatprep.subr.mxu0 0.0
    %4388 = vmatpush1.msra.mxu0 0.0
    %4389 = vmatprep.subr.mxu0 0.0
    %4390 = vmatpush1.msra.mxu0 0.0
    %4391 = vmatprep.subr.mxu0 0.0
    %4392 = vmatpush1.msra.mxu0 0.0
    %4393 = vmatprep.subr.mxu0 0.0
    %4394 = vmatpush1.msra.mxu0 0.0
    %4395 = vmatprep.subr.mxu0 0.0
    %4396 = vmatpush1.msra.mxu0 0.0
    %4397 = vmatprep.subr.mxu0 0.0
    %4398 = vmatpush1.msra.mxu0 0.0
    %4399 = vmatprep.subr.mxu0 0.0
    %4400 = vmatpush1.msra.mxu0 0.0
    %4401 = vmatprep.subr.mxu0 0.0
    %4402 = vmatpush1.msra.mxu0 0.0
    %4403 = vmatprep.subr.mxu0 0.0
    %4404 = vmatpush1.msra.mxu0 0.0
    %4405 = vmatprep.subr.mxu0 0.0
    %4406 = vmatpush1.msra.mxu0 0.0
    %4407 = vmatprep.subr.mxu0 0.0
    %4408 = vmatpush1.msra.mxu0 0.0
    %4409 = vmatprep.subr.mxu0 0.0
    %4410 = vmatpush1.msra.mxu0 0.0
    %4411 = vmatprep.subr.mxu0 0.0
    %4412 = vmatpush1.msra.mxu0 0.0
    %4413 = vmatprep.subr.mxu0 0.0
    %4414 = vmatpush1.msra.mxu0 0.0
    %4415 = vmatprep.subr.mxu0 0.0
    %4416 = vmatpush1.msra.mxu0 0.0
    %4417 = vmatprep.subr.mxu0 0.0
    %4418 = vmatpush1.msra.mxu0 0.0
    %4419 = vmatprep.subr.mxu0 0.0
    %4420 = vmatpush1.msra.mxu0 0.0
    %4421 = vmatprep.subr.mxu0 0.0
    %4422 = vmatpush1.msra.mxu0 0.0
    %4423 = vmatprep.subr.mxu0 0.0
    %4424 = vmatpush1.msra.mxu0 0.0
    %4425 = vmatprep.subr.mxu0 0.0
    %4426 = vmatpush1.msra.mxu0 0.0
    %4427 = vmatprep.subr.mxu0 0.0
    %4428 = vmatpush1.msra.mxu0 0.0
    %4429 = vmatprep.subr.mxu0 0.0
    %4430 = vmatpush1.msra.mxu0 0.0
    %4431 = vmatprep.mubr.f32.mxu0 0.0
    %4432 = vmatmul.mubr.f32.gmra.mrb[0].mxu0 %v4344
    %v4433 = vpop.f32.mrb[0].mxu0
    %v4434 = vadd.f32 %v4340, %v4433
    %v4435 = vpop.f32.mrb[0].mxu0
    %4436 = vmatprep.mubr.f32.mxu0 0.0
    %4437 = vmatmul.mubr.f32.gmra.mrb[0].mxu0 %v4347
    %v4438 = vpop.f32.mrb[0].mxu0
    %v4439 = vadd.f32 %v4340, %v4438
    %v4440 = vpop.f32.mrb[0].mxu0
    %4441 = vmatprep.mubr.f32.mxu0 0.0
    %4442 = vmatmul.mubr.f32.gmra.mrb[0].mxu0 %v4350
    %v4443 = vpop.f32.mrb[0].mxu0
    %v4444 = vadd.f32 %v4340, %v4443
    %v4445 = vpop.f32.mrb[0].mxu0
    %4446 = vmatprep.mubr.f32.mxu0 0.0
    %4447 = vmatmul.mubr.f32.gmra.mrb[0].mxu0 %v4353
    %v4448 = vpop.f32.mrb[0].mxu0
    %v4449 = vadd.f32 %v4340, %v4448
    %v4450 = vpop.f32.mrb[0].mxu0
    %4451 = vmatprep.mubr.f32.mxu0 0.0
    %4452 = vmatmul.mubr.f32.gmra.mrb[0].mxu0 %v4356
    %v4453 = vpop.f32.mrb[0].mxu0
    %v4454 = vadd.f32 %v4340, %v4453
    %v4455 = vpop.f32.mrb[0].mxu0
    %4456 = vmatprep.mubr.f32.mxu0 0.0
    %4457 = vmatmul.mubr.f32.gmra.mrb[0].mxu0 %v4359
    %v4458 = vpop.f32.mrb[0].mxu0
    %v4459 = vadd.f32 %v4340, %v4458
    %v4460 = vpop.f32.mrb[0].mxu0
    %4461 = vmatprep.mubr.f32.mxu0 0.0
    %4462 = vmatmul.mubr.f32.gmra.mrb[0].mxu0 %v4362
    %v4463 = vpop.f32.mrb[0].mxu0
    %v4464 = vadd.f32 %v4340, %v4463
    %v4465 = vpop.f32.mrb[0].mxu0
    %4466 = vmatprep.mubr.f32.mxu0 0.0
    %4467 = vmatmul.mubr.f32.gmra.mrb[0].mxu0 %v4365
    %v4468 = vpop.f32.mrb[0].mxu0
    %v4469 = vadd.f32 %v4340, %v4468
    %v4470 = vpop.f32.mrb[0].mxu0
    %4471 = vdwg.mxu0
    %v4472 = vmax.f32 %v4434, 0.0
    %v4473 = vmax.f32 %v4439, 0.0
    %v4474 = vmax.f32 %v4444, 0.0
    %v4475 = vmax.f32 %v4449, 0.0
    %v4476 = vmax.f32 %v4454, 0.0
    %v4477 = vmax.f32 %v4459, 0.0
    %v4478 = vmax.f32 %v4464, 0.0
    %v4479 = vmax.f32 %v4469, 0.0
    %v4480 = vld [vmem:[%s59] sm:$0xff]
    %v4481 = vld [vmem:[%s59 + $0x8] sm:$0xff]
    %v4482 = vld [vmem:[%s59 + $0x10] sm:$0xff]
    %v4483 = vld [vmem:[%s59 + $0x18] sm:$0xff]
    %v4484 = vld [vmem:[%s59 + $0x20] sm:$0xff]
    %v4485 = vld [vmem:[%s59 + $0x28] sm:$0xff]
    %v4486 = vld [vmem:[%s59 + $0x30] sm:$0xff]
    %v4487 = vld [vmem:[%s59 + $0x38] sm:$0xff]
    %v4488 = vld [vmem:[%s61] sm:$0x1]
    %v4490 = vlaneseq
    %v4491 = vshrl.u32 %v4490, 7
    %v4492 = vsub.s32 0, %v4491
    %v4493 = vrot.slane %v4488, %v4492
    %v4496 = vsel %vm4342, %v4472, 0
    %v4499 = vsel %vm4342, %v4473, 0
    %v4502 = vsel %vm4342, %v4474, 0
    %v4505 = vsel %vm4342, %v4475, 0
    %v4508 = vsel %vm4342, %v4476, 0
    %v4511 = vsel %vm4342, %v4477, 0
    %v4514 = vsel %vm4342, %v4478, 0
    %v4517 = vsel %vm4342, %v4479, 0
    %4519 = vmatprep.subr.mxu0 0.0
    %4520 = vmatpush1.msra.mxu0 %v4480
    %4521 = vmatprep.subr.mxu0 0.0
    %4522 = vmatpush1.msra.mxu0 %v4481
    %4523 = vmatprep.subr.mxu0 0.0
    %4524 = vmatpush1.msra.mxu0 %v4482
    %4525 = vmatprep.subr.mxu0 0.0
    %4526 = vmatpush1.msra.mxu0 %v4483
    %4527 = vmatprep.subr.mxu0 0.0
    %4528 = vmatpush1.msra.mxu0 %v4484
    %4529 = vmatprep.subr.mxu0 0.0
    %4530 = vmatpush1.msra.mxu0 %v4485
    %4531 = vmatprep.subr.mxu0 0.0
    %4532 = vmatpush1.msra.mxu0 %v4486
    %4533 = vmatprep.subr.mxu0 0.0
    %4534 = vmatpush1.msra.mxu0 %v4487
    %4535 = vmatprep.subr.mxu0 0.0
    %4536 = vmatpush1.msra.mxu0 0.0
    %4537 = vmatprep.subr.mxu0 0.0
    %4538 = vmatpush1.msra.mxu0 0.0
    %4539 = vmatprep.subr.mxu0 0.0
    %4540 = vmatpush1.msra.mxu0 0.0
    %4541 = vmatprep.subr.mxu0 0.0
    %4542 = vmatpush1.msra.mxu0 0.0
    %4543 = vmatprep.subr.mxu0 0.0
    %4544 = vmatpush1.msra.mxu0 0.0
    %4545 = vmatprep.subr.mxu0 0.0
    %4546 = vmatpush1.msra.mxu0 0.0
    %4547 = vmatprep.subr.mxu0 0.0
    %4548 = vmatpush1.msra.mxu0 0.0
    %4549 = vmatprep.subr.mxu0 0.0
    %4550 = vmatpush1.msra.mxu0 0.0
    %4551 = vmatprep.subr.mxu0 0.0
    %4552 = vmatpush1.msra.mxu0 0.0
    %4553 = vmatprep.subr.mxu0 0.0
    %4554 = vmatpush1.msra.mxu0 0.0
    %4555 = vmatprep.subr.mxu0 0.0
    %4556 = vmatpush1.msra.mxu0 0.0
    %4557 = vmatprep.subr.mxu0 0.0
    %4558 = vmatpush1.msra.mxu0 0.0
    %4559 = vmatprep.subr.mxu0 0.0
    %4560 = vmatpush1.msra.mxu0 0.0
    %4561 = vmatprep.subr.mxu0 0.0
    %4562 = vmatpush1.msra.mxu0 0.0
    %4563 = vmatprep.subr.mxu0 0.0
    %4564 = vmatpush1.msra.mxu0 0.0
    %4565 = vmatprep.subr.mxu0 0.0
    %4566 = vmatpush1.msra.mxu0 0.0
    %4567 = vmatprep.subr.mxu0 0.0
    %4568 = vmatpush1.msra.mxu0 0.0
    %4569 = vmatprep.subr.mxu0 0.0
    %4570 = vmatpush1.msra.mxu0 0.0
    %4571 = vmatprep.subr.mxu0 0.0
    %4572 = vmatpush1.msra.mxu0 0.0
    %4573 = vmatprep.subr.mxu0 0.0
    %4574 = vmatpush1.msra.mxu0 0.0
    %4575 = vmatprep.subr.mxu0 0.0
    %4576 = vmatpush1.msra.mxu0 0.0
    %4577 = vmatprep.subr.mxu0 0.0
    %4578 = vmatpush1.msra.mxu0 0.0
    %4579 = vmatprep.subr.mxu0 0.0
    %4580 = vmatpush1.msra.mxu0 0.0
    %4581 = vmatprep.subr.mxu0 0.0
    %4582 = vmatpush1.msra.mxu0 0.0
    %4583 = vmatprep.mubr.f32.mxu0 0.0
    %4584 = vmatmul.mubr.f32.gmra.mrb[0].mxu0 %v4496
    %v4585 = vpop.f32.mrb[0].mxu0
    %v4586 = vadd.f32 %v4493, %v4585
    %v4587 = vpop.f32.mrb[0].mxu0
    %4588 = vmatprep.mubr.f32.mxu0 0.0
    %4589 = vmatmul.mubr.f32.gmra.mrb[0].mxu0 %v4499
    %v4590 = vpop.f32.mrb[0].mxu0
    %v4591 = vadd.f32 %v4493, %v4590
    %v4592 = vpop.f32.mrb[0].mxu0
    %4593 = vmatprep.mubr.f32.mxu0 0.0
    %4594 = vmatmul.mubr.f32.gmra.mrb[0].mxu0 %v4502
    %v4595 = vpop.f32.mrb[0].mxu0
    %v4596 = vadd.f32 %v4493, %v4595
    %v4597 = vpop.f32.mrb[0].mxu0
    %4598 = vmatprep.mubr.f32.mxu0 0.0
    %4599 = vmatmul.mubr.f32.gmra.mrb[0].mxu0 %v4505
    %v4600 = vpop.f32.mrb[0].mxu0
    %v4601 = vadd.f32 %v4493, %v4600
    %v4602 = vpop.f32.mrb[0].mxu0
    %4603 = vmatprep.mubr.f32.mxu0 0.0
    %4604 = vmatmul.mubr.f32.gmra.mrb[0].mxu0 %v4508
    %v4605 = vpop.f32.mrb[0].mxu0
    %v4606 = vadd.f32 %v4493, %v4605
    %v4607 = vpop.f32.mrb[0].mxu0
    %4608 = vmatprep.mubr.f32.mxu0 0.0
    %4609 = vmatmul.mubr.f32.gmra.mrb[0].mxu0 %v4511
    %v4610 = vpop.f32.mrb[0].mxu0
    %v4611 = vadd.f32 %v4493, %v4610
    %v4612 = vpop.f32.mrb[0].mxu0
    %4613 = vmatprep.mubr.f32.mxu0 0.0
    %4614 = vmatmul.mubr.f32.gmra.mrb[0].mxu0 %v4514
    %v4615 = vpop.f32.mrb[0].mxu0
    %v4616 = vadd.f32 %v4493, %v4615
    %v4617 = vpop.f32.mrb[0].mxu0
    %4618 = vmatprep.mubr.f32.mxu0 0.0
    %4619 = vmatmul.mubr.f32.gmra.mrb[0].mxu0 %v4517
    %v4620 = vpop.f32.mrb[0].mxu0
    %v4621 = vadd.f32 %v4493, %v4620
    %v4622 = vpop.f32.mrb[0].mxu0
    %4623 = vdwg.mxu0
    %v4624 = vld [vmem:[%s63] sm:$0xff]
    %v4625 = vld [vmem:[%s63 + $0x8] sm:$0xff]
    %v4626 = vld [vmem:[%s63 + $0x10] sm:$0xff]
    %v4627 = vld [vmem:[%s63 + $0x18] sm:$0xff]
    %v4628 = vld [vmem:[%s63 + $0x20] sm:$0xff]
    %v4629 = vld [vmem:[%s63 + $0x28] sm:$0xff]
    %v4630 = vld [vmem:[%s63 + $0x30] sm:$0xff]
    %v4631 = vld [vmem:[%s63 + $0x38] sm:$0xff]
    %v4632 = vld [vmem:[%s65] sm:$0x1]
    %v4634 = vlaneseq
    %v4635 = vshrl.u32 %v4634, 7
    %v4636 = vsub.s32 0, %v4635
    %v4637 = vrot.slane %v4632, %v4636
    %4639 = vmatprep.subr.mxu0 0.0
    %4640 = vmatpush1.msra.mxu0 %v4624
    %4641 = vmatprep.subr.mxu0 0.0
    %4642 = vmatpush1.msra.mxu0 %v4625
    %4643 = vmatprep.subr.mxu0 0.0
    %4644 = vmatpush1.msra.mxu0 %v4626
    %4645 = vmatprep.subr.mxu0 0.0
    %4646 = vmatpush1.msra.mxu0 %v4627
    %4647 = vmatprep.subr.mxu0 0.0
    %4648 = vmatpush1.msra.mxu0 %v4628
    %4649 = vmatprep.subr.mxu0 0.0
    %4650 = vmatpush1.msra.mxu0 %v4629
    %4651 = vmatprep.subr.mxu0 0.0
    %4652 = vmatpush1.msra.mxu0 %v4630
    %4653 = vmatprep.subr.mxu0 0.0
    %4654 = vmatpush1.msra.mxu0 %v4631
    %4655 = vmatprep.subr.mxu0 0.0
    %4656 = vmatpush1.msra.mxu0 0.0
    %4657 = vmatprep.subr.mxu0 0.0
    %4658 = vmatpush1.msra.mxu0 0.0
    %4659 = vmatprep.subr.mxu0 0.0
    %4660 = vmatpush1.msra.mxu0 0.0
    %4661 = vmatprep.subr.mxu0 0.0
    %4662 = vmatpush1.msra.mxu0 0.0
    %4663 = vmatprep.subr.mxu0 0.0
    %4664 = vmatpush1.msra.mxu0 0.0
    %4665 = vmatprep.subr.mxu0 0.0
    %4666 = vmatpush1.msra.mxu0 0.0
    %4667 = vmatprep.subr.mxu0 0.0
    %4668 = vmatpush1.msra.mxu0 0.0
    %4669 = vmatprep.subr.mxu0 0.0
    %4670 = vmatpush1.msra.mxu0 0.0
    %4671 = vmatprep.subr.mxu0 0.0
    %4672 = vmatpush1.msra.mxu0 0.0
    %4673 = vmatprep.subr.mxu0 0.0
    %4674 = vmatpush1.msra.mxu0 0.0
    %4675 = vmatprep.subr.mxu0 0.0
    %4676 = vmatpush1.msra.mxu0 0.0
    %4677 = vmatprep.subr.mxu0 0.0
    %4678 = vmatpush1.msra.mxu0 0.0
    %4679 = vmatprep.subr.mxu0 0.0
    %4680 = vmatpush1.msra.mxu0 0.0
    %4681 = vmatprep.subr.mxu0 0.0
    %4682 = vmatpush1.msra.mxu0 0.0
    %4683 = vmatprep.subr.mxu0 0.0
    %4684 = vmatpush1.msra.mxu0 0.0
    %4685 = vmatprep.subr.mxu0 0.0
    %4686 = vmatpush1.msra.mxu0 0.0
    %4687 = vmatprep.subr.mxu0 0.0
    %4688 = vmatpush1.msra.mxu0 0.0
    %4689 = vmatprep.subr.mxu0 0.0
    %4690 = vmatpush1.msra.mxu0 0.0
    %4691 = vmatprep.subr.mxu0 0.0
    %4692 = vmatpush1.msra.mxu0 0.0
    %4693 = vmatprep.subr.mxu0 0.0
    %4694 = vmatpush1.msra.mxu0 0.0
    %4695 = vmatprep.subr.mxu0 0.0
    %4696 = vmatpush1.msra.mxu0 0.0
    %4697 = vmatprep.subr.mxu0 0.0
    %4698 = vmatpush1.msra.mxu0 0.0
    %4699 = vmatprep.subr.mxu0 0.0
    %4700 = vmatpush1.msra.mxu0 0.0
    %4701 = vmatprep.subr.mxu0 0.0
    %4702 = vmatpush1.msra.mxu0 0.0
    %4703 = vmatprep.mubr.f32.mxu0 0.0
    %4704 = vmatmul.mubr.f32.gmra.mrb[0].mxu0 %v4496
    %v4705 = vpop.f32.mrb[0].mxu0
    %v4706 = vadd.f32 %v4637, %v4705
    %v4707 = vpop.f32.mrb[0].mxu0
    %4708 = vmatprep.mubr.f32.mxu0 0.0
    %4709 = vmatmul.mubr.f32.gmra.mrb[0].mxu0 %v4499
    %v4710 = vpop.f32.mrb[0].mxu0
    %v4711 = vadd.f32 %v4637, %v4710
    %v4712 = vpop.f32.mrb[0].mxu0
    %4713 = vmatprep.mubr.f32.mxu0 0.0
    %4714 = vmatmul.mubr.f32.gmra.mrb[0].mxu0 %v4502
    %v4715 = vpop.f32.mrb[0].mxu0
    %v4716 = vadd.f32 %v4637, %v4715
    %v4717 = vpop.f32.mrb[0].mxu0
    %4718 = vmatprep.mubr.f32.mxu0 0.0
    %4719 = vmatmul.mubr.f32.gmra.mrb[0].mxu0 %v4505
    %v4720 = vpop.f32.mrb[0].mxu0
    %v4721 = vadd.f32 %v4637, %v4720
    %v4722 = vpop.f32.mrb[0].mxu0
    %4723 = vmatprep.mubr.f32.mxu0 0.0
    %4724 = vmatmul.mubr.f32.gmra.mrb[0].mxu0 %v4508
    %v4725 = vpop.f32.mrb[0].mxu0
    %v4726 = vadd.f32 %v4637, %v4725
    %v4727 = vpop.f32.mrb[0].mxu0
    %4728 = vmatprep.mubr.f32.mxu0 0.0
    %4729 = vmatmul.mubr.f32.gmra.mrb[0].mxu0 %v4511
    %v4730 = vpop.f32.mrb[0].mxu0
    %v4731 = vadd.f32 %v4637, %v4730
    %v4732 = vpop.f32.mrb[0].mxu0
    %4733 = vmatprep.mubr.f32.mxu0 0.0
    %4734 = vmatmul.mubr.f32.gmra.mrb[0].mxu0 %v4514
    %v4735 = vpop.f32.mrb[0].mxu0
    %v4736 = vadd.f32 %v4637, %v4735
    %v4737 = vpop.f32.mrb[0].mxu0
    %4738 = vmatprep.mubr.f32.mxu0 0.0
    %4739 = vmatmul.mubr.f32.gmra.mrb[0].mxu0 %v4517
    %v4740 = vpop.f32.mrb[0].mxu0
    %v4741 = vadd.f32 %v4637, %v4740
    %v4742 = vpop.f32.mrb[0].mxu0
    %4743 = vdwg.mxu0
    %v4744 = vmax.f32 %v4706, -20.0
    %v4745 = vmax.f32 %v4711, -20.0
    %v4746 = vmax.f32 %v4716, -20.0
    %v4747 = vmax.f32 %v4721, -20.0
    %v4748 = vmax.f32 %v4726, -20.0
    %v4749 = vmax.f32 %v4731, -20.0
    %v4750 = vmax.f32 %v4736, -20.0
    %v4751 = vmax.f32 %v4741, -20.0
    %v4752 = vmin.f32 %v4744, 2.0
    %v4753 = vmin.f32 %v4745, 2.0
    %v4754 = vmin.f32 %v4746, 2.0
    %v4755 = vmin.f32 %v4747, 2.0
    %v4756 = vmin.f32 %v4748, 2.0
    %v4757 = vmin.f32 %v4749, 2.0
    %v4758 = vmin.f32 %v4750, 2.0
    %v4759 = vmin.f32 %v4751, 2.0
    %v4760 = vmul.f32 %v4752, 1.442695
    %v4761 = vpow.pop %v4760
    %v4762 = vmul.f32 %v4753, 1.442695
    %v4763 = vpow.pop %v4762
    %v4764 = vmul.f32 %v4754, 1.442695
    %v4765 = vpow.pop %v4764
    %v4766 = vmul.f32 %v4755, 1.442695
    %v4767 = vpow.pop %v4766
    %v4768 = vmul.f32 %v4756, 1.442695
    %v4769 = vpow.pop %v4768
    %v4770 = vmul.f32 %v4757, 1.442695
    %v4771 = vpow.pop %v4770
    %v4772 = vmul.f32 %v4758, 1.442695
    %v4773 = vpow.pop %v4772
    %v4774 = vmul.f32 %v4759, 1.442695
    %v4775 = vpow.pop %v4774
    %v4776 = vmul.f32 %v4761, %v163
    %v4777 = vmul.f32 %v4763, %v164
    %v4778 = vmul.f32 %v4765, %v165
    %v4779 = vmul.f32 %v4767, %v166
    %v4780 = vmul.f32 %v4769, %v167
    %v4781 = vmul.f32 %v4771, %v168
    %v4782 = vmul.f32 %v4773, %v169
    %v4783 = vmul.f32 %v4775, %v170
    %v4784 = vadd.f32 %v4586, %v4776
    %v4785 = vadd.f32 %v4591, %v4777
    %v4786 = vadd.f32 %v4596, %v4778
    %v4787 = vadd.f32 %v4601, %v4779
    %v4788 = vadd.f32 %v4606, %v4780
    %v4789 = vadd.f32 %v4611, %v4781
    %v4790 = vadd.f32 %v4616, %v4782
    %v4791 = vadd.f32 %v4621, %v4783
    %v4792 = vtanh.pop %v4784
    %v4793 = vtanh.pop %v4785
    %v4794 = vtanh.pop %v4786
    %v4795 = vtanh.pop %v4787
    %v4796 = vtanh.pop %v4788
    %v4797 = vtanh.pop %v4789
    %v4798 = vtanh.pop %v4790
    %v4799 = vtanh.pop %v4791
    %v4800 = vmul.f32 %v163, -0.5
    %v4801 = vmul.f32 %v164, -0.5
    %v4802 = vmul.f32 %v165, -0.5
    %v4803 = vmul.f32 %v166, -0.5
    %v4804 = vmul.f32 %v167, -0.5
    %v4805 = vmul.f32 %v168, -0.5
    %v4806 = vmul.f32 %v169, -0.5
    %v4807 = vmul.f32 %v170, -0.5
    %v4808 = vmul.f32 %v4800, %v163
    %v4809 = vmul.f32 %v4801, %v164
    %v4810 = vmul.f32 %v4802, %v165
    %v4811 = vmul.f32 %v4803, %v166
    %v4812 = vmul.f32 %v4804, %v167
    %v4813 = vmul.f32 %v4805, %v168
    %v4814 = vmul.f32 %v4806, %v169
    %v4815 = vmul.f32 %v4807, %v170
    %v4816 = vsub.f32 %v4808, %v4752
    %v4817 = vsub.f32 %v4809, %v4753
    %v4818 = vsub.f32 %v4810, %v4754
    %v4819 = vsub.f32 %v4811, %v4755
    %v4820 = vsub.f32 %v4812, %v4756
    %v4821 = vsub.f32 %v4813, %v4757
    %v4822 = vsub.f32 %v4814, %v4758
    %v4823 = vsub.f32 %v4815, %v4759
    %v4824 = vsub.f32 %v4816, 0.9189385
    %v4825 = vsub.f32 %v4817, 0.9189385
    %v4826 = vsub.f32 %v4818, 0.9189385
    %v4827 = vsub.f32 %v4819, 0.9189385
    %v4828 = vsub.f32 %v4820, 0.9189385
    %v4829 = vsub.f32 %v4821, 0.9189385
    %v4830 = vsub.f32 %v4822, 0.9189385
    %v4831 = vsub.f32 %v4823, 0.9189385
    %v4832 = vmul.f32 %v4792, %v4792
    %v4833 = vmul.f32 %v4793, %v4793
    %v4834 = vmul.f32 %v4794, %v4794
    %v4835 = vmul.f32 %v4795, %v4795
    %v4836 = vmul.f32 %v4796, %v4796
    %v4837 = vmul.f32 %v4797, %v4797
    %v4838 = vmul.f32 %v4798, %v4798
    %v4839 = vmul.f32 %v4799, %v4799
    %v4840 = vsub.f32 1.0, %v4832
    %v4841 = vsub.f32 1.0, %v4833
    %v4842 = vsub.f32 1.0, %v4834
    %v4843 = vsub.f32 1.0, %v4835
    %v4844 = vsub.f32 1.0, %v4836
    %v4845 = vsub.f32 1.0, %v4837
    %v4846 = vsub.f32 1.0, %v4838
    %v4847 = vsub.f32 1.0, %v4839
    %v4848 = vadd.f32 %v4840, 1e-06
    %v4849 = vadd.f32 %v4841, 1e-06
    %v4850 = vadd.f32 %v4842, 1e-06
    %v4851 = vadd.f32 %v4843, 1e-06
    %v4852 = vadd.f32 %v4844, 1e-06
    %v4853 = vadd.f32 %v4845, 1e-06
    %v4854 = vadd.f32 %v4846, 1e-06
    %v4855 = vadd.f32 %v4847, 1e-06
    %v4856 = vlog2.pop %v4848
    %v4857 = vmul.f32 %v4856, 0.6931472
    %v4858 = vlog2.pop %v4849
    %v4859 = vmul.f32 %v4858, 0.6931472
    %v4860 = vlog2.pop %v4850
    %v4861 = vmul.f32 %v4860, 0.6931472
    %v4862 = vlog2.pop %v4851
    %v4863 = vmul.f32 %v4862, 0.6931472
    %v4864 = vlog2.pop %v4852
    %v4865 = vmul.f32 %v4864, 0.6931472
    %v4866 = vlog2.pop %v4853
    %v4867 = vmul.f32 %v4866, 0.6931472
    %v4868 = vlog2.pop %v4854
    %v4869 = vmul.f32 %v4868, 0.6931472
    %v4870 = vlog2.pop %v4855
    %v4871 = vmul.f32 %v4870, 0.6931472
    %v4872 = vsub.f32 %v4824, %v4857
    %v4873 = vsub.f32 %v4825, %v4859
    %v4874 = vsub.f32 %v4826, %v4861
    %v4875 = vsub.f32 %v4827, %v4863
    %v4876 = vsub.f32 %v4828, %v4865
    %v4877 = vsub.f32 %v4829, %v4867
    %v4878 = vsub.f32 %v4830, %v4869
    %v4879 = vsub.f32 %v4831, %v4871
    %v4880 = vsel %vm598, %v4872, 0.0
    %4881 = vadd.xlane.f32.xlu0 %v4880
    %v4882 = vpop.xlane.xlu0 %4881
    %v4883 = vsel %vm598, %v4873, 0.0
    %4884 = vadd.xlane.f32.xlu0 %v4883
    %v4885 = vpop.xlane.xlu0 %4884
    %v4886 = vsel %vm598, %v4874, 0.0
    %4887 = vadd.xlane.f32.xlu0 %v4886
    %v4888 = vpop.xlane.xlu0 %4887
    %v4889 = vsel %vm598, %v4875, 0.0
    %4890 = vadd.xlane.f32.xlu0 %v4889
    %v4891 = vpop.xlane.xlu0 %4890
    %v4892 = vsel %vm598, %v4876, 0.0
    %4893 = vadd.xlane.f32.xlu0 %v4892
    %v4894 = vpop.xlane.xlu0 %4893
    %v4895 = vsel %vm598, %v4877, 0.0
    %4896 = vadd.xlane.f32.xlu0 %v4895
    %v4897 = vpop.xlane.xlu0 %4896
    %v4898 = vsel %vm598, %v4878, 0.0
    %4899 = vadd.xlane.f32.xlu0 %v4898
    %v4900 = vpop.xlane.xlu0 %4899
    %v4901 = vsel %vm598, %v4879, 0.0
    %4902 = vadd.xlane.f32.xlu0 %v4901
    %v4903 = vpop.xlane.xlu0 %4902
    %v4904 = vlaneseq
    %v4905 = vand.u32 %v4904, 127
    %v4906 = vlaneseq
    %v4907 = vshrl.u32 %v4906, 7
    %vm4908 = vcmp.eq.s32.totalorder %v4905, %v4907
    %v4909 = vsel %vm4908, 1, 0
    %v4910 = vcvt.s32.f32 %v4909
    %v4911 = vadd.s32 %v4907, 4
    %vm4912 = vcmp.eq.s32.totalorder %v4905, %v4911
    %v4913 = vsel %vm4912, 1, 0
    %v4914 = vcvt.s32.f32 %v4913
    %v4915 = vlaneseq
    %v4916 = vshrl.u32 %v4915, 7
    %v4917 = vsub.s32 0, %v4916
    %v4918 = vrot.slane %v4914, %v4917
    %v4919 = vmul.f32 %v4882, %v4918
    %v4920 = vmul.f32 %v4885, %v4918
    %v4921 = vmul.f32 %v4888, %v4918
    %v4922 = vmul.f32 %v4891, %v4918
    %v4923 = vmul.f32 %v4894, %v4918
    %v4924 = vmul.f32 %v4897, %v4918
    %v4925 = vmul.f32 %v4900, %v4918
    %v4926 = vmul.f32 %v4903, %v4918
    %v4928 = vsel %vm598, %v4792, 0
    %v4931 = vsel %vm598, %v4793, 0
    %v4934 = vsel %vm598, %v4794, 0
    %v4937 = vsel %vm598, %v4795, 0
    %v4940 = vsel %vm598, %v4796, 0
    %v4943 = vsel %vm598, %v4797, 0
    %v4946 = vsel %vm598, %v4798, 0
    %v4949 = vsel %vm598, %v4799, 0
    %v4952 = vsel %vm623, %v4910, 0
    %4954 = vmatprep.subr.mxu0 0.0
    %4955 = vmatpush1.msra.mxu0 %v4952
    %4956 = vmatprep.subr.mxu0 0.0
    %4957 = vmatpush1.msra.mxu0 0.0
    %4958 = vmatprep.subr.mxu0 0.0
    %4959 = vmatpush1.msra.mxu0 0.0
    %4960 = vmatprep.subr.mxu0 0.0
    %4961 = vmatpush1.msra.mxu0 0.0
    %4962 = vmatprep.subr.mxu0 0.0
    %4963 = vmatpush1.msra.mxu0 0.0
    %4964 = vmatprep.subr.mxu0 0.0
    %4965 = vmatpush1.msra.mxu0 0.0
    %4966 = vmatprep.subr.mxu0 0.0
    %4967 = vmatpush1.msra.mxu0 0.0
    %4968 = vmatprep.subr.mxu0 0.0
    %4969 = vmatpush1.msra.mxu0 0.0
    %4970 = vmatprep.subr.mxu0 0.0
    %4971 = vmatpush1.msra.mxu0 0.0
    %4972 = vmatprep.subr.mxu0 0.0
    %4973 = vmatpush1.msra.mxu0 0.0
    %4974 = vmatprep.subr.mxu0 0.0
    %4975 = vmatpush1.msra.mxu0 0.0
    %4976 = vmatprep.subr.mxu0 0.0
    %4977 = vmatpush1.msra.mxu0 0.0
    %4978 = vmatprep.subr.mxu0 0.0
    %4979 = vmatpush1.msra.mxu0 0.0
    %4980 = vmatprep.subr.mxu0 0.0
    %4981 = vmatpush1.msra.mxu0 0.0
    %4982 = vmatprep.subr.mxu0 0.0
    %4983 = vmatpush1.msra.mxu0 0.0
    %4984 = vmatprep.subr.mxu0 0.0
    %4985 = vmatpush1.msra.mxu0 0.0
    %4986 = vmatprep.subr.mxu0 0.0
    %4987 = vmatpush1.msra.mxu0 0.0
    %4988 = vmatprep.subr.mxu0 0.0
    %4989 = vmatpush1.msra.mxu0 0.0
    %4990 = vmatprep.subr.mxu0 0.0
    %4991 = vmatpush1.msra.mxu0 0.0
    %4992 = vmatprep.subr.mxu0 0.0
    %4993 = vmatpush1.msra.mxu0 0.0
    %4994 = vmatprep.subr.mxu0 0.0
    %4995 = vmatpush1.msra.mxu0 0.0
    %4996 = vmatprep.subr.mxu0 0.0
    %4997 = vmatpush1.msra.mxu0 0.0
    %4998 = vmatprep.subr.mxu0 0.0
    %4999 = vmatpush1.msra.mxu0 0.0
    %5000 = vmatprep.subr.mxu0 0.0
    %5001 = vmatpush1.msra.mxu0 0.0
    %5002 = vmatprep.subr.mxu0 0.0
    %5003 = vmatpush1.msra.mxu0 0.0
    %5004 = vmatprep.subr.mxu0 0.0
    %5005 = vmatpush1.msra.mxu0 0.0
    %5006 = vmatprep.subr.mxu0 0.0
    %5007 = vmatpush1.msra.mxu0 0.0
    %5008 = vmatprep.subr.mxu0 0.0
    %5009 = vmatpush1.msra.mxu0 0.0
    %5010 = vmatprep.subr.mxu0 0.0
    %5011 = vmatpush1.msra.mxu0 0.0
    %5012 = vmatprep.subr.mxu0 0.0
    %5013 = vmatpush1.msra.mxu0 0.0
    %5014 = vmatprep.subr.mxu0 0.0
    %5015 = vmatpush1.msra.mxu0 0.0
    %5016 = vmatprep.subr.mxu0 0.0
    %5017 = vmatpush1.msra.mxu0 0.0
    %5018 = vmatprep.mubr.f32.mxu0 0.0
    %5019 = vmatmul.mubr.f32.gmra.mrb[0].mxu0 %v4928
    %v5020 = vpop.f32.mrb[0].mxu0
    %v5021 = vadd.f32 %v4919, %v5020
    %v5022 = vpop.f32.mrb[0].mxu0
    %5023 = vmatprep.mubr.f32.mxu0 0.0
    %5024 = vmatmul.mubr.f32.gmra.mrb[0].mxu0 %v4931
    %v5025 = vpop.f32.mrb[0].mxu0
    %v5026 = vadd.f32 %v4920, %v5025
    %v5027 = vpop.f32.mrb[0].mxu0
    %5028 = vmatprep.mubr.f32.mxu0 0.0
    %5029 = vmatmul.mubr.f32.gmra.mrb[0].mxu0 %v4934
    %v5030 = vpop.f32.mrb[0].mxu0
    %v5031 = vadd.f32 %v4921, %v5030
    %v5032 = vpop.f32.mrb[0].mxu0
    %5033 = vmatprep.mubr.f32.mxu0 0.0
    %5034 = vmatmul.mubr.f32.gmra.mrb[0].mxu0 %v4937
    %v5035 = vpop.f32.mrb[0].mxu0
    %v5036 = vadd.f32 %v4922, %v5035
    %v5037 = vpop.f32.mrb[0].mxu0
    %5038 = vmatprep.mubr.f32.mxu0 0.0
    %5039 = vmatmul.mubr.f32.gmra.mrb[0].mxu0 %v4940
    %v5040 = vpop.f32.mrb[0].mxu0
    %v5041 = vadd.f32 %v4923, %v5040
    %v5042 = vpop.f32.mrb[0].mxu0
    %5043 = vmatprep.mubr.f32.mxu0 0.0
    %5044 = vmatmul.mubr.f32.gmra.mrb[0].mxu0 %v4943
    %v5045 = vpop.f32.mrb[0].mxu0
    %v5046 = vadd.f32 %v4924, %v5045
    %v5047 = vpop.f32.mrb[0].mxu0
    %5048 = vmatprep.mubr.f32.mxu0 0.0
    %5049 = vmatmul.mubr.f32.gmra.mrb[0].mxu0 %v4946
    %v5050 = vpop.f32.mrb[0].mxu0
    %v5051 = vadd.f32 %v4925, %v5050
    %v5052 = vpop.f32.mrb[0].mxu0
    %5053 = vmatprep.mubr.f32.mxu0 0.0
    %5054 = vmatmul.mubr.f32.gmra.mrb[0].mxu0 %v4949
    %v5055 = vpop.f32.mrb[0].mxu0
    %v5056 = vadd.f32 %v4926, %v5055
    %v5057 = vpop.f32.mrb[0].mxu0
    %5058 = vdwg.mxu0
    %v5059 = vadd.s32 %v4907, 5
    %vm5060 = vcmp.eq.s32.totalorder %v4905, %v5059
    %v5061 = vsel %vm5060, 1, 0
    %v5062 = vcvt.s32.f32 %v5061
    %v5064 = vsel %vm598, %v4586, 0
    %v5067 = vsel %vm598, %v4591, 0
    %v5070 = vsel %vm598, %v4596, 0
    %v5073 = vsel %vm598, %v4601, 0
    %v5076 = vsel %vm598, %v4606, 0
    %v5079 = vsel %vm598, %v4611, 0
    %v5082 = vsel %vm598, %v4616, 0
    %v5085 = vsel %vm598, %v4621, 0
    %v5088 = vsel %vm623, %v5062, 0
    %5090 = vmatprep.subr.mxu0 0.0
    %5091 = vmatpush1.msra.mxu0 %v5088
    %5092 = vmatprep.subr.mxu0 0.0
    %5093 = vmatpush1.msra.mxu0 0.0
    %5094 = vmatprep.subr.mxu0 0.0
    %5095 = vmatpush1.msra.mxu0 0.0
    %5096 = vmatprep.subr.mxu0 0.0
    %5097 = vmatpush1.msra.mxu0 0.0
    %5098 = vmatprep.subr.mxu0 0.0
    %5099 = vmatpush1.msra.mxu0 0.0
    %5100 = vmatprep.subr.mxu0 0.0
    %5101 = vmatpush1.msra.mxu0 0.0
    %5102 = vmatprep.subr.mxu0 0.0
    %5103 = vmatpush1.msra.mxu0 0.0
    %5104 = vmatprep.subr.mxu0 0.0
    %5105 = vmatpush1.msra.mxu0 0.0
    %5106 = vmatprep.subr.mxu0 0.0
    %5107 = vmatpush1.msra.mxu0 0.0
    %5108 = vmatprep.subr.mxu0 0.0
    %5109 = vmatpush1.msra.mxu0 0.0
    %5110 = vmatprep.subr.mxu0 0.0
    %5111 = vmatpush1.msra.mxu0 0.0
    %5112 = vmatprep.subr.mxu0 0.0
    %5113 = vmatpush1.msra.mxu0 0.0
    %5114 = vmatprep.subr.mxu0 0.0
    %5115 = vmatpush1.msra.mxu0 0.0
    %5116 = vmatprep.subr.mxu0 0.0
    %5117 = vmatpush1.msra.mxu0 0.0
    %5118 = vmatprep.subr.mxu0 0.0
    %5119 = vmatpush1.msra.mxu0 0.0
    %5120 = vmatprep.subr.mxu0 0.0
    %5121 = vmatpush1.msra.mxu0 0.0
    %5122 = vmatprep.subr.mxu0 0.0
    %5123 = vmatpush1.msra.mxu0 0.0
    %5124 = vmatprep.subr.mxu0 0.0
    %5125 = vmatpush1.msra.mxu0 0.0
    %5126 = vmatprep.subr.mxu0 0.0
    %5127 = vmatpush1.msra.mxu0 0.0
    %5128 = vmatprep.subr.mxu0 0.0
    %5129 = vmatpush1.msra.mxu0 0.0
    %5130 = vmatprep.subr.mxu0 0.0
    %5131 = vmatpush1.msra.mxu0 0.0
    %5132 = vmatprep.subr.mxu0 0.0
    %5133 = vmatpush1.msra.mxu0 0.0
    %5134 = vmatprep.subr.mxu0 0.0
    %5135 = vmatpush1.msra.mxu0 0.0
    %5136 = vmatprep.subr.mxu0 0.0
    %5137 = vmatpush1.msra.mxu0 0.0
    %5138 = vmatprep.subr.mxu0 0.0
    %5139 = vmatpush1.msra.mxu0 0.0
    %5140 = vmatprep.subr.mxu0 0.0
    %5141 = vmatpush1.msra.mxu0 0.0
    %5142 = vmatprep.subr.mxu0 0.0
    %5143 = vmatpush1.msra.mxu0 0.0
    %5144 = vmatprep.subr.mxu0 0.0
    %5145 = vmatpush1.msra.mxu0 0.0
    %5146 = vmatprep.subr.mxu0 0.0
    %5147 = vmatpush1.msra.mxu0 0.0
    %5148 = vmatprep.subr.mxu0 0.0
    %5149 = vmatpush1.msra.mxu0 0.0
    %5150 = vmatprep.subr.mxu0 0.0
    %5151 = vmatpush1.msra.mxu0 0.0
    %5152 = vmatprep.subr.mxu0 0.0
    %5153 = vmatpush1.msra.mxu0 0.0
    %5154 = vmatprep.mubr.f32.mxu0 0.0
    %5155 = vmatmul.mubr.f32.gmra.mrb[0].mxu0 %v5064
    %v5156 = vpop.f32.mrb[0].mxu0
    %v5157 = vadd.f32 0.0, %v5156
    %v5158 = vpop.f32.mrb[0].mxu0
    %5159 = vmatprep.mubr.f32.mxu0 0.0
    %5160 = vmatmul.mubr.f32.gmra.mrb[0].mxu0 %v5067
    %v5161 = vpop.f32.mrb[0].mxu0
    %v5162 = vadd.f32 0.0, %v5161
    %v5163 = vpop.f32.mrb[0].mxu0
    %5164 = vmatprep.mubr.f32.mxu0 0.0
    %5165 = vmatmul.mubr.f32.gmra.mrb[0].mxu0 %v5070
    %v5166 = vpop.f32.mrb[0].mxu0
    %v5167 = vadd.f32 0.0, %v5166
    %v5168 = vpop.f32.mrb[0].mxu0
    %5169 = vmatprep.mubr.f32.mxu0 0.0
    %5170 = vmatmul.mubr.f32.gmra.mrb[0].mxu0 %v5073
    %v5171 = vpop.f32.mrb[0].mxu0
    %v5172 = vadd.f32 0.0, %v5171
    %v5173 = vpop.f32.mrb[0].mxu0
    %5174 = vmatprep.mubr.f32.mxu0 0.0
    %5175 = vmatmul.mubr.f32.gmra.mrb[0].mxu0 %v5076
    %v5176 = vpop.f32.mrb[0].mxu0
    %v5177 = vadd.f32 0.0, %v5176
    %v5178 = vpop.f32.mrb[0].mxu0
    %5179 = vmatprep.mubr.f32.mxu0 0.0
    %5180 = vmatmul.mubr.f32.gmra.mrb[0].mxu0 %v5079
    %v5181 = vpop.f32.mrb[0].mxu0
    %v5182 = vadd.f32 0.0, %v5181
    %v5183 = vpop.f32.mrb[0].mxu0
    %5184 = vmatprep.mubr.f32.mxu0 0.0
    %5185 = vmatmul.mubr.f32.gmra.mrb[0].mxu0 %v5082
    %v5186 = vpop.f32.mrb[0].mxu0
    %v5187 = vadd.f32 0.0, %v5186
    %v5188 = vpop.f32.mrb[0].mxu0
    %5189 = vmatprep.mubr.f32.mxu0 0.0
    %5190 = vmatmul.mubr.f32.gmra.mrb[0].mxu0 %v5085
    %v5191 = vpop.f32.mrb[0].mxu0
    %v5192 = vadd.f32 0.0, %v5191
    %v5193 = vpop.f32.mrb[0].mxu0
    %5194 = vdwg.mxu0
    %v5195 = vadd.f32 %v5021, %v5157
    %v5196 = vadd.f32 %v5026, %v5162
    %v5197 = vadd.f32 %v5031, %v5167
    %v5198 = vadd.f32 %v5036, %v5172
    %v5199 = vadd.f32 %v5041, %v5177
    %v5200 = vadd.f32 %v5046, %v5182
    %v5201 = vadd.f32 %v5051, %v5187
    %v5202 = vadd.f32 %v5056, %v5192
    %v5203 = vadd.s32 %v4907, 9
    %vm5204 = vcmp.eq.s32.totalorder %v4905, %v5203
    %v5205 = vsel %vm5204, 1, 0
    %v5206 = vcvt.s32.f32 %v5205
    %v5208 = vsel %vm598, %v4752, 0
    %v5211 = vsel %vm598, %v4753, 0
    %v5214 = vsel %vm598, %v4754, 0
    %v5217 = vsel %vm598, %v4755, 0
    %v5220 = vsel %vm598, %v4756, 0
    %v5223 = vsel %vm598, %v4757, 0
    %v5226 = vsel %vm598, %v4758, 0
    %v5229 = vsel %vm598, %v4759, 0
    %v5232 = vsel %vm623, %v5206, 0
    %5234 = vmatprep.subr.mxu0 0.0
    %5235 = vmatpush1.msra.mxu0 %v5232
    %5236 = vmatprep.subr.mxu0 0.0
    %5237 = vmatpush1.msra.mxu0 0.0
    %5238 = vmatprep.subr.mxu0 0.0
    %5239 = vmatpush1.msra.mxu0 0.0
    %5240 = vmatprep.subr.mxu0 0.0
    %5241 = vmatpush1.msra.mxu0 0.0
    %5242 = vmatprep.subr.mxu0 0.0
    %5243 = vmatpush1.msra.mxu0 0.0
    %5244 = vmatprep.subr.mxu0 0.0
    %5245 = vmatpush1.msra.mxu0 0.0
    %5246 = vmatprep.subr.mxu0 0.0
    %5247 = vmatpush1.msra.mxu0 0.0
    %5248 = vmatprep.subr.mxu0 0.0
    %5249 = vmatpush1.msra.mxu0 0.0
    %5250 = vmatprep.subr.mxu0 0.0
    %5251 = vmatpush1.msra.mxu0 0.0
    %5252 = vmatprep.subr.mxu0 0.0
    %5253 = vmatpush1.msra.mxu0 0.0
    %5254 = vmatprep.subr.mxu0 0.0
    %5255 = vmatpush1.msra.mxu0 0.0
    %5256 = vmatprep.subr.mxu0 0.0
    %5257 = vmatpush1.msra.mxu0 0.0
    %5258 = vmatprep.subr.mxu0 0.0
    %5259 = vmatpush1.msra.mxu0 0.0
    %5260 = vmatprep.subr.mxu0 0.0
    %5261 = vmatpush1.msra.mxu0 0.0
    %5262 = vmatprep.subr.mxu0 0.0
    %5263 = vmatpush1.msra.mxu0 0.0
    %5264 = vmatprep.subr.mxu0 0.0
    %5265 = vmatpush1.msra.mxu0 0.0
    %5266 = vmatprep.subr.mxu0 0.0
    %5267 = vmatpush1.msra.mxu0 0.0
    %5268 = vmatprep.subr.mxu0 0.0
    %5269 = vmatpush1.msra.mxu0 0.0
    %5270 = vmatprep.subr.mxu0 0.0
    %5271 = vmatpush1.msra.mxu0 0.0
    %5272 = vmatprep.subr.mxu0 0.0
    %5273 = vmatpush1.msra.mxu0 0.0
    %5274 = vmatprep.subr.mxu0 0.0
    %5275 = vmatpush1.msra.mxu0 0.0
    %5276 = vmatprep.subr.mxu0 0.0
    %5277 = vmatpush1.msra.mxu0 0.0
    %5278 = vmatprep.subr.mxu0 0.0
    %5279 = vmatpush1.msra.mxu0 0.0
    %5280 = vmatprep.subr.mxu0 0.0
    %5281 = vmatpush1.msra.mxu0 0.0
    %5282 = vmatprep.subr.mxu0 0.0
    %5283 = vmatpush1.msra.mxu0 0.0
    %5284 = vmatprep.subr.mxu0 0.0
    %5285 = vmatpush1.msra.mxu0 0.0
    %5286 = vmatprep.subr.mxu0 0.0
    %5287 = vmatpush1.msra.mxu0 0.0
    %5288 = vmatprep.subr.mxu0 0.0
    %5289 = vmatpush1.msra.mxu0 0.0
    %5290 = vmatprep.subr.mxu0 0.0
    %5291 = vmatpush1.msra.mxu0 0.0
    %5292 = vmatprep.subr.mxu0 0.0
    %5293 = vmatpush1.msra.mxu0 0.0
    %5294 = vmatprep.subr.mxu0 0.0
    %5295 = vmatpush1.msra.mxu0 0.0
    %5296 = vmatprep.subr.mxu0 0.0
    %5297 = vmatpush1.msra.mxu0 0.0
    %5298 = vmatprep.mubr.f32.mxu0 0.0
    %5299 = vmatmul.mubr.f32.gmra.mrb[0].mxu0 %v5208
    %v5300 = vpop.f32.mrb[0].mxu0
    %v5301 = vadd.f32 0.0, %v5300
    %v5302 = vpop.f32.mrb[0].mxu0
    %5303 = vmatprep.mubr.f32.mxu0 0.0
    %5304 = vmatmul.mubr.f32.gmra.mrb[0].mxu0 %v5211
    %v5305 = vpop.f32.mrb[0].mxu0
    %v5306 = vadd.f32 0.0, %v5305
    %v5307 = vpop.f32.mrb[0].mxu0
    %5308 = vmatprep.mubr.f32.mxu0 0.0
    %5309 = vmatmul.mubr.f32.gmra.mrb[0].mxu0 %v5214
    %v5310 = vpop.f32.mrb[0].mxu0
    %v5311 = vadd.f32 0.0, %v5310
    %v5312 = vpop.f32.mrb[0].mxu0
    %5313 = vmatprep.mubr.f32.mxu0 0.0
    %5314 = vmatmul.mubr.f32.gmra.mrb[0].mxu0 %v5217
    %v5315 = vpop.f32.mrb[0].mxu0
    %v5316 = vadd.f32 0.0, %v5315
    %v5317 = vpop.f32.mrb[0].mxu0
    %5318 = vmatprep.mubr.f32.mxu0 0.0
    %5319 = vmatmul.mubr.f32.gmra.mrb[0].mxu0 %v5220
    %v5320 = vpop.f32.mrb[0].mxu0
    %v5321 = vadd.f32 0.0, %v5320
    %v5322 = vpop.f32.mrb[0].mxu0
    %5323 = vmatprep.mubr.f32.mxu0 0.0
    %5324 = vmatmul.mubr.f32.gmra.mrb[0].mxu0 %v5223
    %v5325 = vpop.f32.mrb[0].mxu0
    %v5326 = vadd.f32 0.0, %v5325
    %v5327 = vpop.f32.mrb[0].mxu0
    %5328 = vmatprep.mubr.f32.mxu0 0.0
    %5329 = vmatmul.mubr.f32.gmra.mrb[0].mxu0 %v5226
    %v5330 = vpop.f32.mrb[0].mxu0
    %v5331 = vadd.f32 0.0, %v5330
    %v5332 = vpop.f32.mrb[0].mxu0
    %5333 = vmatprep.mubr.f32.mxu0 0.0
    %5334 = vmatmul.mubr.f32.gmra.mrb[0].mxu0 %v5229
    %v5335 = vpop.f32.mrb[0].mxu0
    %v5336 = vadd.f32 0.0, %v5335
    %v5337 = vpop.f32.mrb[0].mxu0
    %5338 = vdwg.mxu0
    %v5339 = vadd.f32 %v5195, %v5301
    %v5340 = vadd.f32 %v5196, %v5306
    %v5341 = vadd.f32 %v5197, %v5311
    %v5342 = vadd.f32 %v5198, %v5316
    %v5343 = vadd.f32 %v5199, %v5321
    %v5344 = vadd.f32 %v5200, %v5326
    %v5345 = vadd.f32 %v5201, %v5331
    %v5346 = vadd.f32 %v5202, %v5336
    %5347 = vst [vmem:[#allocation3] sm:$0xff] %v5339
    %5348 = vst [vmem:[#allocation3 + $0x8] sm:$0xff] %v5340
    %5349 = vst [vmem:[#allocation3 + $0x10] sm:$0xff] %v5341
    %5350 = vst [vmem:[#allocation3 + $0x18] sm:$0xff] %v5342
    %5351 = vst [vmem:[#allocation3 + $0x20] sm:$0xff] %v5343
    %5352 = vst [vmem:[#allocation3 + $0x28] sm:$0xff] %v5344
    %5353 = vst [vmem:[#allocation3 + $0x30] sm:$0xff] %v5345
    %5354 = vst [vmem:[#allocation3 + $0x38] sm:$0xff] %v5346
    // Predicated region
    $region134: #{tpu_custom_call.1} parent=1 // pred_check
      _
    $region135: #{tpu_custom_call.1} parent=1 // pred_check_branch
      %5356 = sbr.rel (0) target = $region137
    $region136: #{tpu_custom_call.1} parent=1 // pred_region
      %s5358 = ssub.s32 1024, 1024
      %5359 = vsyncadd [#allocation4], %s5358
      %s5360 = sshll.u32 [#allocation3], 4
      %s5361 = int_to_ptr.vmem [resolvable:$true] %s5360
      %5366 = dma.vmem_to_hbm [thread:$0]  %s5361, 1024, %s67, [#allocation4], 128, 128, 8
    $region137: #{tpu_custom_call.1} parent=1 // pred_fallthru
      _
    // Predicated region
    $region138: #{tpu_custom_call.1} parent=1 // pred_check
      _
    $region139: #{tpu_custom_call.1} parent=1 // pred_check_branch
      %5368 = sbr.rel (0) target = $region141
    $region140: #{tpu_custom_call.1} parent=1 // pred_region
      %5369 = dma.done [#allocation4], 1024
    $region141: #{tpu_custom_call.1} parent=1 // pred_fallthru
      _
    %5370 = vsyncpa [#allocation4], 1

</llo_original>
